<compile_context>
chip_gen: v6e
topology: v6e:2x2x1
jax: 0.10.0
libtpu: 0.0.40
codegen_flags: <defaults>
</compile_context>

<pallas_src>
import numpy as np
import jax
import jax.numpy as jnp
from jax import lax
from jax.experimental import pallas as pl
from jax.experimental.pallas import tpu as pltpu


def _round_up(x, m):
    return ((x + m - 1) // m) * m


def _choose_tile_m(M, requested):
    """Big tiles amortize per-grid-step overhead; but keep >= 4 grid steps when
    the batch allows it (2 TensorCores on v7x, >= 2 pipelined steps each) and
    never let tiles drop below 256 rows for that reason."""
    m8 = _round_up(max(M, 1), 8)
    t = min(_round_up(max(requested, 8), 8), m8)
    quarter = _round_up(-(-M // 4), 8)              # ceil(M/4), sublane multiple
    t = min(t, max(quarter, min(256, m8)))
    return max(t, 8)


# ----------------------------------------------------------------------------
# Kernel factory: the layer structure (D, skips) is baked in at trace time so
# the kernel body is a fully unrolled chain of dots + ReLUs on one row tile.
# ----------------------------------------------------------------------------
def make_base_mlp_kernel(D, skips):
    skips = set(skips)

    def kernel(*refs):
        x_ref = refs[0]
        o_ref = refs[-1]
        p = refs[1:-1]

        x = x_ref[...]                           # (TM, in_pad) f32
        x_bf = x.astype(jnp.bfloat16)            # cast once, reused at the skip
        h = x                                    # f32 carrier between layers
        idx = 0
        for i in range(D):
            if i in skips:
                # Skip layer with the concat folded into two summed dots:
                #   ReLU( x @ W_x + h @ W_h + b )
                wx = p[idx][...]                 # (in_pad, W) bf16
                wh = p[idx + 1][...]             # (W, W)      bf16
                b = p[idx + 2][...]              # (1, W)      f32
                idx += 3
                h = (jnp.dot(x_bf, wx, preferred_element_type=jnp.float32)
                     + jnp.dot(h.astype(jnp.bfloat16), wh,
                               preferred_element_type=jnp.float32)
                     + b)
            else:
                w = p[idx][...]                  # bf16
                b = p[idx + 1][...]              # f32
                idx += 2
                lhs = x_bf if i == 0 else h.astype(jnp.bfloat16)
                h = jnp.dot(lhs, w, preferred_element_type=jnp.float32) + b
            h = jnp.maximum(h, 0.0)              # nn.ReLU (module default), f32

        wf = p[idx][...]                         # (W, out_pad) bf16
        bfin = p[idx + 1][...]                   # (1, out_pad) f32
        out = jnp.dot(h.astype(jnp.bfloat16), wf,
                      preferred_element_type=jnp.float32) + bfin
        o_ref[...] = out.astype(o_ref.dtype)
        # TODO(synk): only the default configuration (activation=ReLU,
        # final_act=False) is implemented; other activations would need to be
        # threaded through this closure.

    return kernel


# ----------------------------------------------------------------------------
# Parameter prep: split skip weights, pad the input/output lane dims, cast
# weights to bf16 (biases stay f32 for the f32 elementwise path).
# ----------------------------------------------------------------------------
def _prepare_params(torch_params, *, D, skips, in_channels, in_pad, out_pad):
    skips = set(skips)
    flat = []
    for i in range(D):
        w, b = torch_params[i]                   # w is (in, out) == weight.T
        b = jnp.asarray(b, jnp.float32).reshape(1, -1)
        if i in skips:
            # torch concat order is [x, h] -> rows [:in_ch] act on x,
            # rows [in_ch:] act on h.
            wx = w[:in_channels, :]
            wh = w[in_channels:, :]
            if in_pad > in_channels:
                wx = jnp.pad(wx, ((0, in_pad - in_channels), (0, 0)))
            flat += [wx.astype(jnp.bfloat16), wh.astype(jnp.bfloat16), b]
        else:
            if i == 0 and in_pad > in_channels:
                w = jnp.pad(w, ((0, in_pad - in_channels), (0, 0)))
            flat += [jnp.asarray(w).astype(jnp.bfloat16), b]
    wf, bf = torch_params[D]
    out_ch = wf.shape[1]
    bf = jnp.asarray(bf, jnp.float32).reshape(1, -1)
    if out_pad > out_ch:
        wf = jnp.pad(wf, ((0, 0), (0, out_pad - out_ch)))
        bf = jnp.pad(bf, ((0, 0), (0, out_pad - out_ch)))
    flat += [jnp.asarray(wf).astype(jnp.bfloat16), bf]
    return flat


# ----------------------------------------------------------------------------
# Wrapper: pads inputs, builds BlockSpecs, calls pallas_call, slices output.
# ----------------------------------------------------------------------------
def base_mlp_forward(x, torch_params, *, D, skips, tile_m=1024):
    """x: (M, in_channels) f32.  torch_params: [(w_i, b_i)] * D + [(w_f, b_f)]
    with w stored as (in, out) == torch weight.T.  Returns (M, out_channels)."""
    M, in_ch = x.shape
    out_ch = torch_params[D][0].shape[1]

    in_pad = _round_up(in_ch, 64)        # 63 -> 64: aligned x rows / clean MXU K
    out_pad = _round_up(out_ch, 128)     # 3 -> 128: lane-dense unmasked stores

    flat_params = _prepare_params(torch_params, D=D, skips=skips,
                                  in_channels=in_ch, in_pad=in_pad,
                                  out_pad=out_pad)

    tile_m = _choose_tile_m(M, tile_m)
    M_pad = _round_up(M, tile_m)
    xp = jnp.pad(x.astype(jnp.float32),
                 ((0, M_pad - M), (0, in_pad - in_ch)))

    grid = (M_pad // tile_m,)

    in_specs = [pl.BlockSpec((tile_m, in_pad), lambda i: (i, 0))]
    for par in flat_params:
        # Whole-array blocks with a constant index_map -> weights/biases stay
        # resident in VMEM across all grid steps.
        in_specs.append(pl.BlockSpec(par.shape, lambda i: (0, 0)))
    out_specs = pl.BlockSpec((tile_m, out_pad), lambda i: (i, 0))

    out = pl.pallas_call(
        make_base_mlp_kernel(D, skips),
        out_shape=jax.ShapeDtypeStruct((M_pad, out_pad), jnp.float32),
        grid_spec=pltpu.PrefetchScalarGridSpec(
            num_scalar_prefetch=0,
            grid=grid,
            in_specs=in_specs,
            out_specs=out_specs,
        ),
        compiler_params=pltpu.CompilerParams(
            dimension_semantics=("parallel",)),
    )(xp, *flat_params)

    return out[:M, :out_ch]


# ----------------------------------------------------------------------------
# Plain-JAX reference with the PyTorch layer wiring (explicit concat at skips).
# ----------------------------------------------------------------------------
def reference_forward(x, torch_params, *, D, skips):
    out = x
    for i in range(D):
        w, b = torch_params[i]
        if i in skips:
            out = jnp.concatenate([x, out], axis=-1)
        out = jnp.maximum(
            jnp.dot(out, w, precision=lax.Precision.HIGHEST) + b, 0.0)
    wf, bf = torch_params[D]
    return jnp.dot(out, wf, precision=lax.Precision.HIGHEST) + bf


if __name__ == "__main__":
    # ---- module configuration (BaseMLP defaults) ----------------------------
    D = 8
    W = 256
    in_channels = 63
    out_channels = 3
    skips = (4,)

    # ---- deterministic parameters (stored as weight.T: (in, out)) -----------
    key = jax.random.PRNGKey(0)
    torch_params = []
    for i in range(D):
        if i == 0:
            din = in_channels
        elif i in skips:
            din = in_channels + W
        else:
            din = W
        key, kw, kb = jax.random.split(key, 3)
        w = jax.random.normal(kw, (din, W), jnp.float32) * 0.1
        b = jax.random.normal(kb, (1, W), jnp.float32) * 0.01
        torch_params.append((w, b))
    key, kw, kb = jax.random.split(key, 3)
    wf = jax.random.normal(kw, (W, out_channels), jnp.float32) * 0.1
    bf = jax.random.normal(kb, (1, out_channels), jnp.float32) * 0.01
    torch_params.append((wf, bf))

    # ---- inputs: M rows of in_channels features ------------------------------
    M = 2048                      # -> tile_m=512, grid=4: 2 steps per v7x core
    key, kx = jax.random.split(key)
    x = jax.random.normal(kx, (M, in_channels), jnp.float32)

    # ---- run Pallas kernel ----------------------------------------------------
    out = base_mlp_forward(x, torch_params, D=D, skips=skips, tile_m=1024)
    out = jax.block_until_ready(out)

    ref = reference_forward(x, torch_params, D=D, skips=skips)
    ref = jax.block_until_ready(ref)

    assert out.shape == (M, out_channels) and out.dtype == jnp.float32
    # Tolerance covers bf16-operand rounding across 9 chained matmuls (f32
    # accumulate) vs. the f32 HIGHEST-precision reference.
    np.testing.assert_allclose(np.asarray(out), np.asarray(ref),
                               rtol=5e-2, atol=1e-1)
    print("KERNEL_OK")
</pallas_src>

<mosaic_0001>
module attributes {stable_mosaic.version = 11 : i64} {
  func.func @kernel(%arg0: i32, %arg1: memref<512x64xf32, #tpu.memory_space<vmem>>, %arg2: memref<64x256xbf16, #tpu.memory_space<vmem>>, %arg3: memref<1x256xf32, #tpu.memory_space<vmem>>, %arg4: memref<256x256xbf16, #tpu.memory_space<vmem>>, %arg5: memref<1x256xf32, #tpu.memory_space<vmem>>, %arg6: memref<256x256xbf16, #tpu.memory_space<vmem>>, %arg7: memref<1x256xf32, #tpu.memory_space<vmem>>, %arg8: memref<256x256xbf16, #tpu.memory_space<vmem>>, %arg9: memref<1x256xf32, #tpu.memory_space<vmem>>, %arg10: memref<64x256xbf16, #tpu.memory_space<vmem>>, %arg11: memref<256x256xbf16, #tpu.memory_space<vmem>>, %arg12: memref<1x256xf32, #tpu.memory_space<vmem>>, %arg13: memref<256x256xbf16, #tpu.memory_space<vmem>>, %arg14: memref<1x256xf32, #tpu.memory_space<vmem>>, %arg15: memref<256x256xbf16, #tpu.memory_space<vmem>>, %arg16: memref<1x256xf32, #tpu.memory_space<vmem>>, %arg17: memref<256x256xbf16, #tpu.memory_space<vmem>>, %arg18: memref<1x256xf32, #tpu.memory_space<vmem>>, %arg19: memref<256x128xbf16, #tpu.memory_space<vmem>>, %arg20: memref<1x128xf32, #tpu.memory_space<vmem>>, %arg21: memref<512x128xf32, #tpu.memory_space<vmem>>) attributes {dimension_semantics = [#tpu.dimension_semantics<parallel>], iteration_bounds = array<i64: 4>, scalar_prefetch = 0 : i64, scratch_operands = 0 : i64, tpu.core_type = #tpu.core_type<tc>, window_params = [{transform_indices = @transform_0, window_bounds = array<i64: 512, 64>}, {pipeline_mode = #tpu.pipeline_mode<synchronous>, transform_indices = @transform_1, window_bounds = array<i64: 64, 256>}, {pipeline_mode = #tpu.pipeline_mode<synchronous>, transform_indices = @transform_2, window_bounds = array<i64: 1, 256>}, {pipeline_mode = #tpu.pipeline_mode<synchronous>, transform_indices = @transform_3, window_bounds = array<i64: 256, 256>}, {pipeline_mode = #tpu.pipeline_mode<synchronous>, transform_indices = @transform_4, window_bounds = array<i64: 1, 256>}, {pipeline_mode = #tpu.pipeline_mode<synchronous>, transform_indices = @transform_5, window_bounds = array<i64: 256, 256>}, {pipeline_mode = #tpu.pipeline_mode<synchronous>, transform_indices = @transform_6, window_bounds = array<i64: 1, 256>}, {pipeline_mode = #tpu.pipeline_mode<synchronous>, transform_indices = @transform_7, window_bounds = array<i64: 256, 256>}, {pipeline_mode = #tpu.pipeline_mode<synchronous>, transform_indices = @transform_8, window_bounds = array<i64: 1, 256>}, {pipeline_mode = #tpu.pipeline_mode<synchronous>, transform_indices = @transform_9, window_bounds = array<i64: 64, 256>}, {pipeline_mode = #tpu.pipeline_mode<synchronous>, transform_indices = @transform_10, window_bounds = array<i64: 256, 256>}, {pipeline_mode = #tpu.pipeline_mode<synchronous>, transform_indices = @transform_11, window_bounds = array<i64: 1, 256>}, {pipeline_mode = #tpu.pipeline_mode<synchronous>, transform_indices = @transform_12, window_bounds = array<i64: 256, 256>}, {pipeline_mode = #tpu.pipeline_mode<synchronous>, transform_indices = @transform_13, window_bounds = array<i64: 1, 256>}, {pipeline_mode = #tpu.pipeline_mode<synchronous>, transform_indices = @transform_14, window_bounds = array<i64: 256, 256>}, {pipeline_mode = #tpu.pipeline_mode<synchronous>, transform_indices = @transform_15, window_bounds = array<i64: 1, 256>}, {pipeline_mode = #tpu.pipeline_mode<synchronous>, transform_indices = @transform_16, window_bounds = array<i64: 256, 256>}, {pipeline_mode = #tpu.pipeline_mode<synchronous>, transform_indices = @transform_17, window_bounds = array<i64: 1, 256>}, {pipeline_mode = #tpu.pipeline_mode<synchronous>, transform_indices = @transform_18, window_bounds = array<i64: 256, 128>}, {pipeline_mode = #tpu.pipeline_mode<synchronous>, transform_indices = @transform_19, window_bounds = array<i64: 1, 128>}, {transform_indices = @transform_20, window_bounds = array<i64: 512, 128>}]} {
    %c0 = arith.constant 0 : index
    %c0_0 = arith.constant 0 : index
    %0 = vector.load %arg1[%c0, %c0_0] : memref<512x64xf32, #tpu.memory_space<vmem>>, vector<512x64xf32>
    %1 = arith.truncf %0 : vector<512x64xf32> to vector<512x64xbf16>
    %c0_1 = arith.constant 0 : index
    %c0_2 = arith.constant 0 : index
    %2 = vector.load %arg2[%c0_1, %c0_2] : memref<64x256xbf16, #tpu.memory_space<vmem>>, vector<64x256xbf16>
    %c0_3 = arith.constant 0 : index
    %c0_4 = arith.constant 0 : index
    %3 = vector.load %arg3[%c0_3, %c0_4] : memref<1x256xf32, #tpu.memory_space<vmem>>, vector<1x256xf32>
    %cst = arith.constant dense<0.000000e+00> : vector<512x256xf32>
    %4 = tpu.matmul %1, %2, %cst {dimension_numbers = #tpu.dot_dimension_numbers<[1], [0], [0], [1], [0, 0, 1, 1], [], []>} : vector<512x64xbf16>, vector<64x256xbf16>, vector<512x256xf32> -> vector<512x256xf32>
    %5 = vector.broadcast %3 : vector<1x256xf32> to vector<512x256xf32>
    %6 = arith.addf %4, %5 : vector<512x256xf32>
    %cst_5 = arith.constant 0.000000e+00 : f32
    %7 = vector.broadcast %cst_5 : f32 to vector<512x256xf32>
    %8 = arith.maximumf %6, %7 : vector<512x256xf32>
    %c0_6 = arith.constant 0 : index
    %c0_7 = arith.constant 0 : index
    %9 = vector.load %arg4[%c0_6, %c0_7] : memref<256x256xbf16, #tpu.memory_space<vmem>>, vector<256x256xbf16>
    %c0_8 = arith.constant 0 : index
    %c0_9 = arith.constant 0 : index
    %10 = vector.load %arg5[%c0_8, %c0_9] : memref<1x256xf32, #tpu.memory_space<vmem>>, vector<1x256xf32>
    %11 = arith.truncf %8 : vector<512x256xf32> to vector<512x256xbf16>
    %cst_10 = arith.constant dense<0.000000e+00> : vector<512x256xf32>
    %12 = tpu.matmul %11, %9, %cst_10 {dimension_numbers = #tpu.dot_dimension_numbers<[1], [0], [0], [1], [0, 0, 1, 1], [], []>} : vector<512x256xbf16>, vector<256x256xbf16>, vector<512x256xf32> -> vector<512x256xf32>
    %13 = vector.broadcast %10 : vector<1x256xf32> to vector<512x256xf32>
    %14 = arith.addf %12, %13 : vector<512x256xf32>
    %cst_11 = arith.constant 0.000000e+00 : f32
    %15 = vector.broadcast %cst_11 : f32 to vector<512x256xf32>
    %16 = arith.maximumf %14, %15 : vector<512x256xf32>
    %c0_12 = arith.constant 0 : index
    %c0_13 = arith.constant 0 : index
    %17 = vector.load %arg6[%c0_12, %c0_13] : memref<256x256xbf16, #tpu.memory_space<vmem>>, vector<256x256xbf16>
    %c0_14 = arith.constant 0 : index
    %c0_15 = arith.constant 0 : index
    %18 = vector.load %arg7[%c0_14, %c0_15] : memref<1x256xf32, #tpu.memory_space<vmem>>, vector<1x256xf32>
    %19 = arith.truncf %16 : vector<512x256xf32> to vector<512x256xbf16>
    %cst_16 = arith.constant dense<0.000000e+00> : vector<512x256xf32>
    %20 = tpu.matmul %19, %17, %cst_16 {dimension_numbers = #tpu.dot_dimension_numbers<[1], [0], [0], [1], [0, 0, 1, 1], [], []>} : vector<512x256xbf16>, vector<256x256xbf16>, vector<512x256xf32> -> vector<512x256xf32>
    %21 = vector.broadcast %18 : vector<1x256xf32> to vector<512x256xf32>
    %22 = arith.addf %20, %21 : vector<512x256xf32>
    %cst_17 = arith.constant 0.000000e+00 : f32
    %23 = vector.broadcast %cst_17 : f32 to vector<512x256xf32>
    %24 = arith.maximumf %22, %23 : vector<512x256xf32>
    %c0_18 = arith.constant 0 : index
    %c0_19 = arith.constant 0 : index
    %25 = vector.load %arg8[%c0_18, %c0_19] : memref<256x256xbf16, #tpu.memory_space<vmem>>, vector<256x256xbf16>
    %c0_20 = arith.constant 0 : index
    %c0_21 = arith.constant 0 : index
    %26 = vector.load %arg9[%c0_20, %c0_21] : memref<1x256xf32, #tpu.memory_space<vmem>>, vector<1x256xf32>
    %27 = arith.truncf %24 : vector<512x256xf32> to vector<512x256xbf16>
    %cst_22 = arith.constant dense<0.000000e+00> : vector<512x256xf32>
    %28 = tpu.matmul %27, %25, %cst_22 {dimension_numbers = #tpu.dot_dimension_numbers<[1], [0], [0], [1], [0, 0, 1, 1], [], []>} : vector<512x256xbf16>, vector<256x256xbf16>, vector<512x256xf32> -> vector<512x256xf32>
    %29 = vector.broadcast %26 : vector<1x256xf32> to vector<512x256xf32>
    %30 = arith.addf %28, %29 : vector<512x256xf32>
    %cst_23 = arith.constant 0.000000e+00 : f32
    %31 = vector.broadcast %cst_23 : f32 to vector<512x256xf32>
    %32 = arith.maximumf %30, %31 : vector<512x256xf32>
    %c0_24 = arith.constant 0 : index
    %c0_25 = arith.constant 0 : index
    %33 = vector.load %arg10[%c0_24, %c0_25] : memref<64x256xbf16, #tpu.memory_space<vmem>>, vector<64x256xbf16>
    %c0_26 = arith.constant 0 : index
    %c0_27 = arith.constant 0 : index
    %34 = vector.load %arg11[%c0_26, %c0_27] : memref<256x256xbf16, #tpu.memory_space<vmem>>, vector<256x256xbf16>
    %c0_28 = arith.constant 0 : index
    %c0_29 = arith.constant 0 : index
    %35 = vector.load %arg12[%c0_28, %c0_29] : memref<1x256xf32, #tpu.memory_space<vmem>>, vector<1x256xf32>
    %cst_30 = arith.constant dense<0.000000e+00> : vector<512x256xf32>
    %36 = tpu.matmul %1, %33, %cst_30 {dimension_numbers = #tpu.dot_dimension_numbers<[1], [0], [0], [1], [0, 0, 1, 1], [], []>} : vector<512x64xbf16>, vector<64x256xbf16>, vector<512x256xf32> -> vector<512x256xf32>
    %37 = arith.truncf %32 : vector<512x256xf32> to vector<512x256xbf16>
    %cst_31 = arith.constant dense<0.000000e+00> : vector<512x256xf32>
    %38 = tpu.matmul %37, %34, %cst_31 {dimension_numbers = #tpu.dot_dimension_numbers<[1], [0], [0], [1], [0, 0, 1, 1], [], []>} : vector<512x256xbf16>, vector<256x256xbf16>, vector<512x256xf32> -> vector<512x256xf32>
    %39 = arith.addf %36, %38 : vector<512x256xf32>
    %40 = vector.broadcast %35 : vector<1x256xf32> to vector<512x256xf32>
    %41 = arith.addf %39, %40 : vector<512x256xf32>
    %cst_32 = arith.constant 0.000000e+00 : f32
    %42 = vector.broadcast %cst_32 : f32 to vector<512x256xf32>
    %43 = arith.maximumf %41, %42 : vector<512x256xf32>
    %c0_33 = arith.constant 0 : index
    %c0_34 = arith.constant 0 : index
    %44 = vector.load %arg13[%c0_33, %c0_34] : memref<256x256xbf16, #tpu.memory_space<vmem>>, vector<256x256xbf16>
    %c0_35 = arith.constant 0 : index
    %c0_36 = arith.constant 0 : index
    %45 = vector.load %arg14[%c0_35, %c0_36] : memref<1x256xf32, #tpu.memory_space<vmem>>, vector<1x256xf32>
    %46 = arith.truncf %43 : vector<512x256xf32> to vector<512x256xbf16>
    %cst_37 = arith.constant dense<0.000000e+00> : vector<512x256xf32>
    %47 = tpu.matmul %46, %44, %cst_37 {dimension_numbers = #tpu.dot_dimension_numbers<[1], [0], [0], [1], [0, 0, 1, 1], [], []>} : vector<512x256xbf16>, vector<256x256xbf16>, vector<512x256xf32> -> vector<512x256xf32>
    %48 = vector.broadcast %45 : vector<1x256xf32> to vector<512x256xf32>
    %49 = arith.addf %47, %48 : vector<512x256xf32>
    %cst_38 = arith.constant 0.000000e+00 : f32
    %50 = vector.broadcast %cst_38 : f32 to vector<512x256xf32>
    %51 = arith.maximumf %49, %50 : vector<512x256xf32>
    %c0_39 = arith.constant 0 : index
    %c0_40 = arith.constant 0 : index
    %52 = vector.load %arg15[%c0_39, %c0_40] : memref<256x256xbf16, #tpu.memory_space<vmem>>, vector<256x256xbf16>
    %c0_41 = arith.constant 0 : index
    %c0_42 = arith.constant 0 : index
    %53 = vector.load %arg16[%c0_41, %c0_42] : memref<1x256xf32, #tpu.memory_space<vmem>>, vector<1x256xf32>
    %54 = arith.truncf %51 : vector<512x256xf32> to vector<512x256xbf16>
    %cst_43 = arith.constant dense<0.000000e+00> : vector<512x256xf32>
    %55 = tpu.matmul %54, %52, %cst_43 {dimension_numbers = #tpu.dot_dimension_numbers<[1], [0], [0], [1], [0, 0, 1, 1], [], []>} : vector<512x256xbf16>, vector<256x256xbf16>, vector<512x256xf32> -> vector<512x256xf32>
    %56 = vector.broadcast %53 : vector<1x256xf32> to vector<512x256xf32>
    %57 = arith.addf %55, %56 : vector<512x256xf32>
    %cst_44 = arith.constant 0.000000e+00 : f32
    %58 = vector.broadcast %cst_44 : f32 to vector<512x256xf32>
    %59 = arith.maximumf %57, %58 : vector<512x256xf32>
    %c0_45 = arith.constant 0 : index
    %c0_46 = arith.constant 0 : index
    %60 = vector.load %arg17[%c0_45, %c0_46] : memref<256x256xbf16, #tpu.memory_space<vmem>>, vector<256x256xbf16>
    %c0_47 = arith.constant 0 : index
    %c0_48 = arith.constant 0 : index
    %61 = vector.load %arg18[%c0_47, %c0_48] : memref<1x256xf32, #tpu.memory_space<vmem>>, vector<1x256xf32>
    %62 = arith.truncf %59 : vector<512x256xf32> to vector<512x256xbf16>
    %cst_49 = arith.constant dense<0.000000e+00> : vector<512x256xf32>
    %63 = tpu.matmul %62, %60, %cst_49 {dimension_numbers = #tpu.dot_dimension_numbers<[1], [0], [0], [1], [0, 0, 1, 1], [], []>} : vector<512x256xbf16>, vector<256x256xbf16>, vector<512x256xf32> -> vector<512x256xf32>
    %64 = vector.broadcast %61 : vector<1x256xf32> to vector<512x256xf32>
    %65 = arith.addf %63, %64 : vector<512x256xf32>
    %cst_50 = arith.constant 0.000000e+00 : f32
    %66 = vector.broadcast %cst_50 : f32 to vector<512x256xf32>
    %67 = arith.maximumf %65, %66 : vector<512x256xf32>
    %c0_51 = arith.constant 0 : index
    %c0_52 = arith.constant 0 : index
    %68 = vector.load %arg19[%c0_51, %c0_52] : memref<256x128xbf16, #tpu.memory_space<vmem>>, vector<256x128xbf16>
    %c0_53 = arith.constant 0 : index
    %c0_54 = arith.constant 0 : index
    %69 = vector.load %arg20[%c0_53, %c0_54] : memref<1x128xf32, #tpu.memory_space<vmem>>, vector<1x128xf32>
    %70 = arith.truncf %67 : vector<512x256xf32> to vector<512x256xbf16>
    %cst_55 = arith.constant dense<0.000000e+00> : vector<512x128xf32>
    %71 = tpu.matmul %70, %68, %cst_55 {dimension_numbers = #tpu.dot_dimension_numbers<[1], [0], [0], [1], [0, 0, 1, 1], [], []>} : vector<512x256xbf16>, vector<256x128xbf16>, vector<512x128xf32> -> vector<512x128xf32>
    %72 = vector.broadcast %69 : vector<1x128xf32> to vector<512x128xf32>
    %73 = arith.addf %71, %72 : vector<512x128xf32>
    %c0_56 = arith.constant 0 : index
    %c0_57 = arith.constant 0 : index
    %74 = vector.load %arg21[%c0_56, %c0_57] : memref<512x128xf32, #tpu.memory_space<vmem>>, vector<512x128xf32>
    tpu.vector_store %arg21[%c0_56, %c0_57], %73 {strides = array<i32>} : memref<512x128xf32, #tpu.memory_space<vmem>>, vector<512x128xf32>,
    return
  }
  func.func @transform_0(%arg0: i32) -> (i32, i32) {
    %c0_i32 = arith.constant 0 : i32
    %c0_i32_0 = arith.constant 0 : i32
    return %arg0, %c0_i32 : i32, i32
  }
  func.func @transform_1(%arg0: i32) -> (i32, i32) {
    %c0_i32 = arith.constant 0 : i32
    %c0_i32_0 = arith.constant 0 : i32
    %c0_i32_1 = arith.constant 0 : i32
    return %c0_i32, %c0_i32_0 : i32, i32
  }
  func.func @transform_2(%arg0: i32) -> (i32, i32) {
    %c0_i32 = arith.constant 0 : i32
    %c0_i32_0 = arith.constant 0 : i32
    %c0_i32_1 = arith.constant 0 : i32
    return %c0_i32, %c0_i32_0 : i32, i32
  }
  func.func @transform_3(%arg0: i32) -> (i32, i32) {
    %c0_i32 = arith.constant 0 : i32
    %c0_i32_0 = arith.constant 0 : i32
    %c0_i32_1 = arith.constant 0 : i32
    return %c0_i32, %c0_i32_0 : i32, i32
  }
  func.func @transform_4(%arg0: i32) -> (i32, i32) {
    %c0_i32 = arith.constant 0 : i32
    %c0_i32_0 = arith.constant 0 : i32
    %c0_i32_1 = arith.constant 0 : i32
    return %c0_i32, %c0_i32_0 : i32, i32
  }
  func.func @transform_5(%arg0: i32) -> (i32, i32) {
    %c0_i32 = arith.constant 0 : i32
    %c0_i32_0 = arith.constant 0 : i32
    %c0_i32_1 = arith.constant 0 : i32
    return %c0_i32, %c0_i32_0 : i32, i32
  }
  func.func @transform_6(%arg0: i32) -> (i32, i32) {
    %c0_i32 = arith.constant 0 : i32
    %c0_i32_0 = arith.constant 0 : i32
    %c0_i32_1 = arith.constant 0 : i32
    return %c0_i32, %c0_i32_0 : i32, i32
  }
  func.func @transform_7(%arg0: i32) -> (i32, i32) {
    %c0_i32 = arith.constant 0 : i32
    %c0_i32_0 = arith.constant 0 : i32
    %c0_i32_1 = arith.constant 0 : i32
    return %c0_i32, %c0_i32_0 : i32, i32
  }
  func.func @transform_8(%arg0: i32) -> (i32, i32) {
    %c0_i32 = arith.constant 0 : i32
    %c0_i32_0 = arith.constant 0 : i32
    %c0_i32_1 = arith.constant 0 : i32
    return %c0_i32, %c0_i32_0 : i32, i32
  }
  func.func @transform_9(%arg0: i32) -> (i32, i32) {
    %c0_i32 = arith.constant 0 : i32
    %c0_i32_0 = arith.constant 0 : i32
    %c0_i32_1 = arith.constant 0 : i32
    return %c0_i32, %c0_i32_0 : i32, i32
  }
  func.func @transform_10(%arg0: i32) -> (i32, i32) {
    %c0_i32 = arith.constant 0 : i32
    %c0_i32_0 = arith.constant 0 : i32
    %c0_i32_1 = arith.constant 0 : i32
    return %c0_i32, %c0_i32_0 : i32, i32
  }
  func.func @transform_11(%arg0: i32) -> (i32, i32) {
    %c0_i32 = arith.constant 0 : i32
    %c0_i32_0 = arith.constant 0 : i32
    %c0_i32_1 = arith.constant 0 : i32
    return %c0_i32, %c0_i32_0 : i32, i32
  }
  func.func @transform_12(%arg0: i32) -> (i32, i32) {
    %c0_i32 = arith.constant 0 : i32
    %c0_i32_0 = arith.constant 0 : i32
    %c0_i32_1 = arith.constant 0 : i32
    return %c0_i32, %c0_i32_0 : i32, i32
  }
  func.func @transform_13(%arg0: i32) -> (i32, i32) {
    %c0_i32 = arith.constant 0 : i32
    %c0_i32_0 = arith.constant 0 : i32
    %c0_i32_1 = arith.constant 0 : i32
    return %c0_i32, %c0_i32_0 : i32, i32
  }
  func.func @transform_14(%arg0: i32) -> (i32, i32) {
    %c0_i32 = arith.constant 0 : i32
    %c0_i32_0 = arith.constant 0 : i32
    %c0_i32_1 = arith.constant 0 : i32
    return %c0_i32, %c0_i32_0 : i32, i32
  }
  func.func @transform_15(%arg0: i32) -> (i32, i32) {
    %c0_i32 = arith.constant 0 : i32
    %c0_i32_0 = arith.constant 0 : i32
    %c0_i32_1 = arith.constant 0 : i32
    return %c0_i32, %c0_i32_0 : i32, i32
  }
  func.func @transform_16(%arg0: i32) -> (i32, i32) {
    %c0_i32 = arith.constant 0 : i32
    %c0_i32_0 = arith.constant 0 : i32
    %c0_i32_1 = arith.constant 0 : i32
    return %c0_i32, %c0_i32_0 : i32, i32
  }
  func.func @transform_17(%arg0: i32) -> (i32, i32) {
    %c0_i32 = arith.constant 0 : i32
    %c0_i32_0 = arith.constant 0 : i32
    %c0_i32_1 = arith.constant 0 : i32
    return %c0_i32, %c0_i32_0 : i32, i32
  }
  func.func @transform_18(%arg0: i32) -> (i32, i32) {
    %c0_i32 = arith.constant 0 : i32
    %c0_i32_0 = arith.constant 0 : i32
    %c0_i32_1 = arith.constant 0 : i32
    return %c0_i32, %c0_i32_0 : i32, i32
  }
  func.func @transform_19(%arg0: i32) -> (i32, i32) {
    %c0_i32 = arith.constant 0 : i32
    %c0_i32_0 = arith.constant 0 : i32
    %c0_i32_1 = arith.constant 0 : i32
    return %c0_i32, %c0_i32_0 : i32, i32
  }
  func.func @transform_20(%arg0: i32) -> (i32, i32) {
    %c0_i32 = arith.constant 0 : i32
    %c0_i32_0 = arith.constant 0 : i32
    return %arg0, %c0_i32 : i32, i32
  }
}

</mosaic_0001>

<llo_original>
// kernel: tpu_custom_call.1
$region0: #{tpu_custom_call.1}
  #allocation0 [shape = 'u32[]', space=smem, size = 0x4, offset = 0x4, fixed_abs, tag = 'smem constant byte address 0x4 - core index']
  #allocation1 [shape = 'u32[144,128]{1,0:T(1,128)}', space=vmem, size = 0x12000, scoped, tag = 'internal scratch']
  %s0 = inlined_call_operand.vmem [shape: f32[2048,64], index: 0, kind: input, shape index: {}]
  %s1 = inlined_call_operand.vmem [shape: bf16[64,256], index: 1, kind: input, shape index: {}]
  %s2 = inlined_call_operand.vmem [shape: f32[1,256], index: 2, kind: input, shape index: {}]
  %s3 = inlined_call_operand.vmem [shape: bf16[256,256], index: 3, kind: input, shape index: {}]
  %s4 = inlined_call_operand.vmem [shape: f32[1,256], index: 4, kind: input, shape index: {}]
  %s5 = inlined_call_operand.vmem [shape: bf16[256,256], index: 5, kind: input, shape index: {}]
  %s6 = inlined_call_operand.vmem [shape: f32[1,256], index: 6, kind: input, shape index: {}]
  %s7 = inlined_call_operand.vmem [shape: bf16[256,256], index: 7, kind: input, shape index: {}]
  %s8 = inlined_call_operand.vmem [shape: f32[1,256], index: 8, kind: input, shape index: {}]
  %s9 = inlined_call_operand.vmem [shape: bf16[64,256], index: 9, kind: input, shape index: {}]
  %s10 = inlined_call_operand.vmem [shape: bf16[256,256], index: 10, kind: input, shape index: {}]
  %s11 = inlined_call_operand.vmem [shape: f32[1,256], index: 11, kind: input, shape index: {}]
  %s12 = inlined_call_operand.vmem [shape: bf16[256,256], index: 12, kind: input, shape index: {}]
  %s13 = inlined_call_operand.vmem [shape: f32[1,256], index: 13, kind: input, shape index: {}]
  %s14 = inlined_call_operand.vmem [shape: bf16[256,256], index: 14, kind: input, shape index: {}]
  %s15 = inlined_call_operand.vmem [shape: f32[1,256], index: 15, kind: input, shape index: {}]
  %s16 = inlined_call_operand.vmem [shape: bf16[256,256], index: 16, kind: input, shape index: {}]
  %s17 = inlined_call_operand.vmem [shape: f32[1,256], index: 17, kind: input, shape index: {}]
  %s18 = inlined_call_operand.vmem [shape: bf16[256,128], index: 18, kind: input, shape index: {}]
  %s19 = inlined_call_operand.vmem [shape: f32[1,128], index: 19, kind: input, shape index: {}]
  %s20 = inlined_call_operand.hbm [shape: f32[2048,128], index: 20, kind: output, shape index: {}]
  %s21 = sld [smem:[#allocation0]]
  $region113: #{tpu_custom_call.1} parent=0
    _
  %s23 = ssub.s32 1, %s21
  %s24 = scalar_select 0, %s23, %s21
  $region1: #{tpu_custom_call.1} parent=0
    #allocation2 [shape = 'u8[524288]{0}', space=vmem, size = 0x80000, scoped, tag = 'output window, operand 0']
    #allocation3 [shape = 's32[2]{0}', space=sflag, size = 0x8, scoped, tag = 'scoped memory for tpu_custom_call.1']
    %25 = vsyncpa [#allocation3], 0
    %s26 = scalar_lea.sflag [#allocation3], 1
    %27 = vsyncpa %s26, 0
    loop: start=0, step=1, limit=6
    $region2: #{tpu_custom_call.1} parent=1 // loop_pre_header
      _
    $region3: #{tpu_custom_call.1} parent=1 // loop_header
      %s29 = sphi 0, %s33
      %p30 = scmp.ge.s32.totalorder %s29, 6
      %s39 = sphi 0, %s41
      %s42 = sphi 0, %s39
      %s43 = sphi 0, %s42
      %s59 = sphi 0, %s43
      %s63 = sphi 0, %s63
      %s65 = sphi 0, %s63
      %s66 = sphi 0, %s65
      %s80 = sphi 0, %s66
      %s84 = sphi 0, %s84
      %s86 = sphi 0, %s84
      %s87 = sphi 0, %s86
      %s101 = sphi 0, %s87
      %s105 = sphi 0, %s105
      %s107 = sphi 0, %s105
      %s108 = sphi 0, %s107
      %s122 = sphi 0, %s108
      %s126 = sphi 0, %s126
      %s128 = sphi 0, %s126
      %s129 = sphi 0, %s128
      %s143 = sphi 0, %s129
      %s147 = sphi 0, %s147
      %s149 = sphi 0, %s147
      %s150 = sphi 0, %s149
      %s164 = sphi 0, %s150
      %s168 = sphi 0, %s168
      %s170 = sphi 0, %s168
      %s171 = sphi 0, %s170
      %s185 = sphi 0, %s171
      %s189 = sphi 0, %s189
      %s191 = sphi 0, %s189
      %s192 = sphi 0, %s191
      %s206 = sphi 0, %s192
      %s210 = sphi 0, %s210
      %s212 = sphi 0, %s210
      %s213 = sphi 0, %s212
      %s227 = sphi 0, %s213
      %s231 = sphi 0, %s231
      %s233 = sphi 0, %s231
      %s234 = sphi 0, %s233
      %s248 = sphi 0, %s234
      %s252 = sphi 0, %s252
      %s254 = sphi 0, %s252
      %s255 = sphi 0, %s254
      %s269 = sphi 0, %s255
      %s273 = sphi 0, %s273
      %s275 = sphi 0, %s273
      %s276 = sphi 0, %s275
      %s290 = sphi 0, %s276
      %s294 = sphi 0, %s294
      %s296 = sphi 0, %s294
      %s297 = sphi 0, %s296
      %s311 = sphi 0, %s297
      %s315 = sphi 0, %s315
      %s317 = sphi 0, %s315
      %s318 = sphi 0, %s317
      %s332 = sphi 0, %s318
      %s336 = sphi 0, %s336
      %s338 = sphi 0, %s336
      %s339 = sphi 0, %s338
      %s353 = sphi 0, %s339
      %s357 = sphi 0, %s357
      %s359 = sphi 0, %s357
      %s360 = sphi 0, %s359
      %s374 = sphi 0, %s360
      %s378 = sphi 0, %s378
      %s380 = sphi 0, %s378
      %s381 = sphi 0, %s380
      %s395 = sphi 0, %s381
      %s399 = sphi 0, %s399
      %s401 = sphi 0, %s399
      %s402 = sphi 0, %s401
      %s416 = sphi 0, %s402
      %s420 = sphi 0, %s420
      %s422 = sphi 0, %s420
      %s423 = sphi 0, %s422
      %s437 = sphi 0, %s423
      %s441 = sphi 0, %s441
      %s443 = sphi 0, %s441
      %s444 = sphi 0, %s443
      %s458 = sphi 0, %s444
      %s464 = sphi 0, %s466
      %s467 = sphi 0, %s464
      %s468 = sphi 0, %s467
      %s484 = sphi 0, %s468
    $region4: #{tpu_custom_call.1} parent=1 // loop_header_branch
      %32 = sbr.rel (%p30) target = $region8
    $region5: #{tpu_custom_call.1} parent=1 // loop_body
      %s34 = ssub.s32 %s29, 1
      %s35 = ssub.s32 %s29, 2
      %s36 = sadd.s32 %s29, 1
      %s37 = ssub.s32 %s29, %s36
      %p38 = scmp.eq.s32.totalorder %s37, 0
      %s40 = sadd.s32 %s39, 1
      %s41 = scalar_select %p38, %s39, %s40
      %p44 = pneg %p38
      %p45 = scmp.eq.s32.totalorder %s29, 3
      %p46 = por %p44, %p45
      %p47 = scmp.ne.s32.totalorder %s39, %s42
      %p48 = scmp.eq.s32.totalorder %s29, 0
      %p49 = por %p47, %p48
      %p50 = scmp.ne.s32.totalorder %s39, %s42
      %p51 = scmp.eq.s32.totalorder %s34, 3
      %p52 = por %p50, %p51
      %p53 = scmp.ne.s32.totalorder %s42, %s43
      %p54 = scmp.eq.s32.totalorder %s34, 0
      %p55 = por %p53, %p54
      %p56 = scmp.ne.s32.totalorder %s42, %s43
      %p57 = scmp.eq.s32.totalorder %s35, 3
      %p58 = por %p56, %p57
      %p60 = scmp.ne.s32.totalorder %s43, %s59
      %p61 = scmp.eq.s32.totalorder %s35, 0
      %p62 = por %p60, %p61
      %s64 = sadd.s32 %s63, 1
      %p67 = scmp.eq.s32.totalorder %s29, 3
      %p68 = scmp.ne.s32.totalorder %s63, %s65
      %p69 = scmp.eq.s32.totalorder %s29, 0
      %p70 = por %p68, %p69
      %p71 = scmp.ne.s32.totalorder %s63, %s65
      %p72 = scmp.eq.s32.totalorder %s34, 3
      %p73 = por %p71, %p72
      %p74 = scmp.ne.s32.totalorder %s65, %s66
      %p75 = scmp.eq.s32.totalorder %s34, 0
      %p76 = por %p74, %p75
      %p77 = scmp.ne.s32.totalorder %s65, %s66
      %p78 = scmp.eq.s32.totalorder %s35, 3
      %p79 = por %p77, %p78
      %p81 = scmp.ne.s32.totalorder %s66, %s80
      %p82 = scmp.eq.s32.totalorder %s35, 0
      %p83 = por %p81, %p82
      %s85 = sadd.s32 %s84, 1
      %p88 = scmp.eq.s32.totalorder %s29, 3
      %p89 = scmp.ne.s32.totalorder %s84, %s86
      %p90 = scmp.eq.s32.totalorder %s29, 0
      %p91 = por %p89, %p90
      %p92 = scmp.ne.s32.totalorder %s84, %s86
      %p93 = scmp.eq.s32.totalorder %s34, 3
      %p94 = por %p92, %p93
      %p95 = scmp.ne.s32.totalorder %s86, %s87
      %p96 = scmp.eq.s32.totalorder %s34, 0
      %p97 = por %p95, %p96
      %p98 = scmp.ne.s32.totalorder %s86, %s87
      %p99 = scmp.eq.s32.totalorder %s35, 3
      %p100 = por %p98, %p99
      %p102 = scmp.ne.s32.totalorder %s87, %s101
      %p103 = scmp.eq.s32.totalorder %s35, 0
      %p104 = por %p102, %p103
      %s106 = sadd.s32 %s105, 1
      %p109 = scmp.eq.s32.totalorder %s29, 3
      %p110 = scmp.ne.s32.totalorder %s105, %s107
      %p111 = scmp.eq.s32.totalorder %s29, 0
      %p112 = por %p110, %p111
      %p113 = scmp.ne.s32.totalorder %s105, %s107
      %p114 = scmp.eq.s32.totalorder %s34, 3
      %p115 = por %p113, %p114
      %p116 = scmp.ne.s32.totalorder %s107, %s108
      %p117 = scmp.eq.s32.totalorder %s34, 0
      %p118 = por %p116, %p117
      %p119 = scmp.ne.s32.totalorder %s107, %s108
      %p120 = scmp.eq.s32.totalorder %s35, 3
      %p121 = por %p119, %p120
      %p123 = scmp.ne.s32.totalorder %s108, %s122
      %p124 = scmp.eq.s32.totalorder %s35, 0
      %p125 = por %p123, %p124
      %s127 = sadd.s32 %s126, 1
      %p130 = scmp.eq.s32.totalorder %s29, 3
      %p131 = scmp.ne.s32.totalorder %s126, %s128
      %p132 = scmp.eq.s32.totalorder %s29, 0
      %p133 = por %p131, %p132
      %p134 = scmp.ne.s32.totalorder %s126, %s128
      %p135 = scmp.eq.s32.totalorder %s34, 3
      %p136 = por %p134, %p135
      %p137 = scmp.ne.s32.totalorder %s128, %s129
      %p138 = scmp.eq.s32.totalorder %s34, 0
      %p139 = por %p137, %p138
      %p140 = scmp.ne.s32.totalorder %s128, %s129
      %p141 = scmp.eq.s32.totalorder %s35, 3
      %p142 = por %p140, %p141
      %p144 = scmp.ne.s32.totalorder %s129, %s143
      %p145 = scmp.eq.s32.totalorder %s35, 0
      %p146 = por %p144, %p145
      %s148 = sadd.s32 %s147, 1
      %p151 = scmp.eq.s32.totalorder %s29, 3
      %p152 = scmp.ne.s32.totalorder %s147, %s149
      %p153 = scmp.eq.s32.totalorder %s29, 0
      %p154 = por %p152, %p153
      %p155 = scmp.ne.s32.totalorder %s147, %s149
      %p156 = scmp.eq.s32.totalorder %s34, 3
      %p157 = por %p155, %p156
      %p158 = scmp.ne.s32.totalorder %s149, %s150
      %p159 = scmp.eq.s32.totalorder %s34, 0
      %p160 = por %p158, %p159
      %p161 = scmp.ne.s32.totalorder %s149, %s150
      %p162 = scmp.eq.s32.totalorder %s35, 3
      %p163 = por %p161, %p162
      %p165 = scmp.ne.s32.totalorder %s150, %s164
      %p166 = scmp.eq.s32.totalorder %s35, 0
      %p167 = por %p165, %p166
      %s169 = sadd.s32 %s168, 1
      %p172 = scmp.eq.s32.totalorder %s29, 3
      %p173 = scmp.ne.s32.totalorder %s168, %s170
      %p174 = scmp.eq.s32.totalorder %s29, 0
      %p175 = por %p173, %p174
      %p176 = scmp.ne.s32.totalorder %s168, %s170
      %p177 = scmp.eq.s32.totalorder %s34, 3
      %p178 = por %p176, %p177
      %p179 = scmp.ne.s32.totalorder %s170, %s171
      %p180 = scmp.eq.s32.totalorder %s34, 0
      %p181 = por %p179, %p180
      %p182 = scmp.ne.s32.totalorder %s170, %s171
      %p183 = scmp.eq.s32.totalorder %s35, 3
      %p184 = por %p182, %p183
      %p186 = scmp.ne.s32.totalorder %s171, %s185
      %p187 = scmp.eq.s32.totalorder %s35, 0
      %p188 = por %p186, %p187
      %s190 = sadd.s32 %s189, 1
      %p193 = scmp.eq.s32.totalorder %s29, 3
      %p194 = scmp.ne.s32.totalorder %s189, %s191
      %p195 = scmp.eq.s32.totalorder %s29, 0
      %p196 = por %p194, %p195
      %p197 = scmp.ne.s32.totalorder %s189, %s191
      %p198 = scmp.eq.s32.totalorder %s34, 3
      %p199 = por %p197, %p198
      %p200 = scmp.ne.s32.totalorder %s191, %s192
      %p201 = scmp.eq.s32.totalorder %s34, 0
      %p202 = por %p200, %p201
      %p203 = scmp.ne.s32.totalorder %s191, %s192
      %p204 = scmp.eq.s32.totalorder %s35, 3
      %p205 = por %p203, %p204
      %p207 = scmp.ne.s32.totalorder %s192, %s206
      %p208 = scmp.eq.s32.totalorder %s35, 0
      %p209 = por %p207, %p208
      %s211 = sadd.s32 %s210, 1
      %p214 = scmp.eq.s32.totalorder %s29, 3
      %p215 = scmp.ne.s32.totalorder %s210, %s212
      %p216 = scmp.eq.s32.totalorder %s29, 0
      %p217 = por %p215, %p216
      %p218 = scmp.ne.s32.totalorder %s210, %s212
      %p219 = scmp.eq.s32.totalorder %s34, 3
      %p220 = por %p218, %p219
      %p221 = scmp.ne.s32.totalorder %s212, %s213
      %p222 = scmp.eq.s32.totalorder %s34, 0
      %p223 = por %p221, %p222
      %p224 = scmp.ne.s32.totalorder %s212, %s213
      %p225 = scmp.eq.s32.totalorder %s35, 3
      %p226 = por %p224, %p225
      %p228 = scmp.ne.s32.totalorder %s213, %s227
      %p229 = scmp.eq.s32.totalorder %s35, 0
      %p230 = por %p228, %p229
      %s232 = sadd.s32 %s231, 1
      %p235 = scmp.eq.s32.totalorder %s29, 3
      %p236 = scmp.ne.s32.totalorder %s231, %s233
      %p237 = scmp.eq.s32.totalorder %s29, 0
      %p238 = por %p236, %p237
      %p239 = scmp.ne.s32.totalorder %s231, %s233
      %p240 = scmp.eq.s32.totalorder %s34, 3
      %p241 = por %p239, %p240
      %p242 = scmp.ne.s32.totalorder %s233, %s234
      %p243 = scmp.eq.s32.totalorder %s34, 0
      %p244 = por %p242, %p243
      %p245 = scmp.ne.s32.totalorder %s233, %s234
      %p246 = scmp.eq.s32.totalorder %s35, 3
      %p247 = por %p245, %p246
      %p249 = scmp.ne.s32.totalorder %s234, %s248
      %p250 = scmp.eq.s32.totalorder %s35, 0
      %p251 = por %p249, %p250
      %s253 = sadd.s32 %s252, 1
      %p256 = scmp.eq.s32.totalorder %s29, 3
      %p257 = scmp.ne.s32.totalorder %s252, %s254
      %p258 = scmp.eq.s32.totalorder %s29, 0
      %p259 = por %p257, %p258
      %p260 = scmp.ne.s32.totalorder %s252, %s254
      %p261 = scmp.eq.s32.totalorder %s34, 3
      %p262 = por %p260, %p261
      %p263 = scmp.ne.s32.totalorder %s254, %s255
      %p264 = scmp.eq.s32.totalorder %s34, 0
      %p265 = por %p263, %p264
      %p266 = scmp.ne.s32.totalorder %s254, %s255
      %p267 = scmp.eq.s32.totalorder %s35, 3
      %p268 = por %p266, %p267
      %p270 = scmp.ne.s32.totalorder %s255, %s269
      %p271 = scmp.eq.s32.totalorder %s35, 0
      %p272 = por %p270, %p271
      %s274 = sadd.s32 %s273, 1
      %p277 = scmp.eq.s32.totalorder %s29, 3
      %p278 = scmp.ne.s32.totalorder %s273, %s275
      %p279 = scmp.eq.s32.totalorder %s29, 0
      %p280 = por %p278, %p279
      %p281 = scmp.ne.s32.totalorder %s273, %s275
      %p282 = scmp.eq.s32.totalorder %s34, 3
      %p283 = por %p281, %p282
      %p284 = scmp.ne.s32.totalorder %s275, %s276
      %p285 = scmp.eq.s32.totalorder %s34, 0
      %p286 = por %p284, %p285
      %p287 = scmp.ne.s32.totalorder %s275, %s276
      %p288 = scmp.eq.s32.totalorder %s35, 3
      %p289 = por %p287, %p288
      %p291 = scmp.ne.s32.totalorder %s276, %s290
      %p292 = scmp.eq.s32.totalorder %s35, 0
      %p293 = por %p291, %p292
      %s295 = sadd.s32 %s294, 1
      %p298 = scmp.eq.s32.totalorder %s29, 3
      %p299 = scmp.ne.s32.totalorder %s294, %s296
      %p300 = scmp.eq.s32.totalorder %s29, 0
      %p301 = por %p299, %p300
      %p302 = scmp.ne.s32.totalorder %s294, %s296
      %p303 = scmp.eq.s32.totalorder %s34, 3
      %p304 = por %p302, %p303
      %p305 = scmp.ne.s32.totalorder %s296, %s297
      %p306 = scmp.eq.s32.totalorder %s34, 0
      %p307 = por %p305, %p306
      %p308 = scmp.ne.s32.totalorder %s296, %s297
      %p309 = scmp.eq.s32.totalorder %s35, 3
      %p310 = por %p308, %p309
      %p312 = scmp.ne.s32.totalorder %s297, %s311
      %p313 = scmp.eq.s32.totalorder %s35, 0
      %p314 = por %p312, %p313
      %s316 = sadd.s32 %s315, 1
      %p319 = scmp.eq.s32.totalorder %s29, 3
      %p320 = scmp.ne.s32.totalorder %s315, %s317
      %p321 = scmp.eq.s32.totalorder %s29, 0
      %p322 = por %p320, %p321
      %p323 = scmp.ne.s32.totalorder %s315, %s317
      %p324 = scmp.eq.s32.totalorder %s34, 3
      %p325 = por %p323, %p324
      %p326 = scmp.ne.s32.totalorder %s317, %s318
      %p327 = scmp.eq.s32.totalorder %s34, 0
      %p328 = por %p326, %p327
      %p329 = scmp.ne.s32.totalorder %s317, %s318
      %p330 = scmp.eq.s32.totalorder %s35, 3
      %p331 = por %p329, %p330
      %p333 = scmp.ne.s32.totalorder %s318, %s332
      %p334 = scmp.eq.s32.totalorder %s35, 0
      %p335 = por %p333, %p334
      %s337 = sadd.s32 %s336, 1
      %p340 = scmp.eq.s32.totalorder %s29, 3
      %p341 = scmp.ne.s32.totalorder %s336, %s338
      %p342 = scmp.eq.s32.totalorder %s29, 0
      %p343 = por %p341, %p342
      %p344 = scmp.ne.s32.totalorder %s336, %s338
      %p345 = scmp.eq.s32.totalorder %s34, 3
      %p346 = por %p344, %p345
      %p347 = scmp.ne.s32.totalorder %s338, %s339
      %p348 = scmp.eq.s32.totalorder %s34, 0
      %p349 = por %p347, %p348
      %p350 = scmp.ne.s32.totalorder %s338, %s339
      %p351 = scmp.eq.s32.totalorder %s35, 3
      %p352 = por %p350, %p351
      %p354 = scmp.ne.s32.totalorder %s339, %s353
      %p355 = scmp.eq.s32.totalorder %s35, 0
      %p356 = por %p354, %p355
      %s358 = sadd.s32 %s357, 1
      %p361 = scmp.eq.s32.totalorder %s29, 3
      %p362 = scmp.ne.s32.totalorder %s357, %s359
      %p363 = scmp.eq.s32.totalorder %s29, 0
      %p364 = por %p362, %p363
      %p365 = scmp.ne.s32.totalorder %s357, %s359
      %p366 = scmp.eq.s32.totalorder %s34, 3
      %p367 = por %p365, %p366
      %p368 = scmp.ne.s32.totalorder %s359, %s360
      %p369 = scmp.eq.s32.totalorder %s34, 0
      %p370 = por %p368, %p369
      %p371 = scmp.ne.s32.totalorder %s359, %s360
      %p372 = scmp.eq.s32.totalorder %s35, 3
      %p373 = por %p371, %p372
      %p375 = scmp.ne.s32.totalorder %s360, %s374
      %p376 = scmp.eq.s32.totalorder %s35, 0
      %p377 = por %p375, %p376
      %s379 = sadd.s32 %s378, 1
      %p382 = scmp.eq.s32.totalorder %s29, 3
      %p383 = scmp.ne.s32.totalorder %s378, %s380
      %p384 = scmp.eq.s32.totalorder %s29, 0
      %p385 = por %p383, %p384
      %p386 = scmp.ne.s32.totalorder %s378, %s380
      %p387 = scmp.eq.s32.totalorder %s34, 3
      %p388 = por %p386, %p387
      %p389 = scmp.ne.s32.totalorder %s380, %s381
      %p390 = scmp.eq.s32.totalorder %s34, 0
      %p391 = por %p389, %p390
      %p392 = scmp.ne.s32.totalorder %s380, %s381
      %p393 = scmp.eq.s32.totalorder %s35, 3
      %p394 = por %p392, %p393
      %p396 = scmp.ne.s32.totalorder %s381, %s395
      %p397 = scmp.eq.s32.totalorder %s35, 0
      %p398 = por %p396, %p397
      %s400 = sadd.s32 %s399, 1
      %p403 = scmp.eq.s32.totalorder %s29, 3
      %p404 = scmp.ne.s32.totalorder %s399, %s401
      %p405 = scmp.eq.s32.totalorder %s29, 0
      %p406 = por %p404, %p405
      %p407 = scmp.ne.s32.totalorder %s399, %s401
      %p408 = scmp.eq.s32.totalorder %s34, 3
      %p409 = por %p407, %p408
      %p410 = scmp.ne.s32.totalorder %s401, %s402
      %p411 = scmp.eq.s32.totalorder %s34, 0
      %p412 = por %p410, %p411
      %p413 = scmp.ne.s32.totalorder %s401, %s402
      %p414 = scmp.eq.s32.totalorder %s35, 3
      %p415 = por %p413, %p414
      %p417 = scmp.ne.s32.totalorder %s402, %s416
      %p418 = scmp.eq.s32.totalorder %s35, 0
      %p419 = por %p417, %p418
      %s421 = sadd.s32 %s420, 1
      %p424 = scmp.eq.s32.totalorder %s29, 3
      %p425 = scmp.ne.s32.totalorder %s420, %s422
      %p426 = scmp.eq.s32.totalorder %s29, 0
      %p427 = por %p425, %p426
      %p428 = scmp.ne.s32.totalorder %s420, %s422
      %p429 = scmp.eq.s32.totalorder %s34, 3
      %p430 = por %p428, %p429
      %p431 = scmp.ne.s32.totalorder %s422, %s423
      %p432 = scmp.eq.s32.totalorder %s34, 0
      %p433 = por %p431, %p432
      %p434 = scmp.ne.s32.totalorder %s422, %s423
      %p435 = scmp.eq.s32.totalorder %s35, 3
      %p436 = por %p434, %p435
      %p438 = scmp.ne.s32.totalorder %s423, %s437
      %p439 = scmp.eq.s32.totalorder %s35, 0
      %p440 = por %p438, %p439
      %s442 = sadd.s32 %s441, 1
      %p445 = scmp.eq.s32.totalorder %s29, 3
      %p446 = scmp.ne.s32.totalorder %s441, %s443
      %p447 = scmp.eq.s32.totalorder %s29, 0
      %p448 = por %p446, %p447
      %p449 = scmp.ne.s32.totalorder %s441, %s443
      %p450 = scmp.eq.s32.totalorder %s34, 3
      %p451 = por %p449, %p450
      %p452 = scmp.ne.s32.totalorder %s443, %s444
      %p453 = scmp.eq.s32.totalorder %s34, 0
      %p454 = por %p452, %p453
      %p455 = scmp.ne.s32.totalorder %s443, %s444
      %p456 = scmp.eq.s32.totalorder %s35, 3
      %p457 = por %p455, %p456
      %p459 = scmp.ne.s32.totalorder %s444, %s458
      %p460 = scmp.eq.s32.totalorder %s35, 0
      %p461 = por %p459, %p460
      %s462 = ssub.s32 %s29, %s36
      %p463 = scmp.eq.s32.totalorder %s462, 0
      %s465 = sadd.s32 %s464, 1
      %s466 = scalar_select %p463, %s464, %s465
      %p469 = pneg %p463
      %p470 = scmp.eq.s32.totalorder %s29, 3
      %p471 = por %p469, %p470
      %p472 = scmp.ne.s32.totalorder %s464, %s467
      %p473 = scmp.eq.s32.totalorder %s29, 0
      %p474 = por %p472, %p473
      %p475 = scmp.ne.s32.totalorder %s464, %s467
      %p476 = scmp.eq.s32.totalorder %s34, 3
      %p477 = por %p475, %p476
      %p478 = scmp.ne.s32.totalorder %s467, %s468
      %p479 = scmp.eq.s32.totalorder %s34, 0
      %p480 = por %p478, %p479
      %p481 = scmp.ne.s32.totalorder %s467, %s468
      %p482 = scmp.eq.s32.totalorder %s35, 3
      %p483 = por %p481, %p482
      %p485 = scmp.ne.s32.totalorder %s468, %s484
      %p486 = scmp.eq.s32.totalorder %s35, 0
      %p487 = por %p485, %p486
      %p488 = scmp.le.s32.totalorder 1, %s29
      %p489 = scmp.lt.s32.totalorder %s29, 5
      %p490 = pnand %p488, %p489
      %p491 = pneg %p490
      // Predicated region
      $region9: #{tpu_custom_call.1} parent=5 // pred_check
        _
      $region10: #{tpu_custom_call.1} parent=5 // pred_check_branch
        %493 = sbr.rel (%p490) target = $region12
      $region11: #{tpu_custom_call.1} parent=5 // pred_region
        %s494 = ssub.s32 %s29, 1
        // Predicated region
        $region13: #{tpu_custom_call.1} parent=11 // pred_check
          %p495 = pneg %p76
        $region14: #{tpu_custom_call.1} parent=11 // pred_check_branch
          %497 = sbr.rel (%p495) target = $region16
        $region15: #{tpu_custom_call.1} parent=11 // pred_region
          _
        $region16: #{tpu_custom_call.1} parent=11 // pred_fallthru
          _
        // Predicated region
        $region17: #{tpu_custom_call.1} parent=11 // pred_check
          %p498 = pneg %p97
        $region18: #{tpu_custom_call.1} parent=11 // pred_check_branch
          %500 = sbr.rel (%p498) target = $region20
        $region19: #{tpu_custom_call.1} parent=11 // pred_region
          _
        $region20: #{tpu_custom_call.1} parent=11 // pred_fallthru
          _
        // Predicated region
        $region21: #{tpu_custom_call.1} parent=11 // pred_check
          %p501 = pneg %p118
        $region22: #{tpu_custom_call.1} parent=11 // pred_check_branch
          %503 = sbr.rel (%p501) target = $region24
        $region23: #{tpu_custom_call.1} parent=11 // pred_region
          _
        $region24: #{tpu_custom_call.1} parent=11 // pred_fallthru
          _
        // Predicated region
        $region25: #{tpu_custom_call.1} parent=11 // pred_check
          %p504 = pneg %p139
        $region26: #{tpu_custom_call.1} parent=11 // pred_check_branch
          %506 = sbr.rel (%p504) target = $region28
        $region27: #{tpu_custom_call.1} parent=11 // pred_region
          _
        $region28: #{tpu_custom_call.1} parent=11 // pred_fallthru
          _
        // Predicated region
        $region29: #{tpu_custom_call.1} parent=11 // pred_check
          %p507 = pneg %p160
        $region30: #{tpu_custom_call.1} parent=11 // pred_check_branch
          %509 = sbr.rel (%p507) target = $region32
        $region31: #{tpu_custom_call.1} parent=11 // pred_region
          _
        $region32: #{tpu_custom_call.1} parent=11 // pred_fallthru
          _
        // Predicated region
        $region33: #{tpu_custom_call.1} parent=11 // pred_check
          %p510 = pneg %p181
        $region34: #{tpu_custom_call.1} parent=11 // pred_check_branch
          %512 = sbr.rel (%p510) target = $region36
        $region35: #{tpu_custom_call.1} parent=11 // pred_region
          _
        $region36: #{tpu_custom_call.1} parent=11 // pred_fallthru
          _
        // Predicated region
        $region37: #{tpu_custom_call.1} parent=11 // pred_check
          %p513 = pneg %p202
        $region38: #{tpu_custom_call.1} parent=11 // pred_check_branch
          %515 = sbr.rel (%p513) target = $region40
        $region39: #{tpu_custom_call.1} parent=11 // pred_region
          _
        $region40: #{tpu_custom_call.1} parent=11 // pred_fallthru
          _
        // Predicated region
        $region41: #{tpu_custom_call.1} parent=11 // pred_check
          %p516 = pneg %p223
        $region42: #{tpu_custom_call.1} parent=11 // pred_check_branch
          %518 = sbr.rel (%p516) target = $region44
        $region43: #{tpu_custom_call.1} parent=11 // pred_region
          _
        $region44: #{tpu_custom_call.1} parent=11 // pred_fallthru
          _
        // Predicated region
        $region45: #{tpu_custom_call.1} parent=11 // pred_check
          %p519 = pneg %p244
        $region46: #{tpu_custom_call.1} parent=11 // pred_check_branch
          %521 = sbr.rel (%p519) target = $region48
        $region47: #{tpu_custom_call.1} parent=11 // pred_region
          _
        $region48: #{tpu_custom_call.1} parent=11 // pred_fallthru
          _
        // Predicated region
        $region49: #{tpu_custom_call.1} parent=11 // pred_check
          %p522 = pneg %p265
        $region50: #{tpu_custom_call.1} parent=11 // pred_check_branch
          %524 = sbr.rel (%p522) target = $region52
        $region51: #{tpu_custom_call.1} parent=11 // pred_region
          _
        $region52: #{tpu_custom_call.1} parent=11 // pred_fallthru
          _
        // Predicated region
        $region53: #{tpu_custom_call.1} parent=11 // pred_check
          %p525 = pneg %p286
        $region54: #{tpu_custom_call.1} parent=11 // pred_check_branch
          %527 = sbr.rel (%p525) target = $region56
        $region55: #{tpu_custom_call.1} parent=11 // pred_region
          _
        $region56: #{tpu_custom_call.1} parent=11 // pred_fallthru
          _
        // Predicated region
        $region57: #{tpu_custom_call.1} parent=11 // pred_check
          %p528 = pneg %p307
        $region58: #{tpu_custom_call.1} parent=11 // pred_check_branch
          %530 = sbr.rel (%p528) target = $region60
        $region59: #{tpu_custom_call.1} parent=11 // pred_region
          _
        $region60: #{tpu_custom_call.1} parent=11 // pred_fallthru
          _
        // Predicated region
        $region61: #{tpu_custom_call.1} parent=11 // pred_check
          %p531 = pneg %p328
        $region62: #{tpu_custom_call.1} parent=11 // pred_check_branch
          %533 = sbr.rel (%p531) target = $region64
        $region63: #{tpu_custom_call.1} parent=11 // pred_region
          _
        $region64: #{tpu_custom_call.1} parent=11 // pred_fallthru
          _
        // Predicated region
        $region65: #{tpu_custom_call.1} parent=11 // pred_check
          %p534 = pneg %p349
        $region66: #{tpu_custom_call.1} parent=11 // pred_check_branch
          %536 = sbr.rel (%p534) target = $region68
        $region67: #{tpu_custom_call.1} parent=11 // pred_region
          _
        $region68: #{tpu_custom_call.1} parent=11 // pred_fallthru
          _
        // Predicated region
        $region69: #{tpu_custom_call.1} parent=11 // pred_check
          %p537 = pneg %p370
        $region70: #{tpu_custom_call.1} parent=11 // pred_check_branch
          %539 = sbr.rel (%p537) target = $region72
        $region71: #{tpu_custom_call.1} parent=11 // pred_region
          _
        $region72: #{tpu_custom_call.1} parent=11 // pred_fallthru
          _
        // Predicated region
        $region73: #{tpu_custom_call.1} parent=11 // pred_check
          %p540 = pneg %p391
        $region74: #{tpu_custom_call.1} parent=11 // pred_check_branch
          %542 = sbr.rel (%p540) target = $region76
        $region75: #{tpu_custom_call.1} parent=11 // pred_region
          _
        $region76: #{tpu_custom_call.1} parent=11 // pred_fallthru
          _
        // Predicated region
        $region77: #{tpu_custom_call.1} parent=11 // pred_check
          %p543 = pneg %p412
        $region78: #{tpu_custom_call.1} parent=11 // pred_check_branch
          %545 = sbr.rel (%p543) target = $region80
        $region79: #{tpu_custom_call.1} parent=11 // pred_region
          _
        $region80: #{tpu_custom_call.1} parent=11 // pred_fallthru
          _
        // Predicated region
        $region81: #{tpu_custom_call.1} parent=11 // pred_check
          %p546 = pneg %p433
        $region82: #{tpu_custom_call.1} parent=11 // pred_check_branch
          %548 = sbr.rel (%p546) target = $region84
        $region83: #{tpu_custom_call.1} parent=11 // pred_region
          _
        $region84: #{tpu_custom_call.1} parent=11 // pred_fallthru
          _
        // Predicated region
        $region85: #{tpu_custom_call.1} parent=11 // pred_check
          %p549 = pneg %p454
        $region86: #{tpu_custom_call.1} parent=11 // pred_check_branch
          %551 = sbr.rel (%p549) target = $region88
        $region87: #{tpu_custom_call.1} parent=11 // pred_region
          _
        $region88: #{tpu_custom_call.1} parent=11 // pred_fallthru
          _
      $region12: #{tpu_custom_call.1} parent=5 // pred_fallthru
        _
      %p552 = scmp.lt.s32.totalorder %s29, 4
      // Predicated region
      $region89: #{tpu_custom_call.1} parent=5 // pred_check
        %p553 = pneg %p552
      $region90: #{tpu_custom_call.1} parent=5 // pred_check_branch
        %555 = sbr.rel (%p553) target = $region92
      $region91: #{tpu_custom_call.1} parent=5 // pred_region
        // Predicated region
        $region93: #{tpu_custom_call.1} parent=91 // pred_check
          %p556 = pneg %p49
        $region94: #{tpu_custom_call.1} parent=91 // pred_check_branch
          %558 = sbr.rel (%p556) target = $region96
        $region95: #{tpu_custom_call.1} parent=91 // pred_region
          %s559 = smul.u32 64, %s29
          %p560 = scmp.lt.s32.totalorder %s559, 255
          %s561 = scalar_select %p560, %s559, 255
          %s562 = smul.addr %s561, 8
          %s563 = scalar_lea.vmem %s0, %s562
          %s564 = smul.u32 64, %s29
        $region96: #{tpu_custom_call.1} parent=91 // pred_fallthru
          _
      $region92: #{tpu_custom_call.1} parent=5 // pred_fallthru
        _
      %p565 = scmp.le.s32.totalorder 1, %s29
      %p566 = scmp.lt.s32.totalorder %s29, 5
      %p567 = pnand %p565, %p566
      %p568 = pneg %p567
      // Predicated region
      $region97: #{tpu_custom_call.1} parent=5 // pred_check
        _
      $region98: #{tpu_custom_call.1} parent=5 // pred_check_branch
        %570 = sbr.rel (%p567) target = $region100
      $region99: #{tpu_custom_call.1} parent=5 // pred_region
        %s571 = ssub.s32 %s29, 1
        %s572 = smul.u32 64, %s34
        %p573 = scmp.lt.s32.totalorder %s572, 255
        %s574 = scalar_select %p573, %s572, 255
        %s575 = smul.addr %s574, 8
        %s576 = scalar_lea.vmem %s0, %s575
        %p577 = pneg %p55
        %p578 = pneg %p52
        %p579 = pneg %p76
        %p580 = pneg %p73
        %p581 = pneg %p97
        %p582 = pneg %p94
        %p583 = pneg %p118
        %p584 = pneg %p115
        %p585 = pneg %p139
        %p586 = pneg %p136
        %p587 = pneg %p160
        %p588 = pneg %p157
        %p589 = pneg %p181
        %p590 = pneg %p178
        %p591 = pneg %p202
        %p592 = pneg %p199
        %p593 = pneg %p223
        %p594 = pneg %p220
        %p595 = pneg %p244
        %p596 = pneg %p241
        %p597 = pneg %p265
        %p598 = pneg %p262
        %p599 = pneg %p286
        %p600 = pneg %p283
        %p601 = pneg %p307
        %p602 = pneg %p304
        %p603 = pneg %p328
        %p604 = pneg %p325
        %p605 = pneg %p349
        %p606 = pneg %p346
        %p607 = pneg %p370
        %p608 = pneg %p367
        %p609 = pneg %p391
        %p610 = pneg %p388
        %p611 = pneg %p412
        %p612 = pneg %p409
        %p613 = pneg %p433
        %p614 = pneg %p430
        %p615 = pneg %p454
        %p616 = pneg %p451
        %p617 = pneg %p480
        %p618 = pneg %p477
        %s619 = sand.u32 %s467, 1
        %s620 = scalar_lea.sflag [#allocation3], %s619
        %s621 = sand.u32 %s467, 1
        %s622 = smul.addr %s621, 512
        %s623 = scalar_lea.vmem [#allocation2], %s622
        %s624 = smul.u32 64, %s34
        %p625 = scmp.lt.s32.totalorder %s624, 255
        %s626 = scalar_select %p625, %s624, 255
        %s627 = smul.addr %s626, 8
        %s628 = scalar_lea.vmem %s0, %s627
        %s629 = smul.u32 64, %s34
        %s630 = smul.u32 64, %s34
        %v632 = vld [vmem:[%s628] sm:$0xff]
        %v633 = vld [vmem:[%s628 + $0x8] sm:$0xff]
        %v634 = vld [vmem:[%s628 + $0x10] sm:$0xff]
        %v635 = vld [vmem:[%s628 + $0x18] sm:$0xff]
        %v636 = vld [vmem:[%s628 + $0x20] sm:$0xff]
        %v637 = vld [vmem:[%s628 + $0x28] sm:$0xff]
        %v638 = vld [vmem:[%s628 + $0x30] sm:$0xff]
        %v639 = vld [vmem:[%s628 + $0x38] sm:$0xff]
        %v640 = vld [vmem:[%s628 + $0x40] sm:$0xff]
        %v641 = vld [vmem:[%s628 + $0x48] sm:$0xff]
        %v642 = vld [vmem:[%s628 + $0x50] sm:$0xff]
        %v643 = vld [vmem:[%s628 + $0x58] sm:$0xff]
        %v644 = vld [vmem:[%s628 + $0x60] sm:$0xff]
        %v645 = vld [vmem:[%s628 + $0x68] sm:$0xff]
        %v646 = vld [vmem:[%s628 + $0x70] sm:$0xff]
        %v647 = vld [vmem:[%s628 + $0x78] sm:$0xff]
        %v648 = vld [vmem:[%s628 + $0x80] sm:$0xff]
        %v649 = vld [vmem:[%s628 + $0x88] sm:$0xff]
        %v650 = vld [vmem:[%s628 + $0x90] sm:$0xff]
        %v651 = vld [vmem:[%s628 + $0x98] sm:$0xff]
        %v652 = vld [vmem:[%s628 + $0xa0] sm:$0xff]
        %v653 = vld [vmem:[%s628 + $0xa8] sm:$0xff]
        %v654 = vld [vmem:[%s628 + $0xb0] sm:$0xff]
        %v655 = vld [vmem:[%s628 + $0xb8] sm:$0xff]
        %v656 = vld [vmem:[%s628 + $0xc0] sm:$0xff]
        %v657 = vld [vmem:[%s628 + $0xc8] sm:$0xff]
        %v658 = vld [vmem:[%s628 + $0xd0] sm:$0xff]
        %v659 = vld [vmem:[%s628 + $0xd8] sm:$0xff]
        %v660 = vld [vmem:[%s628 + $0xe0] sm:$0xff]
        %v661 = vld [vmem:[%s628 + $0xe8] sm:$0xff]
        %v662 = vld [vmem:[%s628 + $0xf0] sm:$0xff]
        %v663 = vld [vmem:[%s628 + $0xf8] sm:$0xff]
        %v664 = vld [vmem:[%s628 + $0x100] sm:$0xff]
        %v665 = vld [vmem:[%s628 + $0x108] sm:$0xff]
        %v666 = vld [vmem:[%s628 + $0x110] sm:$0xff]
        %v667 = vld [vmem:[%s628 + $0x118] sm:$0xff]
        %v668 = vld [vmem:[%s628 + $0x120] sm:$0xff]
        %v669 = vld [vmem:[%s628 + $0x128] sm:$0xff]
        %v670 = vld [vmem:[%s628 + $0x130] sm:$0xff]
        %v671 = vld [vmem:[%s628 + $0x138] sm:$0xff]
        %v672 = vld [vmem:[%s628 + $0x140] sm:$0xff]
        %v673 = vld [vmem:[%s628 + $0x148] sm:$0xff]
        %v674 = vld [vmem:[%s628 + $0x150] sm:$0xff]
        %v675 = vld [vmem:[%s628 + $0x158] sm:$0xff]
        %v676 = vld [vmem:[%s628 + $0x160] sm:$0xff]
        %v677 = vld [vmem:[%s628 + $0x168] sm:$0xff]
        %v678 = vld [vmem:[%s628 + $0x170] sm:$0xff]
        %v679 = vld [vmem:[%s628 + $0x178] sm:$0xff]
        %v680 = vld [vmem:[%s628 + $0x180] sm:$0xff]
        %v681 = vld [vmem:[%s628 + $0x188] sm:$0xff]
        %v682 = vld [vmem:[%s628 + $0x190] sm:$0xff]
        %v683 = vld [vmem:[%s628 + $0x198] sm:$0xff]
        %v684 = vld [vmem:[%s628 + $0x1a0] sm:$0xff]
        %v685 = vld [vmem:[%s628 + $0x1a8] sm:$0xff]
        %v686 = vld [vmem:[%s628 + $0x1b0] sm:$0xff]
        %v687 = vld [vmem:[%s628 + $0x1b8] sm:$0xff]
        %v688 = vld [vmem:[%s628 + $0x1c0] sm:$0xff]
        %v689 = vld [vmem:[%s628 + $0x1c8] sm:$0xff]
        %v690 = vld [vmem:[%s628 + $0x1d0] sm:$0xff]
        %v691 = vld [vmem:[%s628 + $0x1d8] sm:$0xff]
        %v692 = vld [vmem:[%s628 + $0x1e0] sm:$0xff]
        %v693 = vld [vmem:[%s628 + $0x1e8] sm:$0xff]
        %v694 = vld [vmem:[%s628 + $0x1f0] sm:$0xff]
        %v695 = vld [vmem:[%s628 + $0x1f8] sm:$0xff]
        %v696 = vpack.c.bf16 %v633, %v632
        %v697 = vpack.c.bf16 %v635, %v634
        %v698 = vpack.c.bf16 %v637, %v636
        %v699 = vpack.c.bf16 %v639, %v638
        %v700 = vpack.c.bf16 %v641, %v640
        %v701 = vpack.c.bf16 %v643, %v642
        %v702 = vpack.c.bf16 %v645, %v644
        %v703 = vpack.c.bf16 %v647, %v646
        %v704 = vpack.c.bf16 %v649, %v648
        %v705 = vpack.c.bf16 %v651, %v650
        %v706 = vpack.c.bf16 %v653, %v652
        %v707 = vpack.c.bf16 %v655, %v654
        %v708 = vpack.c.bf16 %v657, %v656
        %v709 = vpack.c.bf16 %v659, %v658
        %v710 = vpack.c.bf16 %v661, %v660
        %v711 = vpack.c.bf16 %v663, %v662
        %v712 = vpack.c.bf16 %v665, %v664
        %v713 = vpack.c.bf16 %v667, %v666
        %v714 = vpack.c.bf16 %v669, %v668
        %v715 = vpack.c.bf16 %v671, %v670
        %v716 = vpack.c.bf16 %v673, %v672
        %v717 = vpack.c.bf16 %v675, %v674
        %v718 = vpack.c.bf16 %v677, %v676
        %v719 = vpack.c.bf16 %v679, %v678
        %v720 = vpack.c.bf16 %v681, %v680
        %v721 = vpack.c.bf16 %v683, %v682
        %v722 = vpack.c.bf16 %v685, %v684
        %v723 = vpack.c.bf16 %v687, %v686
        %v724 = vpack.c.bf16 %v689, %v688
        %v725 = vpack.c.bf16 %v691, %v690
        %v726 = vpack.c.bf16 %v693, %v692
        %v727 = vpack.c.bf16 %v695, %v694
        %v728 = vld [vmem:[%s1] sm:$0xff]
        %v729 = vld [vmem:[%s1 + $0x8] sm:$0xff]
        %v730 = vld [vmem:[%s1 + $0x10] sm:$0xff]
        %v731 = vld [vmem:[%s1 + $0x18] sm:$0xff]
        %v732 = vld [vmem:[%s1 + $0x20] sm:$0xff]
        %v733 = vld [vmem:[%s1 + $0x28] sm:$0xff]
        %v734 = vld [vmem:[%s1 + $0x30] sm:$0xff]
        %v735 = vld [vmem:[%s1 + $0x38] sm:$0xff]
        %v736 = vld [vmem:[%s2] sm:$0x3]
        %v738 = vlaneseq
        %v739 = vshrl.u32 %v738, 7
        %v740 = vsub.s32 0, %v739
        %v741 = vrot.slane %v736, %v740
        %v742 = vlaneseq
        %v743 = vshrl.u32 %v742, 7
        %v744 = vsub.s32 1, %v743
        %v745 = vrot.slane %v736, %v744
        %v756 = vunpack.c.l.b16 %v728
        %v757 = vunpack.c.h.b16 %v728
        %v758 = vunpack.c.l.b16 %v729
        %v759 = vunpack.c.h.b16 %v729
        %v760 = vunpack.c.l.b16 %v730
        %v761 = vunpack.c.h.b16 %v730
        %v762 = vunpack.c.l.b16 %v731
        %v763 = vunpack.c.h.b16 %v731
        %v764 = vunpack.c.l.b16 %v732
        %v765 = vunpack.c.h.b16 %v732
        %v766 = vunpack.c.l.b16 %v733
        %v767 = vunpack.c.h.b16 %v733
        %v768 = vunpack.c.l.b16 %v734
        %v769 = vunpack.c.h.b16 %v734
        %v770 = vunpack.c.l.b16 %v735
        %v771 = vunpack.c.h.b16 %v735
        %v772 = vpack.c.b16 %v758, %v756
        %v773 = vpack.c.b16 %v759, %v757
        %v774 = vpack.c.b16 %v762, %v760
        %v775 = vpack.c.b16 %v763, %v761
        %v776 = vpack.c.b16 %v766, %v764
        %v777 = vpack.c.b16 %v767, %v765
        %v778 = vpack.c.b16 %v770, %v768
        %v779 = vpack.c.b16 %v771, %v769
        %vm788 = vcmask 523264
        %v790 = vsel %vm788, %v696, 0
        %v793 = vsel %vm788, %v697, 0
        %v796 = vsel %vm788, %v698, 0
        %v799 = vsel %vm788, %v699, 0
        %v802 = vsel %vm788, %v700, 0
        %v805 = vsel %vm788, %v701, 0
        %v808 = vsel %vm788, %v702, 0
        %v811 = vsel %vm788, %v703, 0
        %v814 = vsel %vm788, %v704, 0
        %v817 = vsel %vm788, %v705, 0
        %v820 = vsel %vm788, %v706, 0
        %v823 = vsel %vm788, %v707, 0
        %v826 = vsel %vm788, %v708, 0
        %v829 = vsel %vm788, %v709, 0
        %v832 = vsel %vm788, %v710, 0
        %v835 = vsel %vm788, %v711, 0
        %v838 = vsel %vm788, %v712, 0
        %v841 = vsel %vm788, %v713, 0
        %v844 = vsel %vm788, %v714, 0
        %v847 = vsel %vm788, %v715, 0
        %v850 = vsel %vm788, %v716, 0
        %v853 = vsel %vm788, %v717, 0
        %v856 = vsel %vm788, %v718, 0
        %v859 = vsel %vm788, %v719, 0
        %v862 = vsel %vm788, %v720, 0
        %v865 = vsel %vm788, %v721, 0
        %v868 = vsel %vm788, %v722, 0
        %v871 = vsel %vm788, %v723, 0
        %v874 = vsel %vm788, %v724, 0
        %v877 = vsel %vm788, %v725, 0
        %v880 = vsel %vm788, %v726, 0
        %v883 = vsel %vm788, %v727, 0
        %885 = vmatprep.subr.bf16.mxu0 0
        %886 = vmatpush1.bf16.msra.mxu0 0
        %887 = vmatprep.subr.bf16.mxu0 0
        %888 = vmatpush1.bf16.msra.mxu0 0
        %889 = vmatprep.subr.bf16.mxu0 0
        %890 = vmatpush1.bf16.msra.mxu0 0
        %891 = vmatprep.subr.bf16.mxu0 0
        %892 = vmatpush1.bf16.msra.mxu0 0
        %893 = vmatprep.subr.bf16.mxu0 %v779
        %894 = vmatpush1.bf16.msra.mxu0 %v778
        %895 = vmatprep.subr.bf16.mxu0 %v777
        %896 = vmatpush1.bf16.msra.mxu0 %v776
        %897 = vmatprep.subr.bf16.mxu0 %v775
        %898 = vmatpush1.bf16.msra.mxu0 %v774
        %899 = vmatprep.subr.bf16.mxu0 %v773
        %900 = vmatpush1.bf16.msra.mxu0 %v772
        %901 = vmatprep.subr.bf16.mxu0 0
        %902 = vmatpush2.bf16.msra.mxu0 0
        %903 = vmatprep.subr.bf16.mxu0 0
        %904 = vmatpush2.bf16.msra.mxu0 0
        %905 = vmatprep.subr.bf16.mxu0 0
        %906 = vmatpush2.bf16.msra.mxu0 0
        %907 = vmatprep.subr.bf16.mxu0 0
        %908 = vmatpush2.bf16.msra.mxu0 0
        %909 = vmatprep.subr.bf16.mxu0 0
        %910 = vmatpush2.bf16.msra.mxu0 0
        %911 = vmatprep.subr.bf16.mxu0 0
        %912 = vmatpush2.bf16.msra.mxu0 0
        %913 = vmatprep.subr.bf16.mxu0 0
        %914 = vmatpush2.bf16.msra.mxu0 0
        %915 = vmatprep.subr.bf16.mxu0 0
        %916 = vmatpush2.bf16.msra.mxu0 0
        %917 = vmatprep.mubr.bf16.mxu0 0
        %918 = vmatmul.mubr.bf16.gmra.mxu0 %v790
        %v919 = vpop.f32.mrf.mxu0
        %v920 = vadd.f32 %v741, %v919
        %v921 = vpop.f32.mrf.mxu0
        %v922 = vadd.f32 %v745, %v921
        %v923 = vpop.f32.mrf.mxu0
        %v924 = vadd.f32 %v741, %v923
        %v925 = vpop.f32.mrf.mxu0
        %v926 = vadd.f32 %v745, %v925
        %927 = vmatprep.mubr.bf16.mxu0 0
        %928 = vmatmul.mubr.bf16.gmra.mxu0 %v793
        %v929 = vpop.f32.mrf.mxu0
        %v930 = vadd.f32 %v741, %v929
        %v931 = vpop.f32.mrf.mxu0
        %v932 = vadd.f32 %v745, %v931
        %v933 = vpop.f32.mrf.mxu0
        %v934 = vadd.f32 %v741, %v933
        %v935 = vpop.f32.mrf.mxu0
        %v936 = vadd.f32 %v745, %v935
        %937 = vmatprep.mubr.bf16.mxu0 0
        %938 = vmatmul.mubr.bf16.gmra.mxu0 %v796
        %v939 = vpop.f32.mrf.mxu0
        %v940 = vadd.f32 %v741, %v939
        %v941 = vpop.f32.mrf.mxu0
        %v942 = vadd.f32 %v745, %v941
        %v943 = vpop.f32.mrf.mxu0
        %v944 = vadd.f32 %v741, %v943
        %v945 = vpop.f32.mrf.mxu0
        %v946 = vadd.f32 %v745, %v945
        %947 = vmatprep.mubr.bf16.mxu0 0
        %948 = vmatmul.mubr.bf16.gmra.mxu0 %v799
        %v949 = vpop.f32.mrf.mxu0
        %v950 = vadd.f32 %v741, %v949
        %v951 = vpop.f32.mrf.mxu0
        %v952 = vadd.f32 %v745, %v951
        %v953 = vpop.f32.mrf.mxu0
        %v954 = vadd.f32 %v741, %v953
        %v955 = vpop.f32.mrf.mxu0
        %v956 = vadd.f32 %v745, %v955
        %957 = vmatprep.mubr.bf16.mxu0 0
        %958 = vmatmul.mubr.bf16.gmra.mxu0 %v802
        %v959 = vpop.f32.mrf.mxu0
        %v960 = vadd.f32 %v741, %v959
        %v961 = vpop.f32.mrf.mxu0
        %v962 = vadd.f32 %v745, %v961
        %v963 = vpop.f32.mrf.mxu0
        %v964 = vadd.f32 %v741, %v963
        %v965 = vpop.f32.mrf.mxu0
        %v966 = vadd.f32 %v745, %v965
        %967 = vmatprep.mubr.bf16.mxu0 0
        %968 = vmatmul.mubr.bf16.gmra.mxu0 %v805
        %v969 = vpop.f32.mrf.mxu0
        %v970 = vadd.f32 %v741, %v969
        %v971 = vpop.f32.mrf.mxu0
        %v972 = vadd.f32 %v745, %v971
        %v973 = vpop.f32.mrf.mxu0
        %v974 = vadd.f32 %v741, %v973
        %v975 = vpop.f32.mrf.mxu0
        %v976 = vadd.f32 %v745, %v975
        %977 = vmatprep.mubr.bf16.mxu0 0
        %978 = vmatmul.mubr.bf16.gmra.mxu0 %v808
        %v979 = vpop.f32.mrf.mxu0
        %v980 = vadd.f32 %v741, %v979
        %v981 = vpop.f32.mrf.mxu0
        %v982 = vadd.f32 %v745, %v981
        %v983 = vpop.f32.mrf.mxu0
        %v984 = vadd.f32 %v741, %v983
        %v985 = vpop.f32.mrf.mxu0
        %v986 = vadd.f32 %v745, %v985
        %987 = vmatprep.mubr.bf16.mxu0 0
        %988 = vmatmul.mubr.bf16.gmra.mxu0 %v811
        %v989 = vpop.f32.mrf.mxu0
        %v990 = vadd.f32 %v741, %v989
        %v991 = vpop.f32.mrf.mxu0
        %v992 = vadd.f32 %v745, %v991
        %v993 = vpop.f32.mrf.mxu0
        %v994 = vadd.f32 %v741, %v993
        %v995 = vpop.f32.mrf.mxu0
        %v996 = vadd.f32 %v745, %v995
        %997 = vmatprep.mubr.bf16.mxu0 0
        %998 = vmatmul.mubr.bf16.gmra.mxu0 %v814
        %v999 = vpop.f32.mrf.mxu0
        %v1000 = vadd.f32 %v741, %v999
        %v1001 = vpop.f32.mrf.mxu0
        %v1002 = vadd.f32 %v745, %v1001
        %v1003 = vpop.f32.mrf.mxu0
        %v1004 = vadd.f32 %v741, %v1003
        %v1005 = vpop.f32.mrf.mxu0
        %v1006 = vadd.f32 %v745, %v1005
        %1007 = vmatprep.mubr.bf16.mxu0 0
        %1008 = vmatmul.mubr.bf16.gmra.mxu0 %v817
        %v1009 = vpop.f32.mrf.mxu0
        %v1010 = vadd.f32 %v741, %v1009
        %v1011 = vpop.f32.mrf.mxu0
        %v1012 = vadd.f32 %v745, %v1011
        %v1013 = vpop.f32.mrf.mxu0
        %v1014 = vadd.f32 %v741, %v1013
        %v1015 = vpop.f32.mrf.mxu0
        %v1016 = vadd.f32 %v745, %v1015
        %1017 = vmatprep.mubr.bf16.mxu0 0
        %1018 = vmatmul.mubr.bf16.gmra.mxu0 %v820
        %v1019 = vpop.f32.mrf.mxu0
        %v1020 = vadd.f32 %v741, %v1019
        %v1021 = vpop.f32.mrf.mxu0
        %v1022 = vadd.f32 %v745, %v1021
        %v1023 = vpop.f32.mrf.mxu0
        %v1024 = vadd.f32 %v741, %v1023
        %v1025 = vpop.f32.mrf.mxu0
        %v1026 = vadd.f32 %v745, %v1025
        %1027 = vmatprep.mubr.bf16.mxu0 0
        %1028 = vmatmul.mubr.bf16.gmra.mxu0 %v823
        %v1029 = vpop.f32.mrf.mxu0
        %v1030 = vadd.f32 %v741, %v1029
        %v1031 = vpop.f32.mrf.mxu0
        %v1032 = vadd.f32 %v745, %v1031
        %v1033 = vpop.f32.mrf.mxu0
        %v1034 = vadd.f32 %v741, %v1033
        %v1035 = vpop.f32.mrf.mxu0
        %v1036 = vadd.f32 %v745, %v1035
        %1037 = vmatprep.mubr.bf16.mxu0 0
        %1038 = vmatmul.mubr.bf16.gmra.mxu0 %v826
        %v1039 = vpop.f32.mrf.mxu0
        %v1040 = vadd.f32 %v741, %v1039
        %v1041 = vpop.f32.mrf.mxu0
        %v1042 = vadd.f32 %v745, %v1041
        %v1043 = vpop.f32.mrf.mxu0
        %v1044 = vadd.f32 %v741, %v1043
        %v1045 = vpop.f32.mrf.mxu0
        %v1046 = vadd.f32 %v745, %v1045
        %1047 = vmatprep.mubr.bf16.mxu0 0
        %1048 = vmatmul.mubr.bf16.gmra.mxu0 %v829
        %v1049 = vpop.f32.mrf.mxu0
        %v1050 = vadd.f32 %v741, %v1049
        %v1051 = vpop.f32.mrf.mxu0
        %v1052 = vadd.f32 %v745, %v1051
        %v1053 = vpop.f32.mrf.mxu0
        %v1054 = vadd.f32 %v741, %v1053
        %v1055 = vpop.f32.mrf.mxu0
        %v1056 = vadd.f32 %v745, %v1055
        %1057 = vmatprep.mubr.bf16.mxu0 0
        %1058 = vmatmul.mubr.bf16.gmra.mxu0 %v832
        %v1059 = vpop.f32.mrf.mxu0
        %v1060 = vadd.f32 %v741, %v1059
        %v1061 = vpop.f32.mrf.mxu0
        %v1062 = vadd.f32 %v745, %v1061
        %v1063 = vpop.f32.mrf.mxu0
        %v1064 = vadd.f32 %v741, %v1063
        %v1065 = vpop.f32.mrf.mxu0
        %v1066 = vadd.f32 %v745, %v1065
        %1067 = vmatprep.mubr.bf16.mxu0 0
        %1068 = vmatmul.mubr.bf16.gmra.mxu0 %v835
        %v1069 = vpop.f32.mrf.mxu0
        %v1070 = vadd.f32 %v741, %v1069
        %v1071 = vpop.f32.mrf.mxu0
        %v1072 = vadd.f32 %v745, %v1071
        %v1073 = vpop.f32.mrf.mxu0
        %v1074 = vadd.f32 %v741, %v1073
        %v1075 = vpop.f32.mrf.mxu0
        %v1076 = vadd.f32 %v745, %v1075
        %1077 = vmatprep.mubr.bf16.mxu0 0
        %1078 = vmatmul.mubr.bf16.gmra.mxu0 %v838
        %v1079 = vpop.f32.mrf.mxu0
        %v1080 = vadd.f32 %v741, %v1079
        %v1081 = vpop.f32.mrf.mxu0
        %v1082 = vadd.f32 %v745, %v1081
        %v1083 = vpop.f32.mrf.mxu0
        %v1084 = vadd.f32 %v741, %v1083
        %v1085 = vpop.f32.mrf.mxu0
        %v1086 = vadd.f32 %v745, %v1085
        %1087 = vmatprep.mubr.bf16.mxu0 0
        %1088 = vmatmul.mubr.bf16.gmra.mxu0 %v841
        %v1089 = vpop.f32.mrf.mxu0
        %v1090 = vadd.f32 %v741, %v1089
        %v1091 = vpop.f32.mrf.mxu0
        %v1092 = vadd.f32 %v745, %v1091
        %v1093 = vpop.f32.mrf.mxu0
        %v1094 = vadd.f32 %v741, %v1093
        %v1095 = vpop.f32.mrf.mxu0
        %v1096 = vadd.f32 %v745, %v1095
        %1097 = vmatprep.mubr.bf16.mxu0 0
        %1098 = vmatmul.mubr.bf16.gmra.mxu0 %v844
        %v1099 = vpop.f32.mrf.mxu0
        %v1100 = vadd.f32 %v741, %v1099
        %v1101 = vpop.f32.mrf.mxu0
        %v1102 = vadd.f32 %v745, %v1101
        %v1103 = vpop.f32.mrf.mxu0
        %v1104 = vadd.f32 %v741, %v1103
        %v1105 = vpop.f32.mrf.mxu0
        %v1106 = vadd.f32 %v745, %v1105
        %1107 = vmatprep.mubr.bf16.mxu0 0
        %1108 = vmatmul.mubr.bf16.gmra.mxu0 %v847
        %v1109 = vpop.f32.mrf.mxu0
        %v1110 = vadd.f32 %v741, %v1109
        %v1111 = vpop.f32.mrf.mxu0
        %v1112 = vadd.f32 %v745, %v1111
        %v1113 = vpop.f32.mrf.mxu0
        %v1114 = vadd.f32 %v741, %v1113
        %v1115 = vpop.f32.mrf.mxu0
        %v1116 = vadd.f32 %v745, %v1115
        %1117 = vmatprep.mubr.bf16.mxu0 0
        %1118 = vmatmul.mubr.bf16.gmra.mxu0 %v850
        %v1119 = vpop.f32.mrf.mxu0
        %v1120 = vadd.f32 %v741, %v1119
        %v1121 = vpop.f32.mrf.mxu0
        %v1122 = vadd.f32 %v745, %v1121
        %v1123 = vpop.f32.mrf.mxu0
        %v1124 = vadd.f32 %v741, %v1123
        %v1125 = vpop.f32.mrf.mxu0
        %v1126 = vadd.f32 %v745, %v1125
        %1127 = vmatprep.mubr.bf16.mxu0 0
        %1128 = vmatmul.mubr.bf16.gmra.mxu0 %v853
        %v1129 = vpop.f32.mrf.mxu0
        %v1130 = vadd.f32 %v741, %v1129
        %v1131 = vpop.f32.mrf.mxu0
        %v1132 = vadd.f32 %v745, %v1131
        %v1133 = vpop.f32.mrf.mxu0
        %v1134 = vadd.f32 %v741, %v1133
        %v1135 = vpop.f32.mrf.mxu0
        %v1136 = vadd.f32 %v745, %v1135
        %1137 = vmatprep.mubr.bf16.mxu0 0
        %1138 = vmatmul.mubr.bf16.gmra.mxu0 %v856
        %v1139 = vpop.f32.mrf.mxu0
        %v1140 = vadd.f32 %v741, %v1139
        %v1141 = vpop.f32.mrf.mxu0
        %v1142 = vadd.f32 %v745, %v1141
        %v1143 = vpop.f32.mrf.mxu0
        %v1144 = vadd.f32 %v741, %v1143
        %v1145 = vpop.f32.mrf.mxu0
        %v1146 = vadd.f32 %v745, %v1145
        %1147 = vmatprep.mubr.bf16.mxu0 0
        %1148 = vmatmul.mubr.bf16.gmra.mxu0 %v859
        %v1149 = vpop.f32.mrf.mxu0
        %v1150 = vadd.f32 %v741, %v1149
        %v1151 = vpop.f32.mrf.mxu0
        %v1152 = vadd.f32 %v745, %v1151
        %v1153 = vpop.f32.mrf.mxu0
        %v1154 = vadd.f32 %v741, %v1153
        %v1155 = vpop.f32.mrf.mxu0
        %v1156 = vadd.f32 %v745, %v1155
        %1157 = vmatprep.mubr.bf16.mxu0 0
        %1158 = vmatmul.mubr.bf16.gmra.mxu0 %v862
        %v1159 = vpop.f32.mrf.mxu0
        %v1160 = vadd.f32 %v741, %v1159
        %v1161 = vpop.f32.mrf.mxu0
        %v1162 = vadd.f32 %v745, %v1161
        %v1163 = vpop.f32.mrf.mxu0
        %v1164 = vadd.f32 %v741, %v1163
        %v1165 = vpop.f32.mrf.mxu0
        %v1166 = vadd.f32 %v745, %v1165
        %1167 = vmatprep.mubr.bf16.mxu0 0
        %1168 = vmatmul.mubr.bf16.gmra.mxu0 %v865
        %v1169 = vpop.f32.mrf.mxu0
        %v1170 = vadd.f32 %v741, %v1169
        %v1171 = vpop.f32.mrf.mxu0
        %v1172 = vadd.f32 %v745, %v1171
        %v1173 = vpop.f32.mrf.mxu0
        %v1174 = vadd.f32 %v741, %v1173
        %v1175 = vpop.f32.mrf.mxu0
        %v1176 = vadd.f32 %v745, %v1175
        %1177 = vmatprep.mubr.bf16.mxu0 0
        %1178 = vmatmul.mubr.bf16.gmra.mxu0 %v868
        %v1179 = vpop.f32.mrf.mxu0
        %v1180 = vadd.f32 %v741, %v1179
        %v1181 = vpop.f32.mrf.mxu0
        %v1182 = vadd.f32 %v745, %v1181
        %v1183 = vpop.f32.mrf.mxu0
        %v1184 = vadd.f32 %v741, %v1183
        %v1185 = vpop.f32.mrf.mxu0
        %v1186 = vadd.f32 %v745, %v1185
        %1187 = vmatprep.mubr.bf16.mxu0 0
        %1188 = vmatmul.mubr.bf16.gmra.mxu0 %v871
        %v1189 = vpop.f32.mrf.mxu0
        %v1190 = vadd.f32 %v741, %v1189
        %v1191 = vpop.f32.mrf.mxu0
        %v1192 = vadd.f32 %v745, %v1191
        %v1193 = vpop.f32.mrf.mxu0
        %v1194 = vadd.f32 %v741, %v1193
        %v1195 = vpop.f32.mrf.mxu0
        %v1196 = vadd.f32 %v745, %v1195
        %1197 = vmatprep.mubr.bf16.mxu0 0
        %1198 = vmatmul.mubr.bf16.gmra.mxu0 %v874
        %v1199 = vpop.f32.mrf.mxu0
        %v1200 = vadd.f32 %v741, %v1199
        %v1201 = vpop.f32.mrf.mxu0
        %v1202 = vadd.f32 %v745, %v1201
        %v1203 = vpop.f32.mrf.mxu0
        %v1204 = vadd.f32 %v741, %v1203
        %v1205 = vpop.f32.mrf.mxu0
        %v1206 = vadd.f32 %v745, %v1205
        %1207 = vmatprep.mubr.bf16.mxu0 0
        %1208 = vmatmul.mubr.bf16.gmra.mxu0 %v877
        %v1209 = vpop.f32.mrf.mxu0
        %v1210 = vadd.f32 %v741, %v1209
        %v1211 = vpop.f32.mrf.mxu0
        %v1212 = vadd.f32 %v745, %v1211
        %v1213 = vpop.f32.mrf.mxu0
        %v1214 = vadd.f32 %v741, %v1213
        %v1215 = vpop.f32.mrf.mxu0
        %v1216 = vadd.f32 %v745, %v1215
        %1217 = vmatprep.mubr.bf16.mxu0 0
        %1218 = vmatmul.mubr.bf16.gmra.mxu0 %v880
        %v1219 = vpop.f32.mrf.mxu0
        %v1220 = vadd.f32 %v741, %v1219
        %v1221 = vpop.f32.mrf.mxu0
        %v1222 = vadd.f32 %v745, %v1221
        %v1223 = vpop.f32.mrf.mxu0
        %v1224 = vadd.f32 %v741, %v1223
        %v1225 = vpop.f32.mrf.mxu0
        %v1226 = vadd.f32 %v745, %v1225
        %1227 = vmatprep.mubr.bf16.mxu0 0
        %1228 = vmatmul.mubr.bf16.gmra.mxu0 %v883
        %v1229 = vpop.f32.mrf.mxu0
        %v1230 = vadd.f32 %v741, %v1229
        %v1231 = vpop.f32.mrf.mxu0
        %v1232 = vadd.f32 %v745, %v1231
        %v1233 = vpop.f32.mrf.mxu0
        %v1234 = vadd.f32 %v741, %v1233
        %v1235 = vpop.f32.mrf.mxu0
        %v1236 = vadd.f32 %v745, %v1235
        %1237 = vdwg.mxu0
        %v1238 = vmax.f32 %v920, 0.0
        %v1239 = vmax.f32 %v922, 0.0
        %v1240 = vmax.f32 %v924, 0.0
        %v1241 = vmax.f32 %v926, 0.0
        %v1242 = vmax.f32 %v930, 0.0
        %v1243 = vmax.f32 %v932, 0.0
        %v1244 = vmax.f32 %v934, 0.0
        %v1245 = vmax.f32 %v936, 0.0
        %v1246 = vmax.f32 %v940, 0.0
        %v1247 = vmax.f32 %v942, 0.0
        %v1248 = vmax.f32 %v944, 0.0
        %v1249 = vmax.f32 %v946, 0.0
        %v1250 = vmax.f32 %v950, 0.0
        %v1251 = vmax.f32 %v952, 0.0
        %v1252 = vmax.f32 %v954, 0.0
        %v1253 = vmax.f32 %v956, 0.0
        %v1254 = vmax.f32 %v960, 0.0
        %v1255 = vmax.f32 %v962, 0.0
        %v1256 = vmax.f32 %v964, 0.0
        %v1257 = vmax.f32 %v966, 0.0
        %v1258 = vmax.f32 %v970, 0.0
        %v1259 = vmax.f32 %v972, 0.0
        %v1260 = vmax.f32 %v974, 0.0
        %v1261 = vmax.f32 %v976, 0.0
        %v1262 = vmax.f32 %v980, 0.0
        %v1263 = vmax.f32 %v982, 0.0
        %v1264 = vmax.f32 %v984, 0.0
        %v1265 = vmax.f32 %v986, 0.0
        %v1266 = vmax.f32 %v990, 0.0
        %v1267 = vmax.f32 %v992, 0.0
        %v1268 = vmax.f32 %v994, 0.0
        %v1269 = vmax.f32 %v996, 0.0
        %v1270 = vmax.f32 %v1000, 0.0
        %v1271 = vmax.f32 %v1002, 0.0
        %v1272 = vmax.f32 %v1004, 0.0
        %v1273 = vmax.f32 %v1006, 0.0
        %v1274 = vmax.f32 %v1010, 0.0
        %v1275 = vmax.f32 %v1012, 0.0
        %v1276 = vmax.f32 %v1014, 0.0
        %v1277 = vmax.f32 %v1016, 0.0
        %v1278 = vmax.f32 %v1020, 0.0
        %v1279 = vmax.f32 %v1022, 0.0
        %v1280 = vmax.f32 %v1024, 0.0
        %v1281 = vmax.f32 %v1026, 0.0
        %v1282 = vmax.f32 %v1030, 0.0
        %v1283 = vmax.f32 %v1032, 0.0
        %v1284 = vmax.f32 %v1034, 0.0
        %v1285 = vmax.f32 %v1036, 0.0
        %v1286 = vmax.f32 %v1040, 0.0
        %v1287 = vmax.f32 %v1042, 0.0
        %v1288 = vmax.f32 %v1044, 0.0
        %v1289 = vmax.f32 %v1046, 0.0
        %v1290 = vmax.f32 %v1050, 0.0
        %v1291 = vmax.f32 %v1052, 0.0
        %v1292 = vmax.f32 %v1054, 0.0
        %v1293 = vmax.f32 %v1056, 0.0
        %v1294 = vmax.f32 %v1060, 0.0
        %v1295 = vmax.f32 %v1062, 0.0
        %v1296 = vmax.f32 %v1064, 0.0
        %v1297 = vmax.f32 %v1066, 0.0
        %v1298 = vmax.f32 %v1070, 0.0
        %v1299 = vmax.f32 %v1072, 0.0
        %v1300 = vmax.f32 %v1074, 0.0
        %v1301 = vmax.f32 %v1076, 0.0
        %v1302 = vmax.f32 %v1080, 0.0
        %v1303 = vmax.f32 %v1082, 0.0
        %v1304 = vmax.f32 %v1084, 0.0
        %v1305 = vmax.f32 %v1086, 0.0
        %v1306 = vmax.f32 %v1090, 0.0
        %v1307 = vmax.f32 %v1092, 0.0
        %v1308 = vmax.f32 %v1094, 0.0
        %v1309 = vmax.f32 %v1096, 0.0
        %v1310 = vmax.f32 %v1100, 0.0
        %v1311 = vmax.f32 %v1102, 0.0
        %v1312 = vmax.f32 %v1104, 0.0
        %v1313 = vmax.f32 %v1106, 0.0
        %v1314 = vmax.f32 %v1110, 0.0
        %v1315 = vmax.f32 %v1112, 0.0
        %v1316 = vmax.f32 %v1114, 0.0
        %v1317 = vmax.f32 %v1116, 0.0
        %v1318 = vmax.f32 %v1120, 0.0
        %v1319 = vmax.f32 %v1122, 0.0
        %v1320 = vmax.f32 %v1124, 0.0
        %v1321 = vmax.f32 %v1126, 0.0
        %v1322 = vmax.f32 %v1130, 0.0
        %v1323 = vmax.f32 %v1132, 0.0
        %v1324 = vmax.f32 %v1134, 0.0
        %v1325 = vmax.f32 %v1136, 0.0
        %v1326 = vmax.f32 %v1140, 0.0
        %v1327 = vmax.f32 %v1142, 0.0
        %v1328 = vmax.f32 %v1144, 0.0
        %v1329 = vmax.f32 %v1146, 0.0
        %v1330 = vmax.f32 %v1150, 0.0
        %v1331 = vmax.f32 %v1152, 0.0
        %v1332 = vmax.f32 %v1154, 0.0
        %v1333 = vmax.f32 %v1156, 0.0
        %v1334 = vmax.f32 %v1160, 0.0
        %v1335 = vmax.f32 %v1162, 0.0
        %v1336 = vmax.f32 %v1164, 0.0
        %v1337 = vmax.f32 %v1166, 0.0
        %v1338 = vmax.f32 %v1170, 0.0
        %v1339 = vmax.f32 %v1172, 0.0
        %v1340 = vmax.f32 %v1174, 0.0
        %v1341 = vmax.f32 %v1176, 0.0
        %v1342 = vmax.f32 %v1180, 0.0
        %v1343 = vmax.f32 %v1182, 0.0
        %v1344 = vmax.f32 %v1184, 0.0
        %v1345 = vmax.f32 %v1186, 0.0
        %v1346 = vmax.f32 %v1190, 0.0
        %v1347 = vmax.f32 %v1192, 0.0
        %v1348 = vmax.f32 %v1194, 0.0
        %v1349 = vmax.f32 %v1196, 0.0
        %v1350 = vmax.f32 %v1200, 0.0
        %v1351 = vmax.f32 %v1202, 0.0
        %v1352 = vmax.f32 %v1204, 0.0
        %v1353 = vmax.f32 %v1206, 0.0
        %v1354 = vmax.f32 %v1210, 0.0
        %v1355 = vmax.f32 %v1212, 0.0
        %v1356 = vmax.f32 %v1214, 0.0
        %v1357 = vmax.f32 %v1216, 0.0
        %v1358 = vmax.f32 %v1220, 0.0
        %v1359 = vmax.f32 %v1222, 0.0
        %v1360 = vmax.f32 %v1224, 0.0
        %v1361 = vmax.f32 %v1226, 0.0
        %v1362 = vmax.f32 %v1230, 0.0
        %v1363 = vmax.f32 %v1232, 0.0
        %v1364 = vmax.f32 %v1234, 0.0
        %v1365 = vmax.f32 %v1236, 0.0
        %v1366 = vld [vmem:[%s3] sm:$0xff]
        %v1367 = vld [vmem:[%s3 + $0x8] sm:$0xff]
        %v1368 = vld [vmem:[%s3 + $0x10] sm:$0xff]
        %v1369 = vld [vmem:[%s3 + $0x18] sm:$0xff]
        %v1370 = vld [vmem:[%s3 + $0x20] sm:$0xff]
        %v1371 = vld [vmem:[%s3 + $0x28] sm:$0xff]
        %v1372 = vld [vmem:[%s3 + $0x30] sm:$0xff]
        %v1373 = vld [vmem:[%s3 + $0x38] sm:$0xff]
        %v1374 = vld [vmem:[%s3 + $0x40] sm:$0xff]
        %v1375 = vld [vmem:[%s3 + $0x48] sm:$0xff]
        %v1376 = vld [vmem:[%s3 + $0x50] sm:$0xff]
        %v1377 = vld [vmem:[%s3 + $0x58] sm:$0xff]
        %v1378 = vld [vmem:[%s3 + $0x60] sm:$0xff]
        %v1379 = vld [vmem:[%s3 + $0x68] sm:$0xff]
        %v1380 = vld [vmem:[%s3 + $0x70] sm:$0xff]
        %v1381 = vld [vmem:[%s3 + $0x78] sm:$0xff]
        %v1382 = vld [vmem:[%s3 + $0x80] sm:$0xff]
        %v1383 = vld [vmem:[%s3 + $0x88] sm:$0xff]
        %v1384 = vld [vmem:[%s3 + $0x90] sm:$0xff]
        %v1385 = vld [vmem:[%s3 + $0x98] sm:$0xff]
        %v1386 = vld [vmem:[%s3 + $0xa0] sm:$0xff]
        %v1387 = vld [vmem:[%s3 + $0xa8] sm:$0xff]
        %v1388 = vld [vmem:[%s3 + $0xb0] sm:$0xff]
        %v1389 = vld [vmem:[%s3 + $0xb8] sm:$0xff]
        %v1390 = vld [vmem:[%s3 + $0xc0] sm:$0xff]
        %v1391 = vld [vmem:[%s3 + $0xc8] sm:$0xff]
        %v1392 = vld [vmem:[%s3 + $0xd0] sm:$0xff]
        %v1393 = vld [vmem:[%s3 + $0xd8] sm:$0xff]
        %v1394 = vld [vmem:[%s3 + $0xe0] sm:$0xff]
        %v1395 = vld [vmem:[%s3 + $0xe8] sm:$0xff]
        %v1396 = vld [vmem:[%s3 + $0xf0] sm:$0xff]
        %v1397 = vld [vmem:[%s3 + $0xf8] sm:$0xff]
        %v1398 = vld [vmem:[%s4] sm:$0x3]
        %v1399 = vpack.c.bf16 %v1240, %v1238
        %v1400 = vpack.c.bf16 %v1241, %v1239
        %v1401 = vpack.c.bf16 %v1244, %v1242
        %v1402 = vpack.c.bf16 %v1245, %v1243
        %v1403 = vpack.c.bf16 %v1248, %v1246
        %v1404 = vpack.c.bf16 %v1249, %v1247
        %v1405 = vpack.c.bf16 %v1252, %v1250
        %v1406 = vpack.c.bf16 %v1253, %v1251
        %v1407 = vpack.c.bf16 %v1256, %v1254
        %v1408 = vpack.c.bf16 %v1257, %v1255
        %v1409 = vpack.c.bf16 %v1260, %v1258
        %v1410 = vpack.c.bf16 %v1261, %v1259
        %v1411 = vpack.c.bf16 %v1264, %v1262
        %v1412 = vpack.c.bf16 %v1265, %v1263
        %v1413 = vpack.c.bf16 %v1268, %v1266
        %v1414 = vpack.c.bf16 %v1269, %v1267
        %v1415 = vpack.c.bf16 %v1272, %v1270
        %v1416 = vpack.c.bf16 %v1273, %v1271
        %v1417 = vpack.c.bf16 %v1276, %v1274
        %v1418 = vpack.c.bf16 %v1277, %v1275
        %v1419 = vpack.c.bf16 %v1280, %v1278
        %v1420 = vpack.c.bf16 %v1281, %v1279
        %v1421 = vpack.c.bf16 %v1284, %v1282
        %v1422 = vpack.c.bf16 %v1285, %v1283
        %v1423 = vpack.c.bf16 %v1288, %v1286
        %v1424 = vpack.c.bf16 %v1289, %v1287
        %v1425 = vpack.c.bf16 %v1292, %v1290
        %v1426 = vpack.c.bf16 %v1293, %v1291
        %v1427 = vpack.c.bf16 %v1296, %v1294
        %v1428 = vpack.c.bf16 %v1297, %v1295
        %v1429 = vpack.c.bf16 %v1300, %v1298
        %v1430 = vpack.c.bf16 %v1301, %v1299
        %v1431 = vpack.c.bf16 %v1304, %v1302
        %v1432 = vpack.c.bf16 %v1305, %v1303
        %v1433 = vpack.c.bf16 %v1308, %v1306
        %v1434 = vpack.c.bf16 %v1309, %v1307
        %v1435 = vpack.c.bf16 %v1312, %v1310
        %v1436 = vpack.c.bf16 %v1313, %v1311
        %v1437 = vpack.c.bf16 %v1316, %v1314
        %v1438 = vpack.c.bf16 %v1317, %v1315
        %v1439 = vpack.c.bf16 %v1320, %v1318
        %v1440 = vpack.c.bf16 %v1321, %v1319
        %v1441 = vpack.c.bf16 %v1324, %v1322
        %v1442 = vpack.c.bf16 %v1325, %v1323
        %v1443 = vpack.c.bf16 %v1328, %v1326
        %v1444 = vpack.c.bf16 %v1329, %v1327
        %v1445 = vpack.c.bf16 %v1332, %v1330
        %v1446 = vpack.c.bf16 %v1333, %v1331
        %v1447 = vpack.c.bf16 %v1336, %v1334
        %v1448 = vpack.c.bf16 %v1337, %v1335
        %v1449 = vpack.c.bf16 %v1340, %v1338
        %v1450 = vpack.c.bf16 %v1341, %v1339
        %v1451 = vpack.c.bf16 %v1344, %v1342
        %v1452 = vpack.c.bf16 %v1345, %v1343
        %v1453 = vpack.c.bf16 %v1348, %v1346
        %v1454 = vpack.c.bf16 %v1349, %v1347
        %v1455 = vpack.c.bf16 %v1352, %v1350
        %v1456 = vpack.c.bf16 %v1353, %v1351
        %v1457 = vpack.c.bf16 %v1356, %v1354
        %v1458 = vpack.c.bf16 %v1357, %v1355
        %v1459 = vpack.c.bf16 %v1360, %v1358
        %v1460 = vpack.c.bf16 %v1361, %v1359
        %v1461 = vpack.c.bf16 %v1364, %v1362
        %v1462 = vpack.c.bf16 %v1365, %v1363
        %v1464 = vlaneseq
        %v1465 = vshrl.u32 %v1464, 7
        %v1466 = vsub.s32 0, %v1465
        %v1467 = vrot.slane %v1398, %v1466
        %v1468 = vlaneseq
        %v1469 = vshrl.u32 %v1468, 7
        %v1470 = vsub.s32 1, %v1469
        %v1471 = vrot.slane %v1398, %v1470
        %v1506 = vunpack.c.l.b16 %v1366
        %v1507 = vunpack.c.h.b16 %v1366
        %v1508 = vunpack.c.l.b16 %v1367
        %v1509 = vunpack.c.h.b16 %v1367
        %v1510 = vunpack.c.l.b16 %v1368
        %v1511 = vunpack.c.h.b16 %v1368
        %v1512 = vunpack.c.l.b16 %v1369
        %v1513 = vunpack.c.h.b16 %v1369
        %v1514 = vunpack.c.l.b16 %v1370
        %v1515 = vunpack.c.h.b16 %v1370
        %v1516 = vunpack.c.l.b16 %v1371
        %v1517 = vunpack.c.h.b16 %v1371
        %v1518 = vunpack.c.l.b16 %v1372
        %v1519 = vunpack.c.h.b16 %v1372
        %v1520 = vunpack.c.l.b16 %v1373
        %v1521 = vunpack.c.h.b16 %v1373
        %v1522 = vunpack.c.l.b16 %v1374
        %v1523 = vunpack.c.h.b16 %v1374
        %v1524 = vunpack.c.l.b16 %v1375
        %v1525 = vunpack.c.h.b16 %v1375
        %v1526 = vunpack.c.l.b16 %v1376
        %v1527 = vunpack.c.h.b16 %v1376
        %v1528 = vunpack.c.l.b16 %v1377
        %v1529 = vunpack.c.h.b16 %v1377
        %v1530 = vunpack.c.l.b16 %v1378
        %v1531 = vunpack.c.h.b16 %v1378
        %v1532 = vunpack.c.l.b16 %v1379
        %v1533 = vunpack.c.h.b16 %v1379
        %v1534 = vunpack.c.l.b16 %v1380
        %v1535 = vunpack.c.h.b16 %v1380
        %v1536 = vunpack.c.l.b16 %v1381
        %v1537 = vunpack.c.h.b16 %v1381
        %v1538 = vunpack.c.l.b16 %v1382
        %v1539 = vunpack.c.h.b16 %v1382
        %v1540 = vunpack.c.l.b16 %v1383
        %v1541 = vunpack.c.h.b16 %v1383
        %v1542 = vunpack.c.l.b16 %v1384
        %v1543 = vunpack.c.h.b16 %v1384
        %v1544 = vunpack.c.l.b16 %v1385
        %v1545 = vunpack.c.h.b16 %v1385
        %v1546 = vunpack.c.l.b16 %v1386
        %v1547 = vunpack.c.h.b16 %v1386
        %v1548 = vunpack.c.l.b16 %v1387
        %v1549 = vunpack.c.h.b16 %v1387
        %v1550 = vunpack.c.l.b16 %v1388
        %v1551 = vunpack.c.h.b16 %v1388
        %v1552 = vunpack.c.l.b16 %v1389
        %v1553 = vunpack.c.h.b16 %v1389
        %v1554 = vunpack.c.l.b16 %v1390
        %v1555 = vunpack.c.h.b16 %v1390
        %v1556 = vunpack.c.l.b16 %v1391
        %v1557 = vunpack.c.h.b16 %v1391
        %v1558 = vunpack.c.l.b16 %v1392
        %v1559 = vunpack.c.h.b16 %v1392
        %v1560 = vunpack.c.l.b16 %v1393
        %v1561 = vunpack.c.h.b16 %v1393
        %v1562 = vunpack.c.l.b16 %v1394
        %v1563 = vunpack.c.h.b16 %v1394
        %v1564 = vunpack.c.l.b16 %v1395
        %v1565 = vunpack.c.h.b16 %v1395
        %v1566 = vunpack.c.l.b16 %v1396
        %v1567 = vunpack.c.h.b16 %v1396
        %v1568 = vunpack.c.l.b16 %v1397
        %v1569 = vunpack.c.h.b16 %v1397
        %v1570 = vpack.c.b16 %v1508, %v1506
        %v1571 = vpack.c.b16 %v1509, %v1507
        %v1572 = vpack.c.b16 %v1512, %v1510
        %v1573 = vpack.c.b16 %v1513, %v1511
        %v1574 = vpack.c.b16 %v1516, %v1514
        %v1575 = vpack.c.b16 %v1517, %v1515
        %v1576 = vpack.c.b16 %v1520, %v1518
        %v1577 = vpack.c.b16 %v1521, %v1519
        %v1578 = vpack.c.b16 %v1524, %v1522
        %v1579 = vpack.c.b16 %v1525, %v1523
        %v1580 = vpack.c.b16 %v1528, %v1526
        %v1581 = vpack.c.b16 %v1529, %v1527
        %v1582 = vpack.c.b16 %v1532, %v1530
        %v1583 = vpack.c.b16 %v1533, %v1531
        %v1584 = vpack.c.b16 %v1536, %v1534
        %v1585 = vpack.c.b16 %v1537, %v1535
        %v1586 = vpack.c.b16 %v1540, %v1538
        %v1587 = vpack.c.b16 %v1541, %v1539
        %v1588 = vpack.c.b16 %v1544, %v1542
        %v1589 = vpack.c.b16 %v1545, %v1543
        %v1590 = vpack.c.b16 %v1548, %v1546
        %v1591 = vpack.c.b16 %v1549, %v1547
        %v1592 = vpack.c.b16 %v1552, %v1550
        %v1593 = vpack.c.b16 %v1553, %v1551
        %v1594 = vpack.c.b16 %v1556, %v1554
        %v1595 = vpack.c.b16 %v1557, %v1555
        %v1596 = vpack.c.b16 %v1560, %v1558
        %v1597 = vpack.c.b16 %v1561, %v1559
        %v1598 = vpack.c.b16 %v1564, %v1562
        %v1599 = vpack.c.b16 %v1565, %v1563
        %v1600 = vpack.c.b16 %v1568, %v1566
        %v1601 = vpack.c.b16 %v1569, %v1567
        %1634 = vmatprep.subr.bf16.mxu0 %v1585
        %1635 = vmatpush1.bf16.msra.mxu0 %v1584
        %1636 = vmatprep.subr.bf16.mxu0 %v1583
        %1637 = vmatpush1.bf16.msra.mxu0 %v1582
        %1638 = vmatprep.subr.bf16.mxu0 %v1581
        %1639 = vmatpush1.bf16.msra.mxu0 %v1580
        %1640 = vmatprep.subr.bf16.mxu0 %v1579
        %1641 = vmatpush1.bf16.msra.mxu0 %v1578
        %1642 = vmatprep.subr.bf16.mxu0 %v1577
        %1643 = vmatpush1.bf16.msra.mxu0 %v1576
        %1644 = vmatprep.subr.bf16.mxu0 %v1575
        %1645 = vmatpush1.bf16.msra.mxu0 %v1574
        %1646 = vmatprep.subr.bf16.mxu0 %v1573
        %1647 = vmatpush1.bf16.msra.mxu0 %v1572
        %1648 = vmatprep.subr.bf16.mxu0 %v1571
        %1649 = vmatpush1.bf16.msra.mxu0 %v1570
        %1650 = vmatprep.subr.bf16.mxu0 %v1601
        %1651 = vmatpush2.bf16.msra.mxu0 %v1600
        %1652 = vmatprep.subr.bf16.mxu0 %v1599
        %1653 = vmatpush2.bf16.msra.mxu0 %v1598
        %1654 = vmatprep.subr.bf16.mxu0 %v1597
        %1655 = vmatpush2.bf16.msra.mxu0 %v1596
        %1656 = vmatprep.subr.bf16.mxu0 %v1595
        %1657 = vmatpush2.bf16.msra.mxu0 %v1594
        %1658 = vmatprep.subr.bf16.mxu0 %v1593
        %1659 = vmatpush2.bf16.msra.mxu0 %v1592
        %1660 = vmatprep.subr.bf16.mxu0 %v1591
        %1661 = vmatpush2.bf16.msra.mxu0 %v1590
        %1662 = vmatprep.subr.bf16.mxu0 %v1589
        %1663 = vmatpush2.bf16.msra.mxu0 %v1588
        %1664 = vmatprep.subr.bf16.mxu0 %v1587
        %1665 = vmatpush2.bf16.msra.mxu0 %v1586
        %1666 = vmatprep.mubr.bf16.mxu0 %v1400
        %1667 = vmatmul.mubr.bf16.gmra.mxu0 %v1399
        %v1668 = vpop.f32.mrf.mxu0
        %v1669 = vadd.f32 %v1467, %v1668
        %v1670 = vpop.f32.mrf.mxu0
        %v1671 = vadd.f32 %v1471, %v1670
        %v1672 = vpop.f32.mrf.mxu0
        %v1673 = vadd.f32 %v1467, %v1672
        %v1674 = vpop.f32.mrf.mxu0
        %v1675 = vadd.f32 %v1471, %v1674
        %1676 = vmatprep.mubr.bf16.mxu0 %v1402
        %1677 = vmatmul.mubr.bf16.gmra.mxu0 %v1401
        %v1678 = vpop.f32.mrf.mxu0
        %v1679 = vadd.f32 %v1467, %v1678
        %v1680 = vpop.f32.mrf.mxu0
        %v1681 = vadd.f32 %v1471, %v1680
        %v1682 = vpop.f32.mrf.mxu0
        %v1683 = vadd.f32 %v1467, %v1682
        %v1684 = vpop.f32.mrf.mxu0
        %v1685 = vadd.f32 %v1471, %v1684
        %1686 = vmatprep.mubr.bf16.mxu0 %v1404
        %1687 = vmatmul.mubr.bf16.gmra.mxu0 %v1403
        %v1688 = vpop.f32.mrf.mxu0
        %v1689 = vadd.f32 %v1467, %v1688
        %v1690 = vpop.f32.mrf.mxu0
        %v1691 = vadd.f32 %v1471, %v1690
        %v1692 = vpop.f32.mrf.mxu0
        %v1693 = vadd.f32 %v1467, %v1692
        %v1694 = vpop.f32.mrf.mxu0
        %v1695 = vadd.f32 %v1471, %v1694
        %1696 = vmatprep.mubr.bf16.mxu0 %v1406
        %1697 = vmatmul.mubr.bf16.gmra.mxu0 %v1405
        %v1698 = vpop.f32.mrf.mxu0
        %v1699 = vadd.f32 %v1467, %v1698
        %v1700 = vpop.f32.mrf.mxu0
        %v1701 = vadd.f32 %v1471, %v1700
        %v1702 = vpop.f32.mrf.mxu0
        %v1703 = vadd.f32 %v1467, %v1702
        %v1704 = vpop.f32.mrf.mxu0
        %v1705 = vadd.f32 %v1471, %v1704
        %1706 = vmatprep.mubr.bf16.mxu0 %v1408
        %1707 = vmatmul.mubr.bf16.gmra.mxu0 %v1407
        %v1708 = vpop.f32.mrf.mxu0
        %v1709 = vadd.f32 %v1467, %v1708
        %v1710 = vpop.f32.mrf.mxu0
        %v1711 = vadd.f32 %v1471, %v1710
        %v1712 = vpop.f32.mrf.mxu0
        %v1713 = vadd.f32 %v1467, %v1712
        %v1714 = vpop.f32.mrf.mxu0
        %v1715 = vadd.f32 %v1471, %v1714
        %1716 = vmatprep.mubr.bf16.mxu0 %v1410
        %1717 = vmatmul.mubr.bf16.gmra.mxu0 %v1409
        %v1718 = vpop.f32.mrf.mxu0
        %v1719 = vadd.f32 %v1467, %v1718
        %v1720 = vpop.f32.mrf.mxu0
        %v1721 = vadd.f32 %v1471, %v1720
        %v1722 = vpop.f32.mrf.mxu0
        %v1723 = vadd.f32 %v1467, %v1722
        %v1724 = vpop.f32.mrf.mxu0
        %v1725 = vadd.f32 %v1471, %v1724
        %1726 = vmatprep.mubr.bf16.mxu0 %v1412
        %1727 = vmatmul.mubr.bf16.gmra.mxu0 %v1411
        %v1728 = vpop.f32.mrf.mxu0
        %v1729 = vadd.f32 %v1467, %v1728
        %v1730 = vpop.f32.mrf.mxu0
        %v1731 = vadd.f32 %v1471, %v1730
        %v1732 = vpop.f32.mrf.mxu0
        %v1733 = vadd.f32 %v1467, %v1732
        %v1734 = vpop.f32.mrf.mxu0
        %v1735 = vadd.f32 %v1471, %v1734
        %1736 = vmatprep.mubr.bf16.mxu0 %v1414
        %1737 = vmatmul.mubr.bf16.gmra.mxu0 %v1413
        %v1738 = vpop.f32.mrf.mxu0
        %v1739 = vadd.f32 %v1467, %v1738
        %v1740 = vpop.f32.mrf.mxu0
        %v1741 = vadd.f32 %v1471, %v1740
        %v1742 = vpop.f32.mrf.mxu0
        %v1743 = vadd.f32 %v1467, %v1742
        %v1744 = vpop.f32.mrf.mxu0
        %v1745 = vadd.f32 %v1471, %v1744
        %1746 = vmatprep.mubr.bf16.mxu0 %v1416
        %1747 = vmatmul.mubr.bf16.gmra.mxu0 %v1415
        %v1748 = vpop.f32.mrf.mxu0
        %v1749 = vadd.f32 %v1467, %v1748
        %v1750 = vpop.f32.mrf.mxu0
        %v1751 = vadd.f32 %v1471, %v1750
        %v1752 = vpop.f32.mrf.mxu0
        %v1753 = vadd.f32 %v1467, %v1752
        %v1754 = vpop.f32.mrf.mxu0
        %v1755 = vadd.f32 %v1471, %v1754
        %1756 = vmatprep.mubr.bf16.mxu0 %v1418
        %1757 = vmatmul.mubr.bf16.gmra.mxu0 %v1417
        %v1758 = vpop.f32.mrf.mxu0
        %v1759 = vadd.f32 %v1467, %v1758
        %v1760 = vpop.f32.mrf.mxu0
        %v1761 = vadd.f32 %v1471, %v1760
        %v1762 = vpop.f32.mrf.mxu0
        %v1763 = vadd.f32 %v1467, %v1762
        %v1764 = vpop.f32.mrf.mxu0
        %v1765 = vadd.f32 %v1471, %v1764
        %1766 = vmatprep.mubr.bf16.mxu0 %v1420
        %1767 = vmatmul.mubr.bf16.gmra.mxu0 %v1419
        %v1768 = vpop.f32.mrf.mxu0
        %v1769 = vadd.f32 %v1467, %v1768
        %v1770 = vpop.f32.mrf.mxu0
        %v1771 = vadd.f32 %v1471, %v1770
        %v1772 = vpop.f32.mrf.mxu0
        %v1773 = vadd.f32 %v1467, %v1772
        %v1774 = vpop.f32.mrf.mxu0
        %v1775 = vadd.f32 %v1471, %v1774
        %1776 = vmatprep.mubr.bf16.mxu0 %v1422
        %1777 = vmatmul.mubr.bf16.gmra.mxu0 %v1421
        %v1778 = vpop.f32.mrf.mxu0
        %v1779 = vadd.f32 %v1467, %v1778
        %v1780 = vpop.f32.mrf.mxu0
        %v1781 = vadd.f32 %v1471, %v1780
        %v1782 = vpop.f32.mrf.mxu0
        %v1783 = vadd.f32 %v1467, %v1782
        %v1784 = vpop.f32.mrf.mxu0
        %v1785 = vadd.f32 %v1471, %v1784
        %1786 = vmatprep.mubr.bf16.mxu0 %v1424
        %1787 = vmatmul.mubr.bf16.gmra.mxu0 %v1423
        %v1788 = vpop.f32.mrf.mxu0
        %v1789 = vadd.f32 %v1467, %v1788
        %v1790 = vpop.f32.mrf.mxu0
        %v1791 = vadd.f32 %v1471, %v1790
        %v1792 = vpop.f32.mrf.mxu0
        %v1793 = vadd.f32 %v1467, %v1792
        %v1794 = vpop.f32.mrf.mxu0
        %v1795 = vadd.f32 %v1471, %v1794
        %1796 = vmatprep.mubr.bf16.mxu0 %v1426
        %1797 = vmatmul.mubr.bf16.gmra.mxu0 %v1425
        %v1798 = vpop.f32.mrf.mxu0
        %v1799 = vadd.f32 %v1467, %v1798
        %v1800 = vpop.f32.mrf.mxu0
        %v1801 = vadd.f32 %v1471, %v1800
        %v1802 = vpop.f32.mrf.mxu0
        %v1803 = vadd.f32 %v1467, %v1802
        %v1804 = vpop.f32.mrf.mxu0
        %v1805 = vadd.f32 %v1471, %v1804
        %1806 = vmatprep.mubr.bf16.mxu0 %v1428
        %1807 = vmatmul.mubr.bf16.gmra.mxu0 %v1427
        %v1808 = vpop.f32.mrf.mxu0
        %v1809 = vadd.f32 %v1467, %v1808
        %v1810 = vpop.f32.mrf.mxu0
        %v1811 = vadd.f32 %v1471, %v1810
        %v1812 = vpop.f32.mrf.mxu0
        %v1813 = vadd.f32 %v1467, %v1812
        %v1814 = vpop.f32.mrf.mxu0
        %v1815 = vadd.f32 %v1471, %v1814
        %1816 = vmatprep.mubr.bf16.mxu0 %v1430
        %1817 = vmatmul.mubr.bf16.gmra.mxu0 %v1429
        %v1818 = vpop.f32.mrf.mxu0
        %v1819 = vadd.f32 %v1467, %v1818
        %v1820 = vpop.f32.mrf.mxu0
        %v1821 = vadd.f32 %v1471, %v1820
        %v1822 = vpop.f32.mrf.mxu0
        %v1823 = vadd.f32 %v1467, %v1822
        %v1824 = vpop.f32.mrf.mxu0
        %v1825 = vadd.f32 %v1471, %v1824
        %1826 = vmatprep.mubr.bf16.mxu0 %v1432
        %1827 = vmatmul.mubr.bf16.gmra.mxu0 %v1431
        %v1828 = vpop.f32.mrf.mxu0
        %v1829 = vadd.f32 %v1467, %v1828
        %v1830 = vpop.f32.mrf.mxu0
        %v1831 = vadd.f32 %v1471, %v1830
        %v1832 = vpop.f32.mrf.mxu0
        %v1833 = vadd.f32 %v1467, %v1832
        %v1834 = vpop.f32.mrf.mxu0
        %v1835 = vadd.f32 %v1471, %v1834
        %1836 = vmatprep.mubr.bf16.mxu0 %v1434
        %1837 = vmatmul.mubr.bf16.gmra.mxu0 %v1433
        %v1838 = vpop.f32.mrf.mxu0
        %v1839 = vadd.f32 %v1467, %v1838
        %v1840 = vpop.f32.mrf.mxu0
        %v1841 = vadd.f32 %v1471, %v1840
        %v1842 = vpop.f32.mrf.mxu0
        %v1843 = vadd.f32 %v1467, %v1842
        %v1844 = vpop.f32.mrf.mxu0
        %v1845 = vadd.f32 %v1471, %v1844
        %1846 = vmatprep.mubr.bf16.mxu0 %v1436
        %1847 = vmatmul.mubr.bf16.gmra.mxu0 %v1435
        %v1848 = vpop.f32.mrf.mxu0
        %v1849 = vadd.f32 %v1467, %v1848
        %v1850 = vpop.f32.mrf.mxu0
        %v1851 = vadd.f32 %v1471, %v1850
        %v1852 = vpop.f32.mrf.mxu0
        %v1853 = vadd.f32 %v1467, %v1852
        %v1854 = vpop.f32.mrf.mxu0
        %v1855 = vadd.f32 %v1471, %v1854
        %1856 = vmatprep.mubr.bf16.mxu0 %v1438
        %1857 = vmatmul.mubr.bf16.gmra.mxu0 %v1437
        %v1858 = vpop.f32.mrf.mxu0
        %v1859 = vadd.f32 %v1467, %v1858
        %v1860 = vpop.f32.mrf.mxu0
        %v1861 = vadd.f32 %v1471, %v1860
        %v1862 = vpop.f32.mrf.mxu0
        %v1863 = vadd.f32 %v1467, %v1862
        %v1864 = vpop.f32.mrf.mxu0
        %v1865 = vadd.f32 %v1471, %v1864
        %1866 = vmatprep.mubr.bf16.mxu0 %v1440
        %1867 = vmatmul.mubr.bf16.gmra.mxu0 %v1439
        %v1868 = vpop.f32.mrf.mxu0
        %v1869 = vadd.f32 %v1467, %v1868
        %v1870 = vpop.f32.mrf.mxu0
        %v1871 = vadd.f32 %v1471, %v1870
        %v1872 = vpop.f32.mrf.mxu0
        %v1873 = vadd.f32 %v1467, %v1872
        %v1874 = vpop.f32.mrf.mxu0
        %v1875 = vadd.f32 %v1471, %v1874
        %1876 = vmatprep.mubr.bf16.mxu0 %v1442
        %1877 = vmatmul.mubr.bf16.gmra.mxu0 %v1441
        %v1878 = vpop.f32.mrf.mxu0
        %v1879 = vadd.f32 %v1467, %v1878
        %v1880 = vpop.f32.mrf.mxu0
        %v1881 = vadd.f32 %v1471, %v1880
        %v1882 = vpop.f32.mrf.mxu0
        %v1883 = vadd.f32 %v1467, %v1882
        %v1884 = vpop.f32.mrf.mxu0
        %v1885 = vadd.f32 %v1471, %v1884
        %1886 = vmatprep.mubr.bf16.mxu0 %v1444
        %1887 = vmatmul.mubr.bf16.gmra.mxu0 %v1443
        %v1888 = vpop.f32.mrf.mxu0
        %v1889 = vadd.f32 %v1467, %v1888
        %v1890 = vpop.f32.mrf.mxu0
        %v1891 = vadd.f32 %v1471, %v1890
        %v1892 = vpop.f32.mrf.mxu0
        %v1893 = vadd.f32 %v1467, %v1892
        %v1894 = vpop.f32.mrf.mxu0
        %v1895 = vadd.f32 %v1471, %v1894
        %1896 = vmatprep.mubr.bf16.mxu0 %v1446
        %1897 = vmatmul.mubr.bf16.gmra.mxu0 %v1445
        %v1898 = vpop.f32.mrf.mxu0
        %v1899 = vadd.f32 %v1467, %v1898
        %v1900 = vpop.f32.mrf.mxu0
        %v1901 = vadd.f32 %v1471, %v1900
        %v1902 = vpop.f32.mrf.mxu0
        %v1903 = vadd.f32 %v1467, %v1902
        %v1904 = vpop.f32.mrf.mxu0
        %v1905 = vadd.f32 %v1471, %v1904
        %1906 = vmatprep.mubr.bf16.mxu0 %v1448
        %1907 = vmatmul.mubr.bf16.gmra.mxu0 %v1447
        %v1908 = vpop.f32.mrf.mxu0
        %v1909 = vadd.f32 %v1467, %v1908
        %v1910 = vpop.f32.mrf.mxu0
        %v1911 = vadd.f32 %v1471, %v1910
        %v1912 = vpop.f32.mrf.mxu0
        %v1913 = vadd.f32 %v1467, %v1912
        %v1914 = vpop.f32.mrf.mxu0
        %v1915 = vadd.f32 %v1471, %v1914
        %1916 = vmatprep.mubr.bf16.mxu0 %v1450
        %1917 = vmatmul.mubr.bf16.gmra.mxu0 %v1449
        %v1918 = vpop.f32.mrf.mxu0
        %v1919 = vadd.f32 %v1467, %v1918
        %v1920 = vpop.f32.mrf.mxu0
        %v1921 = vadd.f32 %v1471, %v1920
        %v1922 = vpop.f32.mrf.mxu0
        %v1923 = vadd.f32 %v1467, %v1922
        %v1924 = vpop.f32.mrf.mxu0
        %v1925 = vadd.f32 %v1471, %v1924
        %1926 = vmatprep.mubr.bf16.mxu0 %v1452
        %1927 = vmatmul.mubr.bf16.gmra.mxu0 %v1451
        %v1928 = vpop.f32.mrf.mxu0
        %v1929 = vadd.f32 %v1467, %v1928
        %v1930 = vpop.f32.mrf.mxu0
        %v1931 = vadd.f32 %v1471, %v1930
        %v1932 = vpop.f32.mrf.mxu0
        %v1933 = vadd.f32 %v1467, %v1932
        %v1934 = vpop.f32.mrf.mxu0
        %v1935 = vadd.f32 %v1471, %v1934
        %1936 = vmatprep.mubr.bf16.mxu0 %v1454
        %1937 = vmatmul.mubr.bf16.gmra.mxu0 %v1453
        %v1938 = vpop.f32.mrf.mxu0
        %v1939 = vadd.f32 %v1467, %v1938
        %v1940 = vpop.f32.mrf.mxu0
        %v1941 = vadd.f32 %v1471, %v1940
        %v1942 = vpop.f32.mrf.mxu0
        %v1943 = vadd.f32 %v1467, %v1942
        %v1944 = vpop.f32.mrf.mxu0
        %v1945 = vadd.f32 %v1471, %v1944
        %1946 = vmatprep.mubr.bf16.mxu0 %v1456
        %1947 = vmatmul.mubr.bf16.gmra.mxu0 %v1455
        %v1948 = vpop.f32.mrf.mxu0
        %v1949 = vadd.f32 %v1467, %v1948
        %v1950 = vpop.f32.mrf.mxu0
        %v1951 = vadd.f32 %v1471, %v1950
        %v1952 = vpop.f32.mrf.mxu0
        %v1953 = vadd.f32 %v1467, %v1952
        %v1954 = vpop.f32.mrf.mxu0
        %v1955 = vadd.f32 %v1471, %v1954
        %1956 = vmatprep.mubr.bf16.mxu0 %v1458
        %1957 = vmatmul.mubr.bf16.gmra.mxu0 %v1457
        %v1958 = vpop.f32.mrf.mxu0
        %v1959 = vadd.f32 %v1467, %v1958
        %v1960 = vpop.f32.mrf.mxu0
        %v1961 = vadd.f32 %v1471, %v1960
        %v1962 = vpop.f32.mrf.mxu0
        %v1963 = vadd.f32 %v1467, %v1962
        %v1964 = vpop.f32.mrf.mxu0
        %v1965 = vadd.f32 %v1471, %v1964
        %1966 = vmatprep.mubr.bf16.mxu0 %v1460
        %1967 = vmatmul.mubr.bf16.gmra.mxu0 %v1459
        %v1968 = vpop.f32.mrf.mxu0
        %v1969 = vadd.f32 %v1467, %v1968
        %v1970 = vpop.f32.mrf.mxu0
        %v1971 = vadd.f32 %v1471, %v1970
        %v1972 = vpop.f32.mrf.mxu0
        %v1973 = vadd.f32 %v1467, %v1972
        %v1974 = vpop.f32.mrf.mxu0
        %v1975 = vadd.f32 %v1471, %v1974
        %1976 = vmatprep.mubr.bf16.mxu0 %v1462
        %1977 = vmatmul.mubr.bf16.gmra.mxu0 %v1461
        %v1978 = vpop.f32.mrf.mxu0
        %v1979 = vadd.f32 %v1467, %v1978
        %v1980 = vpop.f32.mrf.mxu0
        %v1981 = vadd.f32 %v1471, %v1980
        %v1982 = vpop.f32.mrf.mxu0
        %v1983 = vadd.f32 %v1467, %v1982
        %v1984 = vpop.f32.mrf.mxu0
        %v1985 = vadd.f32 %v1471, %v1984
        %1986 = vdwg.mxu0
        %v1987 = vmax.f32 %v1669, 0.0
        %v1988 = vmax.f32 %v1671, 0.0
        %v1989 = vmax.f32 %v1673, 0.0
        %v1990 = vmax.f32 %v1675, 0.0
        %v1991 = vmax.f32 %v1679, 0.0
        %v1992 = vmax.f32 %v1681, 0.0
        %v1993 = vmax.f32 %v1683, 0.0
        %v1994 = vmax.f32 %v1685, 0.0
        %v1995 = vmax.f32 %v1689, 0.0
        %v1996 = vmax.f32 %v1691, 0.0
        %v1997 = vmax.f32 %v1693, 0.0
        %v1998 = vmax.f32 %v1695, 0.0
        %v1999 = vmax.f32 %v1699, 0.0
        %v2000 = vmax.f32 %v1701, 0.0
        %v2001 = vmax.f32 %v1703, 0.0
        %v2002 = vmax.f32 %v1705, 0.0
        %v2003 = vmax.f32 %v1709, 0.0
        %v2004 = vmax.f32 %v1711, 0.0
        %v2005 = vmax.f32 %v1713, 0.0
        %v2006 = vmax.f32 %v1715, 0.0
        %v2007 = vmax.f32 %v1719, 0.0
        %v2008 = vmax.f32 %v1721, 0.0
        %v2009 = vmax.f32 %v1723, 0.0
        %v2010 = vmax.f32 %v1725, 0.0
        %v2011 = vmax.f32 %v1729, 0.0
        %v2012 = vmax.f32 %v1731, 0.0
        %v2013 = vmax.f32 %v1733, 0.0
        %v2014 = vmax.f32 %v1735, 0.0
        %v2015 = vmax.f32 %v1739, 0.0
        %v2016 = vmax.f32 %v1741, 0.0
        %v2017 = vmax.f32 %v1743, 0.0
        %v2018 = vmax.f32 %v1745, 0.0
        %v2019 = vmax.f32 %v1749, 0.0
        %v2020 = vmax.f32 %v1751, 0.0
        %v2021 = vmax.f32 %v1753, 0.0
        %v2022 = vmax.f32 %v1755, 0.0
        %v2023 = vmax.f32 %v1759, 0.0
        %v2024 = vmax.f32 %v1761, 0.0
        %v2025 = vmax.f32 %v1763, 0.0
        %v2026 = vmax.f32 %v1765, 0.0
        %v2027 = vmax.f32 %v1769, 0.0
        %v2028 = vmax.f32 %v1771, 0.0
        %v2029 = vmax.f32 %v1773, 0.0
        %v2030 = vmax.f32 %v1775, 0.0
        %v2031 = vmax.f32 %v1779, 0.0
        %v2032 = vmax.f32 %v1781, 0.0
        %v2033 = vmax.f32 %v1783, 0.0
        %v2034 = vmax.f32 %v1785, 0.0
        %v2035 = vmax.f32 %v1789, 0.0
        %v2036 = vmax.f32 %v1791, 0.0
        %v2037 = vmax.f32 %v1793, 0.0
        %v2038 = vmax.f32 %v1795, 0.0
        %v2039 = vmax.f32 %v1799, 0.0
        %v2040 = vmax.f32 %v1801, 0.0
        %v2041 = vmax.f32 %v1803, 0.0
        %v2042 = vmax.f32 %v1805, 0.0
        %v2043 = vmax.f32 %v1809, 0.0
        %v2044 = vmax.f32 %v1811, 0.0
        %v2045 = vmax.f32 %v1813, 0.0
        %v2046 = vmax.f32 %v1815, 0.0
        %v2047 = vmax.f32 %v1819, 0.0
        %v2048 = vmax.f32 %v1821, 0.0
        %v2049 = vmax.f32 %v1823, 0.0
        %v2050 = vmax.f32 %v1825, 0.0
        %v2051 = vmax.f32 %v1829, 0.0
        %v2052 = vmax.f32 %v1831, 0.0
        %v2053 = vmax.f32 %v1833, 0.0
        %v2054 = vmax.f32 %v1835, 0.0
        %v2055 = vmax.f32 %v1839, 0.0
        %v2056 = vmax.f32 %v1841, 0.0
        %v2057 = vmax.f32 %v1843, 0.0
        %v2058 = vmax.f32 %v1845, 0.0
        %v2059 = vmax.f32 %v1849, 0.0
        %v2060 = vmax.f32 %v1851, 0.0
        %v2061 = vmax.f32 %v1853, 0.0
        %v2062 = vmax.f32 %v1855, 0.0
        %v2063 = vmax.f32 %v1859, 0.0
        %v2064 = vmax.f32 %v1861, 0.0
        %v2065 = vmax.f32 %v1863, 0.0
        %v2066 = vmax.f32 %v1865, 0.0
        %v2067 = vmax.f32 %v1869, 0.0
        %v2068 = vmax.f32 %v1871, 0.0
        %v2069 = vmax.f32 %v1873, 0.0
        %v2070 = vmax.f32 %v1875, 0.0
        %v2071 = vmax.f32 %v1879, 0.0
        %v2072 = vmax.f32 %v1881, 0.0
        %v2073 = vmax.f32 %v1883, 0.0
        %v2074 = vmax.f32 %v1885, 0.0
        %v2075 = vmax.f32 %v1889, 0.0
        %v2076 = vmax.f32 %v1891, 0.0
        %v2077 = vmax.f32 %v1893, 0.0
        %v2078 = vmax.f32 %v1895, 0.0
        %v2079 = vmax.f32 %v1899, 0.0
        %v2080 = vmax.f32 %v1901, 0.0
        %v2081 = vmax.f32 %v1903, 0.0
        %v2082 = vmax.f32 %v1905, 0.0
        %v2083 = vmax.f32 %v1909, 0.0
        %v2084 = vmax.f32 %v1911, 0.0
        %v2085 = vmax.f32 %v1913, 0.0
        %v2086 = vmax.f32 %v1915, 0.0
        %v2087 = vmax.f32 %v1919, 0.0
        %v2088 = vmax.f32 %v1921, 0.0
        %v2089 = vmax.f32 %v1923, 0.0
        %v2090 = vmax.f32 %v1925, 0.0
        %v2091 = vmax.f32 %v1929, 0.0
        %v2092 = vmax.f32 %v1931, 0.0
        %v2093 = vmax.f32 %v1933, 0.0
        %v2094 = vmax.f32 %v1935, 0.0
        %v2095 = vmax.f32 %v1939, 0.0
        %v2096 = vmax.f32 %v1941, 0.0
        %v2097 = vmax.f32 %v1943, 0.0
        %v2098 = vmax.f32 %v1945, 0.0
        %v2099 = vmax.f32 %v1949, 0.0
        %v2100 = vmax.f32 %v1951, 0.0
        %v2101 = vmax.f32 %v1953, 0.0
        %v2102 = vmax.f32 %v1955, 0.0
        %v2103 = vmax.f32 %v1959, 0.0
        %v2104 = vmax.f32 %v1961, 0.0
        %v2105 = vmax.f32 %v1963, 0.0
        %v2106 = vmax.f32 %v1965, 0.0
        %v2107 = vmax.f32 %v1969, 0.0
        %v2108 = vmax.f32 %v1971, 0.0
        %v2109 = vmax.f32 %v1973, 0.0
        %v2110 = vmax.f32 %v1975, 0.0
        %v2111 = vmax.f32 %v1979, 0.0
        %v2112 = vmax.f32 %v1981, 0.0
        %v2113 = vmax.f32 %v1983, 0.0
        %v2114 = vmax.f32 %v1985, 0.0
        %v2115 = vld [vmem:[%s5] sm:$0xff]
        %v2116 = vld [vmem:[%s5 + $0x8] sm:$0xff]
        %v2117 = vld [vmem:[%s5 + $0x10] sm:$0xff]
        %v2118 = vld [vmem:[%s5 + $0x18] sm:$0xff]
        %v2119 = vld [vmem:[%s5 + $0x20] sm:$0xff]
        %v2120 = vld [vmem:[%s5 + $0x28] sm:$0xff]
        %v2121 = vld [vmem:[%s5 + $0x30] sm:$0xff]
        %v2122 = vld [vmem:[%s5 + $0x38] sm:$0xff]
        %v2123 = vld [vmem:[%s5 + $0x40] sm:$0xff]
        %v2124 = vld [vmem:[%s5 + $0x48] sm:$0xff]
        %v2125 = vld [vmem:[%s5 + $0x50] sm:$0xff]
        %v2126 = vld [vmem:[%s5 + $0x58] sm:$0xff]
        %v2127 = vld [vmem:[%s5 + $0x60] sm:$0xff]
        %v2128 = vld [vmem:[%s5 + $0x68] sm:$0xff]
        %v2129 = vld [vmem:[%s5 + $0x70] sm:$0xff]
        %v2130 = vld [vmem:[%s5 + $0x78] sm:$0xff]
        %v2131 = vld [vmem:[%s5 + $0x80] sm:$0xff]
        %v2132 = vld [vmem:[%s5 + $0x88] sm:$0xff]
        %v2133 = vld [vmem:[%s5 + $0x90] sm:$0xff]
        %v2134 = vld [vmem:[%s5 + $0x98] sm:$0xff]
        %v2135 = vld [vmem:[%s5 + $0xa0] sm:$0xff]
        %v2136 = vld [vmem:[%s5 + $0xa8] sm:$0xff]
        %v2137 = vld [vmem:[%s5 + $0xb0] sm:$0xff]
        %v2138 = vld [vmem:[%s5 + $0xb8] sm:$0xff]
        %v2139 = vld [vmem:[%s5 + $0xc0] sm:$0xff]
        %v2140 = vld [vmem:[%s5 + $0xc8] sm:$0xff]
        %v2141 = vld [vmem:[%s5 + $0xd0] sm:$0xff]
        %v2142 = vld [vmem:[%s5 + $0xd8] sm:$0xff]
        %v2143 = vld [vmem:[%s5 + $0xe0] sm:$0xff]
        %v2144 = vld [vmem:[%s5 + $0xe8] sm:$0xff]
        %v2145 = vld [vmem:[%s5 + $0xf0] sm:$0xff]
        %v2146 = vld [vmem:[%s5 + $0xf8] sm:$0xff]
        %v2147 = vld [vmem:[%s6] sm:$0x3]
        %v2148 = vpack.c.bf16 %v1989, %v1987
        %v2149 = vpack.c.bf16 %v1990, %v1988
        %v2150 = vpack.c.bf16 %v1993, %v1991
        %v2151 = vpack.c.bf16 %v1994, %v1992
        %v2152 = vpack.c.bf16 %v1997, %v1995
        %v2153 = vpack.c.bf16 %v1998, %v1996
        %v2154 = vpack.c.bf16 %v2001, %v1999
        %v2155 = vpack.c.bf16 %v2002, %v2000
        %v2156 = vpack.c.bf16 %v2005, %v2003
        %v2157 = vpack.c.bf16 %v2006, %v2004
        %v2158 = vpack.c.bf16 %v2009, %v2007
        %v2159 = vpack.c.bf16 %v2010, %v2008
        %v2160 = vpack.c.bf16 %v2013, %v2011
        %v2161 = vpack.c.bf16 %v2014, %v2012
        %v2162 = vpack.c.bf16 %v2017, %v2015
        %v2163 = vpack.c.bf16 %v2018, %v2016
        %v2164 = vpack.c.bf16 %v2021, %v2019
        %v2165 = vpack.c.bf16 %v2022, %v2020
        %v2166 = vpack.c.bf16 %v2025, %v2023
        %v2167 = vpack.c.bf16 %v2026, %v2024
        %v2168 = vpack.c.bf16 %v2029, %v2027
        %v2169 = vpack.c.bf16 %v2030, %v2028
        %v2170 = vpack.c.bf16 %v2033, %v2031
        %v2171 = vpack.c.bf16 %v2034, %v2032
        %v2172 = vpack.c.bf16 %v2037, %v2035
        %v2173 = vpack.c.bf16 %v2038, %v2036
        %v2174 = vpack.c.bf16 %v2041, %v2039
        %v2175 = vpack.c.bf16 %v2042, %v2040
        %v2176 = vpack.c.bf16 %v2045, %v2043
        %v2177 = vpack.c.bf16 %v2046, %v2044
        %v2178 = vpack.c.bf16 %v2049, %v2047
        %v2179 = vpack.c.bf16 %v2050, %v2048
        %v2180 = vpack.c.bf16 %v2053, %v2051
        %v2181 = vpack.c.bf16 %v2054, %v2052
        %v2182 = vpack.c.bf16 %v2057, %v2055
        %v2183 = vpack.c.bf16 %v2058, %v2056
        %v2184 = vpack.c.bf16 %v2061, %v2059
        %v2185 = vpack.c.bf16 %v2062, %v2060
        %v2186 = vpack.c.bf16 %v2065, %v2063
        %v2187 = vpack.c.bf16 %v2066, %v2064
        %v2188 = vpack.c.bf16 %v2069, %v2067
        %v2189 = vpack.c.bf16 %v2070, %v2068
        %v2190 = vpack.c.bf16 %v2073, %v2071
        %v2191 = vpack.c.bf16 %v2074, %v2072
        %v2192 = vpack.c.bf16 %v2077, %v2075
        %v2193 = vpack.c.bf16 %v2078, %v2076
        %v2194 = vpack.c.bf16 %v2081, %v2079
        %v2195 = vpack.c.bf16 %v2082, %v2080
        %v2196 = vpack.c.bf16 %v2085, %v2083
        %v2197 = vpack.c.bf16 %v2086, %v2084
        %v2198 = vpack.c.bf16 %v2089, %v2087
        %v2199 = vpack.c.bf16 %v2090, %v2088
        %v2200 = vpack.c.bf16 %v2093, %v2091
        %v2201 = vpack.c.bf16 %v2094, %v2092
        %v2202 = vpack.c.bf16 %v2097, %v2095
        %v2203 = vpack.c.bf16 %v2098, %v2096
        %v2204 = vpack.c.bf16 %v2101, %v2099
        %v2205 = vpack.c.bf16 %v2102, %v2100
        %v2206 = vpack.c.bf16 %v2105, %v2103
        %v2207 = vpack.c.bf16 %v2106, %v2104
        %v2208 = vpack.c.bf16 %v2109, %v2107
        %v2209 = vpack.c.bf16 %v2110, %v2108
        %v2210 = vpack.c.bf16 %v2113, %v2111
        %v2211 = vpack.c.bf16 %v2114, %v2112
        %v2213 = vlaneseq
        %v2214 = vshrl.u32 %v2213, 7
        %v2215 = vsub.s32 0, %v2214
        %v2216 = vrot.slane %v2147, %v2215
        %v2217 = vlaneseq
        %v2218 = vshrl.u32 %v2217, 7
        %v2219 = vsub.s32 1, %v2218
        %v2220 = vrot.slane %v2147, %v2219
        %v2255 = vunpack.c.l.b16 %v2115
        %v2256 = vunpack.c.h.b16 %v2115
        %v2257 = vunpack.c.l.b16 %v2116
        %v2258 = vunpack.c.h.b16 %v2116
        %v2259 = vunpack.c.l.b16 %v2117
        %v2260 = vunpack.c.h.b16 %v2117
        %v2261 = vunpack.c.l.b16 %v2118
        %v2262 = vunpack.c.h.b16 %v2118
        %v2263 = vunpack.c.l.b16 %v2119
        %v2264 = vunpack.c.h.b16 %v2119
        %v2265 = vunpack.c.l.b16 %v2120
        %v2266 = vunpack.c.h.b16 %v2120
        %v2267 = vunpack.c.l.b16 %v2121
        %v2268 = vunpack.c.h.b16 %v2121
        %v2269 = vunpack.c.l.b16 %v2122
        %v2270 = vunpack.c.h.b16 %v2122
        %v2271 = vunpack.c.l.b16 %v2123
        %v2272 = vunpack.c.h.b16 %v2123
        %v2273 = vunpack.c.l.b16 %v2124
        %v2274 = vunpack.c.h.b16 %v2124
        %v2275 = vunpack.c.l.b16 %v2125
        %v2276 = vunpack.c.h.b16 %v2125
        %v2277 = vunpack.c.l.b16 %v2126
        %v2278 = vunpack.c.h.b16 %v2126
        %v2279 = vunpack.c.l.b16 %v2127
        %v2280 = vunpack.c.h.b16 %v2127
        %v2281 = vunpack.c.l.b16 %v2128
        %v2282 = vunpack.c.h.b16 %v2128
        %v2283 = vunpack.c.l.b16 %v2129
        %v2284 = vunpack.c.h.b16 %v2129
        %v2285 = vunpack.c.l.b16 %v2130
        %v2286 = vunpack.c.h.b16 %v2130
        %v2287 = vunpack.c.l.b16 %v2131
        %v2288 = vunpack.c.h.b16 %v2131
        %v2289 = vunpack.c.l.b16 %v2132
        %v2290 = vunpack.c.h.b16 %v2132
        %v2291 = vunpack.c.l.b16 %v2133
        %v2292 = vunpack.c.h.b16 %v2133
        %v2293 = vunpack.c.l.b16 %v2134
        %v2294 = vunpack.c.h.b16 %v2134
        %v2295 = vunpack.c.l.b16 %v2135
        %v2296 = vunpack.c.h.b16 %v2135
        %v2297 = vunpack.c.l.b16 %v2136
        %v2298 = vunpack.c.h.b16 %v2136
        %v2299 = vunpack.c.l.b16 %v2137
        %v2300 = vunpack.c.h.b16 %v2137
        %v2301 = vunpack.c.l.b16 %v2138
        %v2302 = vunpack.c.h.b16 %v2138
        %v2303 = vunpack.c.l.b16 %v2139
        %v2304 = vunpack.c.h.b16 %v2139
        %v2305 = vunpack.c.l.b16 %v2140
        %v2306 = vunpack.c.h.b16 %v2140
        %v2307 = vunpack.c.l.b16 %v2141
        %v2308 = vunpack.c.h.b16 %v2141
        %v2309 = vunpack.c.l.b16 %v2142
        %v2310 = vunpack.c.h.b16 %v2142
        %v2311 = vunpack.c.l.b16 %v2143
        %v2312 = vunpack.c.h.b16 %v2143
        %v2313 = vunpack.c.l.b16 %v2144
        %v2314 = vunpack.c.h.b16 %v2144
        %v2315 = vunpack.c.l.b16 %v2145
        %v2316 = vunpack.c.h.b16 %v2145
        %v2317 = vunpack.c.l.b16 %v2146
        %v2318 = vunpack.c.h.b16 %v2146
        %v2319 = vpack.c.b16 %v2257, %v2255
        %v2320 = vpack.c.b16 %v2258, %v2256
        %v2321 = vpack.c.b16 %v2261, %v2259
        %v2322 = vpack.c.b16 %v2262, %v2260
        %v2323 = vpack.c.b16 %v2265, %v2263
        %v2324 = vpack.c.b16 %v2266, %v2264
        %v2325 = vpack.c.b16 %v2269, %v2267
        %v2326 = vpack.c.b16 %v2270, %v2268
        %v2327 = vpack.c.b16 %v2273, %v2271
        %v2328 = vpack.c.b16 %v2274, %v2272
        %v2329 = vpack.c.b16 %v2277, %v2275
        %v2330 = vpack.c.b16 %v2278, %v2276
        %v2331 = vpack.c.b16 %v2281, %v2279
        %v2332 = vpack.c.b16 %v2282, %v2280
        %v2333 = vpack.c.b16 %v2285, %v2283
        %v2334 = vpack.c.b16 %v2286, %v2284
        %v2335 = vpack.c.b16 %v2289, %v2287
        %v2336 = vpack.c.b16 %v2290, %v2288
        %v2337 = vpack.c.b16 %v2293, %v2291
        %v2338 = vpack.c.b16 %v2294, %v2292
        %v2339 = vpack.c.b16 %v2297, %v2295
        %v2340 = vpack.c.b16 %v2298, %v2296
        %v2341 = vpack.c.b16 %v2301, %v2299
        %v2342 = vpack.c.b16 %v2302, %v2300
        %v2343 = vpack.c.b16 %v2305, %v2303
        %v2344 = vpack.c.b16 %v2306, %v2304
        %v2345 = vpack.c.b16 %v2309, %v2307
        %v2346 = vpack.c.b16 %v2310, %v2308
        %v2347 = vpack.c.b16 %v2313, %v2311
        %v2348 = vpack.c.b16 %v2314, %v2312
        %v2349 = vpack.c.b16 %v2317, %v2315
        %v2350 = vpack.c.b16 %v2318, %v2316
        %2383 = vmatprep.subr.bf16.mxu0 %v2334
        %2384 = vmatpush1.bf16.msra.mxu0 %v2333
        %2385 = vmatprep.subr.bf16.mxu0 %v2332
        %2386 = vmatpush1.bf16.msra.mxu0 %v2331
        %2387 = vmatprep.subr.bf16.mxu0 %v2330
        %2388 = vmatpush1.bf16.msra.mxu0 %v2329
        %2389 = vmatprep.subr.bf16.mxu0 %v2328
        %2390 = vmatpush1.bf16.msra.mxu0 %v2327
        %2391 = vmatprep.subr.bf16.mxu0 %v2326
        %2392 = vmatpush1.bf16.msra.mxu0 %v2325
        %2393 = vmatprep.subr.bf16.mxu0 %v2324
        %2394 = vmatpush1.bf16.msra.mxu0 %v2323
        %2395 = vmatprep.subr.bf16.mxu0 %v2322
        %2396 = vmatpush1.bf16.msra.mxu0 %v2321
        %2397 = vmatprep.subr.bf16.mxu0 %v2320
        %2398 = vmatpush1.bf16.msra.mxu0 %v2319
        %2399 = vmatprep.subr.bf16.mxu0 %v2350
        %2400 = vmatpush2.bf16.msra.mxu0 %v2349
        %2401 = vmatprep.subr.bf16.mxu0 %v2348
        %2402 = vmatpush2.bf16.msra.mxu0 %v2347
        %2403 = vmatprep.subr.bf16.mxu0 %v2346
        %2404 = vmatpush2.bf16.msra.mxu0 %v2345
        %2405 = vmatprep.subr.bf16.mxu0 %v2344
        %2406 = vmatpush2.bf16.msra.mxu0 %v2343
        %2407 = vmatprep.subr.bf16.mxu0 %v2342
        %2408 = vmatpush2.bf16.msra.mxu0 %v2341
        %2409 = vmatprep.subr.bf16.mxu0 %v2340
        %2410 = vmatpush2.bf16.msra.mxu0 %v2339
        %2411 = vmatprep.subr.bf16.mxu0 %v2338
        %2412 = vmatpush2.bf16.msra.mxu0 %v2337
        %2413 = vmatprep.subr.bf16.mxu0 %v2336
        %2414 = vmatpush2.bf16.msra.mxu0 %v2335
        %2415 = vmatprep.mubr.bf16.mxu0 %v2149
        %2416 = vmatmul.mubr.bf16.gmra.mxu0 %v2148
        %v2417 = vpop.f32.mrf.mxu0
        %v2418 = vadd.f32 %v2216, %v2417
        %v2419 = vpop.f32.mrf.mxu0
        %v2420 = vadd.f32 %v2220, %v2419
        %v2421 = vpop.f32.mrf.mxu0
        %v2422 = vadd.f32 %v2216, %v2421
        %v2423 = vpop.f32.mrf.mxu0
        %v2424 = vadd.f32 %v2220, %v2423
        %2425 = vmatprep.mubr.bf16.mxu0 %v2151
        %2426 = vmatmul.mubr.bf16.gmra.mxu0 %v2150
        %v2427 = vpop.f32.mrf.mxu0
        %v2428 = vadd.f32 %v2216, %v2427
        %v2429 = vpop.f32.mrf.mxu0
        %v2430 = vadd.f32 %v2220, %v2429
        %v2431 = vpop.f32.mrf.mxu0
        %v2432 = vadd.f32 %v2216, %v2431
        %v2433 = vpop.f32.mrf.mxu0
        %v2434 = vadd.f32 %v2220, %v2433
        %2435 = vmatprep.mubr.bf16.mxu0 %v2153
        %2436 = vmatmul.mubr.bf16.gmra.mxu0 %v2152
        %v2437 = vpop.f32.mrf.mxu0
        %v2438 = vadd.f32 %v2216, %v2437
        %v2439 = vpop.f32.mrf.mxu0
        %v2440 = vadd.f32 %v2220, %v2439
        %v2441 = vpop.f32.mrf.mxu0
        %v2442 = vadd.f32 %v2216, %v2441
        %v2443 = vpop.f32.mrf.mxu0
        %v2444 = vadd.f32 %v2220, %v2443
        %2445 = vmatprep.mubr.bf16.mxu0 %v2155
        %2446 = vmatmul.mubr.bf16.gmra.mxu0 %v2154
        %v2447 = vpop.f32.mrf.mxu0
        %v2448 = vadd.f32 %v2216, %v2447
        %v2449 = vpop.f32.mrf.mxu0
        %v2450 = vadd.f32 %v2220, %v2449
        %v2451 = vpop.f32.mrf.mxu0
        %v2452 = vadd.f32 %v2216, %v2451
        %v2453 = vpop.f32.mrf.mxu0
        %v2454 = vadd.f32 %v2220, %v2453
        %2455 = vmatprep.mubr.bf16.mxu0 %v2157
        %2456 = vmatmul.mubr.bf16.gmra.mxu0 %v2156
        %v2457 = vpop.f32.mrf.mxu0
        %v2458 = vadd.f32 %v2216, %v2457
        %v2459 = vpop.f32.mrf.mxu0
        %v2460 = vadd.f32 %v2220, %v2459
        %v2461 = vpop.f32.mrf.mxu0
        %v2462 = vadd.f32 %v2216, %v2461
        %v2463 = vpop.f32.mrf.mxu0
        %v2464 = vadd.f32 %v2220, %v2463
        %2465 = vmatprep.mubr.bf16.mxu0 %v2159
        %2466 = vmatmul.mubr.bf16.gmra.mxu0 %v2158
        %v2467 = vpop.f32.mrf.mxu0
        %v2468 = vadd.f32 %v2216, %v2467
        %v2469 = vpop.f32.mrf.mxu0
        %v2470 = vadd.f32 %v2220, %v2469
        %v2471 = vpop.f32.mrf.mxu0
        %v2472 = vadd.f32 %v2216, %v2471
        %v2473 = vpop.f32.mrf.mxu0
        %v2474 = vadd.f32 %v2220, %v2473
        %2475 = vmatprep.mubr.bf16.mxu0 %v2161
        %2476 = vmatmul.mubr.bf16.gmra.mxu0 %v2160
        %v2477 = vpop.f32.mrf.mxu0
        %v2478 = vadd.f32 %v2216, %v2477
        %v2479 = vpop.f32.mrf.mxu0
        %v2480 = vadd.f32 %v2220, %v2479
        %v2481 = vpop.f32.mrf.mxu0
        %v2482 = vadd.f32 %v2216, %v2481
        %v2483 = vpop.f32.mrf.mxu0
        %v2484 = vadd.f32 %v2220, %v2483
        %2485 = vmatprep.mubr.bf16.mxu0 %v2163
        %2486 = vmatmul.mubr.bf16.gmra.mxu0 %v2162
        %v2487 = vpop.f32.mrf.mxu0
        %v2488 = vadd.f32 %v2216, %v2487
        %v2489 = vpop.f32.mrf.mxu0
        %v2490 = vadd.f32 %v2220, %v2489
        %v2491 = vpop.f32.mrf.mxu0
        %v2492 = vadd.f32 %v2216, %v2491
        %v2493 = vpop.f32.mrf.mxu0
        %v2494 = vadd.f32 %v2220, %v2493
        %2495 = vmatprep.mubr.bf16.mxu0 %v2165
        %2496 = vmatmul.mubr.bf16.gmra.mxu0 %v2164
        %v2497 = vpop.f32.mrf.mxu0
        %v2498 = vadd.f32 %v2216, %v2497
        %v2499 = vpop.f32.mrf.mxu0
        %v2500 = vadd.f32 %v2220, %v2499
        %v2501 = vpop.f32.mrf.mxu0
        %v2502 = vadd.f32 %v2216, %v2501
        %v2503 = vpop.f32.mrf.mxu0
        %v2504 = vadd.f32 %v2220, %v2503
        %2505 = vmatprep.mubr.bf16.mxu0 %v2167
        %2506 = vmatmul.mubr.bf16.gmra.mxu0 %v2166
        %v2507 = vpop.f32.mrf.mxu0
        %v2508 = vadd.f32 %v2216, %v2507
        %v2509 = vpop.f32.mrf.mxu0
        %v2510 = vadd.f32 %v2220, %v2509
        %v2511 = vpop.f32.mrf.mxu0
        %v2512 = vadd.f32 %v2216, %v2511
        %v2513 = vpop.f32.mrf.mxu0
        %v2514 = vadd.f32 %v2220, %v2513
        %2515 = vmatprep.mubr.bf16.mxu0 %v2169
        %2516 = vmatmul.mubr.bf16.gmra.mxu0 %v2168
        %v2517 = vpop.f32.mrf.mxu0
        %v2518 = vadd.f32 %v2216, %v2517
        %v2519 = vpop.f32.mrf.mxu0
        %v2520 = vadd.f32 %v2220, %v2519
        %v2521 = vpop.f32.mrf.mxu0
        %v2522 = vadd.f32 %v2216, %v2521
        %v2523 = vpop.f32.mrf.mxu0
        %v2524 = vadd.f32 %v2220, %v2523
        %2525 = vmatprep.mubr.bf16.mxu0 %v2171
        %2526 = vmatmul.mubr.bf16.gmra.mxu0 %v2170
        %v2527 = vpop.f32.mrf.mxu0
        %v2528 = vadd.f32 %v2216, %v2527
        %v2529 = vpop.f32.mrf.mxu0
        %v2530 = vadd.f32 %v2220, %v2529
        %v2531 = vpop.f32.mrf.mxu0
        %v2532 = vadd.f32 %v2216, %v2531
        %v2533 = vpop.f32.mrf.mxu0
        %v2534 = vadd.f32 %v2220, %v2533
        %2535 = vmatprep.mubr.bf16.mxu0 %v2173
        %2536 = vmatmul.mubr.bf16.gmra.mxu0 %v2172
        %v2537 = vpop.f32.mrf.mxu0
        %v2538 = vadd.f32 %v2216, %v2537
        %v2539 = vpop.f32.mrf.mxu0
        %v2540 = vadd.f32 %v2220, %v2539
        %v2541 = vpop.f32.mrf.mxu0
        %v2542 = vadd.f32 %v2216, %v2541
        %v2543 = vpop.f32.mrf.mxu0
        %v2544 = vadd.f32 %v2220, %v2543
        %2545 = vmatprep.mubr.bf16.mxu0 %v2175
        %2546 = vmatmul.mubr.bf16.gmra.mxu0 %v2174
        %v2547 = vpop.f32.mrf.mxu0
        %v2548 = vadd.f32 %v2216, %v2547
        %v2549 = vpop.f32.mrf.mxu0
        %v2550 = vadd.f32 %v2220, %v2549
        %v2551 = vpop.f32.mrf.mxu0
        %v2552 = vadd.f32 %v2216, %v2551
        %v2553 = vpop.f32.mrf.mxu0
        %v2554 = vadd.f32 %v2220, %v2553
        %2555 = vmatprep.mubr.bf16.mxu0 %v2177
        %2556 = vmatmul.mubr.bf16.gmra.mxu0 %v2176
        %v2557 = vpop.f32.mrf.mxu0
        %v2558 = vadd.f32 %v2216, %v2557
        %v2559 = vpop.f32.mrf.mxu0
        %v2560 = vadd.f32 %v2220, %v2559
        %v2561 = vpop.f32.mrf.mxu0
        %v2562 = vadd.f32 %v2216, %v2561
        %v2563 = vpop.f32.mrf.mxu0
        %v2564 = vadd.f32 %v2220, %v2563
        %2565 = vmatprep.mubr.bf16.mxu0 %v2179
        %2566 = vmatmul.mubr.bf16.gmra.mxu0 %v2178
        %v2567 = vpop.f32.mrf.mxu0
        %v2568 = vadd.f32 %v2216, %v2567
        %v2569 = vpop.f32.mrf.mxu0
        %v2570 = vadd.f32 %v2220, %v2569
        %v2571 = vpop.f32.mrf.mxu0
        %v2572 = vadd.f32 %v2216, %v2571
        %v2573 = vpop.f32.mrf.mxu0
        %v2574 = vadd.f32 %v2220, %v2573
        %2575 = vmatprep.mubr.bf16.mxu0 %v2181
        %2576 = vmatmul.mubr.bf16.gmra.mxu0 %v2180
        %v2577 = vpop.f32.mrf.mxu0
        %v2578 = vadd.f32 %v2216, %v2577
        %v2579 = vpop.f32.mrf.mxu0
        %v2580 = vadd.f32 %v2220, %v2579
        %v2581 = vpop.f32.mrf.mxu0
        %v2582 = vadd.f32 %v2216, %v2581
        %v2583 = vpop.f32.mrf.mxu0
        %v2584 = vadd.f32 %v2220, %v2583
        %2585 = vmatprep.mubr.bf16.mxu0 %v2183
        %2586 = vmatmul.mubr.bf16.gmra.mxu0 %v2182
        %v2587 = vpop.f32.mrf.mxu0
        %v2588 = vadd.f32 %v2216, %v2587
        %v2589 = vpop.f32.mrf.mxu0
        %v2590 = vadd.f32 %v2220, %v2589
        %v2591 = vpop.f32.mrf.mxu0
        %v2592 = vadd.f32 %v2216, %v2591
        %v2593 = vpop.f32.mrf.mxu0
        %v2594 = vadd.f32 %v2220, %v2593
        %2595 = vmatprep.mubr.bf16.mxu0 %v2185
        %2596 = vmatmul.mubr.bf16.gmra.mxu0 %v2184
        %v2597 = vpop.f32.mrf.mxu0
        %v2598 = vadd.f32 %v2216, %v2597
        %v2599 = vpop.f32.mrf.mxu0
        %v2600 = vadd.f32 %v2220, %v2599
        %v2601 = vpop.f32.mrf.mxu0
        %v2602 = vadd.f32 %v2216, %v2601
        %v2603 = vpop.f32.mrf.mxu0
        %v2604 = vadd.f32 %v2220, %v2603
        %2605 = vmatprep.mubr.bf16.mxu0 %v2187
        %2606 = vmatmul.mubr.bf16.gmra.mxu0 %v2186
        %v2607 = vpop.f32.mrf.mxu0
        %v2608 = vadd.f32 %v2216, %v2607
        %v2609 = vpop.f32.mrf.mxu0
        %v2610 = vadd.f32 %v2220, %v2609
        %v2611 = vpop.f32.mrf.mxu0
        %v2612 = vadd.f32 %v2216, %v2611
        %v2613 = vpop.f32.mrf.mxu0
        %v2614 = vadd.f32 %v2220, %v2613
        %2615 = vmatprep.mubr.bf16.mxu0 %v2189
        %2616 = vmatmul.mubr.bf16.gmra.mxu0 %v2188
        %v2617 = vpop.f32.mrf.mxu0
        %v2618 = vadd.f32 %v2216, %v2617
        %v2619 = vpop.f32.mrf.mxu0
        %v2620 = vadd.f32 %v2220, %v2619
        %v2621 = vpop.f32.mrf.mxu0
        %v2622 = vadd.f32 %v2216, %v2621
        %v2623 = vpop.f32.mrf.mxu0
        %v2624 = vadd.f32 %v2220, %v2623
        %2625 = vmatprep.mubr.bf16.mxu0 %v2191
        %2626 = vmatmul.mubr.bf16.gmra.mxu0 %v2190
        %v2627 = vpop.f32.mrf.mxu0
        %v2628 = vadd.f32 %v2216, %v2627
        %v2629 = vpop.f32.mrf.mxu0
        %v2630 = vadd.f32 %v2220, %v2629
        %v2631 = vpop.f32.mrf.mxu0
        %v2632 = vadd.f32 %v2216, %v2631
        %v2633 = vpop.f32.mrf.mxu0
        %v2634 = vadd.f32 %v2220, %v2633
        %2635 = vmatprep.mubr.bf16.mxu0 %v2193
        %2636 = vmatmul.mubr.bf16.gmra.mxu0 %v2192
        %v2637 = vpop.f32.mrf.mxu0
        %v2638 = vadd.f32 %v2216, %v2637
        %v2639 = vpop.f32.mrf.mxu0
        %v2640 = vadd.f32 %v2220, %v2639
        %v2641 = vpop.f32.mrf.mxu0
        %v2642 = vadd.f32 %v2216, %v2641
        %v2643 = vpop.f32.mrf.mxu0
        %v2644 = vadd.f32 %v2220, %v2643
        %2645 = vmatprep.mubr.bf16.mxu0 %v2195
        %2646 = vmatmul.mubr.bf16.gmra.mxu0 %v2194
        %v2647 = vpop.f32.mrf.mxu0
        %v2648 = vadd.f32 %v2216, %v2647
        %v2649 = vpop.f32.mrf.mxu0
        %v2650 = vadd.f32 %v2220, %v2649
        %v2651 = vpop.f32.mrf.mxu0
        %v2652 = vadd.f32 %v2216, %v2651
        %v2653 = vpop.f32.mrf.mxu0
        %v2654 = vadd.f32 %v2220, %v2653
        %2655 = vmatprep.mubr.bf16.mxu0 %v2197
        %2656 = vmatmul.mubr.bf16.gmra.mxu0 %v2196
        %v2657 = vpop.f32.mrf.mxu0
        %v2658 = vadd.f32 %v2216, %v2657
        %v2659 = vpop.f32.mrf.mxu0
        %v2660 = vadd.f32 %v2220, %v2659
        %v2661 = vpop.f32.mrf.mxu0
        %v2662 = vadd.f32 %v2216, %v2661
        %v2663 = vpop.f32.mrf.mxu0
        %v2664 = vadd.f32 %v2220, %v2663
        %2665 = vmatprep.mubr.bf16.mxu0 %v2199
        %2666 = vmatmul.mubr.bf16.gmra.mxu0 %v2198
        %v2667 = vpop.f32.mrf.mxu0
        %v2668 = vadd.f32 %v2216, %v2667
        %v2669 = vpop.f32.mrf.mxu0
        %v2670 = vadd.f32 %v2220, %v2669
        %v2671 = vpop.f32.mrf.mxu0
        %v2672 = vadd.f32 %v2216, %v2671
        %v2673 = vpop.f32.mrf.mxu0
        %v2674 = vadd.f32 %v2220, %v2673
        %2675 = vmatprep.mubr.bf16.mxu0 %v2201
        %2676 = vmatmul.mubr.bf16.gmra.mxu0 %v2200
        %v2677 = vpop.f32.mrf.mxu0
        %v2678 = vadd.f32 %v2216, %v2677
        %v2679 = vpop.f32.mrf.mxu0
        %v2680 = vadd.f32 %v2220, %v2679
        %v2681 = vpop.f32.mrf.mxu0
        %v2682 = vadd.f32 %v2216, %v2681
        %v2683 = vpop.f32.mrf.mxu0
        %v2684 = vadd.f32 %v2220, %v2683
        %2685 = vmatprep.mubr.bf16.mxu0 %v2203
        %2686 = vmatmul.mubr.bf16.gmra.mxu0 %v2202
        %v2687 = vpop.f32.mrf.mxu0
        %v2688 = vadd.f32 %v2216, %v2687
        %v2689 = vpop.f32.mrf.mxu0
        %v2690 = vadd.f32 %v2220, %v2689
        %v2691 = vpop.f32.mrf.mxu0
        %v2692 = vadd.f32 %v2216, %v2691
        %v2693 = vpop.f32.mrf.mxu0
        %v2694 = vadd.f32 %v2220, %v2693
        %2695 = vmatprep.mubr.bf16.mxu0 %v2205
        %2696 = vmatmul.mubr.bf16.gmra.mxu0 %v2204
        %v2697 = vpop.f32.mrf.mxu0
        %v2698 = vadd.f32 %v2216, %v2697
        %v2699 = vpop.f32.mrf.mxu0
        %v2700 = vadd.f32 %v2220, %v2699
        %v2701 = vpop.f32.mrf.mxu0
        %v2702 = vadd.f32 %v2216, %v2701
        %v2703 = vpop.f32.mrf.mxu0
        %v2704 = vadd.f32 %v2220, %v2703
        %2705 = vmatprep.mubr.bf16.mxu0 %v2207
        %2706 = vmatmul.mubr.bf16.gmra.mxu0 %v2206
        %v2707 = vpop.f32.mrf.mxu0
        %v2708 = vadd.f32 %v2216, %v2707
        %v2709 = vpop.f32.mrf.mxu0
        %v2710 = vadd.f32 %v2220, %v2709
        %v2711 = vpop.f32.mrf.mxu0
        %v2712 = vadd.f32 %v2216, %v2711
        %v2713 = vpop.f32.mrf.mxu0
        %v2714 = vadd.f32 %v2220, %v2713
        %2715 = vmatprep.mubr.bf16.mxu0 %v2209
        %2716 = vmatmul.mubr.bf16.gmra.mxu0 %v2208
        %v2717 = vpop.f32.mrf.mxu0
        %v2718 = vadd.f32 %v2216, %v2717
        %v2719 = vpop.f32.mrf.mxu0
        %v2720 = vadd.f32 %v2220, %v2719
        %v2721 = vpop.f32.mrf.mxu0
        %v2722 = vadd.f32 %v2216, %v2721
        %v2723 = vpop.f32.mrf.mxu0
        %v2724 = vadd.f32 %v2220, %v2723
        %2725 = vmatprep.mubr.bf16.mxu0 %v2211
        %2726 = vmatmul.mubr.bf16.gmra.mxu0 %v2210
        %v2727 = vpop.f32.mrf.mxu0
        %v2728 = vadd.f32 %v2216, %v2727
        %v2729 = vpop.f32.mrf.mxu0
        %v2730 = vadd.f32 %v2220, %v2729
        %v2731 = vpop.f32.mrf.mxu0
        %v2732 = vadd.f32 %v2216, %v2731
        %v2733 = vpop.f32.mrf.mxu0
        %v2734 = vadd.f32 %v2220, %v2733
        %2735 = vdwg.mxu0
        %v2736 = vmax.f32 %v2418, 0.0
        %v2737 = vmax.f32 %v2420, 0.0
        %v2738 = vmax.f32 %v2422, 0.0
        %v2739 = vmax.f32 %v2424, 0.0
        %v2740 = vmax.f32 %v2428, 0.0
        %v2741 = vmax.f32 %v2430, 0.0
        %v2742 = vmax.f32 %v2432, 0.0
        %v2743 = vmax.f32 %v2434, 0.0
        %v2744 = vmax.f32 %v2438, 0.0
        %v2745 = vmax.f32 %v2440, 0.0
        %v2746 = vmax.f32 %v2442, 0.0
        %v2747 = vmax.f32 %v2444, 0.0
        %v2748 = vmax.f32 %v2448, 0.0
        %v2749 = vmax.f32 %v2450, 0.0
        %v2750 = vmax.f32 %v2452, 0.0
        %v2751 = vmax.f32 %v2454, 0.0
        %v2752 = vmax.f32 %v2458, 0.0
        %v2753 = vmax.f32 %v2460, 0.0
        %v2754 = vmax.f32 %v2462, 0.0
        %v2755 = vmax.f32 %v2464, 0.0
        %v2756 = vmax.f32 %v2468, 0.0
        %v2757 = vmax.f32 %v2470, 0.0
        %v2758 = vmax.f32 %v2472, 0.0
        %v2759 = vmax.f32 %v2474, 0.0
        %v2760 = vmax.f32 %v2478, 0.0
        %v2761 = vmax.f32 %v2480, 0.0
        %v2762 = vmax.f32 %v2482, 0.0
        %v2763 = vmax.f32 %v2484, 0.0
        %v2764 = vmax.f32 %v2488, 0.0
        %v2765 = vmax.f32 %v2490, 0.0
        %v2766 = vmax.f32 %v2492, 0.0
        %v2767 = vmax.f32 %v2494, 0.0
        %v2768 = vmax.f32 %v2498, 0.0
        %v2769 = vmax.f32 %v2500, 0.0
        %v2770 = vmax.f32 %v2502, 0.0
        %v2771 = vmax.f32 %v2504, 0.0
        %v2772 = vmax.f32 %v2508, 0.0
        %v2773 = vmax.f32 %v2510, 0.0
        %v2774 = vmax.f32 %v2512, 0.0
        %v2775 = vmax.f32 %v2514, 0.0
        %v2776 = vmax.f32 %v2518, 0.0
        %v2777 = vmax.f32 %v2520, 0.0
        %v2778 = vmax.f32 %v2522, 0.0
        %v2779 = vmax.f32 %v2524, 0.0
        %v2780 = vmax.f32 %v2528, 0.0
        %v2781 = vmax.f32 %v2530, 0.0
        %v2782 = vmax.f32 %v2532, 0.0
        %v2783 = vmax.f32 %v2534, 0.0
        %v2784 = vmax.f32 %v2538, 0.0
        %v2785 = vmax.f32 %v2540, 0.0
        %v2786 = vmax.f32 %v2542, 0.0
        %v2787 = vmax.f32 %v2544, 0.0
        %v2788 = vmax.f32 %v2548, 0.0
        %v2789 = vmax.f32 %v2550, 0.0
        %v2790 = vmax.f32 %v2552, 0.0
        %v2791 = vmax.f32 %v2554, 0.0
        %v2792 = vmax.f32 %v2558, 0.0
        %v2793 = vmax.f32 %v2560, 0.0
        %v2794 = vmax.f32 %v2562, 0.0
        %v2795 = vmax.f32 %v2564, 0.0
        %v2796 = vmax.f32 %v2568, 0.0
        %v2797 = vmax.f32 %v2570, 0.0
        %v2798 = vmax.f32 %v2572, 0.0
        %v2799 = vmax.f32 %v2574, 0.0
        %v2800 = vmax.f32 %v2578, 0.0
        %v2801 = vmax.f32 %v2580, 0.0
        %v2802 = vmax.f32 %v2582, 0.0
        %v2803 = vmax.f32 %v2584, 0.0
        %v2804 = vmax.f32 %v2588, 0.0
        %v2805 = vmax.f32 %v2590, 0.0
        %v2806 = vmax.f32 %v2592, 0.0
        %v2807 = vmax.f32 %v2594, 0.0
        %v2808 = vmax.f32 %v2598, 0.0
        %v2809 = vmax.f32 %v2600, 0.0
        %v2810 = vmax.f32 %v2602, 0.0
        %v2811 = vmax.f32 %v2604, 0.0
        %v2812 = vmax.f32 %v2608, 0.0
        %v2813 = vmax.f32 %v2610, 0.0
        %v2814 = vmax.f32 %v2612, 0.0
        %v2815 = vmax.f32 %v2614, 0.0
        %v2816 = vmax.f32 %v2618, 0.0
        %v2817 = vmax.f32 %v2620, 0.0
        %v2818 = vmax.f32 %v2622, 0.0
        %v2819 = vmax.f32 %v2624, 0.0
        %v2820 = vmax.f32 %v2628, 0.0
        %v2821 = vmax.f32 %v2630, 0.0
        %v2822 = vmax.f32 %v2632, 0.0
        %v2823 = vmax.f32 %v2634, 0.0
        %v2824 = vmax.f32 %v2638, 0.0
        %v2825 = vmax.f32 %v2640, 0.0
        %v2826 = vmax.f32 %v2642, 0.0
        %v2827 = vmax.f32 %v2644, 0.0
        %v2828 = vmax.f32 %v2648, 0.0
        %v2829 = vmax.f32 %v2650, 0.0
        %v2830 = vmax.f32 %v2652, 0.0
        %v2831 = vmax.f32 %v2654, 0.0
        %v2832 = vmax.f32 %v2658, 0.0
        %v2833 = vmax.f32 %v2660, 0.0
        %v2834 = vmax.f32 %v2662, 0.0
        %v2835 = vmax.f32 %v2664, 0.0
        %v2836 = vmax.f32 %v2668, 0.0
        %v2837 = vmax.f32 %v2670, 0.0
        %v2838 = vmax.f32 %v2672, 0.0
        %v2839 = vmax.f32 %v2674, 0.0
        %v2840 = vmax.f32 %v2678, 0.0
        %v2841 = vmax.f32 %v2680, 0.0
        %v2842 = vmax.f32 %v2682, 0.0
        %v2843 = vmax.f32 %v2684, 0.0
        %v2844 = vmax.f32 %v2688, 0.0
        %v2845 = vmax.f32 %v2690, 0.0
        %v2846 = vmax.f32 %v2692, 0.0
        %v2847 = vmax.f32 %v2694, 0.0
        %v2848 = vmax.f32 %v2698, 0.0
        %v2849 = vmax.f32 %v2700, 0.0
        %v2850 = vmax.f32 %v2702, 0.0
        %v2851 = vmax.f32 %v2704, 0.0
        %v2852 = vmax.f32 %v2708, 0.0
        %v2853 = vmax.f32 %v2710, 0.0
        %v2854 = vmax.f32 %v2712, 0.0
        %v2855 = vmax.f32 %v2714, 0.0
        %v2856 = vmax.f32 %v2718, 0.0
        %v2857 = vmax.f32 %v2720, 0.0
        %v2858 = vmax.f32 %v2722, 0.0
        %v2859 = vmax.f32 %v2724, 0.0
        %v2860 = vmax.f32 %v2728, 0.0
        %v2861 = vmax.f32 %v2730, 0.0
        %v2862 = vmax.f32 %v2732, 0.0
        %v2863 = vmax.f32 %v2734, 0.0
        %v2864 = vld [vmem:[%s7] sm:$0xff]
        %v2865 = vld [vmem:[%s7 + $0x8] sm:$0xff]
        %v2866 = vld [vmem:[%s7 + $0x10] sm:$0xff]
        %v2867 = vld [vmem:[%s7 + $0x18] sm:$0xff]
        %v2868 = vld [vmem:[%s7 + $0x20] sm:$0xff]
        %v2869 = vld [vmem:[%s7 + $0x28] sm:$0xff]
        %v2870 = vld [vmem:[%s7 + $0x30] sm:$0xff]
        %v2871 = vld [vmem:[%s7 + $0x38] sm:$0xff]
        %v2872 = vld [vmem:[%s7 + $0x40] sm:$0xff]
        %v2873 = vld [vmem:[%s7 + $0x48] sm:$0xff]
        %v2874 = vld [vmem:[%s7 + $0x50] sm:$0xff]
        %v2875 = vld [vmem:[%s7 + $0x58] sm:$0xff]
        %v2876 = vld [vmem:[%s7 + $0x60] sm:$0xff]
        %v2877 = vld [vmem:[%s7 + $0x68] sm:$0xff]
        %v2878 = vld [vmem:[%s7 + $0x70] sm:$0xff]
        %v2879 = vld [vmem:[%s7 + $0x78] sm:$0xff]
        %v2880 = vld [vmem:[%s7 + $0x80] sm:$0xff]
        %v2881 = vld [vmem:[%s7 + $0x88] sm:$0xff]
        %v2882 = vld [vmem:[%s7 + $0x90] sm:$0xff]
        %v2883 = vld [vmem:[%s7 + $0x98] sm:$0xff]
        %v2884 = vld [vmem:[%s7 + $0xa0] sm:$0xff]
        %v2885 = vld [vmem:[%s7 + $0xa8] sm:$0xff]
        %v2886 = vld [vmem:[%s7 + $0xb0] sm:$0xff]
        %v2887 = vld [vmem:[%s7 + $0xb8] sm:$0xff]
        %v2888 = vld [vmem:[%s7 + $0xc0] sm:$0xff]
        %v2889 = vld [vmem:[%s7 + $0xc8] sm:$0xff]
        %v2890 = vld [vmem:[%s7 + $0xd0] sm:$0xff]
        %v2891 = vld [vmem:[%s7 + $0xd8] sm:$0xff]
        %v2892 = vld [vmem:[%s7 + $0xe0] sm:$0xff]
        %v2893 = vld [vmem:[%s7 + $0xe8] sm:$0xff]
        %v2894 = vld [vmem:[%s7 + $0xf0] sm:$0xff]
        %v2895 = vld [vmem:[%s7 + $0xf8] sm:$0xff]
        %v2896 = vld [vmem:[%s8] sm:$0x3]
        %v2897 = vpack.c.bf16 %v2738, %v2736
        %v2898 = vpack.c.bf16 %v2739, %v2737
        %v2899 = vpack.c.bf16 %v2742, %v2740
        %v2900 = vpack.c.bf16 %v2743, %v2741
        %v2901 = vpack.c.bf16 %v2746, %v2744
        %v2902 = vpack.c.bf16 %v2747, %v2745
        %v2903 = vpack.c.bf16 %v2750, %v2748
        %v2904 = vpack.c.bf16 %v2751, %v2749
        %v2905 = vpack.c.bf16 %v2754, %v2752
        %v2906 = vpack.c.bf16 %v2755, %v2753
        %v2907 = vpack.c.bf16 %v2758, %v2756
        %v2908 = vpack.c.bf16 %v2759, %v2757
        %v2909 = vpack.c.bf16 %v2762, %v2760
        %v2910 = vpack.c.bf16 %v2763, %v2761
        %v2911 = vpack.c.bf16 %v2766, %v2764
        %v2912 = vpack.c.bf16 %v2767, %v2765
        %v2913 = vpack.c.bf16 %v2770, %v2768
        %v2914 = vpack.c.bf16 %v2771, %v2769
        %v2915 = vpack.c.bf16 %v2774, %v2772
        %v2916 = vpack.c.bf16 %v2775, %v2773
        %v2917 = vpack.c.bf16 %v2778, %v2776
        %v2918 = vpack.c.bf16 %v2779, %v2777
        %v2919 = vpack.c.bf16 %v2782, %v2780
        %v2920 = vpack.c.bf16 %v2783, %v2781
        %v2921 = vpack.c.bf16 %v2786, %v2784
        %v2922 = vpack.c.bf16 %v2787, %v2785
        %v2923 = vpack.c.bf16 %v2790, %v2788
        %v2924 = vpack.c.bf16 %v2791, %v2789
        %v2925 = vpack.c.bf16 %v2794, %v2792
        %v2926 = vpack.c.bf16 %v2795, %v2793
        %v2927 = vpack.c.bf16 %v2798, %v2796
        %v2928 = vpack.c.bf16 %v2799, %v2797
        %v2929 = vpack.c.bf16 %v2802, %v2800
        %v2930 = vpack.c.bf16 %v2803, %v2801
        %v2931 = vpack.c.bf16 %v2806, %v2804
        %v2932 = vpack.c.bf16 %v2807, %v2805
        %v2933 = vpack.c.bf16 %v2810, %v2808
        %v2934 = vpack.c.bf16 %v2811, %v2809
        %v2935 = vpack.c.bf16 %v2814, %v2812
        %v2936 = vpack.c.bf16 %v2815, %v2813
        %v2937 = vpack.c.bf16 %v2818, %v2816
        %v2938 = vpack.c.bf16 %v2819, %v2817
        %v2939 = vpack.c.bf16 %v2822, %v2820
        %v2940 = vpack.c.bf16 %v2823, %v2821
        %v2941 = vpack.c.bf16 %v2826, %v2824
        %v2942 = vpack.c.bf16 %v2827, %v2825
        %v2943 = vpack.c.bf16 %v2830, %v2828
        %v2944 = vpack.c.bf16 %v2831, %v2829
        %v2945 = vpack.c.bf16 %v2834, %v2832
        %v2946 = vpack.c.bf16 %v2835, %v2833
        %v2947 = vpack.c.bf16 %v2838, %v2836
        %v2948 = vpack.c.bf16 %v2839, %v2837
        %v2949 = vpack.c.bf16 %v2842, %v2840
        %v2950 = vpack.c.bf16 %v2843, %v2841
        %v2951 = vpack.c.bf16 %v2846, %v2844
        %v2952 = vpack.c.bf16 %v2847, %v2845
        %v2953 = vpack.c.bf16 %v2850, %v2848
        %v2954 = vpack.c.bf16 %v2851, %v2849
        %v2955 = vpack.c.bf16 %v2854, %v2852
        %v2956 = vpack.c.bf16 %v2855, %v2853
        %v2957 = vpack.c.bf16 %v2858, %v2856
        %v2958 = vpack.c.bf16 %v2859, %v2857
        %v2959 = vpack.c.bf16 %v2862, %v2860
        %v2960 = vpack.c.bf16 %v2863, %v2861
        %v2962 = vlaneseq
        %v2963 = vshrl.u32 %v2962, 7
        %v2964 = vsub.s32 0, %v2963
        %v2965 = vrot.slane %v2896, %v2964
        %v2966 = vlaneseq
        %v2967 = vshrl.u32 %v2966, 7
        %v2968 = vsub.s32 1, %v2967
        %v2969 = vrot.slane %v2896, %v2968
        %v3004 = vunpack.c.l.b16 %v2864
        %v3005 = vunpack.c.h.b16 %v2864
        %v3006 = vunpack.c.l.b16 %v2865
        %v3007 = vunpack.c.h.b16 %v2865
        %v3008 = vunpack.c.l.b16 %v2866
        %v3009 = vunpack.c.h.b16 %v2866
        %v3010 = vunpack.c.l.b16 %v2867
        %v3011 = vunpack.c.h.b16 %v2867
        %v3012 = vunpack.c.l.b16 %v2868
        %v3013 = vunpack.c.h.b16 %v2868
        %v3014 = vunpack.c.l.b16 %v2869
        %v3015 = vunpack.c.h.b16 %v2869
        %v3016 = vunpack.c.l.b16 %v2870
        %v3017 = vunpack.c.h.b16 %v2870
        %v3018 = vunpack.c.l.b16 %v2871
        %v3019 = vunpack.c.h.b16 %v2871
        %v3020 = vunpack.c.l.b16 %v2872
        %v3021 = vunpack.c.h.b16 %v2872
        %v3022 = vunpack.c.l.b16 %v2873
        %v3023 = vunpack.c.h.b16 %v2873
        %v3024 = vunpack.c.l.b16 %v2874
        %v3025 = vunpack.c.h.b16 %v2874
        %v3026 = vunpack.c.l.b16 %v2875
        %v3027 = vunpack.c.h.b16 %v2875
        %v3028 = vunpack.c.l.b16 %v2876
        %v3029 = vunpack.c.h.b16 %v2876
        %v3030 = vunpack.c.l.b16 %v2877
        %v3031 = vunpack.c.h.b16 %v2877
        %v3032 = vunpack.c.l.b16 %v2878
        %v3033 = vunpack.c.h.b16 %v2878
        %v3034 = vunpack.c.l.b16 %v2879
        %v3035 = vunpack.c.h.b16 %v2879
        %v3036 = vunpack.c.l.b16 %v2880
        %v3037 = vunpack.c.h.b16 %v2880
        %v3038 = vunpack.c.l.b16 %v2881
        %v3039 = vunpack.c.h.b16 %v2881
        %v3040 = vunpack.c.l.b16 %v2882
        %v3041 = vunpack.c.h.b16 %v2882
        %v3042 = vunpack.c.l.b16 %v2883
        %v3043 = vunpack.c.h.b16 %v2883
        %v3044 = vunpack.c.l.b16 %v2884
        %v3045 = vunpack.c.h.b16 %v2884
        %v3046 = vunpack.c.l.b16 %v2885
        %v3047 = vunpack.c.h.b16 %v2885
        %v3048 = vunpack.c.l.b16 %v2886
        %v3049 = vunpack.c.h.b16 %v2886
        %v3050 = vunpack.c.l.b16 %v2887
        %v3051 = vunpack.c.h.b16 %v2887
        %v3052 = vunpack.c.l.b16 %v2888
        %v3053 = vunpack.c.h.b16 %v2888
        %v3054 = vunpack.c.l.b16 %v2889
        %v3055 = vunpack.c.h.b16 %v2889
        %v3056 = vunpack.c.l.b16 %v2890
        %v3057 = vunpack.c.h.b16 %v2890
        %v3058 = vunpack.c.l.b16 %v2891
        %v3059 = vunpack.c.h.b16 %v2891
        %v3060 = vunpack.c.l.b16 %v2892
        %v3061 = vunpack.c.h.b16 %v2892
        %v3062 = vunpack.c.l.b16 %v2893
        %v3063 = vunpack.c.h.b16 %v2893
        %v3064 = vunpack.c.l.b16 %v2894
        %v3065 = vunpack.c.h.b16 %v2894
        %v3066 = vunpack.c.l.b16 %v2895
        %v3067 = vunpack.c.h.b16 %v2895
        %v3068 = vpack.c.b16 %v3006, %v3004
        %v3069 = vpack.c.b16 %v3007, %v3005
        %v3070 = vpack.c.b16 %v3010, %v3008
        %v3071 = vpack.c.b16 %v3011, %v3009
        %v3072 = vpack.c.b16 %v3014, %v3012
        %v3073 = vpack.c.b16 %v3015, %v3013
        %v3074 = vpack.c.b16 %v3018, %v3016
        %v3075 = vpack.c.b16 %v3019, %v3017
        %v3076 = vpack.c.b16 %v3022, %v3020
        %v3077 = vpack.c.b16 %v3023, %v3021
        %v3078 = vpack.c.b16 %v3026, %v3024
        %v3079 = vpack.c.b16 %v3027, %v3025
        %v3080 = vpack.c.b16 %v3030, %v3028
        %v3081 = vpack.c.b16 %v3031, %v3029
        %v3082 = vpack.c.b16 %v3034, %v3032
        %v3083 = vpack.c.b16 %v3035, %v3033
        %v3084 = vpack.c.b16 %v3038, %v3036
        %v3085 = vpack.c.b16 %v3039, %v3037
        %v3086 = vpack.c.b16 %v3042, %v3040
        %v3087 = vpack.c.b16 %v3043, %v3041
        %v3088 = vpack.c.b16 %v3046, %v3044
        %v3089 = vpack.c.b16 %v3047, %v3045
        %v3090 = vpack.c.b16 %v3050, %v3048
        %v3091 = vpack.c.b16 %v3051, %v3049
        %v3092 = vpack.c.b16 %v3054, %v3052
        %v3093 = vpack.c.b16 %v3055, %v3053
        %v3094 = vpack.c.b16 %v3058, %v3056
        %v3095 = vpack.c.b16 %v3059, %v3057
        %v3096 = vpack.c.b16 %v3062, %v3060
        %v3097 = vpack.c.b16 %v3063, %v3061
        %v3098 = vpack.c.b16 %v3066, %v3064
        %v3099 = vpack.c.b16 %v3067, %v3065
        %3132 = vmatprep.subr.bf16.mxu0 %v3083
        %3133 = vmatpush1.bf16.msra.mxu0 %v3082
        %3134 = vmatprep.subr.bf16.mxu0 %v3081
        %3135 = vmatpush1.bf16.msra.mxu0 %v3080
        %3136 = vmatprep.subr.bf16.mxu0 %v3079
        %3137 = vmatpush1.bf16.msra.mxu0 %v3078
        %3138 = vmatprep.subr.bf16.mxu0 %v3077
        %3139 = vmatpush1.bf16.msra.mxu0 %v3076
        %3140 = vmatprep.subr.bf16.mxu0 %v3075
        %3141 = vmatpush1.bf16.msra.mxu0 %v3074
        %3142 = vmatprep.subr.bf16.mxu0 %v3073
        %3143 = vmatpush1.bf16.msra.mxu0 %v3072
        %3144 = vmatprep.subr.bf16.mxu0 %v3071
        %3145 = vmatpush1.bf16.msra.mxu0 %v3070
        %3146 = vmatprep.subr.bf16.mxu0 %v3069
        %3147 = vmatpush1.bf16.msra.mxu0 %v3068
        %3148 = vmatprep.subr.bf16.mxu0 %v3099
        %3149 = vmatpush2.bf16.msra.mxu0 %v3098
        %3150 = vmatprep.subr.bf16.mxu0 %v3097
        %3151 = vmatpush2.bf16.msra.mxu0 %v3096
        %3152 = vmatprep.subr.bf16.mxu0 %v3095
        %3153 = vmatpush2.bf16.msra.mxu0 %v3094
        %3154 = vmatprep.subr.bf16.mxu0 %v3093
        %3155 = vmatpush2.bf16.msra.mxu0 %v3092
        %3156 = vmatprep.subr.bf16.mxu0 %v3091
        %3157 = vmatpush2.bf16.msra.mxu0 %v3090
        %3158 = vmatprep.subr.bf16.mxu0 %v3089
        %3159 = vmatpush2.bf16.msra.mxu0 %v3088
        %3160 = vmatprep.subr.bf16.mxu0 %v3087
        %3161 = vmatpush2.bf16.msra.mxu0 %v3086
        %3162 = vmatprep.subr.bf16.mxu0 %v3085
        %3163 = vmatpush2.bf16.msra.mxu0 %v3084
        %3164 = vmatprep.mubr.bf16.mxu0 %v2898
        %3165 = vmatmul.mubr.bf16.gmra.mxu0 %v2897
        %v3166 = vpop.f32.mrf.mxu0
        %v3167 = vadd.f32 %v2965, %v3166
        %v3168 = vpop.f32.mrf.mxu0
        %v3169 = vadd.f32 %v2969, %v3168
        %v3170 = vpop.f32.mrf.mxu0
        %v3171 = vadd.f32 %v2965, %v3170
        %v3172 = vpop.f32.mrf.mxu0
        %v3173 = vadd.f32 %v2969, %v3172
        %3174 = vmatprep.mubr.bf16.mxu0 %v2900
        %3175 = vmatmul.mubr.bf16.gmra.mxu0 %v2899
        %v3176 = vpop.f32.mrf.mxu0
        %v3177 = vadd.f32 %v2965, %v3176
        %v3178 = vpop.f32.mrf.mxu0
        %v3179 = vadd.f32 %v2969, %v3178
        %v3180 = vpop.f32.mrf.mxu0
        %v3181 = vadd.f32 %v2965, %v3180
        %v3182 = vpop.f32.mrf.mxu0
        %v3183 = vadd.f32 %v2969, %v3182
        %3184 = vmatprep.mubr.bf16.mxu0 %v2902
        %3185 = vmatmul.mubr.bf16.gmra.mxu0 %v2901
        %v3186 = vpop.f32.mrf.mxu0
        %v3187 = vadd.f32 %v2965, %v3186
        %v3188 = vpop.f32.mrf.mxu0
        %v3189 = vadd.f32 %v2969, %v3188
        %v3190 = vpop.f32.mrf.mxu0
        %v3191 = vadd.f32 %v2965, %v3190
        %v3192 = vpop.f32.mrf.mxu0
        %v3193 = vadd.f32 %v2969, %v3192
        %3194 = vmatprep.mubr.bf16.mxu0 %v2904
        %3195 = vmatmul.mubr.bf16.gmra.mxu0 %v2903
        %v3196 = vpop.f32.mrf.mxu0
        %v3197 = vadd.f32 %v2965, %v3196
        %v3198 = vpop.f32.mrf.mxu0
        %v3199 = vadd.f32 %v2969, %v3198
        %v3200 = vpop.f32.mrf.mxu0
        %v3201 = vadd.f32 %v2965, %v3200
        %v3202 = vpop.f32.mrf.mxu0
        %v3203 = vadd.f32 %v2969, %v3202
        %3204 = vmatprep.mubr.bf16.mxu0 %v2906
        %3205 = vmatmul.mubr.bf16.gmra.mxu0 %v2905
        %v3206 = vpop.f32.mrf.mxu0
        %v3207 = vadd.f32 %v2965, %v3206
        %v3208 = vpop.f32.mrf.mxu0
        %v3209 = vadd.f32 %v2969, %v3208
        %v3210 = vpop.f32.mrf.mxu0
        %v3211 = vadd.f32 %v2965, %v3210
        %v3212 = vpop.f32.mrf.mxu0
        %v3213 = vadd.f32 %v2969, %v3212
        %3214 = vmatprep.mubr.bf16.mxu0 %v2908
        %3215 = vmatmul.mubr.bf16.gmra.mxu0 %v2907
        %v3216 = vpop.f32.mrf.mxu0
        %v3217 = vadd.f32 %v2965, %v3216
        %v3218 = vpop.f32.mrf.mxu0
        %v3219 = vadd.f32 %v2969, %v3218
        %v3220 = vpop.f32.mrf.mxu0
        %v3221 = vadd.f32 %v2965, %v3220
        %v3222 = vpop.f32.mrf.mxu0
        %v3223 = vadd.f32 %v2969, %v3222
        %3224 = vmatprep.mubr.bf16.mxu0 %v2910
        %3225 = vmatmul.mubr.bf16.gmra.mxu0 %v2909
        %v3226 = vpop.f32.mrf.mxu0
        %v3227 = vadd.f32 %v2965, %v3226
        %v3228 = vpop.f32.mrf.mxu0
        %v3229 = vadd.f32 %v2969, %v3228
        %v3230 = vpop.f32.mrf.mxu0
        %v3231 = vadd.f32 %v2965, %v3230
        %v3232 = vpop.f32.mrf.mxu0
        %v3233 = vadd.f32 %v2969, %v3232
        %3234 = vmatprep.mubr.bf16.mxu0 %v2912
        %3235 = vmatmul.mubr.bf16.gmra.mxu0 %v2911
        %v3236 = vpop.f32.mrf.mxu0
        %v3237 = vadd.f32 %v2965, %v3236
        %v3238 = vpop.f32.mrf.mxu0
        %v3239 = vadd.f32 %v2969, %v3238
        %v3240 = vpop.f32.mrf.mxu0
        %v3241 = vadd.f32 %v2965, %v3240
        %v3242 = vpop.f32.mrf.mxu0
        %v3243 = vadd.f32 %v2969, %v3242
        %3244 = vmatprep.mubr.bf16.mxu0 %v2914
        %3245 = vmatmul.mubr.bf16.gmra.mxu0 %v2913
        %v3246 = vpop.f32.mrf.mxu0
        %v3247 = vadd.f32 %v2965, %v3246
        %v3248 = vpop.f32.mrf.mxu0
        %v3249 = vadd.f32 %v2969, %v3248
        %v3250 = vpop.f32.mrf.mxu0
        %v3251 = vadd.f32 %v2965, %v3250
        %v3252 = vpop.f32.mrf.mxu0
        %v3253 = vadd.f32 %v2969, %v3252
        %3254 = vmatprep.mubr.bf16.mxu0 %v2916
        %3255 = vmatmul.mubr.bf16.gmra.mxu0 %v2915
        %v3256 = vpop.f32.mrf.mxu0
        %v3257 = vadd.f32 %v2965, %v3256
        %v3258 = vpop.f32.mrf.mxu0
        %v3259 = vadd.f32 %v2969, %v3258
        %v3260 = vpop.f32.mrf.mxu0
        %v3261 = vadd.f32 %v2965, %v3260
        %v3262 = vpop.f32.mrf.mxu0
        %v3263 = vadd.f32 %v2969, %v3262
        %3264 = vmatprep.mubr.bf16.mxu0 %v2918
        %3265 = vmatmul.mubr.bf16.gmra.mxu0 %v2917
        %v3266 = vpop.f32.mrf.mxu0
        %v3267 = vadd.f32 %v2965, %v3266
        %v3268 = vpop.f32.mrf.mxu0
        %v3269 = vadd.f32 %v2969, %v3268
        %v3270 = vpop.f32.mrf.mxu0
        %v3271 = vadd.f32 %v2965, %v3270
        %v3272 = vpop.f32.mrf.mxu0
        %v3273 = vadd.f32 %v2969, %v3272
        %3274 = vmatprep.mubr.bf16.mxu0 %v2920
        %3275 = vmatmul.mubr.bf16.gmra.mxu0 %v2919
        %v3276 = vpop.f32.mrf.mxu0
        %v3277 = vadd.f32 %v2965, %v3276
        %v3278 = vpop.f32.mrf.mxu0
        %v3279 = vadd.f32 %v2969, %v3278
        %v3280 = vpop.f32.mrf.mxu0
        %v3281 = vadd.f32 %v2965, %v3280
        %v3282 = vpop.f32.mrf.mxu0
        %v3283 = vadd.f32 %v2969, %v3282
        %3284 = vmatprep.mubr.bf16.mxu0 %v2922
        %3285 = vmatmul.mubr.bf16.gmra.mxu0 %v2921
        %v3286 = vpop.f32.mrf.mxu0
        %v3287 = vadd.f32 %v2965, %v3286
        %v3288 = vpop.f32.mrf.mxu0
        %v3289 = vadd.f32 %v2969, %v3288
        %v3290 = vpop.f32.mrf.mxu0
        %v3291 = vadd.f32 %v2965, %v3290
        %v3292 = vpop.f32.mrf.mxu0
        %v3293 = vadd.f32 %v2969, %v3292
        %3294 = vmatprep.mubr.bf16.mxu0 %v2924
        %3295 = vmatmul.mubr.bf16.gmra.mxu0 %v2923
        %v3296 = vpop.f32.mrf.mxu0
        %v3297 = vadd.f32 %v2965, %v3296
        %v3298 = vpop.f32.mrf.mxu0
        %v3299 = vadd.f32 %v2969, %v3298
        %v3300 = vpop.f32.mrf.mxu0
        %v3301 = vadd.f32 %v2965, %v3300
        %v3302 = vpop.f32.mrf.mxu0
        %v3303 = vadd.f32 %v2969, %v3302
        %3304 = vmatprep.mubr.bf16.mxu0 %v2926
        %3305 = vmatmul.mubr.bf16.gmra.mxu0 %v2925
        %v3306 = vpop.f32.mrf.mxu0
        %v3307 = vadd.f32 %v2965, %v3306
        %v3308 = vpop.f32.mrf.mxu0
        %v3309 = vadd.f32 %v2969, %v3308
        %v3310 = vpop.f32.mrf.mxu0
        %v3311 = vadd.f32 %v2965, %v3310
        %v3312 = vpop.f32.mrf.mxu0
        %v3313 = vadd.f32 %v2969, %v3312
        %3314 = vmatprep.mubr.bf16.mxu0 %v2928
        %3315 = vmatmul.mubr.bf16.gmra.mxu0 %v2927
        %v3316 = vpop.f32.mrf.mxu0
        %v3317 = vadd.f32 %v2965, %v3316
        %v3318 = vpop.f32.mrf.mxu0
        %v3319 = vadd.f32 %v2969, %v3318
        %v3320 = vpop.f32.mrf.mxu0
        %v3321 = vadd.f32 %v2965, %v3320
        %v3322 = vpop.f32.mrf.mxu0
        %v3323 = vadd.f32 %v2969, %v3322
        %3324 = vmatprep.mubr.bf16.mxu0 %v2930
        %3325 = vmatmul.mubr.bf16.gmra.mxu0 %v2929
        %v3326 = vpop.f32.mrf.mxu0
        %v3327 = vadd.f32 %v2965, %v3326
        %v3328 = vpop.f32.mrf.mxu0
        %v3329 = vadd.f32 %v2969, %v3328
        %v3330 = vpop.f32.mrf.mxu0
        %v3331 = vadd.f32 %v2965, %v3330
        %v3332 = vpop.f32.mrf.mxu0
        %v3333 = vadd.f32 %v2969, %v3332
        %3334 = vmatprep.mubr.bf16.mxu0 %v2932
        %3335 = vmatmul.mubr.bf16.gmra.mxu0 %v2931
        %v3336 = vpop.f32.mrf.mxu0
        %v3337 = vadd.f32 %v2965, %v3336
        %v3338 = vpop.f32.mrf.mxu0
        %v3339 = vadd.f32 %v2969, %v3338
        %v3340 = vpop.f32.mrf.mxu0
        %v3341 = vadd.f32 %v2965, %v3340
        %v3342 = vpop.f32.mrf.mxu0
        %v3343 = vadd.f32 %v2969, %v3342
        %3344 = vmatprep.mubr.bf16.mxu0 %v2934
        %3345 = vmatmul.mubr.bf16.gmra.mxu0 %v2933
        %v3346 = vpop.f32.mrf.mxu0
        %v3347 = vadd.f32 %v2965, %v3346
        %v3348 = vpop.f32.mrf.mxu0
        %v3349 = vadd.f32 %v2969, %v3348
        %v3350 = vpop.f32.mrf.mxu0
        %v3351 = vadd.f32 %v2965, %v3350
        %v3352 = vpop.f32.mrf.mxu0
        %v3353 = vadd.f32 %v2969, %v3352
        %3354 = vmatprep.mubr.bf16.mxu0 %v2936
        %3355 = vmatmul.mubr.bf16.gmra.mxu0 %v2935
        %v3356 = vpop.f32.mrf.mxu0
        %v3357 = vadd.f32 %v2965, %v3356
        %v3358 = vpop.f32.mrf.mxu0
        %v3359 = vadd.f32 %v2969, %v3358
        %v3360 = vpop.f32.mrf.mxu0
        %v3361 = vadd.f32 %v2965, %v3360
        %v3362 = vpop.f32.mrf.mxu0
        %v3363 = vadd.f32 %v2969, %v3362
        %3364 = vmatprep.mubr.bf16.mxu0 %v2938
        %3365 = vmatmul.mubr.bf16.gmra.mxu0 %v2937
        %v3366 = vpop.f32.mrf.mxu0
        %v3367 = vadd.f32 %v2965, %v3366
        %v3368 = vpop.f32.mrf.mxu0
        %v3369 = vadd.f32 %v2969, %v3368
        %v3370 = vpop.f32.mrf.mxu0
        %v3371 = vadd.f32 %v2965, %v3370
        %v3372 = vpop.f32.mrf.mxu0
        %v3373 = vadd.f32 %v2969, %v3372
        %3374 = vmatprep.mubr.bf16.mxu0 %v2940
        %3375 = vmatmul.mubr.bf16.gmra.mxu0 %v2939
        %v3376 = vpop.f32.mrf.mxu0
        %v3377 = vadd.f32 %v2965, %v3376
        %v3378 = vpop.f32.mrf.mxu0
        %v3379 = vadd.f32 %v2969, %v3378
        %v3380 = vpop.f32.mrf.mxu0
        %v3381 = vadd.f32 %v2965, %v3380
        %v3382 = vpop.f32.mrf.mxu0
        %v3383 = vadd.f32 %v2969, %v3382
        %3384 = vmatprep.mubr.bf16.mxu0 %v2942
        %3385 = vmatmul.mubr.bf16.gmra.mxu0 %v2941
        %v3386 = vpop.f32.mrf.mxu0
        %v3387 = vadd.f32 %v2965, %v3386
        %v3388 = vpop.f32.mrf.mxu0
        %v3389 = vadd.f32 %v2969, %v3388
        %v3390 = vpop.f32.mrf.mxu0
        %v3391 = vadd.f32 %v2965, %v3390
        %v3392 = vpop.f32.mrf.mxu0
        %v3393 = vadd.f32 %v2969, %v3392
        %3394 = vmatprep.mubr.bf16.mxu0 %v2944
        %3395 = vmatmul.mubr.bf16.gmra.mxu0 %v2943
        %v3396 = vpop.f32.mrf.mxu0
        %v3397 = vadd.f32 %v2965, %v3396
        %v3398 = vpop.f32.mrf.mxu0
        %v3399 = vadd.f32 %v2969, %v3398
        %v3400 = vpop.f32.mrf.mxu0
        %v3401 = vadd.f32 %v2965, %v3400
        %v3402 = vpop.f32.mrf.mxu0
        %v3403 = vadd.f32 %v2969, %v3402
        %3404 = vmatprep.mubr.bf16.mxu0 %v2946
        %3405 = vmatmul.mubr.bf16.gmra.mxu0 %v2945
        %v3406 = vpop.f32.mrf.mxu0
        %v3407 = vadd.f32 %v2965, %v3406
        %v3408 = vpop.f32.mrf.mxu0
        %v3409 = vadd.f32 %v2969, %v3408
        %v3410 = vpop.f32.mrf.mxu0
        %v3411 = vadd.f32 %v2965, %v3410
        %v3412 = vpop.f32.mrf.mxu0
        %v3413 = vadd.f32 %v2969, %v3412
        %3414 = vmatprep.mubr.bf16.mxu0 %v2948
        %3415 = vmatmul.mubr.bf16.gmra.mxu0 %v2947
        %v3416 = vpop.f32.mrf.mxu0
        %v3417 = vadd.f32 %v2965, %v3416
        %v3418 = vpop.f32.mrf.mxu0
        %v3419 = vadd.f32 %v2969, %v3418
        %v3420 = vpop.f32.mrf.mxu0
        %v3421 = vadd.f32 %v2965, %v3420
        %v3422 = vpop.f32.mrf.mxu0
        %v3423 = vadd.f32 %v2969, %v3422
        %3424 = vmatprep.mubr.bf16.mxu0 %v2950
        %3425 = vmatmul.mubr.bf16.gmra.mxu0 %v2949
        %v3426 = vpop.f32.mrf.mxu0
        %v3427 = vadd.f32 %v2965, %v3426
        %v3428 = vpop.f32.mrf.mxu0
        %v3429 = vadd.f32 %v2969, %v3428
        %v3430 = vpop.f32.mrf.mxu0
        %v3431 = vadd.f32 %v2965, %v3430
        %v3432 = vpop.f32.mrf.mxu0
        %v3433 = vadd.f32 %v2969, %v3432
        %3434 = vmatprep.mubr.bf16.mxu0 %v2952
        %3435 = vmatmul.mubr.bf16.gmra.mxu0 %v2951
        %v3436 = vpop.f32.mrf.mxu0
        %v3437 = vadd.f32 %v2965, %v3436
        %v3438 = vpop.f32.mrf.mxu0
        %v3439 = vadd.f32 %v2969, %v3438
        %v3440 = vpop.f32.mrf.mxu0
        %v3441 = vadd.f32 %v2965, %v3440
        %v3442 = vpop.f32.mrf.mxu0
        %v3443 = vadd.f32 %v2969, %v3442
        %3444 = vmatprep.mubr.bf16.mxu0 %v2954
        %3445 = vmatmul.mubr.bf16.gmra.mxu0 %v2953
        %v3446 = vpop.f32.mrf.mxu0
        %v3447 = vadd.f32 %v2965, %v3446
        %v3448 = vpop.f32.mrf.mxu0
        %v3449 = vadd.f32 %v2969, %v3448
        %v3450 = vpop.f32.mrf.mxu0
        %v3451 = vadd.f32 %v2965, %v3450
        %v3452 = vpop.f32.mrf.mxu0
        %v3453 = vadd.f32 %v2969, %v3452
        %3454 = vmatprep.mubr.bf16.mxu0 %v2956
        %3455 = vmatmul.mubr.bf16.gmra.mxu0 %v2955
        %v3456 = vpop.f32.mrf.mxu0
        %v3457 = vadd.f32 %v2965, %v3456
        %v3458 = vpop.f32.mrf.mxu0
        %v3459 = vadd.f32 %v2969, %v3458
        %v3460 = vpop.f32.mrf.mxu0
        %v3461 = vadd.f32 %v2965, %v3460
        %v3462 = vpop.f32.mrf.mxu0
        %v3463 = vadd.f32 %v2969, %v3462
        %3464 = vmatprep.mubr.bf16.mxu0 %v2958
        %3465 = vmatmul.mubr.bf16.gmra.mxu0 %v2957
        %v3466 = vpop.f32.mrf.mxu0
        %v3467 = vadd.f32 %v2965, %v3466
        %v3468 = vpop.f32.mrf.mxu0
        %v3469 = vadd.f32 %v2969, %v3468
        %v3470 = vpop.f32.mrf.mxu0
        %v3471 = vadd.f32 %v2965, %v3470
        %v3472 = vpop.f32.mrf.mxu0
        %v3473 = vadd.f32 %v2969, %v3472
        %3474 = vmatprep.mubr.bf16.mxu0 %v2960
        %3475 = vmatmul.mubr.bf16.gmra.mxu0 %v2959
        %v3476 = vpop.f32.mrf.mxu0
        %v3477 = vadd.f32 %v2965, %v3476
        %v3478 = vpop.f32.mrf.mxu0
        %v3479 = vadd.f32 %v2969, %v3478
        %v3480 = vpop.f32.mrf.mxu0
        %v3481 = vadd.f32 %v2965, %v3480
        %v3482 = vpop.f32.mrf.mxu0
        %v3483 = vadd.f32 %v2969, %v3482
        %3484 = vdwg.mxu0
        %v3485 = vmax.f32 %v3167, 0.0
        %v3486 = vmax.f32 %v3169, 0.0
        %v3487 = vmax.f32 %v3171, 0.0
        %v3488 = vmax.f32 %v3173, 0.0
        %v3489 = vmax.f32 %v3177, 0.0
        %v3490 = vmax.f32 %v3179, 0.0
        %v3491 = vmax.f32 %v3181, 0.0
        %v3492 = vmax.f32 %v3183, 0.0
        %v3493 = vmax.f32 %v3187, 0.0
        %v3494 = vmax.f32 %v3189, 0.0
        %v3495 = vmax.f32 %v3191, 0.0
        %v3496 = vmax.f32 %v3193, 0.0
        %v3497 = vmax.f32 %v3197, 0.0
        %v3498 = vmax.f32 %v3199, 0.0
        %v3499 = vmax.f32 %v3201, 0.0
        %v3500 = vmax.f32 %v3203, 0.0
        %v3501 = vmax.f32 %v3207, 0.0
        %v3502 = vmax.f32 %v3209, 0.0
        %v3503 = vmax.f32 %v3211, 0.0
        %v3504 = vmax.f32 %v3213, 0.0
        %v3505 = vmax.f32 %v3217, 0.0
        %v3506 = vmax.f32 %v3219, 0.0
        %v3507 = vmax.f32 %v3221, 0.0
        %v3508 = vmax.f32 %v3223, 0.0
        %v3509 = vmax.f32 %v3227, 0.0
        %v3510 = vmax.f32 %v3229, 0.0
        %v3511 = vmax.f32 %v3231, 0.0
        %v3512 = vmax.f32 %v3233, 0.0
        %v3513 = vmax.f32 %v3237, 0.0
        %v3514 = vmax.f32 %v3239, 0.0
        %v3515 = vmax.f32 %v3241, 0.0
        %v3516 = vmax.f32 %v3243, 0.0
        %v3517 = vmax.f32 %v3247, 0.0
        %v3518 = vmax.f32 %v3249, 0.0
        %v3519 = vmax.f32 %v3251, 0.0
        %v3520 = vmax.f32 %v3253, 0.0
        %v3521 = vmax.f32 %v3257, 0.0
        %v3522 = vmax.f32 %v3259, 0.0
        %v3523 = vmax.f32 %v3261, 0.0
        %v3524 = vmax.f32 %v3263, 0.0
        %v3525 = vmax.f32 %v3267, 0.0
        %v3526 = vmax.f32 %v3269, 0.0
        %v3527 = vmax.f32 %v3271, 0.0
        %v3528 = vmax.f32 %v3273, 0.0
        %v3529 = vmax.f32 %v3277, 0.0
        %v3530 = vmax.f32 %v3279, 0.0
        %v3531 = vmax.f32 %v3281, 0.0
        %v3532 = vmax.f32 %v3283, 0.0
        %v3533 = vmax.f32 %v3287, 0.0
        %v3534 = vmax.f32 %v3289, 0.0
        %v3535 = vmax.f32 %v3291, 0.0
        %v3536 = vmax.f32 %v3293, 0.0
        %v3537 = vmax.f32 %v3297, 0.0
        %v3538 = vmax.f32 %v3299, 0.0
        %v3539 = vmax.f32 %v3301, 0.0
        %v3540 = vmax.f32 %v3303, 0.0
        %v3541 = vmax.f32 %v3307, 0.0
        %v3542 = vmax.f32 %v3309, 0.0
        %v3543 = vmax.f32 %v3311, 0.0
        %v3544 = vmax.f32 %v3313, 0.0
        %v3545 = vmax.f32 %v3317, 0.0
        %v3546 = vmax.f32 %v3319, 0.0
        %v3547 = vmax.f32 %v3321, 0.0
        %v3548 = vmax.f32 %v3323, 0.0
        %v3549 = vmax.f32 %v3327, 0.0
        %v3550 = vmax.f32 %v3329, 0.0
        %v3551 = vmax.f32 %v3331, 0.0
        %v3552 = vmax.f32 %v3333, 0.0
        %v3553 = vmax.f32 %v3337, 0.0
        %v3554 = vmax.f32 %v3339, 0.0
        %v3555 = vmax.f32 %v3341, 0.0
        %v3556 = vmax.f32 %v3343, 0.0
        %v3557 = vmax.f32 %v3347, 0.0
        %v3558 = vmax.f32 %v3349, 0.0
        %v3559 = vmax.f32 %v3351, 0.0
        %v3560 = vmax.f32 %v3353, 0.0
        %v3561 = vmax.f32 %v3357, 0.0
        %v3562 = vmax.f32 %v3359, 0.0
        %v3563 = vmax.f32 %v3361, 0.0
        %v3564 = vmax.f32 %v3363, 0.0
        %v3565 = vmax.f32 %v3367, 0.0
        %v3566 = vmax.f32 %v3369, 0.0
        %v3567 = vmax.f32 %v3371, 0.0
        %v3568 = vmax.f32 %v3373, 0.0
        %v3569 = vmax.f32 %v3377, 0.0
        %v3570 = vmax.f32 %v3379, 0.0
        %v3571 = vmax.f32 %v3381, 0.0
        %v3572 = vmax.f32 %v3383, 0.0
        %v3573 = vmax.f32 %v3387, 0.0
        %v3574 = vmax.f32 %v3389, 0.0
        %v3575 = vmax.f32 %v3391, 0.0
        %v3576 = vmax.f32 %v3393, 0.0
        %v3577 = vmax.f32 %v3397, 0.0
        %v3578 = vmax.f32 %v3399, 0.0
        %v3579 = vmax.f32 %v3401, 0.0
        %v3580 = vmax.f32 %v3403, 0.0
        %v3581 = vmax.f32 %v3407, 0.0
        %v3582 = vmax.f32 %v3409, 0.0
        %v3583 = vmax.f32 %v3411, 0.0
        %v3584 = vmax.f32 %v3413, 0.0
        %v3585 = vmax.f32 %v3417, 0.0
        %v3586 = vmax.f32 %v3419, 0.0
        %v3587 = vmax.f32 %v3421, 0.0
        %v3588 = vmax.f32 %v3423, 0.0
        %v3589 = vmax.f32 %v3427, 0.0
        %v3590 = vmax.f32 %v3429, 0.0
        %v3591 = vmax.f32 %v3431, 0.0
        %v3592 = vmax.f32 %v3433, 0.0
        %v3593 = vmax.f32 %v3437, 0.0
        %v3594 = vmax.f32 %v3439, 0.0
        %v3595 = vmax.f32 %v3441, 0.0
        %v3596 = vmax.f32 %v3443, 0.0
        %v3597 = vmax.f32 %v3447, 0.0
        %v3598 = vmax.f32 %v3449, 0.0
        %v3599 = vmax.f32 %v3451, 0.0
        %v3600 = vmax.f32 %v3453, 0.0
        %v3601 = vmax.f32 %v3457, 0.0
        %v3602 = vmax.f32 %v3459, 0.0
        %v3603 = vmax.f32 %v3461, 0.0
        %v3604 = vmax.f32 %v3463, 0.0
        %v3605 = vmax.f32 %v3467, 0.0
        %v3606 = vmax.f32 %v3469, 0.0
        %v3607 = vmax.f32 %v3471, 0.0
        %v3608 = vmax.f32 %v3473, 0.0
        %v3609 = vmax.f32 %v3477, 0.0
        %v3610 = vmax.f32 %v3479, 0.0
        %v3611 = vmax.f32 %v3481, 0.0
        %v3612 = vmax.f32 %v3483, 0.0
        %v3613 = vld [vmem:[%s9] sm:$0xff]
        %v3614 = vld [vmem:[%s9 + $0x8] sm:$0xff]
        %v3615 = vld [vmem:[%s9 + $0x10] sm:$0xff]
        %v3616 = vld [vmem:[%s9 + $0x18] sm:$0xff]
        %v3617 = vld [vmem:[%s9 + $0x20] sm:$0xff]
        %v3618 = vld [vmem:[%s9 + $0x28] sm:$0xff]
        %v3619 = vld [vmem:[%s9 + $0x30] sm:$0xff]
        %v3620 = vld [vmem:[%s9 + $0x38] sm:$0xff]
        %v3621 = vld [vmem:[%s10] sm:$0xff]
        %v3622 = vld [vmem:[%s10 + $0x8] sm:$0xff]
        %v3623 = vld [vmem:[%s10 + $0x10] sm:$0xff]
        %v3624 = vld [vmem:[%s10 + $0x18] sm:$0xff]
        %v3625 = vld [vmem:[%s10 + $0x20] sm:$0xff]
        %v3626 = vld [vmem:[%s10 + $0x28] sm:$0xff]
        %v3627 = vld [vmem:[%s10 + $0x30] sm:$0xff]
        %v3628 = vld [vmem:[%s10 + $0x38] sm:$0xff]
        %v3629 = vld [vmem:[%s10 + $0x40] sm:$0xff]
        %v3630 = vld [vmem:[%s10 + $0x48] sm:$0xff]
        %v3631 = vld [vmem:[%s10 + $0x50] sm:$0xff]
        %v3632 = vld [vmem:[%s10 + $0x58] sm:$0xff]
        %v3633 = vld [vmem:[%s10 + $0x60] sm:$0xff]
        %v3634 = vld [vmem:[%s10 + $0x68] sm:$0xff]
        %v3635 = vld [vmem:[%s10 + $0x70] sm:$0xff]
        %v3636 = vld [vmem:[%s10 + $0x78] sm:$0xff]
        %v3637 = vld [vmem:[%s10 + $0x80] sm:$0xff]
        %v3638 = vld [vmem:[%s10 + $0x88] sm:$0xff]
        %v3639 = vld [vmem:[%s10 + $0x90] sm:$0xff]
        %v3640 = vld [vmem:[%s10 + $0x98] sm:$0xff]
        %v3641 = vld [vmem:[%s10 + $0xa0] sm:$0xff]
        %v3642 = vld [vmem:[%s10 + $0xa8] sm:$0xff]
        %v3643 = vld [vmem:[%s10 + $0xb0] sm:$0xff]
        %v3644 = vld [vmem:[%s10 + $0xb8] sm:$0xff]
        %v3645 = vld [vmem:[%s10 + $0xc0] sm:$0xff]
        %v3646 = vld [vmem:[%s10 + $0xc8] sm:$0xff]
        %v3647 = vld [vmem:[%s10 + $0xd0] sm:$0xff]
        %v3648 = vld [vmem:[%s10 + $0xd8] sm:$0xff]
        %v3649 = vld [vmem:[%s10 + $0xe0] sm:$0xff]
        %v3650 = vld [vmem:[%s10 + $0xe8] sm:$0xff]
        %v3651 = vld [vmem:[%s10 + $0xf0] sm:$0xff]
        %v3652 = vld [vmem:[%s10 + $0xf8] sm:$0xff]
        %v3653 = vld [vmem:[%s11] sm:$0x3]
        %v3654 = vpack.c.bf16 %v3487, %v3485
        %v3655 = vpack.c.bf16 %v3488, %v3486
        %v3656 = vpack.c.bf16 %v3491, %v3489
        %v3657 = vpack.c.bf16 %v3492, %v3490
        %v3658 = vpack.c.bf16 %v3495, %v3493
        %v3659 = vpack.c.bf16 %v3496, %v3494
        %v3660 = vpack.c.bf16 %v3499, %v3497
        %v3661 = vpack.c.bf16 %v3500, %v3498
        %v3662 = vpack.c.bf16 %v3503, %v3501
        %v3663 = vpack.c.bf16 %v3504, %v3502
        %v3664 = vpack.c.bf16 %v3507, %v3505
        %v3665 = vpack.c.bf16 %v3508, %v3506
        %v3666 = vpack.c.bf16 %v3511, %v3509
        %v3667 = vpack.c.bf16 %v3512, %v3510
        %v3668 = vpack.c.bf16 %v3515, %v3513
        %v3669 = vpack.c.bf16 %v3516, %v3514
        %v3670 = vpack.c.bf16 %v3519, %v3517
        %v3671 = vpack.c.bf16 %v3520, %v3518
        %v3672 = vpack.c.bf16 %v3523, %v3521
        %v3673 = vpack.c.bf16 %v3524, %v3522
        %v3674 = vpack.c.bf16 %v3527, %v3525
        %v3675 = vpack.c.bf16 %v3528, %v3526
        %v3676 = vpack.c.bf16 %v3531, %v3529
        %v3677 = vpack.c.bf16 %v3532, %v3530
        %v3678 = vpack.c.bf16 %v3535, %v3533
        %v3679 = vpack.c.bf16 %v3536, %v3534
        %v3680 = vpack.c.bf16 %v3539, %v3537
        %v3681 = vpack.c.bf16 %v3540, %v3538
        %v3682 = vpack.c.bf16 %v3543, %v3541
        %v3683 = vpack.c.bf16 %v3544, %v3542
        %v3684 = vpack.c.bf16 %v3547, %v3545
        %v3685 = vpack.c.bf16 %v3548, %v3546
        %v3686 = vpack.c.bf16 %v3551, %v3549
        %v3687 = vpack.c.bf16 %v3552, %v3550
        %v3688 = vpack.c.bf16 %v3555, %v3553
        %v3689 = vpack.c.bf16 %v3556, %v3554
        %v3690 = vpack.c.bf16 %v3559, %v3557
        %v3691 = vpack.c.bf16 %v3560, %v3558
        %v3692 = vpack.c.bf16 %v3563, %v3561
        %v3693 = vpack.c.bf16 %v3564, %v3562
        %v3694 = vpack.c.bf16 %v3567, %v3565
        %v3695 = vpack.c.bf16 %v3568, %v3566
        %v3696 = vpack.c.bf16 %v3571, %v3569
        %v3697 = vpack.c.bf16 %v3572, %v3570
        %v3698 = vpack.c.bf16 %v3575, %v3573
        %v3699 = vpack.c.bf16 %v3576, %v3574
        %v3700 = vpack.c.bf16 %v3579, %v3577
        %v3701 = vpack.c.bf16 %v3580, %v3578
        %v3702 = vpack.c.bf16 %v3583, %v3581
        %v3703 = vpack.c.bf16 %v3584, %v3582
        %v3704 = vpack.c.bf16 %v3587, %v3585
        %v3705 = vpack.c.bf16 %v3588, %v3586
        %v3706 = vpack.c.bf16 %v3591, %v3589
        %v3707 = vpack.c.bf16 %v3592, %v3590
        %v3708 = vpack.c.bf16 %v3595, %v3593
        %v3709 = vpack.c.bf16 %v3596, %v3594
        %v3710 = vpack.c.bf16 %v3599, %v3597
        %v3711 = vpack.c.bf16 %v3600, %v3598
        %v3712 = vpack.c.bf16 %v3603, %v3601
        %v3713 = vpack.c.bf16 %v3604, %v3602
        %v3714 = vpack.c.bf16 %v3607, %v3605
        %v3715 = vpack.c.bf16 %v3608, %v3606
        %v3716 = vpack.c.bf16 %v3611, %v3609
        %v3717 = vpack.c.bf16 %v3612, %v3610
        %v3750 = vunpack.c.l.b16 %v3621
        %v3751 = vunpack.c.h.b16 %v3621
        %v3752 = vunpack.c.l.b16 %v3622
        %v3753 = vunpack.c.h.b16 %v3622
        %v3754 = vunpack.c.l.b16 %v3623
        %v3755 = vunpack.c.h.b16 %v3623
        %v3756 = vunpack.c.l.b16 %v3624
        %v3757 = vunpack.c.h.b16 %v3624
        %v3758 = vunpack.c.l.b16 %v3625
        %v3759 = vunpack.c.h.b16 %v3625
        %v3760 = vunpack.c.l.b16 %v3626
        %v3761 = vunpack.c.h.b16 %v3626
        %v3762 = vunpack.c.l.b16 %v3627
        %v3763 = vunpack.c.h.b16 %v3627
        %v3764 = vunpack.c.l.b16 %v3628
        %v3765 = vunpack.c.h.b16 %v3628
        %v3766 = vunpack.c.l.b16 %v3629
        %v3767 = vunpack.c.h.b16 %v3629
        %v3768 = vunpack.c.l.b16 %v3630
        %v3769 = vunpack.c.h.b16 %v3630
        %v3770 = vunpack.c.l.b16 %v3631
        %v3771 = vunpack.c.h.b16 %v3631
        %v3772 = vunpack.c.l.b16 %v3632
        %v3773 = vunpack.c.h.b16 %v3632
        %v3774 = vunpack.c.l.b16 %v3633
        %v3775 = vunpack.c.h.b16 %v3633
        %v3776 = vunpack.c.l.b16 %v3634
        %v3777 = vunpack.c.h.b16 %v3634
        %v3778 = vunpack.c.l.b16 %v3635
        %v3779 = vunpack.c.h.b16 %v3635
        %v3780 = vunpack.c.l.b16 %v3636
        %v3781 = vunpack.c.h.b16 %v3636
        %v3782 = vunpack.c.l.b16 %v3637
        %v3783 = vunpack.c.h.b16 %v3637
        %v3784 = vunpack.c.l.b16 %v3638
        %v3785 = vunpack.c.h.b16 %v3638
        %v3786 = vunpack.c.l.b16 %v3639
        %v3787 = vunpack.c.h.b16 %v3639
        %v3788 = vunpack.c.l.b16 %v3640
        %v3789 = vunpack.c.h.b16 %v3640
        %v3790 = vunpack.c.l.b16 %v3641
        %v3791 = vunpack.c.h.b16 %v3641
        %v3792 = vunpack.c.l.b16 %v3642
        %v3793 = vunpack.c.h.b16 %v3642
        %v3794 = vunpack.c.l.b16 %v3643
        %v3795 = vunpack.c.h.b16 %v3643
        %v3796 = vunpack.c.l.b16 %v3644
        %v3797 = vunpack.c.h.b16 %v3644
        %v3798 = vunpack.c.l.b16 %v3645
        %v3799 = vunpack.c.h.b16 %v3645
        %v3800 = vunpack.c.l.b16 %v3646
        %v3801 = vunpack.c.h.b16 %v3646
        %v3802 = vunpack.c.l.b16 %v3647
        %v3803 = vunpack.c.h.b16 %v3647
        %v3804 = vunpack.c.l.b16 %v3648
        %v3805 = vunpack.c.h.b16 %v3648
        %v3806 = vunpack.c.l.b16 %v3649
        %v3807 = vunpack.c.h.b16 %v3649
        %v3808 = vunpack.c.l.b16 %v3650
        %v3809 = vunpack.c.h.b16 %v3650
        %v3810 = vunpack.c.l.b16 %v3651
        %v3811 = vunpack.c.h.b16 %v3651
        %v3812 = vunpack.c.l.b16 %v3652
        %v3813 = vunpack.c.h.b16 %v3652
        %v3814 = vpack.c.b16 %v3752, %v3750
        %v3815 = vpack.c.b16 %v3753, %v3751
        %v3816 = vpack.c.b16 %v3756, %v3754
        %v3817 = vpack.c.b16 %v3757, %v3755
        %v3818 = vpack.c.b16 %v3760, %v3758
        %v3819 = vpack.c.b16 %v3761, %v3759
        %v3820 = vpack.c.b16 %v3764, %v3762
        %v3821 = vpack.c.b16 %v3765, %v3763
        %v3822 = vpack.c.b16 %v3768, %v3766
        %v3823 = vpack.c.b16 %v3769, %v3767
        %v3824 = vpack.c.b16 %v3772, %v3770
        %v3825 = vpack.c.b16 %v3773, %v3771
        %v3826 = vpack.c.b16 %v3776, %v3774
        %v3827 = vpack.c.b16 %v3777, %v3775
        %v3828 = vpack.c.b16 %v3780, %v3778
        %v3829 = vpack.c.b16 %v3781, %v3779
        %v3830 = vpack.c.b16 %v3784, %v3782
        %v3831 = vpack.c.b16 %v3785, %v3783
        %v3832 = vpack.c.b16 %v3788, %v3786
        %v3833 = vpack.c.b16 %v3789, %v3787
        %v3834 = vpack.c.b16 %v3792, %v3790
        %v3835 = vpack.c.b16 %v3793, %v3791
        %v3836 = vpack.c.b16 %v3796, %v3794
        %v3837 = vpack.c.b16 %v3797, %v3795
        %v3838 = vpack.c.b16 %v3800, %v3798
        %v3839 = vpack.c.b16 %v3801, %v3799
        %v3840 = vpack.c.b16 %v3804, %v3802
        %v3841 = vpack.c.b16 %v3805, %v3803
        %v3842 = vpack.c.b16 %v3808, %v3806
        %v3843 = vpack.c.b16 %v3809, %v3807
        %v3844 = vpack.c.b16 %v3812, %v3810
        %v3845 = vpack.c.b16 %v3813, %v3811
        %3878 = vmatprep.subr.bf16.mxu0 %v3829
        %3879 = vmatpush1.bf16.msra.mxu0 %v3828
        %3880 = vmatprep.subr.bf16.mxu0 %v3827
        %3881 = vmatpush1.bf16.msra.mxu0 %v3826
        %3882 = vmatprep.subr.bf16.mxu0 %v3825
        %3883 = vmatpush1.bf16.msra.mxu0 %v3824
        %3884 = vmatprep.subr.bf16.mxu0 %v3823
        %3885 = vmatpush1.bf16.msra.mxu0 %v3822
        %3886 = vmatprep.subr.bf16.mxu0 %v3821
        %3887 = vmatpush1.bf16.msra.mxu0 %v3820
        %3888 = vmatprep.subr.bf16.mxu0 %v3819
        %3889 = vmatpush1.bf16.msra.mxu0 %v3818
        %3890 = vmatprep.subr.bf16.mxu0 %v3817
        %3891 = vmatpush1.bf16.msra.mxu0 %v3816
        %3892 = vmatprep.subr.bf16.mxu0 %v3815
        %3893 = vmatpush1.bf16.msra.mxu0 %v3814
        %3894 = vmatprep.subr.bf16.mxu0 %v3845
        %3895 = vmatpush2.bf16.msra.mxu0 %v3844
        %3896 = vmatprep.subr.bf16.mxu0 %v3843
        %3897 = vmatpush2.bf16.msra.mxu0 %v3842
        %3898 = vmatprep.subr.bf16.mxu0 %v3841
        %3899 = vmatpush2.bf16.msra.mxu0 %v3840
        %3900 = vmatprep.subr.bf16.mxu0 %v3839
        %3901 = vmatpush2.bf16.msra.mxu0 %v3838
        %3902 = vmatprep.subr.bf16.mxu0 %v3837
        %3903 = vmatpush2.bf16.msra.mxu0 %v3836
        %3904 = vmatprep.subr.bf16.mxu0 %v3835
        %3905 = vmatpush2.bf16.msra.mxu0 %v3834
        %3906 = vmatprep.subr.bf16.mxu0 %v3833
        %3907 = vmatpush2.bf16.msra.mxu0 %v3832
        %3908 = vmatprep.subr.bf16.mxu0 %v3831
        %3909 = vmatpush2.bf16.msra.mxu0 %v3830
        %3910 = vmatprep.mubr.bf16.mxu0 %v3655
        %3911 = vmatmul.mubr.bf16.gmra.mxu0 %v3654
        %v3912 = vpop.f32.mrf.mxu0
        %v3913 = vadd.f32 0.0, %v3912
        %v3914 = vpop.f32.mrf.mxu0
        %v3915 = vadd.f32 0.0, %v3914
        %v3916 = vpop.f32.mrf.mxu0
        %v3917 = vadd.f32 0.0, %v3916
        %v3918 = vpop.f32.mrf.mxu0
        %v3919 = vadd.f32 0.0, %v3918
        %3920 = vmatprep.mubr.bf16.mxu0 %v3657
        %3921 = vmatmul.mubr.bf16.gmra.mxu0 %v3656
        %v3922 = vpop.f32.mrf.mxu0
        %v3923 = vadd.f32 0.0, %v3922
        %v3924 = vpop.f32.mrf.mxu0
        %v3925 = vadd.f32 0.0, %v3924
        %v3926 = vpop.f32.mrf.mxu0
        %v3927 = vadd.f32 0.0, %v3926
        %v3928 = vpop.f32.mrf.mxu0
        %v3929 = vadd.f32 0.0, %v3928
        %3930 = vmatprep.mubr.bf16.mxu0 %v3659
        %3931 = vmatmul.mubr.bf16.gmra.mxu0 %v3658
        %v3932 = vpop.f32.mrf.mxu0
        %v3933 = vadd.f32 0.0, %v3932
        %v3934 = vpop.f32.mrf.mxu0
        %v3935 = vadd.f32 0.0, %v3934
        %v3936 = vpop.f32.mrf.mxu0
        %v3937 = vadd.f32 0.0, %v3936
        %v3938 = vpop.f32.mrf.mxu0
        %v3939 = vadd.f32 0.0, %v3938
        %3940 = vmatprep.mubr.bf16.mxu0 %v3661
        %3941 = vmatmul.mubr.bf16.gmra.mxu0 %v3660
        %v3942 = vpop.f32.mrf.mxu0
        %v3943 = vadd.f32 0.0, %v3942
        %v3944 = vpop.f32.mrf.mxu0
        %v3945 = vadd.f32 0.0, %v3944
        %v3946 = vpop.f32.mrf.mxu0
        %v3947 = vadd.f32 0.0, %v3946
        %v3948 = vpop.f32.mrf.mxu0
        %v3949 = vadd.f32 0.0, %v3948
        %3950 = vmatprep.mubr.bf16.mxu0 %v3663
        %3951 = vmatmul.mubr.bf16.gmra.mxu0 %v3662
        %v3952 = vpop.f32.mrf.mxu0
        %v3953 = vadd.f32 0.0, %v3952
        %v3954 = vpop.f32.mrf.mxu0
        %v3955 = vadd.f32 0.0, %v3954
        %v3956 = vpop.f32.mrf.mxu0
        %v3957 = vadd.f32 0.0, %v3956
        %v3958 = vpop.f32.mrf.mxu0
        %v3959 = vadd.f32 0.0, %v3958
        %3960 = vmatprep.mubr.bf16.mxu0 %v3665
        %3961 = vmatmul.mubr.bf16.gmra.mxu0 %v3664
        %v3962 = vpop.f32.mrf.mxu0
        %v3963 = vadd.f32 0.0, %v3962
        %v3964 = vpop.f32.mrf.mxu0
        %v3965 = vadd.f32 0.0, %v3964
        %v3966 = vpop.f32.mrf.mxu0
        %v3967 = vadd.f32 0.0, %v3966
        %v3968 = vpop.f32.mrf.mxu0
        %v3969 = vadd.f32 0.0, %v3968
        %3970 = vmatprep.mubr.bf16.mxu0 %v3667
        %3971 = vmatmul.mubr.bf16.gmra.mxu0 %v3666
        %v3972 = vpop.f32.mrf.mxu0
        %v3973 = vadd.f32 0.0, %v3972
        %v3974 = vpop.f32.mrf.mxu0
        %v3975 = vadd.f32 0.0, %v3974
        %v3976 = vpop.f32.mrf.mxu0
        %v3977 = vadd.f32 0.0, %v3976
        %v3978 = vpop.f32.mrf.mxu0
        %v3979 = vadd.f32 0.0, %v3978
        %3980 = vmatprep.mubr.bf16.mxu0 %v3669
        %3981 = vmatmul.mubr.bf16.gmra.mxu0 %v3668
        %v3982 = vpop.f32.mrf.mxu0
        %v3983 = vadd.f32 0.0, %v3982
        %v3984 = vpop.f32.mrf.mxu0
        %v3985 = vadd.f32 0.0, %v3984
        %v3986 = vpop.f32.mrf.mxu0
        %v3987 = vadd.f32 0.0, %v3986
        %v3988 = vpop.f32.mrf.mxu0
        %v3989 = vadd.f32 0.0, %v3988
        %3990 = vmatprep.mubr.bf16.mxu0 %v3671
        %3991 = vmatmul.mubr.bf16.gmra.mxu0 %v3670
        %v3992 = vpop.f32.mrf.mxu0
        %v3993 = vadd.f32 0.0, %v3992
        %v3994 = vpop.f32.mrf.mxu0
        %v3995 = vadd.f32 0.0, %v3994
        %v3996 = vpop.f32.mrf.mxu0
        %v3997 = vadd.f32 0.0, %v3996
        %v3998 = vpop.f32.mrf.mxu0
        %v3999 = vadd.f32 0.0, %v3998
        %4000 = vmatprep.mubr.bf16.mxu0 %v3673
        %4001 = vmatmul.mubr.bf16.gmra.mxu0 %v3672
        %v4002 = vpop.f32.mrf.mxu0
        %v4003 = vadd.f32 0.0, %v4002
        %v4004 = vpop.f32.mrf.mxu0
        %v4005 = vadd.f32 0.0, %v4004
        %v4006 = vpop.f32.mrf.mxu0
        %v4007 = vadd.f32 0.0, %v4006
        %v4008 = vpop.f32.mrf.mxu0
        %v4009 = vadd.f32 0.0, %v4008
        %4010 = vmatprep.mubr.bf16.mxu0 %v3675
        %4011 = vmatmul.mubr.bf16.gmra.mxu0 %v3674
        %v4012 = vpop.f32.mrf.mxu0
        %v4013 = vadd.f32 0.0, %v4012
        %v4014 = vpop.f32.mrf.mxu0
        %v4015 = vadd.f32 0.0, %v4014
        %v4016 = vpop.f32.mrf.mxu0
        %v4017 = vadd.f32 0.0, %v4016
        %v4018 = vpop.f32.mrf.mxu0
        %v4019 = vadd.f32 0.0, %v4018
        %4020 = vmatprep.mubr.bf16.mxu0 %v3677
        %4021 = vmatmul.mubr.bf16.gmra.mxu0 %v3676
        %v4022 = vpop.f32.mrf.mxu0
        %v4023 = vadd.f32 0.0, %v4022
        %v4024 = vpop.f32.mrf.mxu0
        %v4025 = vadd.f32 0.0, %v4024
        %v4026 = vpop.f32.mrf.mxu0
        %v4027 = vadd.f32 0.0, %v4026
        %v4028 = vpop.f32.mrf.mxu0
        %v4029 = vadd.f32 0.0, %v4028
        %4030 = vmatprep.mubr.bf16.mxu0 %v3679
        %4031 = vmatmul.mubr.bf16.gmra.mxu0 %v3678
        %v4032 = vpop.f32.mrf.mxu0
        %v4033 = vadd.f32 0.0, %v4032
        %v4034 = vpop.f32.mrf.mxu0
        %v4035 = vadd.f32 0.0, %v4034
        %v4036 = vpop.f32.mrf.mxu0
        %v4037 = vadd.f32 0.0, %v4036
        %v4038 = vpop.f32.mrf.mxu0
        %v4039 = vadd.f32 0.0, %v4038
        %4040 = vmatprep.mubr.bf16.mxu0 %v3681
        %4041 = vmatmul.mubr.bf16.gmra.mxu0 %v3680
        %v4042 = vpop.f32.mrf.mxu0
        %v4043 = vadd.f32 0.0, %v4042
        %v4044 = vpop.f32.mrf.mxu0
        %v4045 = vadd.f32 0.0, %v4044
        %v4046 = vpop.f32.mrf.mxu0
        %v4047 = vadd.f32 0.0, %v4046
        %v4048 = vpop.f32.mrf.mxu0
        %v4049 = vadd.f32 0.0, %v4048
        %4050 = vmatprep.mubr.bf16.mxu0 %v3683
        %4051 = vmatmul.mubr.bf16.gmra.mxu0 %v3682
        %v4052 = vpop.f32.mrf.mxu0
        %v4053 = vadd.f32 0.0, %v4052
        %v4054 = vpop.f32.mrf.mxu0
        %v4055 = vadd.f32 0.0, %v4054
        %v4056 = vpop.f32.mrf.mxu0
        %v4057 = vadd.f32 0.0, %v4056
        %v4058 = vpop.f32.mrf.mxu0
        %v4059 = vadd.f32 0.0, %v4058
        %4060 = vmatprep.mubr.bf16.mxu0 %v3685
        %4061 = vmatmul.mubr.bf16.gmra.mxu0 %v3684
        %v4062 = vpop.f32.mrf.mxu0
        %v4063 = vadd.f32 0.0, %v4062
        %v4064 = vpop.f32.mrf.mxu0
        %v4065 = vadd.f32 0.0, %v4064
        %v4066 = vpop.f32.mrf.mxu0
        %v4067 = vadd.f32 0.0, %v4066
        %v4068 = vpop.f32.mrf.mxu0
        %v4069 = vadd.f32 0.0, %v4068
        %4070 = vmatprep.mubr.bf16.mxu0 %v3687
        %4071 = vmatmul.mubr.bf16.gmra.mxu0 %v3686
        %v4072 = vpop.f32.mrf.mxu0
        %v4073 = vadd.f32 0.0, %v4072
        %v4074 = vpop.f32.mrf.mxu0
        %v4075 = vadd.f32 0.0, %v4074
        %v4076 = vpop.f32.mrf.mxu0
        %v4077 = vadd.f32 0.0, %v4076
        %v4078 = vpop.f32.mrf.mxu0
        %v4079 = vadd.f32 0.0, %v4078
        %4080 = vmatprep.mubr.bf16.mxu0 %v3689
        %4081 = vmatmul.mubr.bf16.gmra.mxu0 %v3688
        %v4082 = vpop.f32.mrf.mxu0
        %v4083 = vadd.f32 0.0, %v4082
        %v4084 = vpop.f32.mrf.mxu0
        %v4085 = vadd.f32 0.0, %v4084
        %v4086 = vpop.f32.mrf.mxu0
        %v4087 = vadd.f32 0.0, %v4086
        %v4088 = vpop.f32.mrf.mxu0
        %v4089 = vadd.f32 0.0, %v4088
        %4090 = vmatprep.mubr.bf16.mxu0 %v3691
        %4091 = vmatmul.mubr.bf16.gmra.mxu0 %v3690
        %v4092 = vpop.f32.mrf.mxu0
        %v4093 = vadd.f32 0.0, %v4092
        %v4094 = vpop.f32.mrf.mxu0
        %v4095 = vadd.f32 0.0, %v4094
        %v4096 = vpop.f32.mrf.mxu0
        %v4097 = vadd.f32 0.0, %v4096
        %v4098 = vpop.f32.mrf.mxu0
        %v4099 = vadd.f32 0.0, %v4098
        %4100 = vmatprep.mubr.bf16.mxu0 %v3693
        %4101 = vmatmul.mubr.bf16.gmra.mxu0 %v3692
        %v4102 = vpop.f32.mrf.mxu0
        %v4103 = vadd.f32 0.0, %v4102
        %v4104 = vpop.f32.mrf.mxu0
        %v4105 = vadd.f32 0.0, %v4104
        %v4106 = vpop.f32.mrf.mxu0
        %v4107 = vadd.f32 0.0, %v4106
        %v4108 = vpop.f32.mrf.mxu0
        %v4109 = vadd.f32 0.0, %v4108
        %4110 = vmatprep.mubr.bf16.mxu0 %v3695
        %4111 = vmatmul.mubr.bf16.gmra.mxu0 %v3694
        %v4112 = vpop.f32.mrf.mxu0
        %v4113 = vadd.f32 0.0, %v4112
        %v4114 = vpop.f32.mrf.mxu0
        %v4115 = vadd.f32 0.0, %v4114
        %v4116 = vpop.f32.mrf.mxu0
        %v4117 = vadd.f32 0.0, %v4116
        %v4118 = vpop.f32.mrf.mxu0
        %v4119 = vadd.f32 0.0, %v4118
        %4120 = vmatprep.mubr.bf16.mxu0 %v3697
        %4121 = vmatmul.mubr.bf16.gmra.mxu0 %v3696
        %v4122 = vpop.f32.mrf.mxu0
        %v4123 = vadd.f32 0.0, %v4122
        %v4124 = vpop.f32.mrf.mxu0
        %v4125 = vadd.f32 0.0, %v4124
        %v4126 = vpop.f32.mrf.mxu0
        %v4127 = vadd.f32 0.0, %v4126
        %v4128 = vpop.f32.mrf.mxu0
        %v4129 = vadd.f32 0.0, %v4128
        %4130 = vmatprep.mubr.bf16.mxu0 %v3699
        %4131 = vmatmul.mubr.bf16.gmra.mxu0 %v3698
        %v4132 = vpop.f32.mrf.mxu0
        %v4133 = vadd.f32 0.0, %v4132
        %v4134 = vpop.f32.mrf.mxu0
        %v4135 = vadd.f32 0.0, %v4134
        %v4136 = vpop.f32.mrf.mxu0
        %v4137 = vadd.f32 0.0, %v4136
        %v4138 = vpop.f32.mrf.mxu0
        %v4139 = vadd.f32 0.0, %v4138
        %4140 = vmatprep.mubr.bf16.mxu0 %v3701
        %4141 = vmatmul.mubr.bf16.gmra.mxu0 %v3700
        %v4142 = vpop.f32.mrf.mxu0
        %v4143 = vadd.f32 0.0, %v4142
        %v4144 = vpop.f32.mrf.mxu0
        %v4145 = vadd.f32 0.0, %v4144
        %v4146 = vpop.f32.mrf.mxu0
        %v4147 = vadd.f32 0.0, %v4146
        %v4148 = vpop.f32.mrf.mxu0
        %v4149 = vadd.f32 0.0, %v4148
        %4150 = vmatprep.mubr.bf16.mxu0 %v3703
        %4151 = vmatmul.mubr.bf16.gmra.mxu0 %v3702
        %v4152 = vpop.f32.mrf.mxu0
        %v4153 = vadd.f32 0.0, %v4152
        %v4154 = vpop.f32.mrf.mxu0
        %v4155 = vadd.f32 0.0, %v4154
        %v4156 = vpop.f32.mrf.mxu0
        %v4157 = vadd.f32 0.0, %v4156
        %v4158 = vpop.f32.mrf.mxu0
        %v4159 = vadd.f32 0.0, %v4158
        %4160 = vmatprep.mubr.bf16.mxu0 %v3705
        %4161 = vmatmul.mubr.bf16.gmra.mxu0 %v3704
        %v4162 = vpop.f32.mrf.mxu0
        %v4163 = vadd.f32 0.0, %v4162
        %v4164 = vpop.f32.mrf.mxu0
        %v4165 = vadd.f32 0.0, %v4164
        %v4166 = vpop.f32.mrf.mxu0
        %v4167 = vadd.f32 0.0, %v4166
        %v4168 = vpop.f32.mrf.mxu0
        %v4169 = vadd.f32 0.0, %v4168
        %4170 = vmatprep.mubr.bf16.mxu0 %v3707
        %4171 = vmatmul.mubr.bf16.gmra.mxu0 %v3706
        %v4172 = vpop.f32.mrf.mxu0
        %v4173 = vadd.f32 0.0, %v4172
        %v4174 = vpop.f32.mrf.mxu0
        %v4175 = vadd.f32 0.0, %v4174
        %v4176 = vpop.f32.mrf.mxu0
        %v4177 = vadd.f32 0.0, %v4176
        %v4178 = vpop.f32.mrf.mxu0
        %v4179 = vadd.f32 0.0, %v4178
        %4180 = vmatprep.mubr.bf16.mxu0 %v3709
        %4181 = vmatmul.mubr.bf16.gmra.mxu0 %v3708
        %v4182 = vpop.f32.mrf.mxu0
        %v4183 = vadd.f32 0.0, %v4182
        %v4184 = vpop.f32.mrf.mxu0
        %v4185 = vadd.f32 0.0, %v4184
        %v4186 = vpop.f32.mrf.mxu0
        %v4187 = vadd.f32 0.0, %v4186
        %v4188 = vpop.f32.mrf.mxu0
        %v4189 = vadd.f32 0.0, %v4188
        %4190 = vmatprep.mubr.bf16.mxu0 %v3711
        %4191 = vmatmul.mubr.bf16.gmra.mxu0 %v3710
        %v4192 = vpop.f32.mrf.mxu0
        %v4193 = vadd.f32 0.0, %v4192
        %v4194 = vpop.f32.mrf.mxu0
        %v4195 = vadd.f32 0.0, %v4194
        %v4196 = vpop.f32.mrf.mxu0
        %v4197 = vadd.f32 0.0, %v4196
        %v4198 = vpop.f32.mrf.mxu0
        %v4199 = vadd.f32 0.0, %v4198
        %4200 = vmatprep.mubr.bf16.mxu0 %v3713
        %4201 = vmatmul.mubr.bf16.gmra.mxu0 %v3712
        %v4202 = vpop.f32.mrf.mxu0
        %v4203 = vadd.f32 0.0, %v4202
        %v4204 = vpop.f32.mrf.mxu0
        %v4205 = vadd.f32 0.0, %v4204
        %v4206 = vpop.f32.mrf.mxu0
        %v4207 = vadd.f32 0.0, %v4206
        %v4208 = vpop.f32.mrf.mxu0
        %v4209 = vadd.f32 0.0, %v4208
        %4210 = vmatprep.mubr.bf16.mxu0 %v3715
        %4211 = vmatmul.mubr.bf16.gmra.mxu0 %v3714
        %v4212 = vpop.f32.mrf.mxu0
        %v4213 = vadd.f32 0.0, %v4212
        %v4214 = vpop.f32.mrf.mxu0
        %v4215 = vadd.f32 0.0, %v4214
        %v4216 = vpop.f32.mrf.mxu0
        %v4217 = vadd.f32 0.0, %v4216
        %v4218 = vpop.f32.mrf.mxu0
        %v4219 = vadd.f32 0.0, %v4218
        %4220 = vmatprep.mubr.bf16.mxu0 %v3717
        %4221 = vmatmul.mubr.bf16.gmra.mxu0 %v3716
        %v4222 = vpop.f32.mrf.mxu0
        %v4223 = vadd.f32 0.0, %v4222
        %v4224 = vpop.f32.mrf.mxu0
        %v4225 = vadd.f32 0.0, %v4224
        %v4226 = vpop.f32.mrf.mxu0
        %v4227 = vadd.f32 0.0, %v4226
        %v4228 = vpop.f32.mrf.mxu0
        %v4229 = vadd.f32 0.0, %v4228
        %4230 = vdwg.mxu0
        %v4239 = vunpack.c.l.b16 %v3613
        %v4240 = vunpack.c.h.b16 %v3613
        %v4241 = vunpack.c.l.b16 %v3614
        %v4242 = vunpack.c.h.b16 %v3614
        %v4243 = vunpack.c.l.b16 %v3615
        %v4244 = vunpack.c.h.b16 %v3615
        %v4245 = vunpack.c.l.b16 %v3616
        %v4246 = vunpack.c.h.b16 %v3616
        %v4247 = vunpack.c.l.b16 %v3617
        %v4248 = vunpack.c.h.b16 %v3617
        %v4249 = vunpack.c.l.b16 %v3618
        %v4250 = vunpack.c.h.b16 %v3618
        %v4251 = vunpack.c.l.b16 %v3619
        %v4252 = vunpack.c.h.b16 %v3619
        %v4253 = vunpack.c.l.b16 %v3620
        %v4254 = vunpack.c.h.b16 %v3620
        %v4255 = vpack.c.b16 %v4241, %v4239
        %v4256 = vpack.c.b16 %v4242, %v4240
        %v4257 = vpack.c.b16 %v4245, %v4243
        %v4258 = vpack.c.b16 %v4246, %v4244
        %v4259 = vpack.c.b16 %v4249, %v4247
        %v4260 = vpack.c.b16 %v4250, %v4248
        %v4261 = vpack.c.b16 %v4253, %v4251
        %v4262 = vpack.c.b16 %v4254, %v4252
        %4271 = vmatprep.subr.bf16.mxu0 0
        %4272 = vmatpush1.bf16.msra.mxu0 0
        %4273 = vmatprep.subr.bf16.mxu0 0
        %4274 = vmatpush1.bf16.msra.mxu0 0
        %4275 = vmatprep.subr.bf16.mxu0 0
        %4276 = vmatpush1.bf16.msra.mxu0 0
        %4277 = vmatprep.subr.bf16.mxu0 0
        %4278 = vmatpush1.bf16.msra.mxu0 0
        %4279 = vmatprep.subr.bf16.mxu0 %v4262
        %4280 = vmatpush1.bf16.msra.mxu0 %v4261
        %4281 = vmatprep.subr.bf16.mxu0 %v4260
        %4282 = vmatpush1.bf16.msra.mxu0 %v4259
        %4283 = vmatprep.subr.bf16.mxu0 %v4258
        %4284 = vmatpush1.bf16.msra.mxu0 %v4257
        %4285 = vmatprep.subr.bf16.mxu0 %v4256
        %4286 = vmatpush1.bf16.msra.mxu0 %v4255
        %4287 = vmatprep.subr.bf16.mxu0 0
        %4288 = vmatpush2.bf16.msra.mxu0 0
        %4289 = vmatprep.subr.bf16.mxu0 0
        %4290 = vmatpush2.bf16.msra.mxu0 0
        %4291 = vmatprep.subr.bf16.mxu0 0
        %4292 = vmatpush2.bf16.msra.mxu0 0
        %4293 = vmatprep.subr.bf16.mxu0 0
        %4294 = vmatpush2.bf16.msra.mxu0 0
        %4295 = vmatprep.subr.bf16.mxu0 0
        %4296 = vmatpush2.bf16.msra.mxu0 0
        %4297 = vmatprep.subr.bf16.mxu0 0
        %4298 = vmatpush2.bf16.msra.mxu0 0
        %4299 = vmatprep.subr.bf16.mxu0 0
        %4300 = vmatpush2.bf16.msra.mxu0 0
        %4301 = vmatprep.subr.bf16.mxu0 0
        %4302 = vmatpush2.bf16.msra.mxu0 0
        %4303 = vmatprep.mubr.bf16.mxu0 0
        %4304 = vmatmul.mubr.bf16.gmra.mxu0 %v790
        %v4305 = vpop.f32.mrf.mxu0
        %v4306 = vadd.f32 %v3913, %v4305
        %v4307 = vpop.f32.mrf.mxu0
        %v4308 = vadd.f32 %v3915, %v4307
        %v4309 = vpop.f32.mrf.mxu0
        %v4310 = vadd.f32 %v3917, %v4309
        %v4311 = vpop.f32.mrf.mxu0
        %v4312 = vadd.f32 %v3919, %v4311
        %4313 = vmatprep.mubr.bf16.mxu0 0
        %4314 = vmatmul.mubr.bf16.gmra.mxu0 %v793
        %v4315 = vpop.f32.mrf.mxu0
        %v4316 = vadd.f32 %v3923, %v4315
        %v4317 = vpop.f32.mrf.mxu0
        %v4318 = vadd.f32 %v3925, %v4317
        %v4319 = vpop.f32.mrf.mxu0
        %v4320 = vadd.f32 %v3927, %v4319
        %v4321 = vpop.f32.mrf.mxu0
        %v4322 = vadd.f32 %v3929, %v4321
        %4323 = vmatprep.mubr.bf16.mxu0 0
        %4324 = vmatmul.mubr.bf16.gmra.mxu0 %v796
        %v4325 = vpop.f32.mrf.mxu0
        %v4326 = vadd.f32 %v3933, %v4325
        %v4327 = vpop.f32.mrf.mxu0
        %v4328 = vadd.f32 %v3935, %v4327
        %v4329 = vpop.f32.mrf.mxu0
        %v4330 = vadd.f32 %v3937, %v4329
        %v4331 = vpop.f32.mrf.mxu0
        %v4332 = vadd.f32 %v3939, %v4331
        %4333 = vmatprep.mubr.bf16.mxu0 0
        %4334 = vmatmul.mubr.bf16.gmra.mxu0 %v799
        %v4335 = vpop.f32.mrf.mxu0
        %v4336 = vadd.f32 %v3943, %v4335
        %v4337 = vpop.f32.mrf.mxu0
        %v4338 = vadd.f32 %v3945, %v4337
        %v4339 = vpop.f32.mrf.mxu0
        %v4340 = vadd.f32 %v3947, %v4339
        %v4341 = vpop.f32.mrf.mxu0
        %v4342 = vadd.f32 %v3949, %v4341
        %4343 = vmatprep.mubr.bf16.mxu0 0
        %4344 = vmatmul.mubr.bf16.gmra.mxu0 %v802
        %v4345 = vpop.f32.mrf.mxu0
        %v4346 = vadd.f32 %v3953, %v4345
        %v4347 = vpop.f32.mrf.mxu0
        %v4348 = vadd.f32 %v3955, %v4347
        %v4349 = vpop.f32.mrf.mxu0
        %v4350 = vadd.f32 %v3957, %v4349
        %v4351 = vpop.f32.mrf.mxu0
        %v4352 = vadd.f32 %v3959, %v4351
        %4353 = vmatprep.mubr.bf16.mxu0 0
        %4354 = vmatmul.mubr.bf16.gmra.mxu0 %v805
        %v4355 = vpop.f32.mrf.mxu0
        %v4356 = vadd.f32 %v3963, %v4355
        %v4357 = vpop.f32.mrf.mxu0
        %v4358 = vadd.f32 %v3965, %v4357
        %v4359 = vpop.f32.mrf.mxu0
        %v4360 = vadd.f32 %v3967, %v4359
        %v4361 = vpop.f32.mrf.mxu0
        %v4362 = vadd.f32 %v3969, %v4361
        %4363 = vmatprep.mubr.bf16.mxu0 0
        %4364 = vmatmul.mubr.bf16.gmra.mxu0 %v808
        %v4365 = vpop.f32.mrf.mxu0
        %v4366 = vadd.f32 %v3973, %v4365
        %v4367 = vpop.f32.mrf.mxu0
        %v4368 = vadd.f32 %v3975, %v4367
        %v4369 = vpop.f32.mrf.mxu0
        %v4370 = vadd.f32 %v3977, %v4369
        %v4371 = vpop.f32.mrf.mxu0
        %v4372 = vadd.f32 %v3979, %v4371
        %4373 = vmatprep.mubr.bf16.mxu0 0
        %4374 = vmatmul.mubr.bf16.gmra.mxu0 %v811
        %v4375 = vpop.f32.mrf.mxu0
        %v4376 = vadd.f32 %v3983, %v4375
        %v4377 = vpop.f32.mrf.mxu0
        %v4378 = vadd.f32 %v3985, %v4377
        %v4379 = vpop.f32.mrf.mxu0
        %v4380 = vadd.f32 %v3987, %v4379
        %v4381 = vpop.f32.mrf.mxu0
        %v4382 = vadd.f32 %v3989, %v4381
        %4383 = vmatprep.mubr.bf16.mxu0 0
        %4384 = vmatmul.mubr.bf16.gmra.mxu0 %v814
        %v4385 = vpop.f32.mrf.mxu0
        %v4386 = vadd.f32 %v3993, %v4385
        %v4387 = vpop.f32.mrf.mxu0
        %v4388 = vadd.f32 %v3995, %v4387
        %v4389 = vpop.f32.mrf.mxu0
        %v4390 = vadd.f32 %v3997, %v4389
        %v4391 = vpop.f32.mrf.mxu0
        %v4392 = vadd.f32 %v3999, %v4391
        %4393 = vmatprep.mubr.bf16.mxu0 0
        %4394 = vmatmul.mubr.bf16.gmra.mxu0 %v817
        %v4395 = vpop.f32.mrf.mxu0
        %v4396 = vadd.f32 %v4003, %v4395
        %v4397 = vpop.f32.mrf.mxu0
        %v4398 = vadd.f32 %v4005, %v4397
        %v4399 = vpop.f32.mrf.mxu0
        %v4400 = vadd.f32 %v4007, %v4399
        %v4401 = vpop.f32.mrf.mxu0
        %v4402 = vadd.f32 %v4009, %v4401
        %4403 = vmatprep.mubr.bf16.mxu0 0
        %4404 = vmatmul.mubr.bf16.gmra.mxu0 %v820
        %v4405 = vpop.f32.mrf.mxu0
        %v4406 = vadd.f32 %v4013, %v4405
        %v4407 = vpop.f32.mrf.mxu0
        %v4408 = vadd.f32 %v4015, %v4407
        %v4409 = vpop.f32.mrf.mxu0
        %v4410 = vadd.f32 %v4017, %v4409
        %v4411 = vpop.f32.mrf.mxu0
        %v4412 = vadd.f32 %v4019, %v4411
        %4413 = vmatprep.mubr.bf16.mxu0 0
        %4414 = vmatmul.mubr.bf16.gmra.mxu0 %v823
        %v4415 = vpop.f32.mrf.mxu0
        %v4416 = vadd.f32 %v4023, %v4415
        %v4417 = vpop.f32.mrf.mxu0
        %v4418 = vadd.f32 %v4025, %v4417
        %v4419 = vpop.f32.mrf.mxu0
        %v4420 = vadd.f32 %v4027, %v4419
        %v4421 = vpop.f32.mrf.mxu0
        %v4422 = vadd.f32 %v4029, %v4421
        %4423 = vmatprep.mubr.bf16.mxu0 0
        %4424 = vmatmul.mubr.bf16.gmra.mxu0 %v826
        %v4425 = vpop.f32.mrf.mxu0
        %v4426 = vadd.f32 %v4033, %v4425
        %v4427 = vpop.f32.mrf.mxu0
        %v4428 = vadd.f32 %v4035, %v4427
        %v4429 = vpop.f32.mrf.mxu0
        %v4430 = vadd.f32 %v4037, %v4429
        %v4431 = vpop.f32.mrf.mxu0
        %v4432 = vadd.f32 %v4039, %v4431
        %4433 = vmatprep.mubr.bf16.mxu0 0
        %4434 = vmatmul.mubr.bf16.gmra.mxu0 %v829
        %v4435 = vpop.f32.mrf.mxu0
        %v4436 = vadd.f32 %v4043, %v4435
        %v4437 = vpop.f32.mrf.mxu0
        %v4438 = vadd.f32 %v4045, %v4437
        %v4439 = vpop.f32.mrf.mxu0
        %v4440 = vadd.f32 %v4047, %v4439
        %v4441 = vpop.f32.mrf.mxu0
        %v4442 = vadd.f32 %v4049, %v4441
        %4443 = vmatprep.mubr.bf16.mxu0 0
        %4444 = vmatmul.mubr.bf16.gmra.mxu0 %v832
        %v4445 = vpop.f32.mrf.mxu0
        %v4446 = vadd.f32 %v4053, %v4445
        %v4447 = vpop.f32.mrf.mxu0
        %v4448 = vadd.f32 %v4055, %v4447
        %v4449 = vpop.f32.mrf.mxu0
        %v4450 = vadd.f32 %v4057, %v4449
        %v4451 = vpop.f32.mrf.mxu0
        %v4452 = vadd.f32 %v4059, %v4451
        %4453 = vmatprep.mubr.bf16.mxu0 0
        %4454 = vmatmul.mubr.bf16.gmra.mxu0 %v835
        %v4455 = vpop.f32.mrf.mxu0
        %v4456 = vadd.f32 %v4063, %v4455
        %v4457 = vpop.f32.mrf.mxu0
        %v4458 = vadd.f32 %v4065, %v4457
        %v4459 = vpop.f32.mrf.mxu0
        %v4460 = vadd.f32 %v4067, %v4459
        %v4461 = vpop.f32.mrf.mxu0
        %v4462 = vadd.f32 %v4069, %v4461
        %4463 = vmatprep.mubr.bf16.mxu0 0
        %4464 = vmatmul.mubr.bf16.gmra.mxu0 %v838
        %v4465 = vpop.f32.mrf.mxu0
        %v4466 = vadd.f32 %v4073, %v4465
        %v4467 = vpop.f32.mrf.mxu0
        %v4468 = vadd.f32 %v4075, %v4467
        %v4469 = vpop.f32.mrf.mxu0
        %v4470 = vadd.f32 %v4077, %v4469
        %v4471 = vpop.f32.mrf.mxu0
        %v4472 = vadd.f32 %v4079, %v4471
        %4473 = vmatprep.mubr.bf16.mxu0 0
        %4474 = vmatmul.mubr.bf16.gmra.mxu0 %v841
        %v4475 = vpop.f32.mrf.mxu0
        %v4476 = vadd.f32 %v4083, %v4475
        %v4477 = vpop.f32.mrf.mxu0
        %v4478 = vadd.f32 %v4085, %v4477
        %v4479 = vpop.f32.mrf.mxu0
        %v4480 = vadd.f32 %v4087, %v4479
        %v4481 = vpop.f32.mrf.mxu0
        %v4482 = vadd.f32 %v4089, %v4481
        %4483 = vmatprep.mubr.bf16.mxu0 0
        %4484 = vmatmul.mubr.bf16.gmra.mxu0 %v844
        %v4485 = vpop.f32.mrf.mxu0
        %v4486 = vadd.f32 %v4093, %v4485
        %v4487 = vpop.f32.mrf.mxu0
        %v4488 = vadd.f32 %v4095, %v4487
        %v4489 = vpop.f32.mrf.mxu0
        %v4490 = vadd.f32 %v4097, %v4489
        %v4491 = vpop.f32.mrf.mxu0
        %v4492 = vadd.f32 %v4099, %v4491
        %4493 = vmatprep.mubr.bf16.mxu0 0
        %4494 = vmatmul.mubr.bf16.gmra.mxu0 %v847
        %v4495 = vpop.f32.mrf.mxu0
        %v4496 = vadd.f32 %v4103, %v4495
        %v4497 = vpop.f32.mrf.mxu0
        %v4498 = vadd.f32 %v4105, %v4497
        %v4499 = vpop.f32.mrf.mxu0
        %v4500 = vadd.f32 %v4107, %v4499
        %v4501 = vpop.f32.mrf.mxu0
        %v4502 = vadd.f32 %v4109, %v4501
        %4503 = vmatprep.mubr.bf16.mxu0 0
        %4504 = vmatmul.mubr.bf16.gmra.mxu0 %v850
        %v4505 = vpop.f32.mrf.mxu0
        %v4506 = vadd.f32 %v4113, %v4505
        %v4507 = vpop.f32.mrf.mxu0
        %v4508 = vadd.f32 %v4115, %v4507
        %v4509 = vpop.f32.mrf.mxu0
        %v4510 = vadd.f32 %v4117, %v4509
        %v4511 = vpop.f32.mrf.mxu0
        %v4512 = vadd.f32 %v4119, %v4511
        %4513 = vmatprep.mubr.bf16.mxu0 0
        %4514 = vmatmul.mubr.bf16.gmra.mxu0 %v853
        %v4515 = vpop.f32.mrf.mxu0
        %v4516 = vadd.f32 %v4123, %v4515
        %v4517 = vpop.f32.mrf.mxu0
        %v4518 = vadd.f32 %v4125, %v4517
        %v4519 = vpop.f32.mrf.mxu0
        %v4520 = vadd.f32 %v4127, %v4519
        %v4521 = vpop.f32.mrf.mxu0
        %v4522 = vadd.f32 %v4129, %v4521
        %4523 = vmatprep.mubr.bf16.mxu0 0
        %4524 = vmatmul.mubr.bf16.gmra.mxu0 %v856
        %v4525 = vpop.f32.mrf.mxu0
        %v4526 = vadd.f32 %v4133, %v4525
        %v4527 = vpop.f32.mrf.mxu0
        %v4528 = vadd.f32 %v4135, %v4527
        %v4529 = vpop.f32.mrf.mxu0
        %v4530 = vadd.f32 %v4137, %v4529
        %v4531 = vpop.f32.mrf.mxu0
        %v4532 = vadd.f32 %v4139, %v4531
        %4533 = vmatprep.mubr.bf16.mxu0 0
        %4534 = vmatmul.mubr.bf16.gmra.mxu0 %v859
        %v4535 = vpop.f32.mrf.mxu0
        %v4536 = vadd.f32 %v4143, %v4535
        %v4537 = vpop.f32.mrf.mxu0
        %v4538 = vadd.f32 %v4145, %v4537
        %v4539 = vpop.f32.mrf.mxu0
        %v4540 = vadd.f32 %v4147, %v4539
        %v4541 = vpop.f32.mrf.mxu0
        %v4542 = vadd.f32 %v4149, %v4541
        %4543 = vmatprep.mubr.bf16.mxu0 0
        %4544 = vmatmul.mubr.bf16.gmra.mxu0 %v862
        %v4545 = vpop.f32.mrf.mxu0
        %v4546 = vadd.f32 %v4153, %v4545
        %v4547 = vpop.f32.mrf.mxu0
        %v4548 = vadd.f32 %v4155, %v4547
        %v4549 = vpop.f32.mrf.mxu0
        %v4550 = vadd.f32 %v4157, %v4549
        %v4551 = vpop.f32.mrf.mxu0
        %v4552 = vadd.f32 %v4159, %v4551
        %4553 = vmatprep.mubr.bf16.mxu0 0
        %4554 = vmatmul.mubr.bf16.gmra.mxu0 %v865
        %v4555 = vpop.f32.mrf.mxu0
        %v4556 = vadd.f32 %v4163, %v4555
        %v4557 = vpop.f32.mrf.mxu0
        %v4558 = vadd.f32 %v4165, %v4557
        %v4559 = vpop.f32.mrf.mxu0
        %v4560 = vadd.f32 %v4167, %v4559
        %v4561 = vpop.f32.mrf.mxu0
        %v4562 = vadd.f32 %v4169, %v4561
        %4563 = vmatprep.mubr.bf16.mxu0 0
        %4564 = vmatmul.mubr.bf16.gmra.mxu0 %v868
        %v4565 = vpop.f32.mrf.mxu0
        %v4566 = vadd.f32 %v4173, %v4565
        %v4567 = vpop.f32.mrf.mxu0
        %v4568 = vadd.f32 %v4175, %v4567
        %v4569 = vpop.f32.mrf.mxu0
        %v4570 = vadd.f32 %v4177, %v4569
        %v4571 = vpop.f32.mrf.mxu0
        %v4572 = vadd.f32 %v4179, %v4571
        %4573 = vmatprep.mubr.bf16.mxu0 0
        %4574 = vmatmul.mubr.bf16.gmra.mxu0 %v871
        %v4575 = vpop.f32.mrf.mxu0
        %v4576 = vadd.f32 %v4183, %v4575
        %v4577 = vpop.f32.mrf.mxu0
        %v4578 = vadd.f32 %v4185, %v4577
        %v4579 = vpop.f32.mrf.mxu0
        %v4580 = vadd.f32 %v4187, %v4579
        %v4581 = vpop.f32.mrf.mxu0
        %v4582 = vadd.f32 %v4189, %v4581
        %4583 = vmatprep.mubr.bf16.mxu0 0
        %4584 = vmatmul.mubr.bf16.gmra.mxu0 %v874
        %v4585 = vpop.f32.mrf.mxu0
        %v4586 = vadd.f32 %v4193, %v4585
        %v4587 = vpop.f32.mrf.mxu0
        %v4588 = vadd.f32 %v4195, %v4587
        %v4589 = vpop.f32.mrf.mxu0
        %v4590 = vadd.f32 %v4197, %v4589
        %v4591 = vpop.f32.mrf.mxu0
        %v4592 = vadd.f32 %v4199, %v4591
        %4593 = vmatprep.mubr.bf16.mxu0 0
        %4594 = vmatmul.mubr.bf16.gmra.mxu0 %v877
        %v4595 = vpop.f32.mrf.mxu0
        %v4596 = vadd.f32 %v4203, %v4595
        %v4597 = vpop.f32.mrf.mxu0
        %v4598 = vadd.f32 %v4205, %v4597
        %v4599 = vpop.f32.mrf.mxu0
        %v4600 = vadd.f32 %v4207, %v4599
        %v4601 = vpop.f32.mrf.mxu0
        %v4602 = vadd.f32 %v4209, %v4601
        %4603 = vmatprep.mubr.bf16.mxu0 0
        %4604 = vmatmul.mubr.bf16.gmra.mxu0 %v880
        %v4605 = vpop.f32.mrf.mxu0
        %v4606 = vadd.f32 %v4213, %v4605
        %v4607 = vpop.f32.mrf.mxu0
        %v4608 = vadd.f32 %v4215, %v4607
        %v4609 = vpop.f32.mrf.mxu0
        %v4610 = vadd.f32 %v4217, %v4609
        %v4611 = vpop.f32.mrf.mxu0
        %v4612 = vadd.f32 %v4219, %v4611
        %4613 = vmatprep.mubr.bf16.mxu0 0
        %4614 = vmatmul.mubr.bf16.gmra.mxu0 %v883
        %v4615 = vpop.f32.mrf.mxu0
        %v4616 = vadd.f32 %v4223, %v4615
        %v4617 = vpop.f32.mrf.mxu0
        %v4618 = vadd.f32 %v4225, %v4617
        %v4619 = vpop.f32.mrf.mxu0
        %v4620 = vadd.f32 %v4227, %v4619
        %v4621 = vpop.f32.mrf.mxu0
        %v4622 = vadd.f32 %v4229, %v4621
        %4623 = vdwg.mxu0
        %v4625 = vlaneseq
        %v4626 = vshrl.u32 %v4625, 7
        %v4627 = vsub.s32 0, %v4626
        %v4628 = vrot.slane %v3653, %v4627
        %v4629 = vlaneseq
        %v4630 = vshrl.u32 %v4629, 7
        %v4631 = vsub.s32 1, %v4630
        %v4632 = vrot.slane %v3653, %v4631
        %v4635 = vadd.f32 %v4306, %v4628
        %v4636 = vadd.f32 %v4308, %v4632
        %v4637 = vadd.f32 %v4310, %v4628
        %v4638 = vadd.f32 %v4312, %v4632
        %v4639 = vadd.f32 %v4316, %v4628
        %v4640 = vadd.f32 %v4318, %v4632
        %v4641 = vadd.f32 %v4320, %v4628
        %v4642 = vadd.f32 %v4322, %v4632
        %v4643 = vadd.f32 %v4326, %v4628
        %v4644 = vadd.f32 %v4328, %v4632
        %v4645 = vadd.f32 %v4330, %v4628
        %v4646 = vadd.f32 %v4332, %v4632
        %v4647 = vadd.f32 %v4336, %v4628
        %v4648 = vadd.f32 %v4338, %v4632
        %v4649 = vadd.f32 %v4340, %v4628
        %v4650 = vadd.f32 %v4342, %v4632
        %v4651 = vadd.f32 %v4346, %v4628
        %v4652 = vadd.f32 %v4348, %v4632
        %v4653 = vadd.f32 %v4350, %v4628
        %v4654 = vadd.f32 %v4352, %v4632
        %v4655 = vadd.f32 %v4356, %v4628
        %v4656 = vadd.f32 %v4358, %v4632
        %v4657 = vadd.f32 %v4360, %v4628
        %v4658 = vadd.f32 %v4362, %v4632
        %v4659 = vadd.f32 %v4366, %v4628
        %v4660 = vadd.f32 %v4368, %v4632
        %v4661 = vadd.f32 %v4370, %v4628
        %v4662 = vadd.f32 %v4372, %v4632
        %v4663 = vadd.f32 %v4376, %v4628
        %v4664 = vadd.f32 %v4378, %v4632
        %v4665 = vadd.f32 %v4380, %v4628
        %v4666 = vadd.f32 %v4382, %v4632
        %v4667 = vadd.f32 %v4386, %v4628
        %v4668 = vadd.f32 %v4388, %v4632
        %v4669 = vadd.f32 %v4390, %v4628
        %v4670 = vadd.f32 %v4392, %v4632
        %v4671 = vadd.f32 %v4396, %v4628
        %v4672 = vadd.f32 %v4398, %v4632
        %v4673 = vadd.f32 %v4400, %v4628
        %v4674 = vadd.f32 %v4402, %v4632
        %v4675 = vadd.f32 %v4406, %v4628
        %v4676 = vadd.f32 %v4408, %v4632
        %v4677 = vadd.f32 %v4410, %v4628
        %v4678 = vadd.f32 %v4412, %v4632
        %v4679 = vadd.f32 %v4416, %v4628
        %v4680 = vadd.f32 %v4418, %v4632
        %v4681 = vadd.f32 %v4420, %v4628
        %v4682 = vadd.f32 %v4422, %v4632
        %v4683 = vadd.f32 %v4426, %v4628
        %v4684 = vadd.f32 %v4428, %v4632
        %v4685 = vadd.f32 %v4430, %v4628
        %v4686 = vadd.f32 %v4432, %v4632
        %v4687 = vadd.f32 %v4436, %v4628
        %v4688 = vadd.f32 %v4438, %v4632
        %v4689 = vadd.f32 %v4440, %v4628
        %v4690 = vadd.f32 %v4442, %v4632
        %v4691 = vadd.f32 %v4446, %v4628
        %v4692 = vadd.f32 %v4448, %v4632
        %v4693 = vadd.f32 %v4450, %v4628
        %v4694 = vadd.f32 %v4452, %v4632
        %v4695 = vadd.f32 %v4456, %v4628
        %v4696 = vadd.f32 %v4458, %v4632
        %v4697 = vadd.f32 %v4460, %v4628
        %v4698 = vadd.f32 %v4462, %v4632
        %v4699 = vadd.f32 %v4466, %v4628
        %v4700 = vadd.f32 %v4468, %v4632
        %v4701 = vadd.f32 %v4470, %v4628
        %v4702 = vadd.f32 %v4472, %v4632
        %v4703 = vadd.f32 %v4476, %v4628
        %v4704 = vadd.f32 %v4478, %v4632
        %v4705 = vadd.f32 %v4480, %v4628
        %v4706 = vadd.f32 %v4482, %v4632
        %v4707 = vadd.f32 %v4486, %v4628
        %v4708 = vadd.f32 %v4488, %v4632
        %v4709 = vadd.f32 %v4490, %v4628
        %v4710 = vadd.f32 %v4492, %v4632
        %v4711 = vadd.f32 %v4496, %v4628
        %v4712 = vadd.f32 %v4498, %v4632
        %v4713 = vadd.f32 %v4500, %v4628
        %v4714 = vadd.f32 %v4502, %v4632
        %v4715 = vadd.f32 %v4506, %v4628
        %v4716 = vadd.f32 %v4508, %v4632
        %v4717 = vadd.f32 %v4510, %v4628
        %v4718 = vadd.f32 %v4512, %v4632
        %v4719 = vadd.f32 %v4516, %v4628
        %v4720 = vadd.f32 %v4518, %v4632
        %v4721 = vadd.f32 %v4520, %v4628
        %v4722 = vadd.f32 %v4522, %v4632
        %v4723 = vadd.f32 %v4526, %v4628
        %v4724 = vadd.f32 %v4528, %v4632
        %v4725 = vadd.f32 %v4530, %v4628
        %v4726 = vadd.f32 %v4532, %v4632
        %v4727 = vadd.f32 %v4536, %v4628
        %v4728 = vadd.f32 %v4538, %v4632
        %v4729 = vadd.f32 %v4540, %v4628
        %v4730 = vadd.f32 %v4542, %v4632
        %v4731 = vadd.f32 %v4546, %v4628
        %v4732 = vadd.f32 %v4548, %v4632
        %v4733 = vadd.f32 %v4550, %v4628
        %v4734 = vadd.f32 %v4552, %v4632
        %v4735 = vadd.f32 %v4556, %v4628
        %v4736 = vadd.f32 %v4558, %v4632
        %v4737 = vadd.f32 %v4560, %v4628
        %v4738 = vadd.f32 %v4562, %v4632
        %v4739 = vadd.f32 %v4566, %v4628
        %v4740 = vadd.f32 %v4568, %v4632
        %v4741 = vadd.f32 %v4570, %v4628
        %v4742 = vadd.f32 %v4572, %v4632
        %v4743 = vadd.f32 %v4576, %v4628
        %v4744 = vadd.f32 %v4578, %v4632
        %v4745 = vadd.f32 %v4580, %v4628
        %v4746 = vadd.f32 %v4582, %v4632
        %v4747 = vadd.f32 %v4586, %v4628
        %v4748 = vadd.f32 %v4588, %v4632
        %v4749 = vadd.f32 %v4590, %v4628
        %v4750 = vadd.f32 %v4592, %v4632
        %v4751 = vadd.f32 %v4596, %v4628
        %v4752 = vadd.f32 %v4598, %v4632
        %v4753 = vadd.f32 %v4600, %v4628
        %v4754 = vadd.f32 %v4602, %v4632
        %v4755 = vadd.f32 %v4606, %v4628
        %v4756 = vadd.f32 %v4608, %v4632
        %v4757 = vadd.f32 %v4610, %v4628
        %v4758 = vadd.f32 %v4612, %v4632
        %v4759 = vadd.f32 %v4616, %v4628
        %v4760 = vadd.f32 %v4618, %v4632
        %v4761 = vadd.f32 %v4620, %v4628
        %v4762 = vadd.f32 %v4622, %v4632
        %v4763 = vmax.f32 %v4635, 0.0
        %v4764 = vmax.f32 %v4636, 0.0
        %v4765 = vmax.f32 %v4637, 0.0
        %v4766 = vmax.f32 %v4638, 0.0
        %v4767 = vmax.f32 %v4639, 0.0
        %v4768 = vmax.f32 %v4640, 0.0
        %v4769 = vmax.f32 %v4641, 0.0
        %v4770 = vmax.f32 %v4642, 0.0
        %v4771 = vmax.f32 %v4643, 0.0
        %v4772 = vmax.f32 %v4644, 0.0
        %v4773 = vmax.f32 %v4645, 0.0
        %v4774 = vmax.f32 %v4646, 0.0
        %v4775 = vmax.f32 %v4647, 0.0
        %v4776 = vmax.f32 %v4648, 0.0
        %v4777 = vmax.f32 %v4649, 0.0
        %v4778 = vmax.f32 %v4650, 0.0
        %v4779 = vmax.f32 %v4651, 0.0
        %v4780 = vmax.f32 %v4652, 0.0
        %v4781 = vmax.f32 %v4653, 0.0
        %v4782 = vmax.f32 %v4654, 0.0
        %v4783 = vmax.f32 %v4655, 0.0
        %v4784 = vmax.f32 %v4656, 0.0
        %v4785 = vmax.f32 %v4657, 0.0
        %v4786 = vmax.f32 %v4658, 0.0
        %v4787 = vmax.f32 %v4659, 0.0
        %v4788 = vmax.f32 %v4660, 0.0
        %v4789 = vmax.f32 %v4661, 0.0
        %v4790 = vmax.f32 %v4662, 0.0
        %v4791 = vmax.f32 %v4663, 0.0
        %v4792 = vmax.f32 %v4664, 0.0
        %v4793 = vmax.f32 %v4665, 0.0
        %v4794 = vmax.f32 %v4666, 0.0
        %v4795 = vmax.f32 %v4667, 0.0
        %v4796 = vmax.f32 %v4668, 0.0
        %v4797 = vmax.f32 %v4669, 0.0
        %v4798 = vmax.f32 %v4670, 0.0
        %v4799 = vmax.f32 %v4671, 0.0
        %v4800 = vmax.f32 %v4672, 0.0
        %v4801 = vmax.f32 %v4673, 0.0
        %v4802 = vmax.f32 %v4674, 0.0
        %v4803 = vmax.f32 %v4675, 0.0
        %v4804 = vmax.f32 %v4676, 0.0
        %v4805 = vmax.f32 %v4677, 0.0
        %v4806 = vmax.f32 %v4678, 0.0
        %v4807 = vmax.f32 %v4679, 0.0
        %v4808 = vmax.f32 %v4680, 0.0
        %v4809 = vmax.f32 %v4681, 0.0
        %v4810 = vmax.f32 %v4682, 0.0
        %v4811 = vmax.f32 %v4683, 0.0
        %v4812 = vmax.f32 %v4684, 0.0
        %v4813 = vmax.f32 %v4685, 0.0
        %v4814 = vmax.f32 %v4686, 0.0
        %v4815 = vmax.f32 %v4687, 0.0
        %v4816 = vmax.f32 %v4688, 0.0
        %v4817 = vmax.f32 %v4689, 0.0
        %v4818 = vmax.f32 %v4690, 0.0
        %v4819 = vmax.f32 %v4691, 0.0
        %v4820 = vmax.f32 %v4692, 0.0
        %v4821 = vmax.f32 %v4693, 0.0
        %v4822 = vmax.f32 %v4694, 0.0
        %v4823 = vmax.f32 %v4695, 0.0
        %v4824 = vmax.f32 %v4696, 0.0
        %v4825 = vmax.f32 %v4697, 0.0
        %v4826 = vmax.f32 %v4698, 0.0
        %v4827 = vmax.f32 %v4699, 0.0
        %v4828 = vmax.f32 %v4700, 0.0
        %v4829 = vmax.f32 %v4701, 0.0
        %v4830 = vmax.f32 %v4702, 0.0
        %v4831 = vmax.f32 %v4703, 0.0
        %v4832 = vmax.f32 %v4704, 0.0
        %v4833 = vmax.f32 %v4705, 0.0
        %v4834 = vmax.f32 %v4706, 0.0
        %v4835 = vmax.f32 %v4707, 0.0
        %v4836 = vmax.f32 %v4708, 0.0
        %v4837 = vmax.f32 %v4709, 0.0
        %v4838 = vmax.f32 %v4710, 0.0
        %v4839 = vmax.f32 %v4711, 0.0
        %v4840 = vmax.f32 %v4712, 0.0
        %v4841 = vmax.f32 %v4713, 0.0
        %v4842 = vmax.f32 %v4714, 0.0
        %v4843 = vmax.f32 %v4715, 0.0
        %v4844 = vmax.f32 %v4716, 0.0
        %v4845 = vmax.f32 %v4717, 0.0
        %v4846 = vmax.f32 %v4718, 0.0
        %v4847 = vmax.f32 %v4719, 0.0
        %v4848 = vmax.f32 %v4720, 0.0
        %v4849 = vmax.f32 %v4721, 0.0
        %v4850 = vmax.f32 %v4722, 0.0
        %v4851 = vmax.f32 %v4723, 0.0
        %v4852 = vmax.f32 %v4724, 0.0
        %v4853 = vmax.f32 %v4725, 0.0
        %v4854 = vmax.f32 %v4726, 0.0
        %v4855 = vmax.f32 %v4727, 0.0
        %v4856 = vmax.f32 %v4728, 0.0
        %v4857 = vmax.f32 %v4729, 0.0
        %v4858 = vmax.f32 %v4730, 0.0
        %v4859 = vmax.f32 %v4731, 0.0
        %v4860 = vmax.f32 %v4732, 0.0
        %v4861 = vmax.f32 %v4733, 0.0
        %v4862 = vmax.f32 %v4734, 0.0
        %v4863 = vmax.f32 %v4735, 0.0
        %v4864 = vmax.f32 %v4736, 0.0
        %v4865 = vmax.f32 %v4737, 0.0
        %v4866 = vmax.f32 %v4738, 0.0
        %v4867 = vmax.f32 %v4739, 0.0
        %v4868 = vmax.f32 %v4740, 0.0
        %v4869 = vmax.f32 %v4741, 0.0
        %v4870 = vmax.f32 %v4742, 0.0
        %v4871 = vmax.f32 %v4743, 0.0
        %v4872 = vmax.f32 %v4744, 0.0
        %v4873 = vmax.f32 %v4745, 0.0
        %v4874 = vmax.f32 %v4746, 0.0
        %v4875 = vmax.f32 %v4747, 0.0
        %v4876 = vmax.f32 %v4748, 0.0
        %v4877 = vmax.f32 %v4749, 0.0
        %v4878 = vmax.f32 %v4750, 0.0
        %v4879 = vmax.f32 %v4751, 0.0
        %v4880 = vmax.f32 %v4752, 0.0
        %v4881 = vmax.f32 %v4753, 0.0
        %v4882 = vmax.f32 %v4754, 0.0
        %v4883 = vmax.f32 %v4755, 0.0
        %v4884 = vmax.f32 %v4756, 0.0
        %v4885 = vmax.f32 %v4757, 0.0
        %v4886 = vmax.f32 %v4758, 0.0
        %v4887 = vmax.f32 %v4759, 0.0
        %v4888 = vmax.f32 %v4760, 0.0
        %v4889 = vmax.f32 %v4761, 0.0
        %v4890 = vmax.f32 %v4762, 0.0
        %v4891 = vld [vmem:[%s12] sm:$0xff]
        %v4892 = vld [vmem:[%s12 + $0x8] sm:$0xff]
        %v4893 = vld [vmem:[%s12 + $0x10] sm:$0xff]
        %v4894 = vld [vmem:[%s12 + $0x18] sm:$0xff]
        %v4895 = vld [vmem:[%s12 + $0x20] sm:$0xff]
        %v4896 = vld [vmem:[%s12 + $0x28] sm:$0xff]
        %v4897 = vld [vmem:[%s12 + $0x30] sm:$0xff]
        %v4898 = vld [vmem:[%s12 + $0x38] sm:$0xff]
        %v4899 = vld [vmem:[%s12 + $0x40] sm:$0xff]
        %v4900 = vld [vmem:[%s12 + $0x48] sm:$0xff]
        %v4901 = vld [vmem:[%s12 + $0x50] sm:$0xff]
        %v4902 = vld [vmem:[%s12 + $0x58] sm:$0xff]
        %v4903 = vld [vmem:[%s12 + $0x60] sm:$0xff]
        %v4904 = vld [vmem:[%s12 + $0x68] sm:$0xff]
        %v4905 = vld [vmem:[%s12 + $0x70] sm:$0xff]
        %v4906 = vld [vmem:[%s12 + $0x78] sm:$0xff]
        %v4907 = vld [vmem:[%s12 + $0x80] sm:$0xff]
        %v4908 = vld [vmem:[%s12 + $0x88] sm:$0xff]
        %v4909 = vld [vmem:[%s12 + $0x90] sm:$0xff]
        %v4910 = vld [vmem:[%s12 + $0x98] sm:$0xff]
        %v4911 = vld [vmem:[%s12 + $0xa0] sm:$0xff]
        %v4912 = vld [vmem:[%s12 + $0xa8] sm:$0xff]
        %v4913 = vld [vmem:[%s12 + $0xb0] sm:$0xff]
        %v4914 = vld [vmem:[%s12 + $0xb8] sm:$0xff]
        %v4915 = vld [vmem:[%s12 + $0xc0] sm:$0xff]
        %v4916 = vld [vmem:[%s12 + $0xc8] sm:$0xff]
        %v4917 = vld [vmem:[%s12 + $0xd0] sm:$0xff]
        %v4918 = vld [vmem:[%s12 + $0xd8] sm:$0xff]
        %v4919 = vld [vmem:[%s12 + $0xe0] sm:$0xff]
        %v4920 = vld [vmem:[%s12 + $0xe8] sm:$0xff]
        %v4921 = vld [vmem:[%s12 + $0xf0] sm:$0xff]
        %v4922 = vld [vmem:[%s12 + $0xf8] sm:$0xff]
        %v4923 = vld [vmem:[%s13] sm:$0x3]
        %v4924 = vpack.c.bf16 %v4765, %v4763
        %v4925 = vpack.c.bf16 %v4766, %v4764
        %v4926 = vpack.c.bf16 %v4769, %v4767
        %v4927 = vpack.c.bf16 %v4770, %v4768
        %v4928 = vpack.c.bf16 %v4773, %v4771
        %v4929 = vpack.c.bf16 %v4774, %v4772
        %v4930 = vpack.c.bf16 %v4777, %v4775
        %v4931 = vpack.c.bf16 %v4778, %v4776
        %v4932 = vpack.c.bf16 %v4781, %v4779
        %v4933 = vpack.c.bf16 %v4782, %v4780
        %v4934 = vpack.c.bf16 %v4785, %v4783
        %v4935 = vpack.c.bf16 %v4786, %v4784
        %v4936 = vpack.c.bf16 %v4789, %v4787
        %v4937 = vpack.c.bf16 %v4790, %v4788
        %v4938 = vpack.c.bf16 %v4793, %v4791
        %v4939 = vpack.c.bf16 %v4794, %v4792
        %v4940 = vpack.c.bf16 %v4797, %v4795
        %v4941 = vpack.c.bf16 %v4798, %v4796
        %v4942 = vpack.c.bf16 %v4801, %v4799
        %v4943 = vpack.c.bf16 %v4802, %v4800
        %v4944 = vpack.c.bf16 %v4805, %v4803
        %v4945 = vpack.c.bf16 %v4806, %v4804
        %v4946 = vpack.c.bf16 %v4809, %v4807
        %v4947 = vpack.c.bf16 %v4810, %v4808
        %v4948 = vpack.c.bf16 %v4813, %v4811
        %v4949 = vpack.c.bf16 %v4814, %v4812
        %v4950 = vpack.c.bf16 %v4817, %v4815
        %v4951 = vpack.c.bf16 %v4818, %v4816
        %v4952 = vpack.c.bf16 %v4821, %v4819
        %v4953 = vpack.c.bf16 %v4822, %v4820
        %v4954 = vpack.c.bf16 %v4825, %v4823
        %v4955 = vpack.c.bf16 %v4826, %v4824
        %v4956 = vpack.c.bf16 %v4829, %v4827
        %v4957 = vpack.c.bf16 %v4830, %v4828
        %v4958 = vpack.c.bf16 %v4833, %v4831
        %v4959 = vpack.c.bf16 %v4834, %v4832
        %v4960 = vpack.c.bf16 %v4837, %v4835
        %v4961 = vpack.c.bf16 %v4838, %v4836
        %v4962 = vpack.c.bf16 %v4841, %v4839
        %v4963 = vpack.c.bf16 %v4842, %v4840
        %v4964 = vpack.c.bf16 %v4845, %v4843
        %v4965 = vpack.c.bf16 %v4846, %v4844
        %v4966 = vpack.c.bf16 %v4849, %v4847
        %v4967 = vpack.c.bf16 %v4850, %v4848
        %v4968 = vpack.c.bf16 %v4853, %v4851
        %v4969 = vpack.c.bf16 %v4854, %v4852
        %v4970 = vpack.c.bf16 %v4857, %v4855
        %v4971 = vpack.c.bf16 %v4858, %v4856
        %v4972 = vpack.c.bf16 %v4861, %v4859
        %v4973 = vpack.c.bf16 %v4862, %v4860
        %v4974 = vpack.c.bf16 %v4865, %v4863
        %v4975 = vpack.c.bf16 %v4866, %v4864
        %v4976 = vpack.c.bf16 %v4869, %v4867
        %v4977 = vpack.c.bf16 %v4870, %v4868
        %v4978 = vpack.c.bf16 %v4873, %v4871
        %v4979 = vpack.c.bf16 %v4874, %v4872
        %v4980 = vpack.c.bf16 %v4877, %v4875
        %v4981 = vpack.c.bf16 %v4878, %v4876
        %v4982 = vpack.c.bf16 %v4881, %v4879
        %v4983 = vpack.c.bf16 %v4882, %v4880
        %v4984 = vpack.c.bf16 %v4885, %v4883
        %v4985 = vpack.c.bf16 %v4886, %v4884
        %v4986 = vpack.c.bf16 %v4889, %v4887
        %v4987 = vpack.c.bf16 %v4890, %v4888
        %v4989 = vlaneseq
        %v4990 = vshrl.u32 %v4989, 7
        %v4991 = vsub.s32 0, %v4990
        %v4992 = vrot.slane %v4923, %v4991
        %v4993 = vlaneseq
        %v4994 = vshrl.u32 %v4993, 7
        %v4995 = vsub.s32 1, %v4994
        %v4996 = vrot.slane %v4923, %v4995
        %v5031 = vunpack.c.l.b16 %v4891
        %v5032 = vunpack.c.h.b16 %v4891
        %v5033 = vunpack.c.l.b16 %v4892
        %v5034 = vunpack.c.h.b16 %v4892
        %v5035 = vunpack.c.l.b16 %v4893
        %v5036 = vunpack.c.h.b16 %v4893
        %v5037 = vunpack.c.l.b16 %v4894
        %v5038 = vunpack.c.h.b16 %v4894
        %v5039 = vunpack.c.l.b16 %v4895
        %v5040 = vunpack.c.h.b16 %v4895
        %v5041 = vunpack.c.l.b16 %v4896
        %v5042 = vunpack.c.h.b16 %v4896
        %v5043 = vunpack.c.l.b16 %v4897
        %v5044 = vunpack.c.h.b16 %v4897
        %v5045 = vunpack.c.l.b16 %v4898
        %v5046 = vunpack.c.h.b16 %v4898
        %v5047 = vunpack.c.l.b16 %v4899
        %v5048 = vunpack.c.h.b16 %v4899
        %v5049 = vunpack.c.l.b16 %v4900
        %v5050 = vunpack.c.h.b16 %v4900
        %v5051 = vunpack.c.l.b16 %v4901
        %v5052 = vunpack.c.h.b16 %v4901
        %v5053 = vunpack.c.l.b16 %v4902
        %v5054 = vunpack.c.h.b16 %v4902
        %v5055 = vunpack.c.l.b16 %v4903
        %v5056 = vunpack.c.h.b16 %v4903
        %v5057 = vunpack.c.l.b16 %v4904
        %v5058 = vunpack.c.h.b16 %v4904
        %v5059 = vunpack.c.l.b16 %v4905
        %v5060 = vunpack.c.h.b16 %v4905
        %v5061 = vunpack.c.l.b16 %v4906
        %v5062 = vunpack.c.h.b16 %v4906
        %v5063 = vunpack.c.l.b16 %v4907
        %v5064 = vunpack.c.h.b16 %v4907
        %v5065 = vunpack.c.l.b16 %v4908
        %v5066 = vunpack.c.h.b16 %v4908
        %v5067 = vunpack.c.l.b16 %v4909
        %v5068 = vunpack.c.h.b16 %v4909
        %v5069 = vunpack.c.l.b16 %v4910
        %v5070 = vunpack.c.h.b16 %v4910
        %v5071 = vunpack.c.l.b16 %v4911
        %v5072 = vunpack.c.h.b16 %v4911
        %v5073 = vunpack.c.l.b16 %v4912
        %v5074 = vunpack.c.h.b16 %v4912
        %v5075 = vunpack.c.l.b16 %v4913
        %v5076 = vunpack.c.h.b16 %v4913
        %v5077 = vunpack.c.l.b16 %v4914
        %v5078 = vunpack.c.h.b16 %v4914
        %v5079 = vunpack.c.l.b16 %v4915
        %v5080 = vunpack.c.h.b16 %v4915
        %v5081 = vunpack.c.l.b16 %v4916
        %v5082 = vunpack.c.h.b16 %v4916
        %v5083 = vunpack.c.l.b16 %v4917
        %v5084 = vunpack.c.h.b16 %v4917
        %v5085 = vunpack.c.l.b16 %v4918
        %v5086 = vunpack.c.h.b16 %v4918
        %v5087 = vunpack.c.l.b16 %v4919
        %v5088 = vunpack.c.h.b16 %v4919
        %v5089 = vunpack.c.l.b16 %v4920
        %v5090 = vunpack.c.h.b16 %v4920
        %v5091 = vunpack.c.l.b16 %v4921
        %v5092 = vunpack.c.h.b16 %v4921
        %v5093 = vunpack.c.l.b16 %v4922
        %v5094 = vunpack.c.h.b16 %v4922
        %v5095 = vpack.c.b16 %v5033, %v5031
        %v5096 = vpack.c.b16 %v5034, %v5032
        %v5097 = vpack.c.b16 %v5037, %v5035
        %v5098 = vpack.c.b16 %v5038, %v5036
        %v5099 = vpack.c.b16 %v5041, %v5039
        %v5100 = vpack.c.b16 %v5042, %v5040
        %v5101 = vpack.c.b16 %v5045, %v5043
        %v5102 = vpack.c.b16 %v5046, %v5044
        %v5103 = vpack.c.b16 %v5049, %v5047
        %v5104 = vpack.c.b16 %v5050, %v5048
        %v5105 = vpack.c.b16 %v5053, %v5051
        %v5106 = vpack.c.b16 %v5054, %v5052
        %v5107 = vpack.c.b16 %v5057, %v5055
        %v5108 = vpack.c.b16 %v5058, %v5056
        %v5109 = vpack.c.b16 %v5061, %v5059
        %v5110 = vpack.c.b16 %v5062, %v5060
        %v5111 = vpack.c.b16 %v5065, %v5063
        %v5112 = vpack.c.b16 %v5066, %v5064
        %v5113 = vpack.c.b16 %v5069, %v5067
        %v5114 = vpack.c.b16 %v5070, %v5068
        %v5115 = vpack.c.b16 %v5073, %v5071
        %v5116 = vpack.c.b16 %v5074, %v5072
        %v5117 = vpack.c.b16 %v5077, %v5075
        %v5118 = vpack.c.b16 %v5078, %v5076
        %v5119 = vpack.c.b16 %v5081, %v5079
        %v5120 = vpack.c.b16 %v5082, %v5080
        %v5121 = vpack.c.b16 %v5085, %v5083
        %v5122 = vpack.c.b16 %v5086, %v5084
        %v5123 = vpack.c.b16 %v5089, %v5087
        %v5124 = vpack.c.b16 %v5090, %v5088
        %v5125 = vpack.c.b16 %v5093, %v5091
        %v5126 = vpack.c.b16 %v5094, %v5092
        %5159 = vmatprep.subr.bf16.mxu0 %v5110
        %5160 = vmatpush1.bf16.msra.mxu0 %v5109
        %5161 = vmatprep.subr.bf16.mxu0 %v5108
        %5162 = vmatpush1.bf16.msra.mxu0 %v5107
        %5163 = vmatprep.subr.bf16.mxu0 %v5106
        %5164 = vmatpush1.bf16.msra.mxu0 %v5105
        %5165 = vmatprep.subr.bf16.mxu0 %v5104
        %5166 = vmatpush1.bf16.msra.mxu0 %v5103
        %5167 = vmatprep.subr.bf16.mxu0 %v5102
        %5168 = vmatpush1.bf16.msra.mxu0 %v5101
        %5169 = vmatprep.subr.bf16.mxu0 %v5100
        %5170 = vmatpush1.bf16.msra.mxu0 %v5099
        %5171 = vmatprep.subr.bf16.mxu0 %v5098
        %5172 = vmatpush1.bf16.msra.mxu0 %v5097
        %5173 = vmatprep.subr.bf16.mxu0 %v5096
        %5174 = vmatpush1.bf16.msra.mxu0 %v5095
        %5175 = vmatprep.subr.bf16.mxu0 %v5126
        %5176 = vmatpush2.bf16.msra.mxu0 %v5125
        %5177 = vmatprep.subr.bf16.mxu0 %v5124
        %5178 = vmatpush2.bf16.msra.mxu0 %v5123
        %5179 = vmatprep.subr.bf16.mxu0 %v5122
        %5180 = vmatpush2.bf16.msra.mxu0 %v5121
        %5181 = vmatprep.subr.bf16.mxu0 %v5120
        %5182 = vmatpush2.bf16.msra.mxu0 %v5119
        %5183 = vmatprep.subr.bf16.mxu0 %v5118
        %5184 = vmatpush2.bf16.msra.mxu0 %v5117
        %5185 = vmatprep.subr.bf16.mxu0 %v5116
        %5186 = vmatpush2.bf16.msra.mxu0 %v5115
        %5187 = vmatprep.subr.bf16.mxu0 %v5114
        %5188 = vmatpush2.bf16.msra.mxu0 %v5113
        %5189 = vmatprep.subr.bf16.mxu0 %v5112
        %5190 = vmatpush2.bf16.msra.mxu0 %v5111
        %5191 = vmatprep.mubr.bf16.mxu0 %v4925
        %5192 = vmatmul.mubr.bf16.gmra.mxu0 %v4924
        %v5193 = vpop.f32.mrf.mxu0
        %v5194 = vadd.f32 %v4992, %v5193
        %v5195 = vpop.f32.mrf.mxu0
        %v5196 = vadd.f32 %v4996, %v5195
        %v5197 = vpop.f32.mrf.mxu0
        %v5198 = vadd.f32 %v4992, %v5197
        %v5199 = vpop.f32.mrf.mxu0
        %v5200 = vadd.f32 %v4996, %v5199
        %5201 = vmatprep.mubr.bf16.mxu0 %v4927
        %5202 = vmatmul.mubr.bf16.gmra.mxu0 %v4926
        %v5203 = vpop.f32.mrf.mxu0
        %v5204 = vadd.f32 %v4992, %v5203
        %v5205 = vpop.f32.mrf.mxu0
        %v5206 = vadd.f32 %v4996, %v5205
        %v5207 = vpop.f32.mrf.mxu0
        %v5208 = vadd.f32 %v4992, %v5207
        %v5209 = vpop.f32.mrf.mxu0
        %v5210 = vadd.f32 %v4996, %v5209
        %5211 = vmatprep.mubr.bf16.mxu0 %v4929
        %5212 = vmatmul.mubr.bf16.gmra.mxu0 %v4928
        %v5213 = vpop.f32.mrf.mxu0
        %v5214 = vadd.f32 %v4992, %v5213
        %v5215 = vpop.f32.mrf.mxu0
        %v5216 = vadd.f32 %v4996, %v5215
        %v5217 = vpop.f32.mrf.mxu0
        %v5218 = vadd.f32 %v4992, %v5217
        %v5219 = vpop.f32.mrf.mxu0
        %v5220 = vadd.f32 %v4996, %v5219
        %5221 = vmatprep.mubr.bf16.mxu0 %v4931
        %5222 = vmatmul.mubr.bf16.gmra.mxu0 %v4930
        %v5223 = vpop.f32.mrf.mxu0
        %v5224 = vadd.f32 %v4992, %v5223
        %v5225 = vpop.f32.mrf.mxu0
        %v5226 = vadd.f32 %v4996, %v5225
        %v5227 = vpop.f32.mrf.mxu0
        %v5228 = vadd.f32 %v4992, %v5227
        %v5229 = vpop.f32.mrf.mxu0
        %v5230 = vadd.f32 %v4996, %v5229
        %5231 = vmatprep.mubr.bf16.mxu0 %v4933
        %5232 = vmatmul.mubr.bf16.gmra.mxu0 %v4932
        %v5233 = vpop.f32.mrf.mxu0
        %v5234 = vadd.f32 %v4992, %v5233
        %v5235 = vpop.f32.mrf.mxu0
        %v5236 = vadd.f32 %v4996, %v5235
        %v5237 = vpop.f32.mrf.mxu0
        %v5238 = vadd.f32 %v4992, %v5237
        %v5239 = vpop.f32.mrf.mxu0
        %v5240 = vadd.f32 %v4996, %v5239
        %5241 = vmatprep.mubr.bf16.mxu0 %v4935
        %5242 = vmatmul.mubr.bf16.gmra.mxu0 %v4934
        %v5243 = vpop.f32.mrf.mxu0
        %v5244 = vadd.f32 %v4992, %v5243
        %v5245 = vpop.f32.mrf.mxu0
        %v5246 = vadd.f32 %v4996, %v5245
        %v5247 = vpop.f32.mrf.mxu0
        %v5248 = vadd.f32 %v4992, %v5247
        %v5249 = vpop.f32.mrf.mxu0
        %v5250 = vadd.f32 %v4996, %v5249
        %5251 = vmatprep.mubr.bf16.mxu0 %v4937
        %5252 = vmatmul.mubr.bf16.gmra.mxu0 %v4936
        %v5253 = vpop.f32.mrf.mxu0
        %v5254 = vadd.f32 %v4992, %v5253
        %v5255 = vpop.f32.mrf.mxu0
        %v5256 = vadd.f32 %v4996, %v5255
        %v5257 = vpop.f32.mrf.mxu0
        %v5258 = vadd.f32 %v4992, %v5257
        %v5259 = vpop.f32.mrf.mxu0
        %v5260 = vadd.f32 %v4996, %v5259
        %5261 = vmatprep.mubr.bf16.mxu0 %v4939
        %5262 = vmatmul.mubr.bf16.gmra.mxu0 %v4938
        %v5263 = vpop.f32.mrf.mxu0
        %v5264 = vadd.f32 %v4992, %v5263
        %v5265 = vpop.f32.mrf.mxu0
        %v5266 = vadd.f32 %v4996, %v5265
        %v5267 = vpop.f32.mrf.mxu0
        %v5268 = vadd.f32 %v4992, %v5267
        %v5269 = vpop.f32.mrf.mxu0
        %v5270 = vadd.f32 %v4996, %v5269
        %5271 = vmatprep.mubr.bf16.mxu0 %v4941
        %5272 = vmatmul.mubr.bf16.gmra.mxu0 %v4940
        %v5273 = vpop.f32.mrf.mxu0
        %v5274 = vadd.f32 %v4992, %v5273
        %v5275 = vpop.f32.mrf.mxu0
        %v5276 = vadd.f32 %v4996, %v5275
        %v5277 = vpop.f32.mrf.mxu0
        %v5278 = vadd.f32 %v4992, %v5277
        %v5279 = vpop.f32.mrf.mxu0
        %v5280 = vadd.f32 %v4996, %v5279
        %5281 = vmatprep.mubr.bf16.mxu0 %v4943
        %5282 = vmatmul.mubr.bf16.gmra.mxu0 %v4942
        %v5283 = vpop.f32.mrf.mxu0
        %v5284 = vadd.f32 %v4992, %v5283
        %v5285 = vpop.f32.mrf.mxu0
        %v5286 = vadd.f32 %v4996, %v5285
        %v5287 = vpop.f32.mrf.mxu0
        %v5288 = vadd.f32 %v4992, %v5287
        %v5289 = vpop.f32.mrf.mxu0
        %v5290 = vadd.f32 %v4996, %v5289
        %5291 = vmatprep.mubr.bf16.mxu0 %v4945
        %5292 = vmatmul.mubr.bf16.gmra.mxu0 %v4944
        %v5293 = vpop.f32.mrf.mxu0
        %v5294 = vadd.f32 %v4992, %v5293
        %v5295 = vpop.f32.mrf.mxu0
        %v5296 = vadd.f32 %v4996, %v5295
        %v5297 = vpop.f32.mrf.mxu0
        %v5298 = vadd.f32 %v4992, %v5297
        %v5299 = vpop.f32.mrf.mxu0
        %v5300 = vadd.f32 %v4996, %v5299
        %5301 = vmatprep.mubr.bf16.mxu0 %v4947
        %5302 = vmatmul.mubr.bf16.gmra.mxu0 %v4946
        %v5303 = vpop.f32.mrf.mxu0
        %v5304 = vadd.f32 %v4992, %v5303
        %v5305 = vpop.f32.mrf.mxu0
        %v5306 = vadd.f32 %v4996, %v5305
        %v5307 = vpop.f32.mrf.mxu0
        %v5308 = vadd.f32 %v4992, %v5307
        %v5309 = vpop.f32.mrf.mxu0
        %v5310 = vadd.f32 %v4996, %v5309
        %5311 = vmatprep.mubr.bf16.mxu0 %v4949
        %5312 = vmatmul.mubr.bf16.gmra.mxu0 %v4948
        %v5313 = vpop.f32.mrf.mxu0
        %v5314 = vadd.f32 %v4992, %v5313
        %v5315 = vpop.f32.mrf.mxu0
        %v5316 = vadd.f32 %v4996, %v5315
        %v5317 = vpop.f32.mrf.mxu0
        %v5318 = vadd.f32 %v4992, %v5317
        %v5319 = vpop.f32.mrf.mxu0
        %v5320 = vadd.f32 %v4996, %v5319
        %5321 = vmatprep.mubr.bf16.mxu0 %v4951
        %5322 = vmatmul.mubr.bf16.gmra.mxu0 %v4950
        %v5323 = vpop.f32.mrf.mxu0
        %v5324 = vadd.f32 %v4992, %v5323
        %v5325 = vpop.f32.mrf.mxu0
        %v5326 = vadd.f32 %v4996, %v5325
        %v5327 = vpop.f32.mrf.mxu0
        %v5328 = vadd.f32 %v4992, %v5327
        %v5329 = vpop.f32.mrf.mxu0
        %v5330 = vadd.f32 %v4996, %v5329
        %5331 = vmatprep.mubr.bf16.mxu0 %v4953
        %5332 = vmatmul.mubr.bf16.gmra.mxu0 %v4952
        %v5333 = vpop.f32.mrf.mxu0
        %v5334 = vadd.f32 %v4992, %v5333
        %v5335 = vpop.f32.mrf.mxu0
        %v5336 = vadd.f32 %v4996, %v5335
        %v5337 = vpop.f32.mrf.mxu0
        %v5338 = vadd.f32 %v4992, %v5337
        %v5339 = vpop.f32.mrf.mxu0
        %v5340 = vadd.f32 %v4996, %v5339
        %5341 = vmatprep.mubr.bf16.mxu0 %v4955
        %5342 = vmatmul.mubr.bf16.gmra.mxu0 %v4954
        %v5343 = vpop.f32.mrf.mxu0
        %v5344 = vadd.f32 %v4992, %v5343
        %v5345 = vpop.f32.mrf.mxu0
        %v5346 = vadd.f32 %v4996, %v5345
        %v5347 = vpop.f32.mrf.mxu0
        %v5348 = vadd.f32 %v4992, %v5347
        %v5349 = vpop.f32.mrf.mxu0
        %v5350 = vadd.f32 %v4996, %v5349
        %5351 = vmatprep.mubr.bf16.mxu0 %v4957
        %5352 = vmatmul.mubr.bf16.gmra.mxu0 %v4956
        %v5353 = vpop.f32.mrf.mxu0
        %v5354 = vadd.f32 %v4992, %v5353
        %v5355 = vpop.f32.mrf.mxu0
        %v5356 = vadd.f32 %v4996, %v5355
        %v5357 = vpop.f32.mrf.mxu0
        %v5358 = vadd.f32 %v4992, %v5357
        %v5359 = vpop.f32.mrf.mxu0
        %v5360 = vadd.f32 %v4996, %v5359
        %5361 = vmatprep.mubr.bf16.mxu0 %v4959
        %5362 = vmatmul.mubr.bf16.gmra.mxu0 %v4958
        %v5363 = vpop.f32.mrf.mxu0
        %v5364 = vadd.f32 %v4992, %v5363
        %v5365 = vpop.f32.mrf.mxu0
        %v5366 = vadd.f32 %v4996, %v5365
        %v5367 = vpop.f32.mrf.mxu0
        %v5368 = vadd.f32 %v4992, %v5367
        %v5369 = vpop.f32.mrf.mxu0
        %v5370 = vadd.f32 %v4996, %v5369
        %5371 = vmatprep.mubr.bf16.mxu0 %v4961
        %5372 = vmatmul.mubr.bf16.gmra.mxu0 %v4960
        %v5373 = vpop.f32.mrf.mxu0
        %v5374 = vadd.f32 %v4992, %v5373
        %v5375 = vpop.f32.mrf.mxu0
        %v5376 = vadd.f32 %v4996, %v5375
        %v5377 = vpop.f32.mrf.mxu0
        %v5378 = vadd.f32 %v4992, %v5377
        %v5379 = vpop.f32.mrf.mxu0
        %v5380 = vadd.f32 %v4996, %v5379
        %5381 = vmatprep.mubr.bf16.mxu0 %v4963
        %5382 = vmatmul.mubr.bf16.gmra.mxu0 %v4962
        %v5383 = vpop.f32.mrf.mxu0
        %v5384 = vadd.f32 %v4992, %v5383
        %v5385 = vpop.f32.mrf.mxu0
        %v5386 = vadd.f32 %v4996, %v5385
        %v5387 = vpop.f32.mrf.mxu0
        %v5388 = vadd.f32 %v4992, %v5387
        %v5389 = vpop.f32.mrf.mxu0
        %v5390 = vadd.f32 %v4996, %v5389
        %5391 = vmatprep.mubr.bf16.mxu0 %v4965
        %5392 = vmatmul.mubr.bf16.gmra.mxu0 %v4964
        %v5393 = vpop.f32.mrf.mxu0
        %v5394 = vadd.f32 %v4992, %v5393
        %v5395 = vpop.f32.mrf.mxu0
        %v5396 = vadd.f32 %v4996, %v5395
        %v5397 = vpop.f32.mrf.mxu0
        %v5398 = vadd.f32 %v4992, %v5397
        %v5399 = vpop.f32.mrf.mxu0
        %v5400 = vadd.f32 %v4996, %v5399
        %5401 = vmatprep.mubr.bf16.mxu0 %v4967
        %5402 = vmatmul.mubr.bf16.gmra.mxu0 %v4966
        %v5403 = vpop.f32.mrf.mxu0
        %v5404 = vadd.f32 %v4992, %v5403
        %v5405 = vpop.f32.mrf.mxu0
        %v5406 = vadd.f32 %v4996, %v5405
        %v5407 = vpop.f32.mrf.mxu0
        %v5408 = vadd.f32 %v4992, %v5407
        %v5409 = vpop.f32.mrf.mxu0
        %v5410 = vadd.f32 %v4996, %v5409
        %5411 = vmatprep.mubr.bf16.mxu0 %v4969
        %5412 = vmatmul.mubr.bf16.gmra.mxu0 %v4968
        %v5413 = vpop.f32.mrf.mxu0
        %v5414 = vadd.f32 %v4992, %v5413
        %v5415 = vpop.f32.mrf.mxu0
        %v5416 = vadd.f32 %v4996, %v5415
        %v5417 = vpop.f32.mrf.mxu0
        %v5418 = vadd.f32 %v4992, %v5417
        %v5419 = vpop.f32.mrf.mxu0
        %v5420 = vadd.f32 %v4996, %v5419
        %5421 = vmatprep.mubr.bf16.mxu0 %v4971
        %5422 = vmatmul.mubr.bf16.gmra.mxu0 %v4970
        %v5423 = vpop.f32.mrf.mxu0
        %v5424 = vadd.f32 %v4992, %v5423
        %v5425 = vpop.f32.mrf.mxu0
        %v5426 = vadd.f32 %v4996, %v5425
        %v5427 = vpop.f32.mrf.mxu0
        %v5428 = vadd.f32 %v4992, %v5427
        %v5429 = vpop.f32.mrf.mxu0
        %v5430 = vadd.f32 %v4996, %v5429
        %5431 = vmatprep.mubr.bf16.mxu0 %v4973
        %5432 = vmatmul.mubr.bf16.gmra.mxu0 %v4972
        %v5433 = vpop.f32.mrf.mxu0
        %v5434 = vadd.f32 %v4992, %v5433
        %v5435 = vpop.f32.mrf.mxu0
        %v5436 = vadd.f32 %v4996, %v5435
        %v5437 = vpop.f32.mrf.mxu0
        %v5438 = vadd.f32 %v4992, %v5437
        %v5439 = vpop.f32.mrf.mxu0
        %v5440 = vadd.f32 %v4996, %v5439
        %5441 = vmatprep.mubr.bf16.mxu0 %v4975
        %5442 = vmatmul.mubr.bf16.gmra.mxu0 %v4974
        %v5443 = vpop.f32.mrf.mxu0
        %v5444 = vadd.f32 %v4992, %v5443
        %v5445 = vpop.f32.mrf.mxu0
        %v5446 = vadd.f32 %v4996, %v5445
        %v5447 = vpop.f32.mrf.mxu0
        %v5448 = vadd.f32 %v4992, %v5447
        %v5449 = vpop.f32.mrf.mxu0
        %v5450 = vadd.f32 %v4996, %v5449
        %5451 = vmatprep.mubr.bf16.mxu0 %v4977
        %5452 = vmatmul.mubr.bf16.gmra.mxu0 %v4976
        %v5453 = vpop.f32.mrf.mxu0
        %v5454 = vadd.f32 %v4992, %v5453
        %v5455 = vpop.f32.mrf.mxu0
        %v5456 = vadd.f32 %v4996, %v5455
        %v5457 = vpop.f32.mrf.mxu0
        %v5458 = vadd.f32 %v4992, %v5457
        %v5459 = vpop.f32.mrf.mxu0
        %v5460 = vadd.f32 %v4996, %v5459
        %5461 = vmatprep.mubr.bf16.mxu0 %v4979
        %5462 = vmatmul.mubr.bf16.gmra.mxu0 %v4978
        %v5463 = vpop.f32.mrf.mxu0
        %v5464 = vadd.f32 %v4992, %v5463
        %v5465 = vpop.f32.mrf.mxu0
        %v5466 = vadd.f32 %v4996, %v5465
        %v5467 = vpop.f32.mrf.mxu0
        %v5468 = vadd.f32 %v4992, %v5467
        %v5469 = vpop.f32.mrf.mxu0
        %v5470 = vadd.f32 %v4996, %v5469
        %5471 = vmatprep.mubr.bf16.mxu0 %v4981
        %5472 = vmatmul.mubr.bf16.gmra.mxu0 %v4980
        %v5473 = vpop.f32.mrf.mxu0
        %v5474 = vadd.f32 %v4992, %v5473
        %v5475 = vpop.f32.mrf.mxu0
        %v5476 = vadd.f32 %v4996, %v5475
        %v5477 = vpop.f32.mrf.mxu0
        %v5478 = vadd.f32 %v4992, %v5477
        %v5479 = vpop.f32.mrf.mxu0
        %v5480 = vadd.f32 %v4996, %v5479
        %5481 = vmatprep.mubr.bf16.mxu0 %v4983
        %5482 = vmatmul.mubr.bf16.gmra.mxu0 %v4982
        %v5483 = vpop.f32.mrf.mxu0
        %v5484 = vadd.f32 %v4992, %v5483
        %v5485 = vpop.f32.mrf.mxu0
        %v5486 = vadd.f32 %v4996, %v5485
        %v5487 = vpop.f32.mrf.mxu0
        %v5488 = vadd.f32 %v4992, %v5487
        %v5489 = vpop.f32.mrf.mxu0
        %v5490 = vadd.f32 %v4996, %v5489
        %5491 = vmatprep.mubr.bf16.mxu0 %v4985
        %5492 = vmatmul.mubr.bf16.gmra.mxu0 %v4984
        %v5493 = vpop.f32.mrf.mxu0
        %v5494 = vadd.f32 %v4992, %v5493
        %v5495 = vpop.f32.mrf.mxu0
        %v5496 = vadd.f32 %v4996, %v5495
        %v5497 = vpop.f32.mrf.mxu0
        %v5498 = vadd.f32 %v4992, %v5497
        %v5499 = vpop.f32.mrf.mxu0
        %v5500 = vadd.f32 %v4996, %v5499
        %5501 = vmatprep.mubr.bf16.mxu0 %v4987
        %5502 = vmatmul.mubr.bf16.gmra.mxu0 %v4986
        %v5503 = vpop.f32.mrf.mxu0
        %v5504 = vadd.f32 %v4992, %v5503
        %v5505 = vpop.f32.mrf.mxu0
        %v5506 = vadd.f32 %v4996, %v5505
        %v5507 = vpop.f32.mrf.mxu0
        %v5508 = vadd.f32 %v4992, %v5507
        %v5509 = vpop.f32.mrf.mxu0
        %v5510 = vadd.f32 %v4996, %v5509
        %5511 = vdwg.mxu0
        %v5512 = vmax.f32 %v5194, 0.0
        %v5513 = vmax.f32 %v5196, 0.0
        %v5514 = vmax.f32 %v5198, 0.0
        %v5515 = vmax.f32 %v5200, 0.0
        %v5516 = vmax.f32 %v5204, 0.0
        %v5517 = vmax.f32 %v5206, 0.0
        %v5518 = vmax.f32 %v5208, 0.0
        %v5519 = vmax.f32 %v5210, 0.0
        %v5520 = vmax.f32 %v5214, 0.0
        %v5521 = vmax.f32 %v5216, 0.0
        %v5522 = vmax.f32 %v5218, 0.0
        %v5523 = vmax.f32 %v5220, 0.0
        %v5524 = vmax.f32 %v5224, 0.0
        %v5525 = vmax.f32 %v5226, 0.0
        %v5526 = vmax.f32 %v5228, 0.0
        %v5527 = vmax.f32 %v5230, 0.0
        %v5528 = vmax.f32 %v5234, 0.0
        %v5529 = vmax.f32 %v5236, 0.0
        %v5530 = vmax.f32 %v5238, 0.0
        %v5531 = vmax.f32 %v5240, 0.0
        %v5532 = vmax.f32 %v5244, 0.0
        %v5533 = vmax.f32 %v5246, 0.0
        %v5534 = vmax.f32 %v5248, 0.0
        %v5535 = vmax.f32 %v5250, 0.0
        %v5536 = vmax.f32 %v5254, 0.0
        %v5537 = vmax.f32 %v5256, 0.0
        %v5538 = vmax.f32 %v5258, 0.0
        %v5539 = vmax.f32 %v5260, 0.0
        %v5540 = vmax.f32 %v5264, 0.0
        %v5541 = vmax.f32 %v5266, 0.0
        %v5542 = vmax.f32 %v5268, 0.0
        %v5543 = vmax.f32 %v5270, 0.0
        %v5544 = vmax.f32 %v5274, 0.0
        %v5545 = vmax.f32 %v5276, 0.0
        %v5546 = vmax.f32 %v5278, 0.0
        %v5547 = vmax.f32 %v5280, 0.0
        %v5548 = vmax.f32 %v5284, 0.0
        %v5549 = vmax.f32 %v5286, 0.0
        %v5550 = vmax.f32 %v5288, 0.0
        %v5551 = vmax.f32 %v5290, 0.0
        %v5552 = vmax.f32 %v5294, 0.0
        %v5553 = vmax.f32 %v5296, 0.0
        %v5554 = vmax.f32 %v5298, 0.0
        %v5555 = vmax.f32 %v5300, 0.0
        %v5556 = vmax.f32 %v5304, 0.0
        %v5557 = vmax.f32 %v5306, 0.0
        %v5558 = vmax.f32 %v5308, 0.0
        %v5559 = vmax.f32 %v5310, 0.0
        %v5560 = vmax.f32 %v5314, 0.0
        %v5561 = vmax.f32 %v5316, 0.0
        %v5562 = vmax.f32 %v5318, 0.0
        %v5563 = vmax.f32 %v5320, 0.0
        %v5564 = vmax.f32 %v5324, 0.0
        %v5565 = vmax.f32 %v5326, 0.0
        %v5566 = vmax.f32 %v5328, 0.0
        %v5567 = vmax.f32 %v5330, 0.0
        %v5568 = vmax.f32 %v5334, 0.0
        %v5569 = vmax.f32 %v5336, 0.0
        %v5570 = vmax.f32 %v5338, 0.0
        %v5571 = vmax.f32 %v5340, 0.0
        %v5572 = vmax.f32 %v5344, 0.0
        %v5573 = vmax.f32 %v5346, 0.0
        %v5574 = vmax.f32 %v5348, 0.0
        %v5575 = vmax.f32 %v5350, 0.0
        %v5576 = vmax.f32 %v5354, 0.0
        %v5577 = vmax.f32 %v5356, 0.0
        %v5578 = vmax.f32 %v5358, 0.0
        %v5579 = vmax.f32 %v5360, 0.0
        %v5580 = vmax.f32 %v5364, 0.0
        %v5581 = vmax.f32 %v5366, 0.0
        %v5582 = vmax.f32 %v5368, 0.0
        %v5583 = vmax.f32 %v5370, 0.0
        %v5584 = vmax.f32 %v5374, 0.0
        %v5585 = vmax.f32 %v5376, 0.0
        %v5586 = vmax.f32 %v5378, 0.0
        %v5587 = vmax.f32 %v5380, 0.0
        %v5588 = vmax.f32 %v5384, 0.0
        %v5589 = vmax.f32 %v5386, 0.0
        %v5590 = vmax.f32 %v5388, 0.0
        %v5591 = vmax.f32 %v5390, 0.0
        %v5592 = vmax.f32 %v5394, 0.0
        %v5593 = vmax.f32 %v5396, 0.0
        %v5594 = vmax.f32 %v5398, 0.0
        %v5595 = vmax.f32 %v5400, 0.0
        %v5596 = vmax.f32 %v5404, 0.0
        %v5597 = vmax.f32 %v5406, 0.0
        %v5598 = vmax.f32 %v5408, 0.0
        %v5599 = vmax.f32 %v5410, 0.0
        %v5600 = vmax.f32 %v5414, 0.0
        %v5601 = vmax.f32 %v5416, 0.0
        %v5602 = vmax.f32 %v5418, 0.0
        %v5603 = vmax.f32 %v5420, 0.0
        %v5604 = vmax.f32 %v5424, 0.0
        %v5605 = vmax.f32 %v5426, 0.0
        %v5606 = vmax.f32 %v5428, 0.0
        %v5607 = vmax.f32 %v5430, 0.0
        %v5608 = vmax.f32 %v5434, 0.0
        %v5609 = vmax.f32 %v5436, 0.0
        %v5610 = vmax.f32 %v5438, 0.0
        %v5611 = vmax.f32 %v5440, 0.0
        %v5612 = vmax.f32 %v5444, 0.0
        %v5613 = vmax.f32 %v5446, 0.0
        %v5614 = vmax.f32 %v5448, 0.0
        %v5615 = vmax.f32 %v5450, 0.0
        %v5616 = vmax.f32 %v5454, 0.0
        %v5617 = vmax.f32 %v5456, 0.0
        %v5618 = vmax.f32 %v5458, 0.0
        %v5619 = vmax.f32 %v5460, 0.0
        %v5620 = vmax.f32 %v5464, 0.0
        %v5621 = vmax.f32 %v5466, 0.0
        %v5622 = vmax.f32 %v5468, 0.0
        %v5623 = vmax.f32 %v5470, 0.0
        %v5624 = vmax.f32 %v5474, 0.0
        %v5625 = vmax.f32 %v5476, 0.0
        %v5626 = vmax.f32 %v5478, 0.0
        %v5627 = vmax.f32 %v5480, 0.0
        %v5628 = vmax.f32 %v5484, 0.0
        %v5629 = vmax.f32 %v5486, 0.0
        %v5630 = vmax.f32 %v5488, 0.0
        %v5631 = vmax.f32 %v5490, 0.0
        %v5632 = vmax.f32 %v5494, 0.0
        %v5633 = vmax.f32 %v5496, 0.0
        %v5634 = vmax.f32 %v5498, 0.0
        %v5635 = vmax.f32 %v5500, 0.0
        %v5636 = vmax.f32 %v5504, 0.0
        %v5637 = vmax.f32 %v5506, 0.0
        %v5638 = vmax.f32 %v5508, 0.0
        %v5639 = vmax.f32 %v5510, 0.0
        %v5640 = vld [vmem:[%s14] sm:$0xff]
        %v5641 = vld [vmem:[%s14 + $0x8] sm:$0xff]
        %v5642 = vld [vmem:[%s14 + $0x10] sm:$0xff]
        %v5643 = vld [vmem:[%s14 + $0x18] sm:$0xff]
        %v5644 = vld [vmem:[%s14 + $0x20] sm:$0xff]
        %v5645 = vld [vmem:[%s14 + $0x28] sm:$0xff]
        %v5646 = vld [vmem:[%s14 + $0x30] sm:$0xff]
        %v5647 = vld [vmem:[%s14 + $0x38] sm:$0xff]
        %v5648 = vld [vmem:[%s14 + $0x40] sm:$0xff]
        %v5649 = vld [vmem:[%s14 + $0x48] sm:$0xff]
        %v5650 = vld [vmem:[%s14 + $0x50] sm:$0xff]
        %v5651 = vld [vmem:[%s14 + $0x58] sm:$0xff]
        %v5652 = vld [vmem:[%s14 + $0x60] sm:$0xff]
        %v5653 = vld [vmem:[%s14 + $0x68] sm:$0xff]
        %v5654 = vld [vmem:[%s14 + $0x70] sm:$0xff]
        %v5655 = vld [vmem:[%s14 + $0x78] sm:$0xff]
        %v5656 = vld [vmem:[%s14 + $0x80] sm:$0xff]
        %v5657 = vld [vmem:[%s14 + $0x88] sm:$0xff]
        %v5658 = vld [vmem:[%s14 + $0x90] sm:$0xff]
        %v5659 = vld [vmem:[%s14 + $0x98] sm:$0xff]
        %v5660 = vld [vmem:[%s14 + $0xa0] sm:$0xff]
        %v5661 = vld [vmem:[%s14 + $0xa8] sm:$0xff]
        %v5662 = vld [vmem:[%s14 + $0xb0] sm:$0xff]
        %v5663 = vld [vmem:[%s14 + $0xb8] sm:$0xff]
        %v5664 = vld [vmem:[%s14 + $0xc0] sm:$0xff]
        %v5665 = vld [vmem:[%s14 + $0xc8] sm:$0xff]
        %v5666 = vld [vmem:[%s14 + $0xd0] sm:$0xff]
        %v5667 = vld [vmem:[%s14 + $0xd8] sm:$0xff]
        %v5668 = vld [vmem:[%s14 + $0xe0] sm:$0xff]
        %v5669 = vld [vmem:[%s14 + $0xe8] sm:$0xff]
        %v5670 = vld [vmem:[%s14 + $0xf0] sm:$0xff]
        %v5671 = vld [vmem:[%s14 + $0xf8] sm:$0xff]
        %v5672 = vld [vmem:[%s15] sm:$0x3]
        %v5673 = vpack.c.bf16 %v5514, %v5512
        %v5674 = vpack.c.bf16 %v5515, %v5513
        %v5675 = vpack.c.bf16 %v5518, %v5516
        %v5676 = vpack.c.bf16 %v5519, %v5517
        %v5677 = vpack.c.bf16 %v5522, %v5520
        %v5678 = vpack.c.bf16 %v5523, %v5521
        %v5679 = vpack.c.bf16 %v5526, %v5524
        %v5680 = vpack.c.bf16 %v5527, %v5525
        %v5681 = vpack.c.bf16 %v5530, %v5528
        %v5682 = vpack.c.bf16 %v5531, %v5529
        %v5683 = vpack.c.bf16 %v5534, %v5532
        %v5684 = vpack.c.bf16 %v5535, %v5533
        %v5685 = vpack.c.bf16 %v5538, %v5536
        %v5686 = vpack.c.bf16 %v5539, %v5537
        %v5687 = vpack.c.bf16 %v5542, %v5540
        %v5688 = vpack.c.bf16 %v5543, %v5541
        %v5689 = vpack.c.bf16 %v5546, %v5544
        %v5690 = vpack.c.bf16 %v5547, %v5545
        %v5691 = vpack.c.bf16 %v5550, %v5548
        %v5692 = vpack.c.bf16 %v5551, %v5549
        %v5693 = vpack.c.bf16 %v5554, %v5552
        %v5694 = vpack.c.bf16 %v5555, %v5553
        %v5695 = vpack.c.bf16 %v5558, %v5556
        %v5696 = vpack.c.bf16 %v5559, %v5557
        %v5697 = vpack.c.bf16 %v5562, %v5560
        %v5698 = vpack.c.bf16 %v5563, %v5561
        %v5699 = vpack.c.bf16 %v5566, %v5564
        %v5700 = vpack.c.bf16 %v5567, %v5565
        %v5701 = vpack.c.bf16 %v5570, %v5568
        %v5702 = vpack.c.bf16 %v5571, %v5569
        %v5703 = vpack.c.bf16 %v5574, %v5572
        %v5704 = vpack.c.bf16 %v5575, %v5573
        %v5705 = vpack.c.bf16 %v5578, %v5576
        %v5706 = vpack.c.bf16 %v5579, %v5577
        %v5707 = vpack.c.bf16 %v5582, %v5580
        %v5708 = vpack.c.bf16 %v5583, %v5581
        %v5709 = vpack.c.bf16 %v5586, %v5584
        %v5710 = vpack.c.bf16 %v5587, %v5585
        %v5711 = vpack.c.bf16 %v5590, %v5588
        %v5712 = vpack.c.bf16 %v5591, %v5589
        %v5713 = vpack.c.bf16 %v5594, %v5592
        %v5714 = vpack.c.bf16 %v5595, %v5593
        %v5715 = vpack.c.bf16 %v5598, %v5596
        %v5716 = vpack.c.bf16 %v5599, %v5597
        %v5717 = vpack.c.bf16 %v5602, %v5600
        %v5718 = vpack.c.bf16 %v5603, %v5601
        %v5719 = vpack.c.bf16 %v5606, %v5604
        %v5720 = vpack.c.bf16 %v5607, %v5605
        %v5721 = vpack.c.bf16 %v5610, %v5608
        %v5722 = vpack.c.bf16 %v5611, %v5609
        %v5723 = vpack.c.bf16 %v5614, %v5612
        %v5724 = vpack.c.bf16 %v5615, %v5613
        %v5725 = vpack.c.bf16 %v5618, %v5616
        %v5726 = vpack.c.bf16 %v5619, %v5617
        %v5727 = vpack.c.bf16 %v5622, %v5620
        %v5728 = vpack.c.bf16 %v5623, %v5621
        %v5729 = vpack.c.bf16 %v5626, %v5624
        %v5730 = vpack.c.bf16 %v5627, %v5625
        %v5731 = vpack.c.bf16 %v5630, %v5628
        %v5732 = vpack.c.bf16 %v5631, %v5629
        %v5733 = vpack.c.bf16 %v5634, %v5632
        %v5734 = vpack.c.bf16 %v5635, %v5633
        %v5735 = vpack.c.bf16 %v5638, %v5636
        %v5736 = vpack.c.bf16 %v5639, %v5637
        %v5738 = vlaneseq
        %v5739 = vshrl.u32 %v5738, 7
        %v5740 = vsub.s32 0, %v5739
        %v5741 = vrot.slane %v5672, %v5740
        %v5742 = vlaneseq
        %v5743 = vshrl.u32 %v5742, 7
        %v5744 = vsub.s32 1, %v5743
        %v5745 = vrot.slane %v5672, %v5744
        %v5780 = vunpack.c.l.b16 %v5640
        %v5781 = vunpack.c.h.b16 %v5640
        %v5782 = vunpack.c.l.b16 %v5641
        %v5783 = vunpack.c.h.b16 %v5641
        %v5784 = vunpack.c.l.b16 %v5642
        %v5785 = vunpack.c.h.b16 %v5642
        %v5786 = vunpack.c.l.b16 %v5643
        %v5787 = vunpack.c.h.b16 %v5643
        %v5788 = vunpack.c.l.b16 %v5644
        %v5789 = vunpack.c.h.b16 %v5644
        %v5790 = vunpack.c.l.b16 %v5645
        %v5791 = vunpack.c.h.b16 %v5645
        %v5792 = vunpack.c.l.b16 %v5646
        %v5793 = vunpack.c.h.b16 %v5646
        %v5794 = vunpack.c.l.b16 %v5647
        %v5795 = vunpack.c.h.b16 %v5647
        %v5796 = vunpack.c.l.b16 %v5648
        %v5797 = vunpack.c.h.b16 %v5648
        %v5798 = vunpack.c.l.b16 %v5649
        %v5799 = vunpack.c.h.b16 %v5649
        %v5800 = vunpack.c.l.b16 %v5650
        %v5801 = vunpack.c.h.b16 %v5650
        %v5802 = vunpack.c.l.b16 %v5651
        %v5803 = vunpack.c.h.b16 %v5651
        %v5804 = vunpack.c.l.b16 %v5652
        %v5805 = vunpack.c.h.b16 %v5652
        %v5806 = vunpack.c.l.b16 %v5653
        %v5807 = vunpack.c.h.b16 %v5653
        %v5808 = vunpack.c.l.b16 %v5654
        %v5809 = vunpack.c.h.b16 %v5654
        %v5810 = vunpack.c.l.b16 %v5655
        %v5811 = vunpack.c.h.b16 %v5655
        %v5812 = vunpack.c.l.b16 %v5656
        %v5813 = vunpack.c.h.b16 %v5656
        %v5814 = vunpack.c.l.b16 %v5657
        %v5815 = vunpack.c.h.b16 %v5657
        %v5816 = vunpack.c.l.b16 %v5658
        %v5817 = vunpack.c.h.b16 %v5658
        %v5818 = vunpack.c.l.b16 %v5659
        %v5819 = vunpack.c.h.b16 %v5659
        %v5820 = vunpack.c.l.b16 %v5660
        %v5821 = vunpack.c.h.b16 %v5660
        %v5822 = vunpack.c.l.b16 %v5661
        %v5823 = vunpack.c.h.b16 %v5661
        %v5824 = vunpack.c.l.b16 %v5662
        %v5825 = vunpack.c.h.b16 %v5662
        %v5826 = vunpack.c.l.b16 %v5663
        %v5827 = vunpack.c.h.b16 %v5663
        %v5828 = vunpack.c.l.b16 %v5664
        %v5829 = vunpack.c.h.b16 %v5664
        %v5830 = vunpack.c.l.b16 %v5665
        %v5831 = vunpack.c.h.b16 %v5665
        %v5832 = vunpack.c.l.b16 %v5666
        %v5833 = vunpack.c.h.b16 %v5666
        %v5834 = vunpack.c.l.b16 %v5667
        %v5835 = vunpack.c.h.b16 %v5667
        %v5836 = vunpack.c.l.b16 %v5668
        %v5837 = vunpack.c.h.b16 %v5668
        %v5838 = vunpack.c.l.b16 %v5669
        %v5839 = vunpack.c.h.b16 %v5669
        %v5840 = vunpack.c.l.b16 %v5670
        %v5841 = vunpack.c.h.b16 %v5670
        %v5842 = vunpack.c.l.b16 %v5671
        %v5843 = vunpack.c.h.b16 %v5671
        %v5844 = vpack.c.b16 %v5782, %v5780
        %v5845 = vpack.c.b16 %v5783, %v5781
        %v5846 = vpack.c.b16 %v5786, %v5784
        %v5847 = vpack.c.b16 %v5787, %v5785
        %v5848 = vpack.c.b16 %v5790, %v5788
        %v5849 = vpack.c.b16 %v5791, %v5789
        %v5850 = vpack.c.b16 %v5794, %v5792
        %v5851 = vpack.c.b16 %v5795, %v5793
        %v5852 = vpack.c.b16 %v5798, %v5796
        %v5853 = vpack.c.b16 %v5799, %v5797
        %v5854 = vpack.c.b16 %v5802, %v5800
        %v5855 = vpack.c.b16 %v5803, %v5801
        %v5856 = vpack.c.b16 %v5806, %v5804
        %v5857 = vpack.c.b16 %v5807, %v5805
        %v5858 = vpack.c.b16 %v5810, %v5808
        %v5859 = vpack.c.b16 %v5811, %v5809
        %v5860 = vpack.c.b16 %v5814, %v5812
        %v5861 = vpack.c.b16 %v5815, %v5813
        %v5862 = vpack.c.b16 %v5818, %v5816
        %v5863 = vpack.c.b16 %v5819, %v5817
        %v5864 = vpack.c.b16 %v5822, %v5820
        %v5865 = vpack.c.b16 %v5823, %v5821
        %v5866 = vpack.c.b16 %v5826, %v5824
        %v5867 = vpack.c.b16 %v5827, %v5825
        %v5868 = vpack.c.b16 %v5830, %v5828
        %v5869 = vpack.c.b16 %v5831, %v5829
        %v5870 = vpack.c.b16 %v5834, %v5832
        %v5871 = vpack.c.b16 %v5835, %v5833
        %v5872 = vpack.c.b16 %v5838, %v5836
        %v5873 = vpack.c.b16 %v5839, %v5837
        %v5874 = vpack.c.b16 %v5842, %v5840
        %v5875 = vpack.c.b16 %v5843, %v5841
        %5908 = vmatprep.subr.bf16.mxu0 %v5859
        %5909 = vmatpush1.bf16.msra.mxu0 %v5858
        %5910 = vmatprep.subr.bf16.mxu0 %v5857
        %5911 = vmatpush1.bf16.msra.mxu0 %v5856
        %5912 = vmatprep.subr.bf16.mxu0 %v5855
        %5913 = vmatpush1.bf16.msra.mxu0 %v5854
        %5914 = vmatprep.subr.bf16.mxu0 %v5853
        %5915 = vmatpush1.bf16.msra.mxu0 %v5852
        %5916 = vmatprep.subr.bf16.mxu0 %v5851
        %5917 = vmatpush1.bf16.msra.mxu0 %v5850
        %5918 = vmatprep.subr.bf16.mxu0 %v5849
        %5919 = vmatpush1.bf16.msra.mxu0 %v5848
        %5920 = vmatprep.subr.bf16.mxu0 %v5847
        %5921 = vmatpush1.bf16.msra.mxu0 %v5846
        %5922 = vmatprep.subr.bf16.mxu0 %v5845
        %5923 = vmatpush1.bf16.msra.mxu0 %v5844
        %5924 = vmatprep.subr.bf16.mxu0 %v5875
        %5925 = vmatpush2.bf16.msra.mxu0 %v5874
        %5926 = vmatprep.subr.bf16.mxu0 %v5873
        %5927 = vmatpush2.bf16.msra.mxu0 %v5872
        %5928 = vmatprep.subr.bf16.mxu0 %v5871
        %5929 = vmatpush2.bf16.msra.mxu0 %v5870
        %5930 = vmatprep.subr.bf16.mxu0 %v5869
        %5931 = vmatpush2.bf16.msra.mxu0 %v5868
        %5932 = vmatprep.subr.bf16.mxu0 %v5867
        %5933 = vmatpush2.bf16.msra.mxu0 %v5866
        %5934 = vmatprep.subr.bf16.mxu0 %v5865
        %5935 = vmatpush2.bf16.msra.mxu0 %v5864
        %5936 = vmatprep.subr.bf16.mxu0 %v5863
        %5937 = vmatpush2.bf16.msra.mxu0 %v5862
        %5938 = vmatprep.subr.bf16.mxu0 %v5861
        %5939 = vmatpush2.bf16.msra.mxu0 %v5860
        %5940 = vmatprep.mubr.bf16.mxu0 %v5674
        %5941 = vmatmul.mubr.bf16.gmra.mxu0 %v5673
        %v5942 = vpop.f32.mrf.mxu0
        %v5943 = vadd.f32 %v5741, %v5942
        %v5944 = vpop.f32.mrf.mxu0
        %v5945 = vadd.f32 %v5745, %v5944
        %v5946 = vpop.f32.mrf.mxu0
        %v5947 = vadd.f32 %v5741, %v5946
        %v5948 = vpop.f32.mrf.mxu0
        %v5949 = vadd.f32 %v5745, %v5948
        %5950 = vmatprep.mubr.bf16.mxu0 %v5676
        %5951 = vmatmul.mubr.bf16.gmra.mxu0 %v5675
        %v5952 = vpop.f32.mrf.mxu0
        %v5953 = vadd.f32 %v5741, %v5952
        %v5954 = vpop.f32.mrf.mxu0
        %v5955 = vadd.f32 %v5745, %v5954
        %v5956 = vpop.f32.mrf.mxu0
        %v5957 = vadd.f32 %v5741, %v5956
        %v5958 = vpop.f32.mrf.mxu0
        %v5959 = vadd.f32 %v5745, %v5958
        %5960 = vmatprep.mubr.bf16.mxu0 %v5678
        %5961 = vmatmul.mubr.bf16.gmra.mxu0 %v5677
        %v5962 = vpop.f32.mrf.mxu0
        %v5963 = vadd.f32 %v5741, %v5962
        %v5964 = vpop.f32.mrf.mxu0
        %v5965 = vadd.f32 %v5745, %v5964
        %v5966 = vpop.f32.mrf.mxu0
        %v5967 = vadd.f32 %v5741, %v5966
        %v5968 = vpop.f32.mrf.mxu0
        %v5969 = vadd.f32 %v5745, %v5968
        %5970 = vmatprep.mubr.bf16.mxu0 %v5680
        %5971 = vmatmul.mubr.bf16.gmra.mxu0 %v5679
        %v5972 = vpop.f32.mrf.mxu0
        %v5973 = vadd.f32 %v5741, %v5972
        %v5974 = vpop.f32.mrf.mxu0
        %v5975 = vadd.f32 %v5745, %v5974
        %v5976 = vpop.f32.mrf.mxu0
        %v5977 = vadd.f32 %v5741, %v5976
        %v5978 = vpop.f32.mrf.mxu0
        %v5979 = vadd.f32 %v5745, %v5978
        %5980 = vmatprep.mubr.bf16.mxu0 %v5682
        %5981 = vmatmul.mubr.bf16.gmra.mxu0 %v5681
        %v5982 = vpop.f32.mrf.mxu0
        %v5983 = vadd.f32 %v5741, %v5982
        %v5984 = vpop.f32.mrf.mxu0
        %v5985 = vadd.f32 %v5745, %v5984
        %v5986 = vpop.f32.mrf.mxu0
        %v5987 = vadd.f32 %v5741, %v5986
        %v5988 = vpop.f32.mrf.mxu0
        %v5989 = vadd.f32 %v5745, %v5988
        %5990 = vmatprep.mubr.bf16.mxu0 %v5684
        %5991 = vmatmul.mubr.bf16.gmra.mxu0 %v5683
        %v5992 = vpop.f32.mrf.mxu0
        %v5993 = vadd.f32 %v5741, %v5992
        %v5994 = vpop.f32.mrf.mxu0
        %v5995 = vadd.f32 %v5745, %v5994
        %v5996 = vpop.f32.mrf.mxu0
        %v5997 = vadd.f32 %v5741, %v5996
        %v5998 = vpop.f32.mrf.mxu0
        %v5999 = vadd.f32 %v5745, %v5998
        %6000 = vmatprep.mubr.bf16.mxu0 %v5686
        %6001 = vmatmul.mubr.bf16.gmra.mxu0 %v5685
        %v6002 = vpop.f32.mrf.mxu0
        %v6003 = vadd.f32 %v5741, %v6002
        %v6004 = vpop.f32.mrf.mxu0
        %v6005 = vadd.f32 %v5745, %v6004
        %v6006 = vpop.f32.mrf.mxu0
        %v6007 = vadd.f32 %v5741, %v6006
        %v6008 = vpop.f32.mrf.mxu0
        %v6009 = vadd.f32 %v5745, %v6008
        %6010 = vmatprep.mubr.bf16.mxu0 %v5688
        %6011 = vmatmul.mubr.bf16.gmra.mxu0 %v5687
        %v6012 = vpop.f32.mrf.mxu0
        %v6013 = vadd.f32 %v5741, %v6012
        %v6014 = vpop.f32.mrf.mxu0
        %v6015 = vadd.f32 %v5745, %v6014
        %v6016 = vpop.f32.mrf.mxu0
        %v6017 = vadd.f32 %v5741, %v6016
        %v6018 = vpop.f32.mrf.mxu0
        %v6019 = vadd.f32 %v5745, %v6018
        %6020 = vmatprep.mubr.bf16.mxu0 %v5690
        %6021 = vmatmul.mubr.bf16.gmra.mxu0 %v5689
        %v6022 = vpop.f32.mrf.mxu0
        %v6023 = vadd.f32 %v5741, %v6022
        %v6024 = vpop.f32.mrf.mxu0
        %v6025 = vadd.f32 %v5745, %v6024
        %v6026 = vpop.f32.mrf.mxu0
        %v6027 = vadd.f32 %v5741, %v6026
        %v6028 = vpop.f32.mrf.mxu0
        %v6029 = vadd.f32 %v5745, %v6028
        %6030 = vmatprep.mubr.bf16.mxu0 %v5692
        %6031 = vmatmul.mubr.bf16.gmra.mxu0 %v5691
        %v6032 = vpop.f32.mrf.mxu0
        %v6033 = vadd.f32 %v5741, %v6032
        %v6034 = vpop.f32.mrf.mxu0
        %v6035 = vadd.f32 %v5745, %v6034
        %v6036 = vpop.f32.mrf.mxu0
        %v6037 = vadd.f32 %v5741, %v6036
        %v6038 = vpop.f32.mrf.mxu0
        %v6039 = vadd.f32 %v5745, %v6038
        %6040 = vmatprep.mubr.bf16.mxu0 %v5694
        %6041 = vmatmul.mubr.bf16.gmra.mxu0 %v5693
        %v6042 = vpop.f32.mrf.mxu0
        %v6043 = vadd.f32 %v5741, %v6042
        %v6044 = vpop.f32.mrf.mxu0
        %v6045 = vadd.f32 %v5745, %v6044
        %v6046 = vpop.f32.mrf.mxu0
        %v6047 = vadd.f32 %v5741, %v6046
        %v6048 = vpop.f32.mrf.mxu0
        %v6049 = vadd.f32 %v5745, %v6048
        %6050 = vmatprep.mubr.bf16.mxu0 %v5696
        %6051 = vmatmul.mubr.bf16.gmra.mxu0 %v5695
        %v6052 = vpop.f32.mrf.mxu0
        %v6053 = vadd.f32 %v5741, %v6052
        %v6054 = vpop.f32.mrf.mxu0
        %v6055 = vadd.f32 %v5745, %v6054
        %v6056 = vpop.f32.mrf.mxu0
        %v6057 = vadd.f32 %v5741, %v6056
        %v6058 = vpop.f32.mrf.mxu0
        %v6059 = vadd.f32 %v5745, %v6058
        %6060 = vmatprep.mubr.bf16.mxu0 %v5698
        %6061 = vmatmul.mubr.bf16.gmra.mxu0 %v5697
        %v6062 = vpop.f32.mrf.mxu0
        %v6063 = vadd.f32 %v5741, %v6062
        %v6064 = vpop.f32.mrf.mxu0
        %v6065 = vadd.f32 %v5745, %v6064
        %v6066 = vpop.f32.mrf.mxu0
        %v6067 = vadd.f32 %v5741, %v6066
        %v6068 = vpop.f32.mrf.mxu0
        %v6069 = vadd.f32 %v5745, %v6068
        %6070 = vmatprep.mubr.bf16.mxu0 %v5700
        %6071 = vmatmul.mubr.bf16.gmra.mxu0 %v5699
        %v6072 = vpop.f32.mrf.mxu0
        %v6073 = vadd.f32 %v5741, %v6072
        %v6074 = vpop.f32.mrf.mxu0
        %v6075 = vadd.f32 %v5745, %v6074
        %v6076 = vpop.f32.mrf.mxu0
        %v6077 = vadd.f32 %v5741, %v6076
        %v6078 = vpop.f32.mrf.mxu0
        %v6079 = vadd.f32 %v5745, %v6078
        %6080 = vmatprep.mubr.bf16.mxu0 %v5702
        %6081 = vmatmul.mubr.bf16.gmra.mxu0 %v5701
        %v6082 = vpop.f32.mrf.mxu0
        %v6083 = vadd.f32 %v5741, %v6082
        %v6084 = vpop.f32.mrf.mxu0
        %v6085 = vadd.f32 %v5745, %v6084
        %v6086 = vpop.f32.mrf.mxu0
        %v6087 = vadd.f32 %v5741, %v6086
        %v6088 = vpop.f32.mrf.mxu0
        %v6089 = vadd.f32 %v5745, %v6088
        %6090 = vmatprep.mubr.bf16.mxu0 %v5704
        %6091 = vmatmul.mubr.bf16.gmra.mxu0 %v5703
        %v6092 = vpop.f32.mrf.mxu0
        %v6093 = vadd.f32 %v5741, %v6092
        %v6094 = vpop.f32.mrf.mxu0
        %v6095 = vadd.f32 %v5745, %v6094
        %v6096 = vpop.f32.mrf.mxu0
        %v6097 = vadd.f32 %v5741, %v6096
        %v6098 = vpop.f32.mrf.mxu0
        %v6099 = vadd.f32 %v5745, %v6098
        %6100 = vmatprep.mubr.bf16.mxu0 %v5706
        %6101 = vmatmul.mubr.bf16.gmra.mxu0 %v5705
        %v6102 = vpop.f32.mrf.mxu0
        %v6103 = vadd.f32 %v5741, %v6102
        %v6104 = vpop.f32.mrf.mxu0
        %v6105 = vadd.f32 %v5745, %v6104
        %v6106 = vpop.f32.mrf.mxu0
        %v6107 = vadd.f32 %v5741, %v6106
        %v6108 = vpop.f32.mrf.mxu0
        %v6109 = vadd.f32 %v5745, %v6108
        %6110 = vmatprep.mubr.bf16.mxu0 %v5708
        %6111 = vmatmul.mubr.bf16.gmra.mxu0 %v5707
        %v6112 = vpop.f32.mrf.mxu0
        %v6113 = vadd.f32 %v5741, %v6112
        %v6114 = vpop.f32.mrf.mxu0
        %v6115 = vadd.f32 %v5745, %v6114
        %v6116 = vpop.f32.mrf.mxu0
        %v6117 = vadd.f32 %v5741, %v6116
        %v6118 = vpop.f32.mrf.mxu0
        %v6119 = vadd.f32 %v5745, %v6118
        %6120 = vmatprep.mubr.bf16.mxu0 %v5710
        %6121 = vmatmul.mubr.bf16.gmra.mxu0 %v5709
        %v6122 = vpop.f32.mrf.mxu0
        %v6123 = vadd.f32 %v5741, %v6122
        %v6124 = vpop.f32.mrf.mxu0
        %v6125 = vadd.f32 %v5745, %v6124
        %v6126 = vpop.f32.mrf.mxu0
        %v6127 = vadd.f32 %v5741, %v6126
        %v6128 = vpop.f32.mrf.mxu0
        %v6129 = vadd.f32 %v5745, %v6128
        %6130 = vmatprep.mubr.bf16.mxu0 %v5712
        %6131 = vmatmul.mubr.bf16.gmra.mxu0 %v5711
        %v6132 = vpop.f32.mrf.mxu0
        %v6133 = vadd.f32 %v5741, %v6132
        %v6134 = vpop.f32.mrf.mxu0
        %v6135 = vadd.f32 %v5745, %v6134
        %v6136 = vpop.f32.mrf.mxu0
        %v6137 = vadd.f32 %v5741, %v6136
        %v6138 = vpop.f32.mrf.mxu0
        %v6139 = vadd.f32 %v5745, %v6138
        %6140 = vmatprep.mubr.bf16.mxu0 %v5714
        %6141 = vmatmul.mubr.bf16.gmra.mxu0 %v5713
        %v6142 = vpop.f32.mrf.mxu0
        %v6143 = vadd.f32 %v5741, %v6142
        %v6144 = vpop.f32.mrf.mxu0
        %v6145 = vadd.f32 %v5745, %v6144
        %v6146 = vpop.f32.mrf.mxu0
        %v6147 = vadd.f32 %v5741, %v6146
        %v6148 = vpop.f32.mrf.mxu0
        %v6149 = vadd.f32 %v5745, %v6148
        %6150 = vmatprep.mubr.bf16.mxu0 %v5716
        %6151 = vmatmul.mubr.bf16.gmra.mxu0 %v5715
        %v6152 = vpop.f32.mrf.mxu0
        %v6153 = vadd.f32 %v5741, %v6152
        %v6154 = vpop.f32.mrf.mxu0
        %v6155 = vadd.f32 %v5745, %v6154
        %v6156 = vpop.f32.mrf.mxu0
        %v6157 = vadd.f32 %v5741, %v6156
        %v6158 = vpop.f32.mrf.mxu0
        %v6159 = vadd.f32 %v5745, %v6158
        %6160 = vmatprep.mubr.bf16.mxu0 %v5718
        %6161 = vmatmul.mubr.bf16.gmra.mxu0 %v5717
        %v6162 = vpop.f32.mrf.mxu0
        %v6163 = vadd.f32 %v5741, %v6162
        %v6164 = vpop.f32.mrf.mxu0
        %v6165 = vadd.f32 %v5745, %v6164
        %v6166 = vpop.f32.mrf.mxu0
        %v6167 = vadd.f32 %v5741, %v6166
        %v6168 = vpop.f32.mrf.mxu0
        %v6169 = vadd.f32 %v5745, %v6168
        %6170 = vmatprep.mubr.bf16.mxu0 %v5720
        %6171 = vmatmul.mubr.bf16.gmra.mxu0 %v5719
        %v6172 = vpop.f32.mrf.mxu0
        %v6173 = vadd.f32 %v5741, %v6172
        %v6174 = vpop.f32.mrf.mxu0
        %v6175 = vadd.f32 %v5745, %v6174
        %v6176 = vpop.f32.mrf.mxu0
        %v6177 = vadd.f32 %v5741, %v6176
        %v6178 = vpop.f32.mrf.mxu0
        %v6179 = vadd.f32 %v5745, %v6178
        %6180 = vmatprep.mubr.bf16.mxu0 %v5722
        %6181 = vmatmul.mubr.bf16.gmra.mxu0 %v5721
        %v6182 = vpop.f32.mrf.mxu0
        %v6183 = vadd.f32 %v5741, %v6182
        %v6184 = vpop.f32.mrf.mxu0
        %v6185 = vadd.f32 %v5745, %v6184
        %v6186 = vpop.f32.mrf.mxu0
        %v6187 = vadd.f32 %v5741, %v6186
        %v6188 = vpop.f32.mrf.mxu0
        %v6189 = vadd.f32 %v5745, %v6188
        %6190 = vmatprep.mubr.bf16.mxu0 %v5724
        %6191 = vmatmul.mubr.bf16.gmra.mxu0 %v5723
        %v6192 = vpop.f32.mrf.mxu0
        %v6193 = vadd.f32 %v5741, %v6192
        %v6194 = vpop.f32.mrf.mxu0
        %v6195 = vadd.f32 %v5745, %v6194
        %v6196 = vpop.f32.mrf.mxu0
        %v6197 = vadd.f32 %v5741, %v6196
        %v6198 = vpop.f32.mrf.mxu0
        %v6199 = vadd.f32 %v5745, %v6198
        %6200 = vmatprep.mubr.bf16.mxu0 %v5726
        %6201 = vmatmul.mubr.bf16.gmra.mxu0 %v5725
        %v6202 = vpop.f32.mrf.mxu0
        %v6203 = vadd.f32 %v5741, %v6202
        %v6204 = vpop.f32.mrf.mxu0
        %v6205 = vadd.f32 %v5745, %v6204
        %v6206 = vpop.f32.mrf.mxu0
        %v6207 = vadd.f32 %v5741, %v6206
        %v6208 = vpop.f32.mrf.mxu0
        %v6209 = vadd.f32 %v5745, %v6208
        %6210 = vmatprep.mubr.bf16.mxu0 %v5728
        %6211 = vmatmul.mubr.bf16.gmra.mxu0 %v5727
        %v6212 = vpop.f32.mrf.mxu0
        %v6213 = vadd.f32 %v5741, %v6212
        %v6214 = vpop.f32.mrf.mxu0
        %v6215 = vadd.f32 %v5745, %v6214
        %v6216 = vpop.f32.mrf.mxu0
        %v6217 = vadd.f32 %v5741, %v6216
        %v6218 = vpop.f32.mrf.mxu0
        %v6219 = vadd.f32 %v5745, %v6218
        %6220 = vmatprep.mubr.bf16.mxu0 %v5730
        %6221 = vmatmul.mubr.bf16.gmra.mxu0 %v5729
        %v6222 = vpop.f32.mrf.mxu0
        %v6223 = vadd.f32 %v5741, %v6222
        %v6224 = vpop.f32.mrf.mxu0
        %v6225 = vadd.f32 %v5745, %v6224
        %v6226 = vpop.f32.mrf.mxu0
        %v6227 = vadd.f32 %v5741, %v6226
        %v6228 = vpop.f32.mrf.mxu0
        %v6229 = vadd.f32 %v5745, %v6228
        %6230 = vmatprep.mubr.bf16.mxu0 %v5732
        %6231 = vmatmul.mubr.bf16.gmra.mxu0 %v5731
        %v6232 = vpop.f32.mrf.mxu0
        %v6233 = vadd.f32 %v5741, %v6232
        %v6234 = vpop.f32.mrf.mxu0
        %v6235 = vadd.f32 %v5745, %v6234
        %v6236 = vpop.f32.mrf.mxu0
        %v6237 = vadd.f32 %v5741, %v6236
        %v6238 = vpop.f32.mrf.mxu0
        %v6239 = vadd.f32 %v5745, %v6238
        %6240 = vmatprep.mubr.bf16.mxu0 %v5734
        %6241 = vmatmul.mubr.bf16.gmra.mxu0 %v5733
        %v6242 = vpop.f32.mrf.mxu0
        %v6243 = vadd.f32 %v5741, %v6242
        %v6244 = vpop.f32.mrf.mxu0
        %v6245 = vadd.f32 %v5745, %v6244
        %v6246 = vpop.f32.mrf.mxu0
        %v6247 = vadd.f32 %v5741, %v6246
        %v6248 = vpop.f32.mrf.mxu0
        %v6249 = vadd.f32 %v5745, %v6248
        %6250 = vmatprep.mubr.bf16.mxu0 %v5736
        %6251 = vmatmul.mubr.bf16.gmra.mxu0 %v5735
        %v6252 = vpop.f32.mrf.mxu0
        %v6253 = vadd.f32 %v5741, %v6252
        %v6254 = vpop.f32.mrf.mxu0
        %v6255 = vadd.f32 %v5745, %v6254
        %v6256 = vpop.f32.mrf.mxu0
        %v6257 = vadd.f32 %v5741, %v6256
        %v6258 = vpop.f32.mrf.mxu0
        %v6259 = vadd.f32 %v5745, %v6258
        %6260 = vdwg.mxu0
        %v6261 = vmax.f32 %v5943, 0.0
        %v6262 = vmax.f32 %v5945, 0.0
        %v6263 = vmax.f32 %v5947, 0.0
        %v6264 = vmax.f32 %v5949, 0.0
        %v6265 = vmax.f32 %v5953, 0.0
        %v6266 = vmax.f32 %v5955, 0.0
        %v6267 = vmax.f32 %v5957, 0.0
        %v6268 = vmax.f32 %v5959, 0.0
        %v6269 = vmax.f32 %v5963, 0.0
        %v6270 = vmax.f32 %v5965, 0.0
        %v6271 = vmax.f32 %v5967, 0.0
        %v6272 = vmax.f32 %v5969, 0.0
        %v6273 = vmax.f32 %v5973, 0.0
        %v6274 = vmax.f32 %v5975, 0.0
        %v6275 = vmax.f32 %v5977, 0.0
        %v6276 = vmax.f32 %v5979, 0.0
        %v6277 = vmax.f32 %v5983, 0.0
        %v6278 = vmax.f32 %v5985, 0.0
        %v6279 = vmax.f32 %v5987, 0.0
        %v6280 = vmax.f32 %v5989, 0.0
        %v6281 = vmax.f32 %v5993, 0.0
        %v6282 = vmax.f32 %v5995, 0.0
        %v6283 = vmax.f32 %v5997, 0.0
        %v6284 = vmax.f32 %v5999, 0.0
        %v6285 = vmax.f32 %v6003, 0.0
        %v6286 = vmax.f32 %v6005, 0.0
        %v6287 = vmax.f32 %v6007, 0.0
        %v6288 = vmax.f32 %v6009, 0.0
        %v6289 = vmax.f32 %v6013, 0.0
        %v6290 = vmax.f32 %v6015, 0.0
        %v6291 = vmax.f32 %v6017, 0.0
        %v6292 = vmax.f32 %v6019, 0.0
        %v6293 = vmax.f32 %v6023, 0.0
        %v6294 = vmax.f32 %v6025, 0.0
        %v6295 = vmax.f32 %v6027, 0.0
        %v6296 = vmax.f32 %v6029, 0.0
        %v6297 = vmax.f32 %v6033, 0.0
        %v6298 = vmax.f32 %v6035, 0.0
        %v6299 = vmax.f32 %v6037, 0.0
        %v6300 = vmax.f32 %v6039, 0.0
        %v6301 = vmax.f32 %v6043, 0.0
        %v6302 = vmax.f32 %v6045, 0.0
        %v6303 = vmax.f32 %v6047, 0.0
        %v6304 = vmax.f32 %v6049, 0.0
        %v6305 = vmax.f32 %v6053, 0.0
        %v6306 = vmax.f32 %v6055, 0.0
        %v6307 = vmax.f32 %v6057, 0.0
        %v6308 = vmax.f32 %v6059, 0.0
        %v6309 = vmax.f32 %v6063, 0.0
        %v6310 = vmax.f32 %v6065, 0.0
        %v6311 = vmax.f32 %v6067, 0.0
        %v6312 = vmax.f32 %v6069, 0.0
        %v6313 = vmax.f32 %v6073, 0.0
        %v6314 = vmax.f32 %v6075, 0.0
        %v6315 = vmax.f32 %v6077, 0.0
        %v6316 = vmax.f32 %v6079, 0.0
        %v6317 = vmax.f32 %v6083, 0.0
        %v6318 = vmax.f32 %v6085, 0.0
        %v6319 = vmax.f32 %v6087, 0.0
        %v6320 = vmax.f32 %v6089, 0.0
        %v6321 = vmax.f32 %v6093, 0.0
        %v6322 = vmax.f32 %v6095, 0.0
        %v6323 = vmax.f32 %v6097, 0.0
        %v6324 = vmax.f32 %v6099, 0.0
        %v6325 = vmax.f32 %v6103, 0.0
        %v6326 = vmax.f32 %v6105, 0.0
        %v6327 = vmax.f32 %v6107, 0.0
        %v6328 = vmax.f32 %v6109, 0.0
        %v6329 = vmax.f32 %v6113, 0.0
        %v6330 = vmax.f32 %v6115, 0.0
        %v6331 = vmax.f32 %v6117, 0.0
        %v6332 = vmax.f32 %v6119, 0.0
        %v6333 = vmax.f32 %v6123, 0.0
        %v6334 = vmax.f32 %v6125, 0.0
        %v6335 = vmax.f32 %v6127, 0.0
        %v6336 = vmax.f32 %v6129, 0.0
        %v6337 = vmax.f32 %v6133, 0.0
        %v6338 = vmax.f32 %v6135, 0.0
        %v6339 = vmax.f32 %v6137, 0.0
        %v6340 = vmax.f32 %v6139, 0.0
        %v6341 = vmax.f32 %v6143, 0.0
        %v6342 = vmax.f32 %v6145, 0.0
        %v6343 = vmax.f32 %v6147, 0.0
        %v6344 = vmax.f32 %v6149, 0.0
        %v6345 = vmax.f32 %v6153, 0.0
        %v6346 = vmax.f32 %v6155, 0.0
        %v6347 = vmax.f32 %v6157, 0.0
        %v6348 = vmax.f32 %v6159, 0.0
        %v6349 = vmax.f32 %v6163, 0.0
        %v6350 = vmax.f32 %v6165, 0.0
        %v6351 = vmax.f32 %v6167, 0.0
        %v6352 = vmax.f32 %v6169, 0.0
        %v6353 = vmax.f32 %v6173, 0.0
        %v6354 = vmax.f32 %v6175, 0.0
        %v6355 = vmax.f32 %v6177, 0.0
        %v6356 = vmax.f32 %v6179, 0.0
        %v6357 = vmax.f32 %v6183, 0.0
        %v6358 = vmax.f32 %v6185, 0.0
        %v6359 = vmax.f32 %v6187, 0.0
        %v6360 = vmax.f32 %v6189, 0.0
        %v6361 = vmax.f32 %v6193, 0.0
        %v6362 = vmax.f32 %v6195, 0.0
        %v6363 = vmax.f32 %v6197, 0.0
        %v6364 = vmax.f32 %v6199, 0.0
        %v6365 = vmax.f32 %v6203, 0.0
        %v6366 = vmax.f32 %v6205, 0.0
        %v6367 = vmax.f32 %v6207, 0.0
        %v6368 = vmax.f32 %v6209, 0.0
        %v6369 = vmax.f32 %v6213, 0.0
        %v6370 = vmax.f32 %v6215, 0.0
        %v6371 = vmax.f32 %v6217, 0.0
        %v6372 = vmax.f32 %v6219, 0.0
        %v6373 = vmax.f32 %v6223, 0.0
        %v6374 = vmax.f32 %v6225, 0.0
        %v6375 = vmax.f32 %v6227, 0.0
        %v6376 = vmax.f32 %v6229, 0.0
        %v6377 = vmax.f32 %v6233, 0.0
        %v6378 = vmax.f32 %v6235, 0.0
        %v6379 = vmax.f32 %v6237, 0.0
        %v6380 = vmax.f32 %v6239, 0.0
        %v6381 = vmax.f32 %v6243, 0.0
        %v6382 = vmax.f32 %v6245, 0.0
        %v6383 = vmax.f32 %v6247, 0.0
        %v6384 = vmax.f32 %v6249, 0.0
        %v6385 = vmax.f32 %v6253, 0.0
        %v6386 = vmax.f32 %v6255, 0.0
        %v6387 = vmax.f32 %v6257, 0.0
        %v6388 = vmax.f32 %v6259, 0.0
        %v6389 = vld [vmem:[%s16] sm:$0xff]
        %v6390 = vld [vmem:[%s16 + $0x8] sm:$0xff]
        %v6391 = vld [vmem:[%s16 + $0x10] sm:$0xff]
        %v6392 = vld [vmem:[%s16 + $0x18] sm:$0xff]
        %v6393 = vld [vmem:[%s16 + $0x20] sm:$0xff]
        %v6394 = vld [vmem:[%s16 + $0x28] sm:$0xff]
        %v6395 = vld [vmem:[%s16 + $0x30] sm:$0xff]
        %v6396 = vld [vmem:[%s16 + $0x38] sm:$0xff]
        %v6397 = vld [vmem:[%s16 + $0x40] sm:$0xff]
        %v6398 = vld [vmem:[%s16 + $0x48] sm:$0xff]
        %v6399 = vld [vmem:[%s16 + $0x50] sm:$0xff]
        %v6400 = vld [vmem:[%s16 + $0x58] sm:$0xff]
        %v6401 = vld [vmem:[%s16 + $0x60] sm:$0xff]
        %v6402 = vld [vmem:[%s16 + $0x68] sm:$0xff]
        %v6403 = vld [vmem:[%s16 + $0x70] sm:$0xff]
        %v6404 = vld [vmem:[%s16 + $0x78] sm:$0xff]
        %v6405 = vld [vmem:[%s16 + $0x80] sm:$0xff]
        %v6406 = vld [vmem:[%s16 + $0x88] sm:$0xff]
        %v6407 = vld [vmem:[%s16 + $0x90] sm:$0xff]
        %v6408 = vld [vmem:[%s16 + $0x98] sm:$0xff]
        %v6409 = vld [vmem:[%s16 + $0xa0] sm:$0xff]
        %v6410 = vld [vmem:[%s16 + $0xa8] sm:$0xff]
        %v6411 = vld [vmem:[%s16 + $0xb0] sm:$0xff]
        %v6412 = vld [vmem:[%s16 + $0xb8] sm:$0xff]
        %v6413 = vld [vmem:[%s16 + $0xc0] sm:$0xff]
        %v6414 = vld [vmem:[%s16 + $0xc8] sm:$0xff]
        %v6415 = vld [vmem:[%s16 + $0xd0] sm:$0xff]
        %v6416 = vld [vmem:[%s16 + $0xd8] sm:$0xff]
        %v6417 = vld [vmem:[%s16 + $0xe0] sm:$0xff]
        %v6418 = vld [vmem:[%s16 + $0xe8] sm:$0xff]
        %v6419 = vld [vmem:[%s16 + $0xf0] sm:$0xff]
        %v6420 = vld [vmem:[%s16 + $0xf8] sm:$0xff]
        %v6421 = vld [vmem:[%s17] sm:$0x3]
        %v6422 = vpack.c.bf16 %v6263, %v6261
        %v6423 = vpack.c.bf16 %v6264, %v6262
        %v6424 = vpack.c.bf16 %v6267, %v6265
        %v6425 = vpack.c.bf16 %v6268, %v6266
        %v6426 = vpack.c.bf16 %v6271, %v6269
        %v6427 = vpack.c.bf16 %v6272, %v6270
        %v6428 = vpack.c.bf16 %v6275, %v6273
        %v6429 = vpack.c.bf16 %v6276, %v6274
        %v6430 = vpack.c.bf16 %v6279, %v6277
        %v6431 = vpack.c.bf16 %v6280, %v6278
        %v6432 = vpack.c.bf16 %v6283, %v6281
        %v6433 = vpack.c.bf16 %v6284, %v6282
        %v6434 = vpack.c.bf16 %v6287, %v6285
        %v6435 = vpack.c.bf16 %v6288, %v6286
        %v6436 = vpack.c.bf16 %v6291, %v6289
        %v6437 = vpack.c.bf16 %v6292, %v6290
        %v6438 = vpack.c.bf16 %v6295, %v6293
        %v6439 = vpack.c.bf16 %v6296, %v6294
        %v6440 = vpack.c.bf16 %v6299, %v6297
        %v6441 = vpack.c.bf16 %v6300, %v6298
        %v6442 = vpack.c.bf16 %v6303, %v6301
        %v6443 = vpack.c.bf16 %v6304, %v6302
        %v6444 = vpack.c.bf16 %v6307, %v6305
        %v6445 = vpack.c.bf16 %v6308, %v6306
        %v6446 = vpack.c.bf16 %v6311, %v6309
        %v6447 = vpack.c.bf16 %v6312, %v6310
        %v6448 = vpack.c.bf16 %v6315, %v6313
        %v6449 = vpack.c.bf16 %v6316, %v6314
        %v6450 = vpack.c.bf16 %v6319, %v6317
        %v6451 = vpack.c.bf16 %v6320, %v6318
        %v6452 = vpack.c.bf16 %v6323, %v6321
        %v6453 = vpack.c.bf16 %v6324, %v6322
        %v6454 = vpack.c.bf16 %v6327, %v6325
        %v6455 = vpack.c.bf16 %v6328, %v6326
        %v6456 = vpack.c.bf16 %v6331, %v6329
        %v6457 = vpack.c.bf16 %v6332, %v6330
        %v6458 = vpack.c.bf16 %v6335, %v6333
        %v6459 = vpack.c.bf16 %v6336, %v6334
        %v6460 = vpack.c.bf16 %v6339, %v6337
        %v6461 = vpack.c.bf16 %v6340, %v6338
        %v6462 = vpack.c.bf16 %v6343, %v6341
        %v6463 = vpack.c.bf16 %v6344, %v6342
        %v6464 = vpack.c.bf16 %v6347, %v6345
        %v6465 = vpack.c.bf16 %v6348, %v6346
        %v6466 = vpack.c.bf16 %v6351, %v6349
        %v6467 = vpack.c.bf16 %v6352, %v6350
        %v6468 = vpack.c.bf16 %v6355, %v6353
        %v6469 = vpack.c.bf16 %v6356, %v6354
        %v6470 = vpack.c.bf16 %v6359, %v6357
        %v6471 = vpack.c.bf16 %v6360, %v6358
        %v6472 = vpack.c.bf16 %v6363, %v6361
        %v6473 = vpack.c.bf16 %v6364, %v6362
        %v6474 = vpack.c.bf16 %v6367, %v6365
        %v6475 = vpack.c.bf16 %v6368, %v6366
        %v6476 = vpack.c.bf16 %v6371, %v6369
        %v6477 = vpack.c.bf16 %v6372, %v6370
        %v6478 = vpack.c.bf16 %v6375, %v6373
        %v6479 = vpack.c.bf16 %v6376, %v6374
        %v6480 = vpack.c.bf16 %v6379, %v6377
        %v6481 = vpack.c.bf16 %v6380, %v6378
        %v6482 = vpack.c.bf16 %v6383, %v6381
        %v6483 = vpack.c.bf16 %v6384, %v6382
        %v6484 = vpack.c.bf16 %v6387, %v6385
        %v6485 = vpack.c.bf16 %v6388, %v6386
        %v6487 = vlaneseq
        %v6488 = vshrl.u32 %v6487, 7
        %v6489 = vsub.s32 0, %v6488
        %v6490 = vrot.slane %v6421, %v6489
        %v6491 = vlaneseq
        %v6492 = vshrl.u32 %v6491, 7
        %v6493 = vsub.s32 1, %v6492
        %v6494 = vrot.slane %v6421, %v6493
        %v6529 = vunpack.c.l.b16 %v6389
        %v6530 = vunpack.c.h.b16 %v6389
        %v6531 = vunpack.c.l.b16 %v6390
        %v6532 = vunpack.c.h.b16 %v6390
        %v6533 = vunpack.c.l.b16 %v6391
        %v6534 = vunpack.c.h.b16 %v6391
        %v6535 = vunpack.c.l.b16 %v6392
        %v6536 = vunpack.c.h.b16 %v6392
        %v6537 = vunpack.c.l.b16 %v6393
        %v6538 = vunpack.c.h.b16 %v6393
        %v6539 = vunpack.c.l.b16 %v6394
        %v6540 = vunpack.c.h.b16 %v6394
        %v6541 = vunpack.c.l.b16 %v6395
        %v6542 = vunpack.c.h.b16 %v6395
        %v6543 = vunpack.c.l.b16 %v6396
        %v6544 = vunpack.c.h.b16 %v6396
        %v6545 = vunpack.c.l.b16 %v6397
        %v6546 = vunpack.c.h.b16 %v6397
        %v6547 = vunpack.c.l.b16 %v6398
        %v6548 = vunpack.c.h.b16 %v6398
        %v6549 = vunpack.c.l.b16 %v6399
        %v6550 = vunpack.c.h.b16 %v6399
        %v6551 = vunpack.c.l.b16 %v6400
        %v6552 = vunpack.c.h.b16 %v6400
        %v6553 = vunpack.c.l.b16 %v6401
        %v6554 = vunpack.c.h.b16 %v6401
        %v6555 = vunpack.c.l.b16 %v6402
        %v6556 = vunpack.c.h.b16 %v6402
        %v6557 = vunpack.c.l.b16 %v6403
        %v6558 = vunpack.c.h.b16 %v6403
        %v6559 = vunpack.c.l.b16 %v6404
        %v6560 = vunpack.c.h.b16 %v6404
        %v6561 = vunpack.c.l.b16 %v6405
        %v6562 = vunpack.c.h.b16 %v6405
        %v6563 = vunpack.c.l.b16 %v6406
        %v6564 = vunpack.c.h.b16 %v6406
        %v6565 = vunpack.c.l.b16 %v6407
        %v6566 = vunpack.c.h.b16 %v6407
        %v6567 = vunpack.c.l.b16 %v6408
        %v6568 = vunpack.c.h.b16 %v6408
        %v6569 = vunpack.c.l.b16 %v6409
        %v6570 = vunpack.c.h.b16 %v6409
        %v6571 = vunpack.c.l.b16 %v6410
        %v6572 = vunpack.c.h.b16 %v6410
        %v6573 = vunpack.c.l.b16 %v6411
        %v6574 = vunpack.c.h.b16 %v6411
        %v6575 = vunpack.c.l.b16 %v6412
        %v6576 = vunpack.c.h.b16 %v6412
        %v6577 = vunpack.c.l.b16 %v6413
        %v6578 = vunpack.c.h.b16 %v6413
        %v6579 = vunpack.c.l.b16 %v6414
        %v6580 = vunpack.c.h.b16 %v6414
        %v6581 = vunpack.c.l.b16 %v6415
        %v6582 = vunpack.c.h.b16 %v6415
        %v6583 = vunpack.c.l.b16 %v6416
        %v6584 = vunpack.c.h.b16 %v6416
        %v6585 = vunpack.c.l.b16 %v6417
        %v6586 = vunpack.c.h.b16 %v6417
        %v6587 = vunpack.c.l.b16 %v6418
        %v6588 = vunpack.c.h.b16 %v6418
        %v6589 = vunpack.c.l.b16 %v6419
        %v6590 = vunpack.c.h.b16 %v6419
        %v6591 = vunpack.c.l.b16 %v6420
        %v6592 = vunpack.c.h.b16 %v6420
        %v6593 = vpack.c.b16 %v6531, %v6529
        %v6594 = vpack.c.b16 %v6532, %v6530
        %v6595 = vpack.c.b16 %v6535, %v6533
        %v6596 = vpack.c.b16 %v6536, %v6534
        %v6597 = vpack.c.b16 %v6539, %v6537
        %v6598 = vpack.c.b16 %v6540, %v6538
        %v6599 = vpack.c.b16 %v6543, %v6541
        %v6600 = vpack.c.b16 %v6544, %v6542
        %v6601 = vpack.c.b16 %v6547, %v6545
        %v6602 = vpack.c.b16 %v6548, %v6546
        %v6603 = vpack.c.b16 %v6551, %v6549
        %v6604 = vpack.c.b16 %v6552, %v6550
        %v6605 = vpack.c.b16 %v6555, %v6553
        %v6606 = vpack.c.b16 %v6556, %v6554
        %v6607 = vpack.c.b16 %v6559, %v6557
        %v6608 = vpack.c.b16 %v6560, %v6558
        %v6609 = vpack.c.b16 %v6563, %v6561
        %v6610 = vpack.c.b16 %v6564, %v6562
        %v6611 = vpack.c.b16 %v6567, %v6565
        %v6612 = vpack.c.b16 %v6568, %v6566
        %v6613 = vpack.c.b16 %v6571, %v6569
        %v6614 = vpack.c.b16 %v6572, %v6570
        %v6615 = vpack.c.b16 %v6575, %v6573
        %v6616 = vpack.c.b16 %v6576, %v6574
        %v6617 = vpack.c.b16 %v6579, %v6577
        %v6618 = vpack.c.b16 %v6580, %v6578
        %v6619 = vpack.c.b16 %v6583, %v6581
        %v6620 = vpack.c.b16 %v6584, %v6582
        %v6621 = vpack.c.b16 %v6587, %v6585
        %v6622 = vpack.c.b16 %v6588, %v6586
        %v6623 = vpack.c.b16 %v6591, %v6589
        %v6624 = vpack.c.b16 %v6592, %v6590
        %6657 = vmatprep.subr.bf16.mxu0 %v6608
        %6658 = vmatpush1.bf16.msra.mxu0 %v6607
        %6659 = vmatprep.subr.bf16.mxu0 %v6606
        %6660 = vmatpush1.bf16.msra.mxu0 %v6605
        %6661 = vmatprep.subr.bf16.mxu0 %v6604
        %6662 = vmatpush1.bf16.msra.mxu0 %v6603
        %6663 = vmatprep.subr.bf16.mxu0 %v6602
        %6664 = vmatpush1.bf16.msra.mxu0 %v6601
        %6665 = vmatprep.subr.bf16.mxu0 %v6600
        %6666 = vmatpush1.bf16.msra.mxu0 %v6599
        %6667 = vmatprep.subr.bf16.mxu0 %v6598
        %6668 = vmatpush1.bf16.msra.mxu0 %v6597
        %6669 = vmatprep.subr.bf16.mxu0 %v6596
        %6670 = vmatpush1.bf16.msra.mxu0 %v6595
        %6671 = vmatprep.subr.bf16.mxu0 %v6594
        %6672 = vmatpush1.bf16.msra.mxu0 %v6593
        %6673 = vmatprep.subr.bf16.mxu0 %v6624
        %6674 = vmatpush2.bf16.msra.mxu0 %v6623
        %6675 = vmatprep.subr.bf16.mxu0 %v6622
        %6676 = vmatpush2.bf16.msra.mxu0 %v6621
        %6677 = vmatprep.subr.bf16.mxu0 %v6620
        %6678 = vmatpush2.bf16.msra.mxu0 %v6619
        %6679 = vmatprep.subr.bf16.mxu0 %v6618
        %6680 = vmatpush2.bf16.msra.mxu0 %v6617
        %6681 = vmatprep.subr.bf16.mxu0 %v6616
        %6682 = vmatpush2.bf16.msra.mxu0 %v6615
        %6683 = vmatprep.subr.bf16.mxu0 %v6614
        %6684 = vmatpush2.bf16.msra.mxu0 %v6613
        %6685 = vmatprep.subr.bf16.mxu0 %v6612
        %6686 = vmatpush2.bf16.msra.mxu0 %v6611
        %6687 = vmatprep.subr.bf16.mxu0 %v6610
        %6688 = vmatpush2.bf16.msra.mxu0 %v6609
        %6689 = vmatprep.mubr.bf16.mxu0 %v6423
        %6690 = vmatmul.mubr.bf16.gmra.mxu0 %v6422
        %v6691 = vpop.f32.mrf.mxu0
        %v6692 = vadd.f32 %v6490, %v6691
        %v6693 = vpop.f32.mrf.mxu0
        %v6694 = vadd.f32 %v6494, %v6693
        %v6695 = vpop.f32.mrf.mxu0
        %v6696 = vadd.f32 %v6490, %v6695
        %v6697 = vpop.f32.mrf.mxu0
        %v6698 = vadd.f32 %v6494, %v6697
        %6699 = vmatprep.mubr.bf16.mxu0 %v6425
        %6700 = vmatmul.mubr.bf16.gmra.mxu0 %v6424
        %v6701 = vpop.f32.mrf.mxu0
        %v6702 = vadd.f32 %v6490, %v6701
        %v6703 = vpop.f32.mrf.mxu0
        %v6704 = vadd.f32 %v6494, %v6703
        %v6705 = vpop.f32.mrf.mxu0
        %v6706 = vadd.f32 %v6490, %v6705
        %v6707 = vpop.f32.mrf.mxu0
        %v6708 = vadd.f32 %v6494, %v6707
        %6709 = vmatprep.mubr.bf16.mxu0 %v6427
        %6710 = vmatmul.mubr.bf16.gmra.mxu0 %v6426
        %v6711 = vpop.f32.mrf.mxu0
        %v6712 = vadd.f32 %v6490, %v6711
        %v6713 = vpop.f32.mrf.mxu0
        %v6714 = vadd.f32 %v6494, %v6713
        %v6715 = vpop.f32.mrf.mxu0
        %v6716 = vadd.f32 %v6490, %v6715
        %v6717 = vpop.f32.mrf.mxu0
        %v6718 = vadd.f32 %v6494, %v6717
        %6719 = vmatprep.mubr.bf16.mxu0 %v6429
        %6720 = vmatmul.mubr.bf16.gmra.mxu0 %v6428
        %v6721 = vpop.f32.mrf.mxu0
        %v6722 = vadd.f32 %v6490, %v6721
        %v6723 = vpop.f32.mrf.mxu0
        %v6724 = vadd.f32 %v6494, %v6723
        %v6725 = vpop.f32.mrf.mxu0
        %v6726 = vadd.f32 %v6490, %v6725
        %v6727 = vpop.f32.mrf.mxu0
        %v6728 = vadd.f32 %v6494, %v6727
        %6729 = vmatprep.mubr.bf16.mxu0 %v6431
        %6730 = vmatmul.mubr.bf16.gmra.mxu0 %v6430
        %v6731 = vpop.f32.mrf.mxu0
        %v6732 = vadd.f32 %v6490, %v6731
        %v6733 = vpop.f32.mrf.mxu0
        %v6734 = vadd.f32 %v6494, %v6733
        %v6735 = vpop.f32.mrf.mxu0
        %v6736 = vadd.f32 %v6490, %v6735
        %v6737 = vpop.f32.mrf.mxu0
        %v6738 = vadd.f32 %v6494, %v6737
        %6739 = vmatprep.mubr.bf16.mxu0 %v6433
        %6740 = vmatmul.mubr.bf16.gmra.mxu0 %v6432
        %v6741 = vpop.f32.mrf.mxu0
        %v6742 = vadd.f32 %v6490, %v6741
        %v6743 = vpop.f32.mrf.mxu0
        %v6744 = vadd.f32 %v6494, %v6743
        %v6745 = vpop.f32.mrf.mxu0
        %v6746 = vadd.f32 %v6490, %v6745
        %v6747 = vpop.f32.mrf.mxu0
        %v6748 = vadd.f32 %v6494, %v6747
        %6749 = vmatprep.mubr.bf16.mxu0 %v6435
        %6750 = vmatmul.mubr.bf16.gmra.mxu0 %v6434
        %v6751 = vpop.f32.mrf.mxu0
        %v6752 = vadd.f32 %v6490, %v6751
        %v6753 = vpop.f32.mrf.mxu0
        %v6754 = vadd.f32 %v6494, %v6753
        %v6755 = vpop.f32.mrf.mxu0
        %v6756 = vadd.f32 %v6490, %v6755
        %v6757 = vpop.f32.mrf.mxu0
        %v6758 = vadd.f32 %v6494, %v6757
        %6759 = vmatprep.mubr.bf16.mxu0 %v6437
        %6760 = vmatmul.mubr.bf16.gmra.mxu0 %v6436
        %v6761 = vpop.f32.mrf.mxu0
        %v6762 = vadd.f32 %v6490, %v6761
        %v6763 = vpop.f32.mrf.mxu0
        %v6764 = vadd.f32 %v6494, %v6763
        %v6765 = vpop.f32.mrf.mxu0
        %v6766 = vadd.f32 %v6490, %v6765
        %v6767 = vpop.f32.mrf.mxu0
        %v6768 = vadd.f32 %v6494, %v6767
        %6769 = vmatprep.mubr.bf16.mxu0 %v6439
        %6770 = vmatmul.mubr.bf16.gmra.mxu0 %v6438
        %v6771 = vpop.f32.mrf.mxu0
        %v6772 = vadd.f32 %v6490, %v6771
        %v6773 = vpop.f32.mrf.mxu0
        %v6774 = vadd.f32 %v6494, %v6773
        %v6775 = vpop.f32.mrf.mxu0
        %v6776 = vadd.f32 %v6490, %v6775
        %v6777 = vpop.f32.mrf.mxu0
        %v6778 = vadd.f32 %v6494, %v6777
        %6779 = vmatprep.mubr.bf16.mxu0 %v6441
        %6780 = vmatmul.mubr.bf16.gmra.mxu0 %v6440
        %v6781 = vpop.f32.mrf.mxu0
        %v6782 = vadd.f32 %v6490, %v6781
        %v6783 = vpop.f32.mrf.mxu0
        %v6784 = vadd.f32 %v6494, %v6783
        %v6785 = vpop.f32.mrf.mxu0
        %v6786 = vadd.f32 %v6490, %v6785
        %v6787 = vpop.f32.mrf.mxu0
        %v6788 = vadd.f32 %v6494, %v6787
        %6789 = vmatprep.mubr.bf16.mxu0 %v6443
        %6790 = vmatmul.mubr.bf16.gmra.mxu0 %v6442
        %v6791 = vpop.f32.mrf.mxu0
        %v6792 = vadd.f32 %v6490, %v6791
        %v6793 = vpop.f32.mrf.mxu0
        %v6794 = vadd.f32 %v6494, %v6793
        %v6795 = vpop.f32.mrf.mxu0
        %v6796 = vadd.f32 %v6490, %v6795
        %v6797 = vpop.f32.mrf.mxu0
        %v6798 = vadd.f32 %v6494, %v6797
        %6799 = vmatprep.mubr.bf16.mxu0 %v6445
        %6800 = vmatmul.mubr.bf16.gmra.mxu0 %v6444
        %v6801 = vpop.f32.mrf.mxu0
        %v6802 = vadd.f32 %v6490, %v6801
        %v6803 = vpop.f32.mrf.mxu0
        %v6804 = vadd.f32 %v6494, %v6803
        %v6805 = vpop.f32.mrf.mxu0
        %v6806 = vadd.f32 %v6490, %v6805
        %v6807 = vpop.f32.mrf.mxu0
        %v6808 = vadd.f32 %v6494, %v6807
        %6809 = vmatprep.mubr.bf16.mxu0 %v6447
        %6810 = vmatmul.mubr.bf16.gmra.mxu0 %v6446
        %v6811 = vpop.f32.mrf.mxu0
        %v6812 = vadd.f32 %v6490, %v6811
        %v6813 = vpop.f32.mrf.mxu0
        %v6814 = vadd.f32 %v6494, %v6813
        %v6815 = vpop.f32.mrf.mxu0
        %v6816 = vadd.f32 %v6490, %v6815
        %v6817 = vpop.f32.mrf.mxu0
        %v6818 = vadd.f32 %v6494, %v6817
        %6819 = vmatprep.mubr.bf16.mxu0 %v6449
        %6820 = vmatmul.mubr.bf16.gmra.mxu0 %v6448
        %v6821 = vpop.f32.mrf.mxu0
        %v6822 = vadd.f32 %v6490, %v6821
        %v6823 = vpop.f32.mrf.mxu0
        %v6824 = vadd.f32 %v6494, %v6823
        %v6825 = vpop.f32.mrf.mxu0
        %v6826 = vadd.f32 %v6490, %v6825
        %v6827 = vpop.f32.mrf.mxu0
        %v6828 = vadd.f32 %v6494, %v6827
        %6829 = vmatprep.mubr.bf16.mxu0 %v6451
        %6830 = vmatmul.mubr.bf16.gmra.mxu0 %v6450
        %v6831 = vpop.f32.mrf.mxu0
        %v6832 = vadd.f32 %v6490, %v6831
        %v6833 = vpop.f32.mrf.mxu0
        %v6834 = vadd.f32 %v6494, %v6833
        %v6835 = vpop.f32.mrf.mxu0
        %v6836 = vadd.f32 %v6490, %v6835
        %v6837 = vpop.f32.mrf.mxu0
        %v6838 = vadd.f32 %v6494, %v6837
        %6839 = vmatprep.mubr.bf16.mxu0 %v6453
        %6840 = vmatmul.mubr.bf16.gmra.mxu0 %v6452
        %v6841 = vpop.f32.mrf.mxu0
        %v6842 = vadd.f32 %v6490, %v6841
        %v6843 = vpop.f32.mrf.mxu0
        %v6844 = vadd.f32 %v6494, %v6843
        %v6845 = vpop.f32.mrf.mxu0
        %v6846 = vadd.f32 %v6490, %v6845
        %v6847 = vpop.f32.mrf.mxu0
        %v6848 = vadd.f32 %v6494, %v6847
        %6849 = vmatprep.mubr.bf16.mxu0 %v6455
        %6850 = vmatmul.mubr.bf16.gmra.mxu0 %v6454
        %v6851 = vpop.f32.mrf.mxu0
        %v6852 = vadd.f32 %v6490, %v6851
        %v6853 = vpop.f32.mrf.mxu0
        %v6854 = vadd.f32 %v6494, %v6853
        %v6855 = vpop.f32.mrf.mxu0
        %v6856 = vadd.f32 %v6490, %v6855
        %v6857 = vpop.f32.mrf.mxu0
        %v6858 = vadd.f32 %v6494, %v6857
        %6859 = vmatprep.mubr.bf16.mxu0 %v6457
        %6860 = vmatmul.mubr.bf16.gmra.mxu0 %v6456
        %v6861 = vpop.f32.mrf.mxu0
        %v6862 = vadd.f32 %v6490, %v6861
        %v6863 = vpop.f32.mrf.mxu0
        %v6864 = vadd.f32 %v6494, %v6863
        %v6865 = vpop.f32.mrf.mxu0
        %v6866 = vadd.f32 %v6490, %v6865
        %v6867 = vpop.f32.mrf.mxu0
        %v6868 = vadd.f32 %v6494, %v6867
        %6869 = vmatprep.mubr.bf16.mxu0 %v6459
        %6870 = vmatmul.mubr.bf16.gmra.mxu0 %v6458
        %v6871 = vpop.f32.mrf.mxu0
        %v6872 = vadd.f32 %v6490, %v6871
        %v6873 = vpop.f32.mrf.mxu0
        %v6874 = vadd.f32 %v6494, %v6873
        %v6875 = vpop.f32.mrf.mxu0
        %v6876 = vadd.f32 %v6490, %v6875
        %v6877 = vpop.f32.mrf.mxu0
        %v6878 = vadd.f32 %v6494, %v6877
        %6879 = vmatprep.mubr.bf16.mxu0 %v6461
        %6880 = vmatmul.mubr.bf16.gmra.mxu0 %v6460
        %v6881 = vpop.f32.mrf.mxu0
        %v6882 = vadd.f32 %v6490, %v6881
        %v6883 = vpop.f32.mrf.mxu0
        %v6884 = vadd.f32 %v6494, %v6883
        %v6885 = vpop.f32.mrf.mxu0
        %v6886 = vadd.f32 %v6490, %v6885
        %v6887 = vpop.f32.mrf.mxu0
        %v6888 = vadd.f32 %v6494, %v6887
        %6889 = vmatprep.mubr.bf16.mxu0 %v6463
        %6890 = vmatmul.mubr.bf16.gmra.mxu0 %v6462
        %v6891 = vpop.f32.mrf.mxu0
        %v6892 = vadd.f32 %v6490, %v6891
        %v6893 = vpop.f32.mrf.mxu0
        %v6894 = vadd.f32 %v6494, %v6893
        %v6895 = vpop.f32.mrf.mxu0
        %v6896 = vadd.f32 %v6490, %v6895
        %v6897 = vpop.f32.mrf.mxu0
        %v6898 = vadd.f32 %v6494, %v6897
        %6899 = vmatprep.mubr.bf16.mxu0 %v6465
        %6900 = vmatmul.mubr.bf16.gmra.mxu0 %v6464
        %v6901 = vpop.f32.mrf.mxu0
        %v6902 = vadd.f32 %v6490, %v6901
        %v6903 = vpop.f32.mrf.mxu0
        %v6904 = vadd.f32 %v6494, %v6903
        %v6905 = vpop.f32.mrf.mxu0
        %v6906 = vadd.f32 %v6490, %v6905
        %v6907 = vpop.f32.mrf.mxu0
        %v6908 = vadd.f32 %v6494, %v6907
        %6909 = vmatprep.mubr.bf16.mxu0 %v6467
        %6910 = vmatmul.mubr.bf16.gmra.mxu0 %v6466
        %v6911 = vpop.f32.mrf.mxu0
        %v6912 = vadd.f32 %v6490, %v6911
        %v6913 = vpop.f32.mrf.mxu0
        %v6914 = vadd.f32 %v6494, %v6913
        %v6915 = vpop.f32.mrf.mxu0
        %v6916 = vadd.f32 %v6490, %v6915
        %v6917 = vpop.f32.mrf.mxu0
        %v6918 = vadd.f32 %v6494, %v6917
        %6919 = vmatprep.mubr.bf16.mxu0 %v6469
        %6920 = vmatmul.mubr.bf16.gmra.mxu0 %v6468
        %v6921 = vpop.f32.mrf.mxu0
        %v6922 = vadd.f32 %v6490, %v6921
        %v6923 = vpop.f32.mrf.mxu0
        %v6924 = vadd.f32 %v6494, %v6923
        %v6925 = vpop.f32.mrf.mxu0
        %v6926 = vadd.f32 %v6490, %v6925
        %v6927 = vpop.f32.mrf.mxu0
        %v6928 = vadd.f32 %v6494, %v6927
        %6929 = vmatprep.mubr.bf16.mxu0 %v6471
        %6930 = vmatmul.mubr.bf16.gmra.mxu0 %v6470
        %v6931 = vpop.f32.mrf.mxu0
        %v6932 = vadd.f32 %v6490, %v6931
        %v6933 = vpop.f32.mrf.mxu0
        %v6934 = vadd.f32 %v6494, %v6933
        %v6935 = vpop.f32.mrf.mxu0
        %v6936 = vadd.f32 %v6490, %v6935
        %v6937 = vpop.f32.mrf.mxu0
        %v6938 = vadd.f32 %v6494, %v6937
        %6939 = vmatprep.mubr.bf16.mxu0 %v6473
        %6940 = vmatmul.mubr.bf16.gmra.mxu0 %v6472
        %v6941 = vpop.f32.mrf.mxu0
        %v6942 = vadd.f32 %v6490, %v6941
        %v6943 = vpop.f32.mrf.mxu0
        %v6944 = vadd.f32 %v6494, %v6943
        %v6945 = vpop.f32.mrf.mxu0
        %v6946 = vadd.f32 %v6490, %v6945
        %v6947 = vpop.f32.mrf.mxu0
        %v6948 = vadd.f32 %v6494, %v6947
        %6949 = vmatprep.mubr.bf16.mxu0 %v6475
        %6950 = vmatmul.mubr.bf16.gmra.mxu0 %v6474
        %v6951 = vpop.f32.mrf.mxu0
        %v6952 = vadd.f32 %v6490, %v6951
        %v6953 = vpop.f32.mrf.mxu0
        %v6954 = vadd.f32 %v6494, %v6953
        %v6955 = vpop.f32.mrf.mxu0
        %v6956 = vadd.f32 %v6490, %v6955
        %v6957 = vpop.f32.mrf.mxu0
        %v6958 = vadd.f32 %v6494, %v6957
        %6959 = vmatprep.mubr.bf16.mxu0 %v6477
        %6960 = vmatmul.mubr.bf16.gmra.mxu0 %v6476
        %v6961 = vpop.f32.mrf.mxu0
        %v6962 = vadd.f32 %v6490, %v6961
        %v6963 = vpop.f32.mrf.mxu0
        %v6964 = vadd.f32 %v6494, %v6963
        %v6965 = vpop.f32.mrf.mxu0
        %v6966 = vadd.f32 %v6490, %v6965
        %v6967 = vpop.f32.mrf.mxu0
        %v6968 = vadd.f32 %v6494, %v6967
        %6969 = vmatprep.mubr.bf16.mxu0 %v6479
        %6970 = vmatmul.mubr.bf16.gmra.mxu0 %v6478
        %v6971 = vpop.f32.mrf.mxu0
        %v6972 = vadd.f32 %v6490, %v6971
        %v6973 = vpop.f32.mrf.mxu0
        %v6974 = vadd.f32 %v6494, %v6973
        %v6975 = vpop.f32.mrf.mxu0
        %v6976 = vadd.f32 %v6490, %v6975
        %v6977 = vpop.f32.mrf.mxu0
        %v6978 = vadd.f32 %v6494, %v6977
        %6979 = vmatprep.mubr.bf16.mxu0 %v6481
        %6980 = vmatmul.mubr.bf16.gmra.mxu0 %v6480
        %v6981 = vpop.f32.mrf.mxu0
        %v6982 = vadd.f32 %v6490, %v6981
        %v6983 = vpop.f32.mrf.mxu0
        %v6984 = vadd.f32 %v6494, %v6983
        %v6985 = vpop.f32.mrf.mxu0
        %v6986 = vadd.f32 %v6490, %v6985
        %v6987 = vpop.f32.mrf.mxu0
        %v6988 = vadd.f32 %v6494, %v6987
        %6989 = vmatprep.mubr.bf16.mxu0 %v6483
        %6990 = vmatmul.mubr.bf16.gmra.mxu0 %v6482
        %v6991 = vpop.f32.mrf.mxu0
        %v6992 = vadd.f32 %v6490, %v6991
        %v6993 = vpop.f32.mrf.mxu0
        %v6994 = vadd.f32 %v6494, %v6993
        %v6995 = vpop.f32.mrf.mxu0
        %v6996 = vadd.f32 %v6490, %v6995
        %v6997 = vpop.f32.mrf.mxu0
        %v6998 = vadd.f32 %v6494, %v6997
        %6999 = vmatprep.mubr.bf16.mxu0 %v6485
        %7000 = vmatmul.mubr.bf16.gmra.mxu0 %v6484
        %v7001 = vpop.f32.mrf.mxu0
        %v7002 = vadd.f32 %v6490, %v7001
        %v7003 = vpop.f32.mrf.mxu0
        %v7004 = vadd.f32 %v6494, %v7003
        %v7005 = vpop.f32.mrf.mxu0
        %v7006 = vadd.f32 %v6490, %v7005
        %v7007 = vpop.f32.mrf.mxu0
        %v7008 = vadd.f32 %v6494, %v7007
        %7009 = vdwg.mxu0
        %v7010 = vmax.f32 %v6692, 0.0
        %v7011 = vmax.f32 %v6694, 0.0
        %v7012 = vmax.f32 %v6696, 0.0
        %v7013 = vmax.f32 %v6698, 0.0
        %v7014 = vmax.f32 %v6702, 0.0
        %v7015 = vmax.f32 %v6704, 0.0
        %v7016 = vmax.f32 %v6706, 0.0
        %v7017 = vmax.f32 %v6708, 0.0
        %v7018 = vmax.f32 %v6712, 0.0
        %v7019 = vmax.f32 %v6714, 0.0
        %v7020 = vmax.f32 %v6716, 0.0
        %v7021 = vmax.f32 %v6718, 0.0
        %v7022 = vmax.f32 %v6722, 0.0
        %v7023 = vmax.f32 %v6724, 0.0
        %v7024 = vmax.f32 %v6726, 0.0
        %v7025 = vmax.f32 %v6728, 0.0
        %v7026 = vmax.f32 %v6732, 0.0
        %v7027 = vmax.f32 %v6734, 0.0
        %v7028 = vmax.f32 %v6736, 0.0
        %v7029 = vmax.f32 %v6738, 0.0
        %v7030 = vmax.f32 %v6742, 0.0
        %v7031 = vmax.f32 %v6744, 0.0
        %v7032 = vmax.f32 %v6746, 0.0
        %v7033 = vmax.f32 %v6748, 0.0
        %v7034 = vmax.f32 %v6752, 0.0
        %v7035 = vmax.f32 %v6754, 0.0
        %v7036 = vmax.f32 %v6756, 0.0
        %v7037 = vmax.f32 %v6758, 0.0
        %v7038 = vmax.f32 %v6762, 0.0
        %v7039 = vmax.f32 %v6764, 0.0
        %v7040 = vmax.f32 %v6766, 0.0
        %v7041 = vmax.f32 %v6768, 0.0
        %v7042 = vmax.f32 %v6772, 0.0
        %v7043 = vmax.f32 %v6774, 0.0
        %v7044 = vmax.f32 %v6776, 0.0
        %v7045 = vmax.f32 %v6778, 0.0
        %v7046 = vmax.f32 %v6782, 0.0
        %v7047 = vmax.f32 %v6784, 0.0
        %v7048 = vmax.f32 %v6786, 0.0
        %v7049 = vmax.f32 %v6788, 0.0
        %v7050 = vmax.f32 %v6792, 0.0
        %v7051 = vmax.f32 %v6794, 0.0
        %v7052 = vmax.f32 %v6796, 0.0
        %v7053 = vmax.f32 %v6798, 0.0
        %v7054 = vmax.f32 %v6802, 0.0
        %v7055 = vmax.f32 %v6804, 0.0
        %v7056 = vmax.f32 %v6806, 0.0
        %v7057 = vmax.f32 %v6808, 0.0
        %v7058 = vmax.f32 %v6812, 0.0
        %v7059 = vmax.f32 %v6814, 0.0
        %v7060 = vmax.f32 %v6816, 0.0
        %v7061 = vmax.f32 %v6818, 0.0
        %v7062 = vmax.f32 %v6822, 0.0
        %v7063 = vmax.f32 %v6824, 0.0
        %v7064 = vmax.f32 %v6826, 0.0
        %v7065 = vmax.f32 %v6828, 0.0
        %v7066 = vmax.f32 %v6832, 0.0
        %v7067 = vmax.f32 %v6834, 0.0
        %v7068 = vmax.f32 %v6836, 0.0
        %v7069 = vmax.f32 %v6838, 0.0
        %v7070 = vmax.f32 %v6842, 0.0
        %v7071 = vmax.f32 %v6844, 0.0
        %v7072 = vmax.f32 %v6846, 0.0
        %v7073 = vmax.f32 %v6848, 0.0
        %v7074 = vmax.f32 %v6852, 0.0
        %v7075 = vmax.f32 %v6854, 0.0
        %v7076 = vmax.f32 %v6856, 0.0
        %v7077 = vmax.f32 %v6858, 0.0
        %v7078 = vmax.f32 %v6862, 0.0
        %v7079 = vmax.f32 %v6864, 0.0
        %v7080 = vmax.f32 %v6866, 0.0
        %v7081 = vmax.f32 %v6868, 0.0
        %v7082 = vmax.f32 %v6872, 0.0
        %v7083 = vmax.f32 %v6874, 0.0
        %v7084 = vmax.f32 %v6876, 0.0
        %v7085 = vmax.f32 %v6878, 0.0
        %v7086 = vmax.f32 %v6882, 0.0
        %v7087 = vmax.f32 %v6884, 0.0
        %v7088 = vmax.f32 %v6886, 0.0
        %v7089 = vmax.f32 %v6888, 0.0
        %v7090 = vmax.f32 %v6892, 0.0
        %v7091 = vmax.f32 %v6894, 0.0
        %v7092 = vmax.f32 %v6896, 0.0
        %v7093 = vmax.f32 %v6898, 0.0
        %v7094 = vmax.f32 %v6902, 0.0
        %v7095 = vmax.f32 %v6904, 0.0
        %v7096 = vmax.f32 %v6906, 0.0
        %v7097 = vmax.f32 %v6908, 0.0
        %v7098 = vmax.f32 %v6912, 0.0
        %v7099 = vmax.f32 %v6914, 0.0
        %v7100 = vmax.f32 %v6916, 0.0
        %v7101 = vmax.f32 %v6918, 0.0
        %v7102 = vmax.f32 %v6922, 0.0
        %v7103 = vmax.f32 %v6924, 0.0
        %v7104 = vmax.f32 %v6926, 0.0
        %v7105 = vmax.f32 %v6928, 0.0
        %v7106 = vmax.f32 %v6932, 0.0
        %v7107 = vmax.f32 %v6934, 0.0
        %v7108 = vmax.f32 %v6936, 0.0
        %v7109 = vmax.f32 %v6938, 0.0
        %v7110 = vmax.f32 %v6942, 0.0
        %v7111 = vmax.f32 %v6944, 0.0
        %v7112 = vmax.f32 %v6946, 0.0
        %v7113 = vmax.f32 %v6948, 0.0
        %v7114 = vmax.f32 %v6952, 0.0
        %v7115 = vmax.f32 %v6954, 0.0
        %v7116 = vmax.f32 %v6956, 0.0
        %v7117 = vmax.f32 %v6958, 0.0
        %v7118 = vmax.f32 %v6962, 0.0
        %v7119 = vmax.f32 %v6964, 0.0
        %v7120 = vmax.f32 %v6966, 0.0
        %v7121 = vmax.f32 %v6968, 0.0
        %v7122 = vmax.f32 %v6972, 0.0
        %v7123 = vmax.f32 %v6974, 0.0
        %v7124 = vmax.f32 %v6976, 0.0
        %v7125 = vmax.f32 %v6978, 0.0
        %v7126 = vmax.f32 %v6982, 0.0
        %v7127 = vmax.f32 %v6984, 0.0
        %v7128 = vmax.f32 %v6986, 0.0
        %v7129 = vmax.f32 %v6988, 0.0
        %v7130 = vmax.f32 %v6992, 0.0
        %v7131 = vmax.f32 %v6994, 0.0
        %v7132 = vmax.f32 %v6996, 0.0
        %v7133 = vmax.f32 %v6998, 0.0
        %v7134 = vmax.f32 %v7002, 0.0
        %v7135 = vmax.f32 %v7004, 0.0
        %v7136 = vmax.f32 %v7006, 0.0
        %v7137 = vmax.f32 %v7008, 0.0
        %v7138 = vld [vmem:[%s18] sm:$0xf]
        %v7139 = vld [vmem:[%s18 + $0x4] sm:$0xf]
        %v7140 = vld [vmem:[%s18 + $0x8] sm:$0xf]
        %v7141 = vld [vmem:[%s18 + $0xc] sm:$0xf]
        %v7142 = vld [vmem:[%s18 + $0x10] sm:$0xf]
        %v7143 = vld [vmem:[%s18 + $0x14] sm:$0xf]
        %v7144 = vld [vmem:[%s18 + $0x18] sm:$0xf]
        %v7145 = vld [vmem:[%s18 + $0x1c] sm:$0xf]
        %v7146 = vld [vmem:[%s18 + $0x20] sm:$0xf]
        %v7147 = vld [vmem:[%s18 + $0x24] sm:$0xf]
        %v7148 = vld [vmem:[%s18 + $0x28] sm:$0xf]
        %v7149 = vld [vmem:[%s18 + $0x2c] sm:$0xf]
        %v7150 = vld [vmem:[%s18 + $0x30] sm:$0xf]
        %v7151 = vld [vmem:[%s18 + $0x34] sm:$0xf]
        %v7152 = vld [vmem:[%s18 + $0x38] sm:$0xf]
        %v7153 = vld [vmem:[%s18 + $0x3c] sm:$0xf]
        %v7154 = vld [vmem:[%s18 + $0x40] sm:$0xf]
        %v7155 = vld [vmem:[%s18 + $0x44] sm:$0xf]
        %v7156 = vld [vmem:[%s18 + $0x48] sm:$0xf]
        %v7157 = vld [vmem:[%s18 + $0x4c] sm:$0xf]
        %v7158 = vld [vmem:[%s18 + $0x50] sm:$0xf]
        %v7159 = vld [vmem:[%s18 + $0x54] sm:$0xf]
        %v7160 = vld [vmem:[%s18 + $0x58] sm:$0xf]
        %v7161 = vld [vmem:[%s18 + $0x5c] sm:$0xf]
        %v7162 = vld [vmem:[%s18 + $0x60] sm:$0xf]
        %v7163 = vld [vmem:[%s18 + $0x64] sm:$0xf]
        %v7164 = vld [vmem:[%s18 + $0x68] sm:$0xf]
        %v7165 = vld [vmem:[%s18 + $0x6c] sm:$0xf]
        %v7166 = vld [vmem:[%s18 + $0x70] sm:$0xf]
        %v7167 = vld [vmem:[%s18 + $0x74] sm:$0xf]
        %v7168 = vld [vmem:[%s18 + $0x78] sm:$0xf]
        %v7169 = vld [vmem:[%s18 + $0x7c] sm:$0xf]
        %v7170 = vld [vmem:[%s19] sm:$0x1]
        %v7171 = vpack.c.bf16 %v7012, %v7010
        %v7172 = vpack.c.bf16 %v7013, %v7011
        %v7173 = vpack.c.bf16 %v7016, %v7014
        %v7174 = vpack.c.bf16 %v7017, %v7015
        %v7175 = vpack.c.bf16 %v7020, %v7018
        %v7176 = vpack.c.bf16 %v7021, %v7019
        %v7177 = vpack.c.bf16 %v7024, %v7022
        %v7178 = vpack.c.bf16 %v7025, %v7023
        %v7179 = vpack.c.bf16 %v7028, %v7026
        %v7180 = vpack.c.bf16 %v7029, %v7027
        %v7181 = vpack.c.bf16 %v7032, %v7030
        %v7182 = vpack.c.bf16 %v7033, %v7031
        %v7183 = vpack.c.bf16 %v7036, %v7034
        %v7184 = vpack.c.bf16 %v7037, %v7035
        %v7185 = vpack.c.bf16 %v7040, %v7038
        %v7186 = vpack.c.bf16 %v7041, %v7039
        %v7187 = vpack.c.bf16 %v7044, %v7042
        %v7188 = vpack.c.bf16 %v7045, %v7043
        %v7189 = vpack.c.bf16 %v7048, %v7046
        %v7190 = vpack.c.bf16 %v7049, %v7047
        %v7191 = vpack.c.bf16 %v7052, %v7050
        %v7192 = vpack.c.bf16 %v7053, %v7051
        %v7193 = vpack.c.bf16 %v7056, %v7054
        %v7194 = vpack.c.bf16 %v7057, %v7055
        %v7195 = vpack.c.bf16 %v7060, %v7058
        %v7196 = vpack.c.bf16 %v7061, %v7059
        %v7197 = vpack.c.bf16 %v7064, %v7062
        %v7198 = vpack.c.bf16 %v7065, %v7063
        %v7199 = vpack.c.bf16 %v7068, %v7066
        %v7200 = vpack.c.bf16 %v7069, %v7067
        %v7201 = vpack.c.bf16 %v7072, %v7070
        %v7202 = vpack.c.bf16 %v7073, %v7071
        %v7203 = vpack.c.bf16 %v7076, %v7074
        %v7204 = vpack.c.bf16 %v7077, %v7075
        %v7205 = vpack.c.bf16 %v7080, %v7078
        %v7206 = vpack.c.bf16 %v7081, %v7079
        %v7207 = vpack.c.bf16 %v7084, %v7082
        %v7208 = vpack.c.bf16 %v7085, %v7083
        %v7209 = vpack.c.bf16 %v7088, %v7086
        %v7210 = vpack.c.bf16 %v7089, %v7087
        %v7211 = vpack.c.bf16 %v7092, %v7090
        %v7212 = vpack.c.bf16 %v7093, %v7091
        %v7213 = vpack.c.bf16 %v7096, %v7094
        %v7214 = vpack.c.bf16 %v7097, %v7095
        %v7215 = vpack.c.bf16 %v7100, %v7098
        %v7216 = vpack.c.bf16 %v7101, %v7099
        %v7217 = vpack.c.bf16 %v7104, %v7102
        %v7218 = vpack.c.bf16 %v7105, %v7103
        %v7219 = vpack.c.bf16 %v7108, %v7106
        %v7220 = vpack.c.bf16 %v7109, %v7107
        %v7221 = vpack.c.bf16 %v7112, %v7110
        %v7222 = vpack.c.bf16 %v7113, %v7111
        %v7223 = vpack.c.bf16 %v7116, %v7114
        %v7224 = vpack.c.bf16 %v7117, %v7115
        %v7225 = vpack.c.bf16 %v7120, %v7118
        %v7226 = vpack.c.bf16 %v7121, %v7119
        %v7227 = vpack.c.bf16 %v7124, %v7122
        %v7228 = vpack.c.bf16 %v7125, %v7123
        %v7229 = vpack.c.bf16 %v7128, %v7126
        %v7230 = vpack.c.bf16 %v7129, %v7127
        %v7231 = vpack.c.bf16 %v7132, %v7130
        %v7232 = vpack.c.bf16 %v7133, %v7131
        %v7233 = vpack.c.bf16 %v7136, %v7134
        %v7234 = vpack.c.bf16 %v7137, %v7135
        %v7236 = vlaneseq
        %v7237 = vshrl.u32 %v7236, 7
        %v7238 = vsub.s32 0, %v7237
        %v7239 = vrot.slane %v7170, %v7238
        %v7273 = vunpack.c.l.b16 %v7138
        %v7274 = vunpack.c.l.b16 %v7139
        %v7275 = vunpack.c.l.b16 %v7140
        %v7276 = vunpack.c.l.b16 %v7141
        %v7277 = vunpack.c.l.b16 %v7142
        %v7278 = vunpack.c.l.b16 %v7143
        %v7279 = vunpack.c.l.b16 %v7144
        %v7280 = vunpack.c.l.b16 %v7145
        %v7281 = vunpack.c.l.b16 %v7146
        %v7282 = vunpack.c.l.b16 %v7147
        %v7283 = vunpack.c.l.b16 %v7148
        %v7284 = vunpack.c.l.b16 %v7149
        %v7285 = vunpack.c.l.b16 %v7150
        %v7286 = vunpack.c.l.b16 %v7151
        %v7287 = vunpack.c.l.b16 %v7152
        %v7288 = vunpack.c.l.b16 %v7153
        %v7289 = vunpack.c.l.b16 %v7154
        %v7290 = vunpack.c.l.b16 %v7155
        %v7291 = vunpack.c.l.b16 %v7156
        %v7292 = vunpack.c.l.b16 %v7157
        %v7293 = vunpack.c.l.b16 %v7158
        %v7294 = vunpack.c.l.b16 %v7159
        %v7295 = vunpack.c.l.b16 %v7160
        %v7296 = vunpack.c.l.b16 %v7161
        %v7297 = vunpack.c.l.b16 %v7162
        %v7298 = vunpack.c.l.b16 %v7163
        %v7299 = vunpack.c.l.b16 %v7164
        %v7300 = vunpack.c.l.b16 %v7165
        %v7301 = vunpack.c.l.b16 %v7166
        %v7302 = vunpack.c.l.b16 %v7167
        %v7303 = vunpack.c.l.b16 %v7168
        %v7304 = vunpack.c.l.b16 %v7169
        %v7305 = vpack.c.b16 %v7274, %v7273
        %v7306 = vpack.c.b16 %v7276, %v7275
        %v7307 = vpack.c.b16 %v7278, %v7277
        %v7308 = vpack.c.b16 %v7280, %v7279
        %v7309 = vpack.c.b16 %v7282, %v7281
        %v7310 = vpack.c.b16 %v7284, %v7283
        %v7311 = vpack.c.b16 %v7286, %v7285
        %v7312 = vpack.c.b16 %v7288, %v7287
        %v7313 = vpack.c.b16 %v7290, %v7289
        %v7314 = vpack.c.b16 %v7292, %v7291
        %v7315 = vpack.c.b16 %v7294, %v7293
        %v7316 = vpack.c.b16 %v7296, %v7295
        %v7317 = vpack.c.b16 %v7298, %v7297
        %v7318 = vpack.c.b16 %v7300, %v7299
        %v7319 = vpack.c.b16 %v7302, %v7301
        %v7320 = vpack.c.b16 %v7304, %v7303
        %7337 = vmatprep.subr.bf16.mxu0 0
        %7338 = vmatpush1.bf16.msra.mxu0 %v7312
        %7339 = vmatprep.subr.bf16.mxu0 0
        %7340 = vmatpush1.bf16.msra.mxu0 %v7311
        %7341 = vmatprep.subr.bf16.mxu0 0
        %7342 = vmatpush1.bf16.msra.mxu0 %v7310
        %7343 = vmatprep.subr.bf16.mxu0 0
        %7344 = vmatpush1.bf16.msra.mxu0 %v7309
        %7345 = vmatprep.subr.bf16.mxu0 0
        %7346 = vmatpush1.bf16.msra.mxu0 %v7308
        %7347 = vmatprep.subr.bf16.mxu0 0
        %7348 = vmatpush1.bf16.msra.mxu0 %v7307
        %7349 = vmatprep.subr.bf16.mxu0 0
        %7350 = vmatpush1.bf16.msra.mxu0 %v7306
        %7351 = vmatprep.subr.bf16.mxu0 0
        %7352 = vmatpush1.bf16.msra.mxu0 %v7305
        %7353 = vmatprep.subr.bf16.mxu0 0
        %7354 = vmatpush2.bf16.msra.mxu0 %v7320
        %7355 = vmatprep.subr.bf16.mxu0 0
        %7356 = vmatpush2.bf16.msra.mxu0 %v7319
        %7357 = vmatprep.subr.bf16.mxu0 0
        %7358 = vmatpush2.bf16.msra.mxu0 %v7318
        %7359 = vmatprep.subr.bf16.mxu0 0
        %7360 = vmatpush2.bf16.msra.mxu0 %v7317
        %7361 = vmatprep.subr.bf16.mxu0 0
        %7362 = vmatpush2.bf16.msra.mxu0 %v7316
        %7363 = vmatprep.subr.bf16.mxu0 0
        %7364 = vmatpush2.bf16.msra.mxu0 %v7315
        %7365 = vmatprep.subr.bf16.mxu0 0
        %7366 = vmatpush2.bf16.msra.mxu0 %v7314
        %7367 = vmatprep.subr.bf16.mxu0 0
        %7368 = vmatpush2.bf16.msra.mxu0 %v7313
        %7369 = vmatprep.mubr.bf16.mxu0 %v7172
        %7370 = vmatmul.mubr.bf16.gmra.mxu0 %v7171
        %v7371 = vpop.f32.mrf.mxu0
        %v7372 = vadd.f32 %v7239, %v7371
        %v7373 = vpop.f32.mrf.mxu0
        %v7374 = vpop.f32.mrf.mxu0
        %v7375 = vadd.f32 %v7239, %v7374
        %v7376 = vpop.f32.mrf.mxu0
        %7377 = vmatprep.mubr.bf16.mxu0 %v7174
        %7378 = vmatmul.mubr.bf16.gmra.mxu0 %v7173
        %v7379 = vpop.f32.mrf.mxu0
        %v7380 = vadd.f32 %v7239, %v7379
        %v7381 = vpop.f32.mrf.mxu0
        %v7382 = vpop.f32.mrf.mxu0
        %v7383 = vadd.f32 %v7239, %v7382
        %v7384 = vpop.f32.mrf.mxu0
        %7385 = vmatprep.mubr.bf16.mxu0 %v7176
        %7386 = vmatmul.mubr.bf16.gmra.mxu0 %v7175
        %v7387 = vpop.f32.mrf.mxu0
        %v7388 = vadd.f32 %v7239, %v7387
        %v7389 = vpop.f32.mrf.mxu0
        %v7390 = vpop.f32.mrf.mxu0
        %v7391 = vadd.f32 %v7239, %v7390
        %v7392 = vpop.f32.mrf.mxu0
        %7393 = vmatprep.mubr.bf16.mxu0 %v7178
        %7394 = vmatmul.mubr.bf16.gmra.mxu0 %v7177
        %v7395 = vpop.f32.mrf.mxu0
        %v7396 = vadd.f32 %v7239, %v7395
        %v7397 = vpop.f32.mrf.mxu0
        %v7398 = vpop.f32.mrf.mxu0
        %v7399 = vadd.f32 %v7239, %v7398
        %v7400 = vpop.f32.mrf.mxu0
        %7401 = vmatprep.mubr.bf16.mxu0 %v7180
        %7402 = vmatmul.mubr.bf16.gmra.mxu0 %v7179
        %v7403 = vpop.f32.mrf.mxu0
        %v7404 = vadd.f32 %v7239, %v7403
        %v7405 = vpop.f32.mrf.mxu0
        %v7406 = vpop.f32.mrf.mxu0
        %v7407 = vadd.f32 %v7239, %v7406
        %v7408 = vpop.f32.mrf.mxu0
        %7409 = vmatprep.mubr.bf16.mxu0 %v7182
        %7410 = vmatmul.mubr.bf16.gmra.mxu0 %v7181
        %v7411 = vpop.f32.mrf.mxu0
        %v7412 = vadd.f32 %v7239, %v7411
        %v7413 = vpop.f32.mrf.mxu0
        %v7414 = vpop.f32.mrf.mxu0
        %v7415 = vadd.f32 %v7239, %v7414
        %v7416 = vpop.f32.mrf.mxu0
        %7417 = vmatprep.mubr.bf16.mxu0 %v7184
        %7418 = vmatmul.mubr.bf16.gmra.mxu0 %v7183
        %v7419 = vpop.f32.mrf.mxu0
        %v7420 = vadd.f32 %v7239, %v7419
        %v7421 = vpop.f32.mrf.mxu0
        %v7422 = vpop.f32.mrf.mxu0
        %v7423 = vadd.f32 %v7239, %v7422
        %v7424 = vpop.f32.mrf.mxu0
        %7425 = vmatprep.mubr.bf16.mxu0 %v7186
        %7426 = vmatmul.mubr.bf16.gmra.mxu0 %v7185
        %v7427 = vpop.f32.mrf.mxu0
        %v7428 = vadd.f32 %v7239, %v7427
        %v7429 = vpop.f32.mrf.mxu0
        %v7430 = vpop.f32.mrf.mxu0
        %v7431 = vadd.f32 %v7239, %v7430
        %v7432 = vpop.f32.mrf.mxu0
        %7433 = vmatprep.mubr.bf16.mxu0 %v7188
        %7434 = vmatmul.mubr.bf16.gmra.mxu0 %v7187
        %v7435 = vpop.f32.mrf.mxu0
        %v7436 = vadd.f32 %v7239, %v7435
        %v7437 = vpop.f32.mrf.mxu0
        %v7438 = vpop.f32.mrf.mxu0
        %v7439 = vadd.f32 %v7239, %v7438
        %v7440 = vpop.f32.mrf.mxu0
        %7441 = vmatprep.mubr.bf16.mxu0 %v7190
        %7442 = vmatmul.mubr.bf16.gmra.mxu0 %v7189
        %v7443 = vpop.f32.mrf.mxu0
        %v7444 = vadd.f32 %v7239, %v7443
        %v7445 = vpop.f32.mrf.mxu0
        %v7446 = vpop.f32.mrf.mxu0
        %v7447 = vadd.f32 %v7239, %v7446
        %v7448 = vpop.f32.mrf.mxu0
        %7449 = vmatprep.mubr.bf16.mxu0 %v7192
        %7450 = vmatmul.mubr.bf16.gmra.mxu0 %v7191
        %v7451 = vpop.f32.mrf.mxu0
        %v7452 = vadd.f32 %v7239, %v7451
        %v7453 = vpop.f32.mrf.mxu0
        %v7454 = vpop.f32.mrf.mxu0
        %v7455 = vadd.f32 %v7239, %v7454
        %v7456 = vpop.f32.mrf.mxu0
        %7457 = vmatprep.mubr.bf16.mxu0 %v7194
        %7458 = vmatmul.mubr.bf16.gmra.mxu0 %v7193
        %v7459 = vpop.f32.mrf.mxu0
        %v7460 = vadd.f32 %v7239, %v7459
        %v7461 = vpop.f32.mrf.mxu0
        %v7462 = vpop.f32.mrf.mxu0
        %v7463 = vadd.f32 %v7239, %v7462
        %v7464 = vpop.f32.mrf.mxu0
        %7465 = vmatprep.mubr.bf16.mxu0 %v7196
        %7466 = vmatmul.mubr.bf16.gmra.mxu0 %v7195
        %v7467 = vpop.f32.mrf.mxu0
        %v7468 = vadd.f32 %v7239, %v7467
        %v7469 = vpop.f32.mrf.mxu0
        %v7470 = vpop.f32.mrf.mxu0
        %v7471 = vadd.f32 %v7239, %v7470
        %v7472 = vpop.f32.mrf.mxu0
        %7473 = vmatprep.mubr.bf16.mxu0 %v7198
        %7474 = vmatmul.mubr.bf16.gmra.mxu0 %v7197
        %v7475 = vpop.f32.mrf.mxu0
        %v7476 = vadd.f32 %v7239, %v7475
        %v7477 = vpop.f32.mrf.mxu0
        %v7478 = vpop.f32.mrf.mxu0
        %v7479 = vadd.f32 %v7239, %v7478
        %v7480 = vpop.f32.mrf.mxu0
        %7481 = vmatprep.mubr.bf16.mxu0 %v7200
        %7482 = vmatmul.mubr.bf16.gmra.mxu0 %v7199
        %v7483 = vpop.f32.mrf.mxu0
        %v7484 = vadd.f32 %v7239, %v7483
        %v7485 = vpop.f32.mrf.mxu0
        %v7486 = vpop.f32.mrf.mxu0
        %v7487 = vadd.f32 %v7239, %v7486
        %v7488 = vpop.f32.mrf.mxu0
        %7489 = vmatprep.mubr.bf16.mxu0 %v7202
        %7490 = vmatmul.mubr.bf16.gmra.mxu0 %v7201
        %v7491 = vpop.f32.mrf.mxu0
        %v7492 = vadd.f32 %v7239, %v7491
        %v7493 = vpop.f32.mrf.mxu0
        %v7494 = vpop.f32.mrf.mxu0
        %v7495 = vadd.f32 %v7239, %v7494
        %v7496 = vpop.f32.mrf.mxu0
        %7497 = vmatprep.mubr.bf16.mxu0 %v7204
        %7498 = vmatmul.mubr.bf16.gmra.mxu0 %v7203
        %v7499 = vpop.f32.mrf.mxu0
        %v7500 = vadd.f32 %v7239, %v7499
        %v7501 = vpop.f32.mrf.mxu0
        %v7502 = vpop.f32.mrf.mxu0
        %v7503 = vadd.f32 %v7239, %v7502
        %v7504 = vpop.f32.mrf.mxu0
        %7505 = vmatprep.mubr.bf16.mxu0 %v7206
        %7506 = vmatmul.mubr.bf16.gmra.mxu0 %v7205
        %v7507 = vpop.f32.mrf.mxu0
        %v7508 = vadd.f32 %v7239, %v7507
        %v7509 = vpop.f32.mrf.mxu0
        %v7510 = vpop.f32.mrf.mxu0
        %v7511 = vadd.f32 %v7239, %v7510
        %v7512 = vpop.f32.mrf.mxu0
        %7513 = vmatprep.mubr.bf16.mxu0 %v7208
        %7514 = vmatmul.mubr.bf16.gmra.mxu0 %v7207
        %v7515 = vpop.f32.mrf.mxu0
        %v7516 = vadd.f32 %v7239, %v7515
        %v7517 = vpop.f32.mrf.mxu0
        %v7518 = vpop.f32.mrf.mxu0
        %v7519 = vadd.f32 %v7239, %v7518
        %v7520 = vpop.f32.mrf.mxu0
        %7521 = vmatprep.mubr.bf16.mxu0 %v7210
        %7522 = vmatmul.mubr.bf16.gmra.mxu0 %v7209
        %v7523 = vpop.f32.mrf.mxu0
        %v7524 = vadd.f32 %v7239, %v7523
        %v7525 = vpop.f32.mrf.mxu0
        %v7526 = vpop.f32.mrf.mxu0
        %v7527 = vadd.f32 %v7239, %v7526
        %v7528 = vpop.f32.mrf.mxu0
        %7529 = vmatprep.mubr.bf16.mxu0 %v7212
        %7530 = vmatmul.mubr.bf16.gmra.mxu0 %v7211
        %v7531 = vpop.f32.mrf.mxu0
        %v7532 = vadd.f32 %v7239, %v7531
        %v7533 = vpop.f32.mrf.mxu0
        %v7534 = vpop.f32.mrf.mxu0
        %v7535 = vadd.f32 %v7239, %v7534
        %v7536 = vpop.f32.mrf.mxu0
        %7537 = vmatprep.mubr.bf16.mxu0 %v7214
        %7538 = vmatmul.mubr.bf16.gmra.mxu0 %v7213
        %v7539 = vpop.f32.mrf.mxu0
        %v7540 = vadd.f32 %v7239, %v7539
        %v7541 = vpop.f32.mrf.mxu0
        %v7542 = vpop.f32.mrf.mxu0
        %v7543 = vadd.f32 %v7239, %v7542
        %v7544 = vpop.f32.mrf.mxu0
        %7545 = vmatprep.mubr.bf16.mxu0 %v7216
        %7546 = vmatmul.mubr.bf16.gmra.mxu0 %v7215
        %v7547 = vpop.f32.mrf.mxu0
        %v7548 = vadd.f32 %v7239, %v7547
        %v7549 = vpop.f32.mrf.mxu0
        %v7550 = vpop.f32.mrf.mxu0
        %v7551 = vadd.f32 %v7239, %v7550
        %v7552 = vpop.f32.mrf.mxu0
        %7553 = vmatprep.mubr.bf16.mxu0 %v7218
        %7554 = vmatmul.mubr.bf16.gmra.mxu0 %v7217
        %v7555 = vpop.f32.mrf.mxu0
        %v7556 = vadd.f32 %v7239, %v7555
        %v7557 = vpop.f32.mrf.mxu0
        %v7558 = vpop.f32.mrf.mxu0
        %v7559 = vadd.f32 %v7239, %v7558
        %v7560 = vpop.f32.mrf.mxu0
        %7561 = vmatprep.mubr.bf16.mxu0 %v7220
        %7562 = vmatmul.mubr.bf16.gmra.mxu0 %v7219
        %v7563 = vpop.f32.mrf.mxu0
        %v7564 = vadd.f32 %v7239, %v7563
        %v7565 = vpop.f32.mrf.mxu0
        %v7566 = vpop.f32.mrf.mxu0
        %v7567 = vadd.f32 %v7239, %v7566
        %v7568 = vpop.f32.mrf.mxu0
        %7569 = vmatprep.mubr.bf16.mxu0 %v7222
        %7570 = vmatmul.mubr.bf16.gmra.mxu0 %v7221
        %v7571 = vpop.f32.mrf.mxu0
        %v7572 = vadd.f32 %v7239, %v7571
        %v7573 = vpop.f32.mrf.mxu0
        %v7574 = vpop.f32.mrf.mxu0
        %v7575 = vadd.f32 %v7239, %v7574
        %v7576 = vpop.f32.mrf.mxu0
        %7577 = vmatprep.mubr.bf16.mxu0 %v7224
        %7578 = vmatmul.mubr.bf16.gmra.mxu0 %v7223
        %v7579 = vpop.f32.mrf.mxu0
        %v7580 = vadd.f32 %v7239, %v7579
        %v7581 = vpop.f32.mrf.mxu0
        %v7582 = vpop.f32.mrf.mxu0
        %v7583 = vadd.f32 %v7239, %v7582
        %v7584 = vpop.f32.mrf.mxu0
        %7585 = vmatprep.mubr.bf16.mxu0 %v7226
        %7586 = vmatmul.mubr.bf16.gmra.mxu0 %v7225
        %v7587 = vpop.f32.mrf.mxu0
        %v7588 = vadd.f32 %v7239, %v7587
        %v7589 = vpop.f32.mrf.mxu0
        %v7590 = vpop.f32.mrf.mxu0
        %v7591 = vadd.f32 %v7239, %v7590
        %v7592 = vpop.f32.mrf.mxu0
        %7593 = vmatprep.mubr.bf16.mxu0 %v7228
        %7594 = vmatmul.mubr.bf16.gmra.mxu0 %v7227
        %v7595 = vpop.f32.mrf.mxu0
        %v7596 = vadd.f32 %v7239, %v7595
        %v7597 = vpop.f32.mrf.mxu0
        %v7598 = vpop.f32.mrf.mxu0
        %v7599 = vadd.f32 %v7239, %v7598
        %v7600 = vpop.f32.mrf.mxu0
        %7601 = vmatprep.mubr.bf16.mxu0 %v7230
        %7602 = vmatmul.mubr.bf16.gmra.mxu0 %v7229
        %v7603 = vpop.f32.mrf.mxu0
        %v7604 = vadd.f32 %v7239, %v7603
        %v7605 = vpop.f32.mrf.mxu0
        %v7606 = vpop.f32.mrf.mxu0
        %v7607 = vadd.f32 %v7239, %v7606
        %v7608 = vpop.f32.mrf.mxu0
        %7609 = vmatprep.mubr.bf16.mxu0 %v7232
        %7610 = vmatmul.mubr.bf16.gmra.mxu0 %v7231
        %v7611 = vpop.f32.mrf.mxu0
        %v7612 = vadd.f32 %v7239, %v7611
        %v7613 = vpop.f32.mrf.mxu0
        %v7614 = vpop.f32.mrf.mxu0
        %v7615 = vadd.f32 %v7239, %v7614
        %v7616 = vpop.f32.mrf.mxu0
        %7617 = vmatprep.mubr.bf16.mxu0 %v7234
        %7618 = vmatmul.mubr.bf16.gmra.mxu0 %v7233
        %v7619 = vpop.f32.mrf.mxu0
        %v7620 = vadd.f32 %v7239, %v7619
        %v7621 = vpop.f32.mrf.mxu0
        %v7622 = vpop.f32.mrf.mxu0
        %v7623 = vadd.f32 %v7239, %v7622
        %v7624 = vpop.f32.mrf.mxu0
        %7625 = vdwg.mxu0
        %7626 = vst [vmem:[%s623] sm:$0xff] %v7372
        %7627 = vst [vmem:[%s623 + $0x8] sm:$0xff] %v7375
        %7628 = vst [vmem:[%s623 + $0x10] sm:$0xff] %v7380
        %7629 = vst [vmem:[%s623 + $0x18] sm:$0xff] %v7383
        %7630 = vst [vmem:[%s623 + $0x20] sm:$0xff] %v7388
        %7631 = vst [vmem:[%s623 + $0x28] sm:$0xff] %v7391
        %7632 = vst [vmem:[%s623 + $0x30] sm:$0xff] %v7396
        %7633 = vst [vmem:[%s623 + $0x38] sm:$0xff] %v7399
        %7634 = vst [vmem:[%s623 + $0x40] sm:$0xff] %v7404
        %7635 = vst [vmem:[%s623 + $0x48] sm:$0xff] %v7407
        %7636 = vst [vmem:[%s623 + $0x50] sm:$0xff] %v7412
        %7637 = vst [vmem:[%s623 + $0x58] sm:$0xff] %v7415
        %7638 = vst [vmem:[%s623 + $0x60] sm:$0xff] %v7420
        %7639 = vst [vmem:[%s623 + $0x68] sm:$0xff] %v7423
        %7640 = vst [vmem:[%s623 + $0x70] sm:$0xff] %v7428
        %7641 = vst [vmem:[%s623 + $0x78] sm:$0xff] %v7431
        %7642 = vst [vmem:[%s623 + $0x80] sm:$0xff] %v7436
        %7643 = vst [vmem:[%s623 + $0x88] sm:$0xff] %v7439
        %7644 = vst [vmem:[%s623 + $0x90] sm:$0xff] %v7444
        %7645 = vst [vmem:[%s623 + $0x98] sm:$0xff] %v7447
        %7646 = vst [vmem:[%s623 + $0xa0] sm:$0xff] %v7452
        %7647 = vst [vmem:[%s623 + $0xa8] sm:$0xff] %v7455
        %7648 = vst [vmem:[%s623 + $0xb0] sm:$0xff] %v7460
        %7649 = vst [vmem:[%s623 + $0xb8] sm:$0xff] %v7463
        %7650 = vst [vmem:[%s623 + $0xc0] sm:$0xff] %v7468
        %7651 = vst [vmem:[%s623 + $0xc8] sm:$0xff] %v7471
        %7652 = vst [vmem:[%s623 + $0xd0] sm:$0xff] %v7476
        %7653 = vst [vmem:[%s623 + $0xd8] sm:$0xff] %v7479
        %7654 = vst [vmem:[%s623 + $0xe0] sm:$0xff] %v7484
        %7655 = vst [vmem:[%s623 + $0xe8] sm:$0xff] %v7487
        %7656 = vst [vmem:[%s623 + $0xf0] sm:$0xff] %v7492
        %7657 = vst [vmem:[%s623 + $0xf8] sm:$0xff] %v7495
        %7658 = vst [vmem:[%s623 + $0x100] sm:$0xff] %v7500
        %7659 = vst [vmem:[%s623 + $0x108] sm:$0xff] %v7503
        %7660 = vst [vmem:[%s623 + $0x110] sm:$0xff] %v7508
        %7661 = vst [vmem:[%s623 + $0x118] sm:$0xff] %v7511
        %7662 = vst [vmem:[%s623 + $0x120] sm:$0xff] %v7516
        %7663 = vst [vmem:[%s623 + $0x128] sm:$0xff] %v7519
        %7664 = vst [vmem:[%s623 + $0x130] sm:$0xff] %v7524
        %7665 = vst [vmem:[%s623 + $0x138] sm:$0xff] %v7527
        %7666 = vst [vmem:[%s623 + $0x140] sm:$0xff] %v7532
        %7667 = vst [vmem:[%s623 + $0x148] sm:$0xff] %v7535
        %7668 = vst [vmem:[%s623 + $0x150] sm:$0xff] %v7540
        %7669 = vst [vmem:[%s623 + $0x158] sm:$0xff] %v7543
        %7670 = vst [vmem:[%s623 + $0x160] sm:$0xff] %v7548
        %7671 = vst [vmem:[%s623 + $0x168] sm:$0xff] %v7551
        %7672 = vst [vmem:[%s623 + $0x170] sm:$0xff] %v7556
        %7673 = vst [vmem:[%s623 + $0x178] sm:$0xff] %v7559
        %7674 = vst [vmem:[%s623 + $0x180] sm:$0xff] %v7564
        %7675 = vst [vmem:[%s623 + $0x188] sm:$0xff] %v7567
        %7676 = vst [vmem:[%s623 + $0x190] sm:$0xff] %v7572
        %7677 = vst [vmem:[%s623 + $0x198] sm:$0xff] %v7575
        %7678 = vst [vmem:[%s623 + $0x1a0] sm:$0xff] %v7580
        %7679 = vst [vmem:[%s623 + $0x1a8] sm:$0xff] %v7583
        %7680 = vst [vmem:[%s623 + $0x1b0] sm:$0xff] %v7588
        %7681 = vst [vmem:[%s623 + $0x1b8] sm:$0xff] %v7591
        %7682 = vst [vmem:[%s623 + $0x1c0] sm:$0xff] %v7596
        %7683 = vst [vmem:[%s623 + $0x1c8] sm:$0xff] %v7599
        %7684 = vst [vmem:[%s623 + $0x1d0] sm:$0xff] %v7604
        %7685 = vst [vmem:[%s623 + $0x1d8] sm:$0xff] %v7607
        %7686 = vst [vmem:[%s623 + $0x1e0] sm:$0xff] %v7612
        %7687 = vst [vmem:[%s623 + $0x1e8] sm:$0xff] %v7615
        %7688 = vst [vmem:[%s623 + $0x1f0] sm:$0xff] %v7620
        %7689 = vst [vmem:[%s623 + $0x1f8] sm:$0xff] %v7623
        %s7690 = sand.u32 %s467, 1
        %s7691 = scalar_lea.sflag [#allocation3], %s7690
        %s7692 = sand.u32 %s467, 1
        %s7693 = smul.addr %s7692, 512
        %s7694 = scalar_lea.vmem [#allocation2], %s7693
        // Predicated region
        $region101: #{tpu_custom_call.1} parent=99 // pred_check
          %p7695 = pneg %p477
        $region102: #{tpu_custom_call.1} parent=99 // pred_check_branch
          %7697 = sbr.rel (%p7695) target = $region104
        $region103: #{tpu_custom_call.1} parent=99 // pred_region
          %s7698 = smul.u32 64, %s34
          %s7700 = ssub.s32 8192, 8192
          %7701 = vsyncadd %s7691, %s7700
          %s7702 = smul.addr %s7698, 128
          %s7703 = scalar_lea.hbm %s20, %s7702
          %s7704 = sshll.u32 %s7694, 4
          %s7705 = int_to_ptr.vmem [resolvable:$true] %s7704
          %7710 = dma.vmem_to_hbm [thread:$0]  %s7705, 8192, %s7703, %s7691, 128, 128, 8
        $region104: #{tpu_custom_call.1} parent=99 // pred_fallthru
          _
      $region100: #{tpu_custom_call.1} parent=5 // pred_fallthru
        _
      %p7711 = scmp.le.s32.totalorder 2, %s29
      // Predicated region
      $region105: #{tpu_custom_call.1} parent=5 // pred_check
        %p7712 = pneg %p7711
      $region106: #{tpu_custom_call.1} parent=5 // pred_check_branch
        %7714 = sbr.rel (%p7712) target = $region108
      $region107: #{tpu_custom_call.1} parent=5 // pred_region
        %s7715 = ssub.s32 %s29, 2
        // Predicated region
        $region109: #{tpu_custom_call.1} parent=107 // pred_check
          %p7716 = pneg %p483
        $region110: #{tpu_custom_call.1} parent=107 // pred_check_branch
          %7718 = sbr.rel (%p7716) target = $region112
        $region111: #{tpu_custom_call.1} parent=107 // pred_region
          %s7719 = sand.u32 %s468, 1
          %s7720 = scalar_lea.sflag [#allocation3], %s7719
          %s7721 = sand.u32 %s468, 1
          %s7722 = smul.addr %s7721, 512
          %s7723 = scalar_lea.vmem [#allocation2], %s7722
          %7724 = dma.done %s7720, 8192
        $region112: #{tpu_custom_call.1} parent=107 // pred_fallthru
          _
      $region108: #{tpu_custom_call.1} parent=5 // pred_fallthru
        _
    $region6: #{tpu_custom_call.1} parent=1 // loop_footer
      %s33 = sadd.s32 1, %s29
    $region7: #{tpu_custom_call.1} parent=1 // loop_footer_branch
      %28 = sbr.rel target = $region3
    $region8: #{tpu_custom_call.1} parent=1 // loop_exit
      _
    %7725 = vsyncpa [#allocation3], 1
    %s7726 = scalar_lea.sflag [#allocation3], 1
    %7727 = vsyncpa %s7726, 1

</llo_original>
